<compile_context>
chip_gen: v7x
topology: tpu7x:2x2x1
jax: 0.10.0
libtpu: 0.0.40
codegen_flags: <defaults>
</compile_context>

<pallas_src>
import math
import functools

import numpy as np
import jax
import jax.numpy as jnp
from jax.experimental import pallas as pl
from jax.experimental.pallas import tpu as pltpu


# --------------------------------------------------------------------------------------
# Pallas kernel: whole AttentionBlock forward for `Bt` batch elements per grid step.
# --------------------------------------------------------------------------------------
def _attention_block_kernel(num_heads, head_dim, kv_tile, eps,
                            x_ref, cos_ref, sin_ref,
                            g1_ref, b1_ref, wqkv_ref,
                            wproj_ref, bproj_ref,
                            g2_ref, b2_ref,
                            w1_ref, bb1_ref, w2_ref, bb2_ref,
                            out_ref, attn_sc):
    Bt, N, C = x_ref.shape
    H, D = num_heads, head_dim
    M = Bt * N                                     # matmul M dimension (>= 256)

    x = x_ref[...].reshape(M, C)                   # (M, C) f32, sublane-split only

    def layernorm(v, g, b):
        mu = jnp.mean(v, axis=-1, keepdims=True)
        var = jnp.mean((v - mu) * (v - mu), axis=-1, keepdims=True)   # two-pass variance
        return (v - mu) * jax.lax.rsqrt(var + eps) * g + b

    # ---------------- attention branch: x + proj(attn(rope(qkv(LN(x))))) ---------------
    h1 = layernorm(x, g1_ref[...], b1_ref[...])
    qkv = jnp.dot(h1.astype(jnp.bfloat16), wqkv_ref[...],
                  preferred_element_type=jnp.float32)                 # (M, 3C) f32

    cos = cos_ref[...][None]                        # (1, N, D)
    sin = sin_ref[...][None]

    nk = N // kv_tile
    for h in range(H):                              # small static unroll over heads
        # lane-aligned per-head column slices (head_dim is a multiple of 128) -> no
        # transposes; the (M, D) -> (Bt, N, D) reshape only splits the sublane axis.
        q = qkv[:, h * D:(h + 1) * D].reshape(Bt, N, D)
        k = qkv[:, C + h * D:C + (h + 1) * D].reshape(Bt, N, D)
        v = qkv[:, 2 * C + h * D:2 * C + (h + 1) * D].reshape(Bt, N, D)

        # RoPE in split-half permuted layout: rotate_half == roll by D//2 (XLU), with
        # the alternating sign folded into the sin table offline.
        q = q * cos + pltpu.roll(q, shift=D // 2, axis=2) * sin
        k = k * cos + pltpu.roll(k, shift=D // 2, axis=2) * sin

        qb = q.astype(jnp.bfloat16)                 # 1/sqrt(D) already folded into weights

        # Online softmax over lane-dense KV tiles: only one (Bt, N, TK) score tile live.
        m_run = jnp.full((Bt, N, 1), -jnp.inf, jnp.float32)
        l_run = jnp.zeros((Bt, N, 1), jnp.float32)
        acc = jnp.zeros((Bt, N, D), jnp.float32)
        for t in range(nk):
            sl = slice(t * kv_tile, (t + 1) * kv_tile)
            kb = k[:, sl].astype(jnp.bfloat16)
            vb = v[:, sl].astype(jnp.bfloat16)
            s = jnp.einsum("bnd,bmd->bnm", qb, kb,
                           preferred_element_type=jnp.float32)        # (Bt, N, TK) f32
            m_new = jnp.maximum(m_run, jnp.max(s, axis=-1, keepdims=True))
            alpha = jnp.exp(m_run - m_new)
            p = jnp.exp(s - m_new).astype(jnp.bfloat16)   # single bf16 copy feeds l and p@v
            l_run = alpha * l_run + jnp.sum(p, axis=-1, keepdims=True, dtype=jnp.float32)
            acc = alpha * acc + jnp.einsum("bnm,bmd->bnd", p, vb,
                                           preferred_element_type=jnp.float32)
            m_run = m_new

        o = acc * pl.reciprocal(l_run, approx=True)       # softmax normalization on EUP
        # write head output back into lane-aligned columns (channel = h*D + d)
        attn_sc[:, h * D:(h + 1) * D] = o.reshape(M, D)

    attn = jnp.dot(attn_sc[...].astype(jnp.bfloat16), wproj_ref[...],
                   preferred_element_type=jnp.float32) + bproj_ref[...]
    x1 = x + attn

    # ---------------- MLP branch: x1 + fc2(gelu(fc1(LN(x1)))) --------------------------
    h2 = layernorm(x1, g2_ref[...], b2_ref[...])
    mm = jnp.dot(h2.astype(jnp.bfloat16), w1_ref[...],
                 preferred_element_type=jnp.float32) + bb1_ref[...]
    mm = 0.5 * mm * (1.0 + jax.lax.erf(mm * (1.0 / math.sqrt(2.0))))   # exact GELU (nn.GELU)
    mm = jnp.dot(mm.astype(jnp.bfloat16), w2_ref[...],
                 preferred_element_type=jnp.float32) + bb2_ref[...]

    out_ref[...] = (x1 + mm).reshape(Bt, N, C).astype(out_ref.dtype)


# --------------------------------------------------------------------------------------
# Wrapper
# --------------------------------------------------------------------------------------
def _vmem_limit_bytes():
    # ~3/4 of physical VMEM, capped at 100 MiB: ~96 MiB on v5e/v6e, ~48 MiB on v7x.
    try:
        cap = int(pltpu.get_tpu_info().vmem_capacity_bytes)
    except Exception:
        cap = 64 * 1024 * 1024
    return int(min(cap * 3 // 4, 100 * 1024 * 1024))


def _default_batch_tile(B, N):
    bt = 1
    for cand in range(1, B + 1):
        if B % cand == 0 and cand * N <= max(256, N):
            bt = cand
    return bt


def attention_block(x, kp, num_heads, batch_tile=None):
    B, N, C = x.shape
    head_dim = C // num_heads
    hidden = kp["w1"].shape[1]

    Bt = batch_tile if batch_tile is not None else _default_batch_tile(B, N)
    assert B % Bt == 0, "batch_tile must divide batch"

    # lane-dense KV tile (multiple of 128) that divides N, else fall back to full N.
    kv_tile = N
    for cand in (512, 256, 128):
        if N % cand == 0:
            kv_tile = cand
            break

    kernel = functools.partial(_attention_block_kernel, num_heads, head_dim, kv_tile, 1e-5)

    def const_spec(arr):
        return pl.BlockSpec(arr.shape, lambda b: (0,) * arr.ndim)

    flops = (2 * B * N * (3 * C * C + C * C + 2 * C * hidden)
             + 4 * B * num_heads * N * N * head_dim)
    transcendentals = B * num_heads * N * N + B * N * hidden
    bytes_accessed = (2 * B * N * C * 4                               # x in + out (f32)
                      + (3 * C * C + C * C + 2 * C * hidden) * 2      # bf16 weights
                      + (2 * N * head_dim + 6 * C + 2 * hidden) * 4)  # tables / biases / LN
    cost = pl.CostEstimate(flops=flops, transcendentals=transcendentals,
                           bytes_accessed=bytes_accessed)

    return pl.pallas_call(
        kernel,
        out_shape=jax.ShapeDtypeStruct((B, N, C), x.dtype),
        grid=(B // Bt,),
        in_specs=[
            pl.BlockSpec((Bt, N, C), lambda b: (b, 0, 0)),  # x
            const_spec(kp["cos"]), const_spec(kp["sin"]),   # rotary tables (N, head_dim)
            const_spec(kp["ln1_g"]), const_spec(kp["ln1_b"]),
            const_spec(kp["wqkv"]),                         # qkv weight (T, permuted, bf16)
            const_spec(kp["wproj"]), const_spec(kp["bproj"]),
            const_spec(kp["ln2_g"]), const_spec(kp["ln2_b"]),
            const_spec(kp["w1"]), const_spec(kp["b1"]),
            const_spec(kp["w2"]), const_spec(kp["b2"]),
        ],
        out_specs=pl.BlockSpec((Bt, N, C), lambda b: (b, 0, 0)),
        scratch_shapes=[pltpu.VMEM((Bt * N, C), jnp.float32)],        # per-head attn output
        compiler_params=pltpu.CompilerParams(
            dimension_semantics=("parallel",),
            vmem_limit_bytes=_vmem_limit_bytes()),
        cost_estimate=cost,
    )(x, kp["cos"], kp["sin"],
      kp["ln1_g"], kp["ln1_b"], kp["wqkv"],
      kp["wproj"], kp["bproj"], kp["ln2_g"], kp["ln2_b"],
      kp["w1"], kp["b1"], kp["w2"], kp["b2"])


# --------------------------------------------------------------------------------------
# Axial rotary tables (RotaryEmbedding(dim=head_dim//4, freqs_for='pixel',
# max_freq=H*W).get_axial_freqs(H, W)) in the ORIGINAL interleaved per-head layout,
# padded to head_dim (cos=1, sin=0 on the un-rotated tail). Shape (N, head_dim).
# --------------------------------------------------------------------------------------
def rotary_tables(H, W, head_dim):
    rot_emb_dim = head_dim // 4
    max_freq = H * W
    n_f = rot_emb_dim // 2
    base_freqs = jnp.linspace(1.0, max_freq / 2.0, n_f) * jnp.pi        # (n_f,)

    def axis_freqs(steps):
        pos = jnp.linspace(-1.0, 1.0, steps)                            # 'pixel' positions
        f = pos[:, None] * base_freqs[None, :]                          # (steps, n_f)
        return jnp.repeat(f, 2, axis=-1)                                # interleave r=2

    fh = jnp.broadcast_to(axis_freqs(H)[:, None, :], (H, W, 2 * n_f))
    fw = jnp.broadcast_to(axis_freqs(W)[None, :, :], (H, W, 2 * n_f))
    freqs = jnp.concatenate([fh, fw], axis=-1).reshape(H * W, -1)       # (N, rot_dim)
    rot_dim = freqs.shape[-1]
    N = H * W
    pad = head_dim - rot_dim
    cos = jnp.concatenate([jnp.cos(freqs), jnp.ones((N, pad), jnp.float32)], axis=-1)
    sin = jnp.concatenate([jnp.sin(freqs), jnp.zeros((N, pad), jnp.float32)], axis=-1)
    return cos.astype(jnp.float32), sin.astype(jnp.float32)             # (N, head_dim)


# --------------------------------------------------------------------------------------
# Offline prep: per-head split-half column permutation of q/k (so rotate_half == one roll
# by head_dim//2), sign folded into sin, 1/sqrt(head_dim) folded into q weight columns,
# matmul weights cast to bf16.
# --------------------------------------------------------------------------------------
def prep_kernel_inputs(params, cos_hd, sin_hd, num_heads):
    C = params["wqkv_t"].shape[0]
    head_dim = C // num_heads
    rot = head_dim // 2                             # rotary dim (2 axes * head_dim//4)
    pad = head_dim - rot

    # new layout within a head: [even rot chans, tail_lo | odd rot chans, tail_hi]
    first = list(range(0, rot, 2)) + list(range(rot, rot + pad // 2))
    second = list(range(1, rot, 2)) + list(range(rot + pad // 2, head_dim))
    perm = np.array(first + second, dtype=np.int64)

    # rotate_half sign folded into sin (even original channel -> -sin, odd -> +sin).
    sign = np.where(np.arange(head_dim) % 2 == 0, -1.0, 1.0).astype(np.float32)
    cos_k = jnp.asarray(np.asarray(cos_hd)[:, perm], jnp.float32)
    sin_k = jnp.asarray((np.asarray(sin_hd) * sign[None, :])[:, perm], jnp.float32)

    # permute q and k output columns of the qkv weight; fold attention scale into q.
    col = np.arange(3 * C)
    for blk in (0, 1):                              # q block, k block (v untouched)
        for h in range(num_heads):
            base = blk * C + h * head_dim
            col[base:base + head_dim] = base + perm
    scale = np.ones((3 * C,), np.float32)
    scale[:C] = 1.0 / math.sqrt(head_dim)
    wqkv = np.asarray(params["wqkv_t"], np.float32)[:, col] * scale[None, :]

    return {
        "cos": cos_k, "sin": sin_k,
        "ln1_g": params["ln1_g"], "ln1_b": params["ln1_b"],
        "wqkv": jnp.asarray(wqkv, jnp.bfloat16),
        "wproj": params["wproj_t"].astype(jnp.bfloat16), "bproj": params["bproj"],
        "ln2_g": params["ln2_g"], "ln2_b": params["ln2_b"],
        "w1": params["w1_t"].astype(jnp.bfloat16), "b1": params["b1"],
        "w2": params["w2_t"].astype(jnp.bfloat16), "b2": params["b2"],
    }


# --------------------------------------------------------------------------------------
# Pure-JAX f32 reference (original layout / interleaved rotate_half) for validation.
# --------------------------------------------------------------------------------------
def ref_attention_block(x, params, cos_hd, sin_hd, num_heads):
    B, N, C = x.shape
    d = C // num_heads

    def ln(v, g, b):
        mu = v.mean(-1, keepdims=True)
        var = ((v - mu) ** 2).mean(-1, keepdims=True)
        return (v - mu) / jnp.sqrt(var + 1e-5) * g + b

    def rotate_half(t):
        tr = t.reshape(t.shape[:-1] + (t.shape[-1] // 2, 2))
        return jnp.stack([-tr[..., 1], tr[..., 0]], axis=-1).reshape(t.shape)

    h = ln(x, params["ln1_g"][0], params["ln1_b"][0])
    qkv = h @ params["wqkv_t"]
    q, k, v = jnp.split(qkv, 3, axis=-1)

    def to_heads(t):
        return t.reshape(B, N, num_heads, d).transpose(0, 2, 1, 3)      # (B, h, N, d)

    q, k, v = to_heads(q), to_heads(k), to_heads(v)
    cos = cos_hd[None, None]
    sin = sin_hd[None, None]
    q = q * cos + rotate_half(q) * sin
    k = k * cos + rotate_half(k) * sin

    s = jnp.einsum("bhnd,bhmd->bhnm", q, k) / math.sqrt(d)
    p = jax.nn.softmax(s, axis=-1)
    o = jnp.einsum("bhnm,bhmd->bhnd", p, v)
    o = o.transpose(0, 2, 1, 3).reshape(B, N, C)
    o = o @ params["wproj_t"] + params["bproj"][0]
    x1 = x + o

    h2 = ln(x1, params["ln2_g"][0], params["ln2_b"][0])
    m = jax.nn.gelu(h2 @ params["w1_t"] + params["b1"][0], approximate=False)
    m = m @ params["w2_t"] + params["b2"][0]
    return x1 + m


# --------------------------------------------------------------------------------------
if __name__ == "__main__":
    # Small but lane-dense shapes: C=256, head_dim=128, hidden=1024, N=128 (16x8 frame).
    # batch_tile=2 -> every dense matmul sees M = 2*128 = 256 rows, grid=(2,) parallel.
    B, num_heads, FH, FW = 4, 2, 16, 8
    dim = 256
    N = FH * FW
    head_dim = dim // num_heads
    hidden = int(dim * 4.0)

    key = jax.random.PRNGKey(0)
    keys = jax.random.split(key, 8)
    x = jax.random.normal(keys[0], (B, N, dim), jnp.float32)

    params = {
        "ln1_g": jnp.ones((1, dim), jnp.float32),
        "ln1_b": jnp.zeros((1, dim), jnp.float32),
        "wqkv_t": 0.05 * jax.random.normal(keys[1], (dim, 3 * dim), jnp.float32),
        "wproj_t": 0.05 * jax.random.normal(keys[2], (dim, dim), jnp.float32),
        "bproj": 0.05 * jax.random.normal(keys[3], (1, dim), jnp.float32),
        "ln2_g": jnp.ones((1, dim), jnp.float32),
        "ln2_b": jnp.zeros((1, dim), jnp.float32),
        "w1_t": 0.05 * jax.random.normal(keys[4], (dim, hidden), jnp.float32),
        "b1": 0.05 * jax.random.normal(keys[5], (1, hidden), jnp.float32),
        "w2_t": 0.05 * jax.random.normal(keys[6], (hidden, dim), jnp.float32),
        "b2": 0.05 * jax.random.normal(keys[7], (1, dim), jnp.float32),
    }

    cos_hd, sin_hd = rotary_tables(FH, FW, head_dim)          # (N, head_dim), original layout
    kp = prep_kernel_inputs(params, cos_hd, sin_hd, num_heads)

    out = attention_block(x, kp, num_heads, batch_tile=2)
    out = jax.block_until_ready(out)

    ref = ref_attention_block(x, params, cos_hd, sin_hd, num_heads)
    err = float(jnp.max(jnp.abs(out - ref)))
    # Tolerance accounts for bf16 matmul inputs (f32 accumulation) and the approx
    # EUP reciprocal on the softmax denominator.
    assert jnp.allclose(out, ref, atol=5e-2, rtol=5e-2), f"max abs err {err}"

    print("KERNEL_OK")
</pallas_src>

<mosaic_0001>
module attributes {stable_mosaic.version = 11 : i64} {
  func.func @_attention_block_kernel(%arg0: i32, %arg1: memref<2x128x256xf32, #tpu.memory_space<vmem>>, %arg2: memref<128x128xf32, #tpu.memory_space<vmem>>, %arg3: memref<128x128xf32, #tpu.memory_space<vmem>>, %arg4: memref<1x256xf32, #tpu.memory_space<vmem>>, %arg5: memref<1x256xf32, #tpu.memory_space<vmem>>, %arg6: memref<256x768xbf16, #tpu.memory_space<vmem>>, %arg7: memref<256x256xbf16, #tpu.memory_space<vmem>>, %arg8: memref<1x256xf32, #tpu.memory_space<vmem>>, %arg9: memref<1x256xf32, #tpu.memory_space<vmem>>, %arg10: memref<1x256xf32, #tpu.memory_space<vmem>>, %arg11: memref<256x1024xbf16, #tpu.memory_space<vmem>>, %arg12: memref<1x1024xf32, #tpu.memory_space<vmem>>, %arg13: memref<1024x256xbf16, #tpu.memory_space<vmem>>, %arg14: memref<1x256xf32, #tpu.memory_space<vmem>>, %arg15: memref<2x128x256xf32, #tpu.memory_space<vmem>>, %arg16: memref<256x256xf32, #tpu.memory_space<vmem>>) attributes {dimension_semantics = [#tpu.dimension_semantics<parallel>], iteration_bounds = array<i64: 2>, scalar_prefetch = 0 : i64, scratch_operands = 1 : i64, tpu.core_type = #tpu.core_type<tc>, window_params = [{transform_indices = @transform_0, window_bounds = array<i64: 2, 128, 256>}, {pipeline_mode = #tpu.pipeline_mode<synchronous>, transform_indices = @transform_1, window_bounds = array<i64: 128, 128>}, {pipeline_mode = #tpu.pipeline_mode<synchronous>, transform_indices = @transform_2, window_bounds = array<i64: 128, 128>}, {pipeline_mode = #tpu.pipeline_mode<synchronous>, transform_indices = @transform_3, window_bounds = array<i64: 1, 256>}, {pipeline_mode = #tpu.pipeline_mode<synchronous>, transform_indices = @transform_4, window_bounds = array<i64: 1, 256>}, {pipeline_mode = #tpu.pipeline_mode<synchronous>, transform_indices = @transform_5, window_bounds = array<i64: 256, 768>}, {pipeline_mode = #tpu.pipeline_mode<synchronous>, transform_indices = @transform_6, window_bounds = array<i64: 256, 256>}, {pipeline_mode = #tpu.pipeline_mode<synchronous>, transform_indices = @transform_7, window_bounds = array<i64: 1, 256>}, {pipeline_mode = #tpu.pipeline_mode<synchronous>, transform_indices = @transform_8, window_bounds = array<i64: 1, 256>}, {pipeline_mode = #tpu.pipeline_mode<synchronous>, transform_indices = @transform_9, window_bounds = array<i64: 1, 256>}, {pipeline_mode = #tpu.pipeline_mode<synchronous>, transform_indices = @transform_10, window_bounds = array<i64: 256, 1024>}, {pipeline_mode = #tpu.pipeline_mode<synchronous>, transform_indices = @transform_11, window_bounds = array<i64: 1, 1024>}, {pipeline_mode = #tpu.pipeline_mode<synchronous>, transform_indices = @transform_12, window_bounds = array<i64: 1024, 256>}, {pipeline_mode = #tpu.pipeline_mode<synchronous>, transform_indices = @transform_13, window_bounds = array<i64: 1, 256>}, {transform_indices = @transform_14, window_bounds = array<i64: 2, 128, 256>}]} {
    %c0 = arith.constant 0 : index
    %c0_0 = arith.constant 0 : index
    %c0_1 = arith.constant 0 : index
    %0 = vector.load %arg1[%c0, %c0_0, %c0_1] : memref<2x128x256xf32, #tpu.memory_space<vmem>>, vector<2x128x256xf32>
    %1 = vector.shape_cast %0 : vector<2x128x256xf32> to vector<256x256xf32>
    %c0_2 = arith.constant 0 : index
    %c0_3 = arith.constant 0 : index
    %2 = vector.load %arg4[%c0_2, %c0_3] : memref<1x256xf32, #tpu.memory_space<vmem>>, vector<1x256xf32>
    %c0_4 = arith.constant 0 : index
    %c0_5 = arith.constant 0 : index
    %3 = vector.load %arg5[%c0_4, %c0_5] : memref<1x256xf32, #tpu.memory_space<vmem>>, vector<1x256xf32>
    %cst = arith.constant dense<0.000000e+00> : vector<256xf32>
    %4 = vector.multi_reduction <add>, %1, %cst [1] : vector<256x256xf32> to vector<256xf32>
    %5 = vector.shape_cast %4 : vector<256xf32> to vector<256x1xf32>
    %cst_6 = arith.constant 2.560000e+02 : f32
    %6 = vector.broadcast %cst_6 : f32 to vector<256x1xf32>
    %7 = arith.divf %5, %6 : vector<256x1xf32>
    %8 = vector.broadcast %7 : vector<256x1xf32> to vector<256x256xf32>
    %9 = arith.subf %1, %8 : vector<256x256xf32>
    %10 = vector.broadcast %7 : vector<256x1xf32> to vector<256x256xf32>
    %11 = arith.subf %1, %10 : vector<256x256xf32>
    %12 = arith.mulf %9, %11 : vector<256x256xf32>
    %cst_7 = arith.constant dense<0.000000e+00> : vector<256xf32>
    %13 = vector.multi_reduction <add>, %12, %cst_7 [1] : vector<256x256xf32> to vector<256xf32>
    %14 = vector.shape_cast %13 : vector<256xf32> to vector<256x1xf32>
    %cst_8 = arith.constant 2.560000e+02 : f32
    %15 = vector.broadcast %cst_8 : f32 to vector<256x1xf32>
    %16 = arith.divf %14, %15 : vector<256x1xf32>
    %17 = vector.broadcast %7 : vector<256x1xf32> to vector<256x256xf32>
    %18 = arith.subf %1, %17 : vector<256x256xf32>
    %cst_9 = arith.constant 9.99999974E-6 : f32
    %19 = vector.broadcast %cst_9 : f32 to vector<256x1xf32>
    %20 = arith.addf %16, %19 : vector<256x1xf32>
    %21 = math.rsqrt %20 : vector<256x1xf32>
    %22 = vector.broadcast %21 : vector<256x1xf32> to vector<256x256xf32>
    %23 = arith.mulf %18, %22 : vector<256x256xf32>
    %24 = vector.broadcast %2 : vector<1x256xf32> to vector<256x256xf32>
    %25 = arith.mulf %23, %24 : vector<256x256xf32>
    %26 = vector.broadcast %3 : vector<1x256xf32> to vector<256x256xf32>
    %27 = arith.addf %25, %26 : vector<256x256xf32>
    %28 = arith.truncf %27 : vector<256x256xf32> to vector<256x256xbf16>
    %c0_10 = arith.constant 0 : index
    %c0_11 = arith.constant 0 : index
    %29 = vector.load %arg6[%c0_10, %c0_11] : memref<256x768xbf16, #tpu.memory_space<vmem>>, vector<256x768xbf16>
    %cst_12 = arith.constant dense<0.000000e+00> : vector<256x768xf32>
    %30 = tpu.matmul %28, %29, %cst_12 {dimension_numbers = #tpu.dot_dimension_numbers<[1], [0], [0], [1], [0, 0, 1, 1], [], []>} : vector<256x256xbf16>, vector<256x768xbf16>, vector<256x768xf32> -> vector<256x768xf32>
    %c0_13 = arith.constant 0 : index
    %c0_14 = arith.constant 0 : index
    %31 = vector.load %arg2[%c0_13, %c0_14] : memref<128x128xf32, #tpu.memory_space<vmem>>, vector<128x128xf32>
    %32 = vector.shape_cast %31 : vector<128x128xf32> to vector<1x128x128xf32>
    %c0_15 = arith.constant 0 : index
    %c0_16 = arith.constant 0 : index
    %33 = vector.load %arg3[%c0_15, %c0_16] : memref<128x128xf32, #tpu.memory_space<vmem>>, vector<128x128xf32>
    %34 = vector.shape_cast %33 : vector<128x128xf32> to vector<1x128x128xf32>
    %35 = vector.extract_strided_slice %30 {offsets = [0, 0], sizes = [256, 128], strides = [1, 1]} : vector<256x768xf32> to vector<256x128xf32>
    %36 = vector.shape_cast %35 : vector<256x128xf32> to vector<2x128x128xf32>
    %37 = vector.extract_strided_slice %30 {offsets = [0, 256], sizes = [256, 128], strides = [1, 1]} : vector<256x768xf32> to vector<256x128xf32>
    %38 = vector.shape_cast %37 : vector<256x128xf32> to vector<2x128x128xf32>
    %39 = vector.extract_strided_slice %30 {offsets = [0, 512], sizes = [256, 128], strides = [1, 1]} : vector<256x768xf32> to vector<256x128xf32>
    %40 = vector.shape_cast %39 : vector<256x128xf32> to vector<2x128x128xf32>
    %41 = vector.broadcast %32 : vector<1x128x128xf32> to vector<2x128x128xf32>
    %42 = arith.mulf %36, %41 : vector<2x128x128xf32>
    %c64_i32 = arith.constant 64 : i32
    %43 = tpu.dynamic_rotate %36 by %c64_i32 dim 2 : vector<2x128x128xf32>, i32 -> vector<2x128x128xf32>
    %44 = vector.broadcast %34 : vector<1x128x128xf32> to vector<2x128x128xf32>
    %45 = arith.mulf %43, %44 : vector<2x128x128xf32>
    %46 = arith.addf %42, %45 : vector<2x128x128xf32>
    %47 = vector.broadcast %32 : vector<1x128x128xf32> to vector<2x128x128xf32>
    %48 = arith.mulf %38, %47 : vector<2x128x128xf32>
    %c64_i32_17 = arith.constant 64 : i32
    %49 = tpu.dynamic_rotate %38 by %c64_i32_17 dim 2 : vector<2x128x128xf32>, i32 -> vector<2x128x128xf32>
    %50 = vector.broadcast %34 : vector<1x128x128xf32> to vector<2x128x128xf32>
    %51 = arith.mulf %49, %50 : vector<2x128x128xf32>
    %52 = arith.addf %48, %51 : vector<2x128x128xf32>
    %53 = arith.truncf %46 : vector<2x128x128xf32> to vector<2x128x128xbf16>
    %cst_18 = arith.constant 0xFF800000 : f32
    %54 = vector.broadcast %cst_18 : f32 to vector<2x128x1xf32>
    %cst_19 = arith.constant 0.000000e+00 : f32
    %55 = vector.broadcast %cst_19 : f32 to vector<2x128x1xf32>
    %cst_20 = arith.constant 0.000000e+00 : f32
    %56 = vector.broadcast %cst_20 : f32 to vector<2x128x128xf32>
    %57 = arith.truncf %52 : vector<2x128x128xf32> to vector<2x128x128xbf16>
    %58 = arith.truncf %40 : vector<2x128x128xf32> to vector<2x128x128xbf16>
    "tpu.trace_start"() <{level = 10 : i32, message = "bnd,bmd->bnm"}> : () -> ()
    %cst_21 = arith.constant dense<0.000000e+00> : vector<2x128x128xf32>
    %59 = tpu.matmul %53, %57, %cst_21 {dimension_numbers = #tpu.dot_dimension_numbers<[2], [2], [1], [1], [0, 0, 0, 1, 1, 1], [0], [0]>} : vector<2x128x128xbf16>, vector<2x128x128xbf16>, vector<2x128x128xf32> -> vector<2x128x128xf32>
    "tpu.trace_stop"() : () -> ()
    %cst_22 = arith.constant dense<0xFF800000> : vector<2x128xf32>
    %60 = vector.multi_reduction <maximumf>, %59, %cst_22 [2] : vector<2x128x128xf32> to vector<2x128xf32>
    %61 = vector.shape_cast %60 : vector<2x128xf32> to vector<2x128x1xf32>
    %62 = arith.maximumf %54, %61 : vector<2x128x1xf32>
    %63 = arith.subf %54, %62 : vector<2x128x1xf32>
    %64 = math.exp %63 : vector<2x128x1xf32>
    %65 = vector.broadcast %62 : vector<2x128x1xf32> to vector<2x128x128xf32>
    %66 = arith.subf %59, %65 : vector<2x128x128xf32>
    %67 = math.exp %66 : vector<2x128x128xf32>
    %68 = arith.truncf %67 : vector<2x128x128xf32> to vector<2x128x128xbf16>
    %69 = arith.mulf %64, %55 : vector<2x128x1xf32>
    %70 = arith.extf %68 : vector<2x128x128xbf16> to vector<2x128x128xf32>
    %cst_23 = arith.constant dense<0.000000e+00> : vector<2x128xf32>
    %71 = vector.multi_reduction <add>, %70, %cst_23 [2] : vector<2x128x128xf32> to vector<2x128xf32>
    %72 = vector.shape_cast %71 : vector<2x128xf32> to vector<2x128x1xf32>
    %73 = arith.addf %69, %72 : vector<2x128x1xf32>
    %74 = vector.broadcast %64 : vector<2x128x1xf32> to vector<2x128x128xf32>
    %75 = arith.mulf %74, %56 : vector<2x128x128xf32>
    "tpu.trace_start"() <{level = 10 : i32, message = "bnm,bmd->bnd"}> : () -> ()
    %cst_24 = arith.constant dense<0.000000e+00> : vector<2x128x128xf32>
    %76 = tpu.matmul %68, %58, %cst_24 {dimension_numbers = #tpu.dot_dimension_numbers<[2], [1], [1], [2], [0, 0, 0, 1, 1, 2], [0], [0]>} : vector<2x128x128xbf16>, vector<2x128x128xbf16>, vector<2x128x128xf32> -> vector<2x128x128xf32>
    "tpu.trace_stop"() : () -> ()
    %77 = arith.addf %75, %76 : vector<2x128x128xf32>
    %78 = tpu.reciprocal %73 {approx = true} : vector<2x128x1xf32> -> vector<2x128x1xf32>
    %79 = vector.broadcast %78 : vector<2x128x1xf32> to vector<2x128x128xf32>
    %80 = arith.mulf %77, %79 : vector<2x128x128xf32>
    %81 = vector.shape_cast %80 : vector<2x128x128xf32> to vector<256x128xf32>
    %c0_25 = arith.constant 0 : index
    %c0_26 = arith.constant 0 : index
    %82 = vector.load %arg16[%c0_25, %c0_26] : memref<256x256xf32, #tpu.memory_space<vmem>>, vector<256x128xf32>
    tpu.vector_store %arg16[%c0_25, %c0_26], %81 {strides = array<i32>} : memref<256x256xf32, #tpu.memory_space<vmem>>, vector<256x128xf32>,
    %83 = vector.extract_strided_slice %30 {offsets = [0, 128], sizes = [256, 128], strides = [1, 1]} : vector<256x768xf32> to vector<256x128xf32>
    %84 = vector.shape_cast %83 : vector<256x128xf32> to vector<2x128x128xf32>
    %85 = vector.extract_strided_slice %30 {offsets = [0, 384], sizes = [256, 128], strides = [1, 1]} : vector<256x768xf32> to vector<256x128xf32>
    %86 = vector.shape_cast %85 : vector<256x128xf32> to vector<2x128x128xf32>
    %87 = vector.extract_strided_slice %30 {offsets = [0, 640], sizes = [256, 128], strides = [1, 1]} : vector<256x768xf32> to vector<256x128xf32>
    %88 = vector.shape_cast %87 : vector<256x128xf32> to vector<2x128x128xf32>
    %89 = vector.broadcast %32 : vector<1x128x128xf32> to vector<2x128x128xf32>
    %90 = arith.mulf %84, %89 : vector<2x128x128xf32>
    %c64_i32_27 = arith.constant 64 : i32
    %91 = tpu.dynamic_rotate %84 by %c64_i32_27 dim 2 : vector<2x128x128xf32>, i32 -> vector<2x128x128xf32>
    %92 = vector.broadcast %34 : vector<1x128x128xf32> to vector<2x128x128xf32>
    %93 = arith.mulf %91, %92 : vector<2x128x128xf32>
    %94 = arith.addf %90, %93 : vector<2x128x128xf32>
    %95 = vector.broadcast %32 : vector<1x128x128xf32> to vector<2x128x128xf32>
    %96 = arith.mulf %86, %95 : vector<2x128x128xf32>
    %c64_i32_28 = arith.constant 64 : i32
    %97 = tpu.dynamic_rotate %86 by %c64_i32_28 dim 2 : vector<2x128x128xf32>, i32 -> vector<2x128x128xf32>
    %98 = vector.broadcast %34 : vector<1x128x128xf32> to vector<2x128x128xf32>
    %99 = arith.mulf %97, %98 : vector<2x128x128xf32>
    %100 = arith.addf %96, %99 : vector<2x128x128xf32>
    %101 = arith.truncf %94 : vector<2x128x128xf32> to vector<2x128x128xbf16>
    %cst_29 = arith.constant 0xFF800000 : f32
    %102 = vector.broadcast %cst_29 : f32 to vector<2x128x1xf32>
    %cst_30 = arith.constant 0.000000e+00 : f32
    %103 = vector.broadcast %cst_30 : f32 to vector<2x128x1xf32>
    %cst_31 = arith.constant 0.000000e+00 : f32
    %104 = vector.broadcast %cst_31 : f32 to vector<2x128x128xf32>
    %105 = arith.truncf %100 : vector<2x128x128xf32> to vector<2x128x128xbf16>
    %106 = arith.truncf %88 : vector<2x128x128xf32> to vector<2x128x128xbf16>
    "tpu.trace_start"() <{level = 10 : i32, message = "bnd,bmd->bnm"}> : () -> ()
    %cst_32 = arith.constant dense<0.000000e+00> : vector<2x128x128xf32>
    %107 = tpu.matmul %101, %105, %cst_32 {dimension_numbers = #tpu.dot_dimension_numbers<[2], [2], [1], [1], [0, 0, 0, 1, 1, 1], [0], [0]>} : vector<2x128x128xbf16>, vector<2x128x128xbf16>, vector<2x128x128xf32> -> vector<2x128x128xf32>
    "tpu.trace_stop"() : () -> ()
    %cst_33 = arith.constant dense<0xFF800000> : vector<2x128xf32>
    %108 = vector.multi_reduction <maximumf>, %107, %cst_33 [2] : vector<2x128x128xf32> to vector<2x128xf32>
    %109 = vector.shape_cast %108 : vector<2x128xf32> to vector<2x128x1xf32>
    %110 = arith.maximumf %102, %109 : vector<2x128x1xf32>
    %111 = arith.subf %102, %110 : vector<2x128x1xf32>
    %112 = math.exp %111 : vector<2x128x1xf32>
    %113 = vector.broadcast %110 : vector<2x128x1xf32> to vector<2x128x128xf32>
    %114 = arith.subf %107, %113 : vector<2x128x128xf32>
    %115 = math.exp %114 : vector<2x128x128xf32>
    %116 = arith.truncf %115 : vector<2x128x128xf32> to vector<2x128x128xbf16>
    %117 = arith.mulf %112, %103 : vector<2x128x1xf32>
    %118 = arith.extf %116 : vector<2x128x128xbf16> to vector<2x128x128xf32>
    %cst_34 = arith.constant dense<0.000000e+00> : vector<2x128xf32>
    %119 = vector.multi_reduction <add>, %118, %cst_34 [2] : vector<2x128x128xf32> to vector<2x128xf32>
    %120 = vector.shape_cast %119 : vector<2x128xf32> to vector<2x128x1xf32>
    %121 = arith.addf %117, %120 : vector<2x128x1xf32>
    %122 = vector.broadcast %112 : vector<2x128x1xf32> to vector<2x128x128xf32>
    %123 = arith.mulf %122, %104 : vector<2x128x128xf32>
    "tpu.trace_start"() <{level = 10 : i32, message = "bnm,bmd->bnd"}> : () -> ()
    %cst_35 = arith.constant dense<0.000000e+00> : vector<2x128x128xf32>
    %124 = tpu.matmul %116, %106, %cst_35 {dimension_numbers = #tpu.dot_dimension_numbers<[2], [1], [1], [2], [0, 0, 0, 1, 1, 2], [0], [0]>} : vector<2x128x128xbf16>, vector<2x128x128xbf16>, vector<2x128x128xf32> -> vector<2x128x128xf32>
    "tpu.trace_stop"() : () -> ()
    %125 = arith.addf %123, %124 : vector<2x128x128xf32>
    %126 = tpu.reciprocal %121 {approx = true} : vector<2x128x1xf32> -> vector<2x128x1xf32>
    %127 = vector.broadcast %126 : vector<2x128x1xf32> to vector<2x128x128xf32>
    %128 = arith.mulf %125, %127 : vector<2x128x128xf32>
    %129 = vector.shape_cast %128 : vector<2x128x128xf32> to vector<256x128xf32>
    %c0_36 = arith.constant 0 : index
    %c128 = arith.constant 128 : index
    %130 = vector.load %arg16[%c0_36, %c128] : memref<256x256xf32, #tpu.memory_space<vmem>>, vector<256x128xf32>
    tpu.vector_store %arg16[%c0_36, %c128], %129 {strides = array<i32>} : memref<256x256xf32, #tpu.memory_space<vmem>>, vector<256x128xf32>,
    %c0_37 = arith.constant 0 : index
    %c0_38 = arith.constant 0 : index
    %131 = vector.load %arg16[%c0_37, %c0_38] : memref<256x256xf32, #tpu.memory_space<vmem>>, vector<256x256xf32>
    %132 = arith.truncf %131 : vector<256x256xf32> to vector<256x256xbf16>
    %c0_39 = arith.constant 0 : index
    %c0_40 = arith.constant 0 : index
    %133 = vector.load %arg7[%c0_39, %c0_40] : memref<256x256xbf16, #tpu.memory_space<vmem>>, vector<256x256xbf16>
    %cst_41 = arith.constant dense<0.000000e+00> : vector<256x256xf32>
    %134 = tpu.matmul %132, %133, %cst_41 {dimension_numbers = #tpu.dot_dimension_numbers<[1], [0], [0], [1], [0, 0, 1, 1], [], []>} : vector<256x256xbf16>, vector<256x256xbf16>, vector<256x256xf32> -> vector<256x256xf32>
    %c0_42 = arith.constant 0 : index
    %c0_43 = arith.constant 0 : index
    %135 = vector.load %arg8[%c0_42, %c0_43] : memref<1x256xf32, #tpu.memory_space<vmem>>, vector<1x256xf32>
    %136 = vector.broadcast %135 : vector<1x256xf32> to vector<256x256xf32>
    %137 = arith.addf %134, %136 : vector<256x256xf32>
    %138 = arith.addf %1, %137 : vector<256x256xf32>
    %c0_44 = arith.constant 0 : index
    %c0_45 = arith.constant 0 : index
    %139 = vector.load %arg9[%c0_44, %c0_45] : memref<1x256xf32, #tpu.memory_space<vmem>>, vector<1x256xf32>
    %c0_46 = arith.constant 0 : index
    %c0_47 = arith.constant 0 : index
    %140 = vector.load %arg10[%c0_46, %c0_47] : memref<1x256xf32, #tpu.memory_space<vmem>>, vector<1x256xf32>
    %cst_48 = arith.constant dense<0.000000e+00> : vector<256xf32>
    %141 = vector.multi_reduction <add>, %138, %cst_48 [1] : vector<256x256xf32> to vector<256xf32>
    %142 = vector.shape_cast %141 : vector<256xf32> to vector<256x1xf32>
    %cst_49 = arith.constant 2.560000e+02 : f32
    %143 = vector.broadcast %cst_49 : f32 to vector<256x1xf32>
    %144 = arith.divf %142, %143 : vector<256x1xf32>
    %145 = vector.broadcast %144 : vector<256x1xf32> to vector<256x256xf32>
    %146 = arith.subf %138, %145 : vector<256x256xf32>
    %147 = vector.broadcast %144 : vector<256x1xf32> to vector<256x256xf32>
    %148 = arith.subf %138, %147 : vector<256x256xf32>
    %149 = arith.mulf %146, %148 : vector<256x256xf32>
    %cst_50 = arith.constant dense<0.000000e+00> : vector<256xf32>
    %150 = vector.multi_reduction <add>, %149, %cst_50 [1] : vector<256x256xf32> to vector<256xf32>
    %151 = vector.shape_cast %150 : vector<256xf32> to vector<256x1xf32>
    %cst_51 = arith.constant 2.560000e+02 : f32
    %152 = vector.broadcast %cst_51 : f32 to vector<256x1xf32>
    %153 = arith.divf %151, %152 : vector<256x1xf32>
    %154 = vector.broadcast %144 : vector<256x1xf32> to vector<256x256xf32>
    %155 = arith.subf %138, %154 : vector<256x256xf32>
    %cst_52 = arith.constant 9.99999974E-6 : f32
    %156 = vector.broadcast %cst_52 : f32 to vector<256x1xf32>
    %157 = arith.addf %153, %156 : vector<256x1xf32>
    %158 = math.rsqrt %157 : vector<256x1xf32>
    %159 = vector.broadcast %158 : vector<256x1xf32> to vector<256x256xf32>
    %160 = arith.mulf %155, %159 : vector<256x256xf32>
    %161 = vector.broadcast %139 : vector<1x256xf32> to vector<256x256xf32>
    %162 = arith.mulf %160, %161 : vector<256x256xf32>
    %163 = vector.broadcast %140 : vector<1x256xf32> to vector<256x256xf32>
    %164 = arith.addf %162, %163 : vector<256x256xf32>
    %165 = arith.truncf %164 : vector<256x256xf32> to vector<256x256xbf16>
    %c0_53 = arith.constant 0 : index
    %c0_54 = arith.constant 0 : index
    %166 = vector.load %arg11[%c0_53, %c0_54] : memref<256x1024xbf16, #tpu.memory_space<vmem>>, vector<256x1024xbf16>
    %cst_55 = arith.constant dense<0.000000e+00> : vector<256x1024xf32>
    %167 = tpu.matmul %165, %166, %cst_55 {dimension_numbers = #tpu.dot_dimension_numbers<[1], [0], [0], [1], [0, 0, 1, 1], [], []>} : vector<256x256xbf16>, vector<256x1024xbf16>, vector<256x1024xf32> -> vector<256x1024xf32>
    %c0_56 = arith.constant 0 : index
    %c0_57 = arith.constant 0 : index
    %168 = vector.load %arg12[%c0_56, %c0_57] : memref<1x1024xf32, #tpu.memory_space<vmem>>, vector<1x1024xf32>
    %169 = vector.broadcast %168 : vector<1x1024xf32> to vector<256x1024xf32>
    %170 = arith.addf %167, %169 : vector<256x1024xf32>
    %cst_58 = arith.constant 5.000000e-01 : f32
    %171 = vector.broadcast %cst_58 : f32 to vector<256x1024xf32>
    %172 = arith.mulf %171, %170 : vector<256x1024xf32>
    %cst_59 = arith.constant 0.707106769 : f32
    %173 = vector.broadcast %cst_59 : f32 to vector<256x1024xf32>
    %174 = arith.mulf %170, %173 : vector<256x1024xf32>
    %175 = math.erf %174 : vector<256x1024xf32>
    %cst_60 = arith.constant 1.000000e+00 : f32
    %176 = vector.broadcast %cst_60 : f32 to vector<256x1024xf32>
    %177 = arith.addf %176, %175 : vector<256x1024xf32>
    %178 = arith.mulf %172, %177 : vector<256x1024xf32>
    %179 = arith.truncf %178 : vector<256x1024xf32> to vector<256x1024xbf16>
    %c0_61 = arith.constant 0 : index
    %c0_62 = arith.constant 0 : index
    %180 = vector.load %arg13[%c0_61, %c0_62] : memref<1024x256xbf16, #tpu.memory_space<vmem>>, vector<1024x256xbf16>
    %cst_63 = arith.constant dense<0.000000e+00> : vector<256x256xf32>
    %181 = tpu.matmul %179, %180, %cst_63 {dimension_numbers = #tpu.dot_dimension_numbers<[1], [0], [0], [1], [0, 0, 1, 1], [], []>} : vector<256x1024xbf16>, vector<1024x256xbf16>, vector<256x256xf32> -> vector<256x256xf32>
    %c0_64 = arith.constant 0 : index
    %c0_65 = arith.constant 0 : index
    %182 = vector.load %arg14[%c0_64, %c0_65] : memref<1x256xf32, #tpu.memory_space<vmem>>, vector<1x256xf32>
    %183 = vector.broadcast %182 : vector<1x256xf32> to vector<256x256xf32>
    %184 = arith.addf %181, %183 : vector<256x256xf32>
    %185 = arith.addf %138, %184 : vector<256x256xf32>
    %186 = vector.shape_cast %185 : vector<256x256xf32> to vector<2x128x256xf32>
    %c0_66 = arith.constant 0 : index
    %c0_67 = arith.constant 0 : index
    %c0_68 = arith.constant 0 : index
    %187 = vector.load %arg15[%c0_66, %c0_67, %c0_68] : memref<2x128x256xf32, #tpu.memory_space<vmem>>, vector<2x128x256xf32>
    tpu.vector_store %arg15[%c0_66, %c0_67, %c0_68], %186 {strides = array<i32>} : memref<2x128x256xf32, #tpu.memory_space<vmem>>, vector<2x128x256xf32>,
    return
  }
  func.func @transform_0(%arg0: i32) -> (i32, i32, i32) {
    %c0_i32 = arith.constant 0 : i32
    %c0_i32_0 = arith.constant 0 : i32
    %c0_i32_1 = arith.constant 0 : i32
    return %arg0, %c0_i32, %c0_i32_0 : i32, i32, i32
  }
  func.func @transform_1(%arg0: i32) -> (i32, i32) {
    %c0_i32 = arith.constant 0 : i32
    %c0_i32_0 = arith.constant 0 : i32
    %c0_i32_1 = arith.constant 0 : i32
    return %c0_i32, %c0_i32_0 : i32, i32
  }
  func.func @transform_2(%arg0: i32) -> (i32, i32) {
    %c0_i32 = arith.constant 0 : i32
    %c0_i32_0 = arith.constant 0 : i32
    %c0_i32_1 = arith.constant 0 : i32
    return %c0_i32, %c0_i32_0 : i32, i32
  }
  func.func @transform_3(%arg0: i32) -> (i32, i32) {
    %c0_i32 = arith.constant 0 : i32
    %c0_i32_0 = arith.constant 0 : i32
    %c0_i32_1 = arith.constant 0 : i32
    return %c0_i32, %c0_i32_0 : i32, i32
  }
  func.func @transform_4(%arg0: i32) -> (i32, i32) {
    %c0_i32 = arith.constant 0 : i32
    %c0_i32_0 = arith.constant 0 : i32
    %c0_i32_1 = arith.constant 0 : i32
    return %c0_i32, %c0_i32_0 : i32, i32
  }
  func.func @transform_5(%arg0: i32) -> (i32, i32) {
    %c0_i32 = arith.constant 0 : i32
    %c0_i32_0 = arith.constant 0 : i32
    %c0_i32_1 = arith.constant 0 : i32
    return %c0_i32, %c0_i32_0 : i32, i32
  }
  func.func @transform_6(%arg0: i32) -> (i32, i32) {
    %c0_i32 = arith.constant 0 : i32
    %c0_i32_0 = arith.constant 0 : i32
    %c0_i32_1 = arith.constant 0 : i32
    return %c0_i32, %c0_i32_0 : i32, i32
  }
  func.func @transform_7(%arg0: i32) -> (i32, i32) {
    %c0_i32 = arith.constant 0 : i32
    %c0_i32_0 = arith.constant 0 : i32
    %c0_i32_1 = arith.constant 0 : i32
    return %c0_i32, %c0_i32_0 : i32, i32
  }
  func.func @transform_8(%arg0: i32) -> (i32, i32) {
    %c0_i32 = arith.constant 0 : i32
    %c0_i32_0 = arith.constant 0 : i32
    %c0_i32_1 = arith.constant 0 : i32
    return %c0_i32, %c0_i32_0 : i32, i32
  }
  func.func @transform_9(%arg0: i32) -> (i32, i32) {
    %c0_i32 = arith.constant 0 : i32
    %c0_i32_0 = arith.constant 0 : i32
    %c0_i32_1 = arith.constant 0 : i32
    return %c0_i32, %c0_i32_0 : i32, i32
  }
  func.func @transform_10(%arg0: i32) -> (i32, i32) {
    %c0_i32 = arith.constant 0 : i32
    %c0_i32_0 = arith.constant 0 : i32
    %c0_i32_1 = arith.constant 0 : i32
    return %c0_i32, %c0_i32_0 : i32, i32
  }
  func.func @transform_11(%arg0: i32) -> (i32, i32) {
    %c0_i32 = arith.constant 0 : i32
    %c0_i32_0 = arith.constant 0 : i32
    %c0_i32_1 = arith.constant 0 : i32
    return %c0_i32, %c0_i32_0 : i32, i32
  }
  func.func @transform_12(%arg0: i32) -> (i32, i32) {
    %c0_i32 = arith.constant 0 : i32
    %c0_i32_0 = arith.constant 0 : i32
    %c0_i32_1 = arith.constant 0 : i32
    return %c0_i32, %c0_i32_0 : i32, i32
  }
  func.func @transform_13(%arg0: i32) -> (i32, i32) {
    %c0_i32 = arith.constant 0 : i32
    %c0_i32_0 = arith.constant 0 : i32
    %c0_i32_1 = arith.constant 0 : i32
    return %c0_i32, %c0_i32_0 : i32, i32
  }
  func.func @transform_14(%arg0: i32) -> (i32, i32, i32) {
    %c0_i32 = arith.constant 0 : i32
    %c0_i32_0 = arith.constant 0 : i32
    %c0_i32_1 = arith.constant 0 : i32
    return %arg0, %c0_i32, %c0_i32_0 : i32, i32, i32
  }
}

</mosaic_0001>

<llo_original>
// kernel: tpu_custom_call.1
$region0: #{tpu_custom_call.1}
  #allocation0 [shape = 'u32[]', space=smem, size = 0x4, offset = 0x4, fixed_abs, tag = 'smem constant byte address 0x4 - core index']
  #allocation1 [shape = 'u32[144,128]{1,0:T(1,128)}', space=vmem, size = 0x12000, scoped, tag = 'internal scratch']
  #allocation2 [shape = 'f32[256,256]{1,0:T(8,128)}', space=vmem, size = 0x40000, scoped, tag = 'scratch operand']
  %s0 = inlined_call_operand.hbm [shape: f32[4,128,256], index: 0, kind: input, shape index: {}]
  %s1 = inlined_call_operand.hbm [shape: f32[128,128], index: 1, kind: input, shape index: {}]
  %s2 = inlined_call_operand.hbm [shape: f32[128,128], index: 2, kind: input, shape index: {}]
  %s3 = inlined_call_operand.vmem [shape: f32[1,256], index: 3, kind: input, shape index: {}]
  %s4 = inlined_call_operand.vmem [shape: f32[1,256], index: 4, kind: input, shape index: {}]
  %s5 = inlined_call_operand.hbm [shape: bf16[256,768], index: 5, kind: input, shape index: {}]
  %s6 = inlined_call_operand.hbm [shape: bf16[256,256], index: 6, kind: input, shape index: {}]
  %s7 = inlined_call_operand.vmem [shape: f32[1,256], index: 7, kind: input, shape index: {}]
  %s8 = inlined_call_operand.vmem [shape: f32[1,256], index: 8, kind: input, shape index: {}]
  %s9 = inlined_call_operand.vmem [shape: f32[1,256], index: 9, kind: input, shape index: {}]
  %s10 = inlined_call_operand.hbm [shape: bf16[256,1024], index: 10, kind: input, shape index: {}]
  %s11 = inlined_call_operand.vmem [shape: f32[1,1024], index: 11, kind: input, shape index: {}]
  %s12 = inlined_call_operand.hbm [shape: bf16[1024,256], index: 12, kind: input, shape index: {}]
  %s13 = inlined_call_operand.vmem [shape: f32[1,256], index: 13, kind: input, shape index: {}]
  %s14 = inlined_call_operand.hbm [shape: f32[4,128,256], index: 14, kind: output, shape index: {}]
  %s15 = sld [smem:[#allocation0]]
  $region117: #{tpu_custom_call.1} parent=0
    _
  %s17 = ssub.s32 1, %s15
  %s18 = scalar_select 0, %s17, %s15
  $region1: #{tpu_custom_call.1} parent=0
    #allocation3 [shape = 'u8[524288]{0}', space=vmem, size = 0x80000, scoped, tag = 'input window, operand 0']
    #allocation4 [shape = 's32[2]{0}', space=sflag, size = 0x8, scoped, tag = 'scoped memory for tpu_custom_call.1']
    #allocation5 [shape = 's32[2]{0}', space=sflag, size = 0x8, scoped, tag = 'scoped memory for tpu_custom_call.1']
    #allocation6 [shape = 'u8[65536]{0}', space=vmem, size = 0x10000, scoped, tag = 'input window, operand 1, single buffered']
    #allocation7 [shape = 's32[1]{0}', space=sflag, size = 0x4, scoped, tag = 'scoped memory for tpu_custom_call.1']
    #allocation8 [shape = 'u8[65536]{0}', space=vmem, size = 0x10000, scoped, tag = 'input window, operand 2, single buffered']
    #allocation9 [shape = 'u8[393216]{0}', space=vmem, size = 0x60000, scoped, tag = 'input window, operand 5, single buffered']
    #allocation10 [shape = 's32[1]{0}', space=sflag, size = 0x4, scoped, tag = 'scoped memory for tpu_custom_call.1']
    #allocation11 [shape = 'u8[131072]{0}', space=vmem, size = 0x20000, scoped, tag = 'input window, operand 6, single buffered']
    #allocation12 [shape = 'u8[524288]{0}', space=vmem, size = 0x80000, scoped, tag = 'input window, operand 10, single buffered']
    #allocation13 [shape = 's32[1]{0}', space=sflag, size = 0x4, scoped, tag = 'scoped memory for tpu_custom_call.1']
    #allocation14 [shape = 'u8[524288]{0}', space=vmem, size = 0x80000, scoped, tag = 'input window, operand 12, single buffered']
    #allocation15 [shape = 'u8[524288]{0}', space=vmem, size = 0x80000, scoped, tag = 'output window, operand 0']
    %19 = vsyncpa [#allocation4], 0
    %s20 = scalar_lea.sflag [#allocation4], 1
    %21 = vsyncpa %s20, 0
    %22 = vsyncpa [#allocation7], 0
    %23 = vsyncpa [#allocation10], 0
    %24 = vsyncpa [#allocation13], 0
    %25 = vsyncpa [#allocation5], 0
    %s26 = scalar_lea.sflag [#allocation5], 1
    %27 = vsyncpa %s26, 0
    loop: start=0, step=1, limit=4
    $region2: #{tpu_custom_call.1} parent=1 // loop_pre_header
      _
    $region3: #{tpu_custom_call.1} parent=1 // loop_header
      %s29 = sphi 0, %s33
      %p30 = scmp.ge.s32.totalorder %s29, 4
      %s39 = sphi 0, %s41
      %s42 = sphi 0, %s39
      %s43 = sphi 0, %s42
      %s59 = sphi 0, %s43
      %s63 = sphi 0, %s63
      %s65 = sphi 0, %s63
      %s66 = sphi 0, %s65
      %s80 = sphi 0, %s66
      %s84 = sphi 0, %s84
      %s86 = sphi 0, %s84
      %s87 = sphi 0, %s86
      %s101 = sphi 0, %s87
      %s105 = sphi 0, %s105
      %s107 = sphi 0, %s105
      %s108 = sphi 0, %s107
      %s122 = sphi 0, %s108
      %s126 = sphi 0, %s126
      %s128 = sphi 0, %s126
      %s129 = sphi 0, %s128
      %s143 = sphi 0, %s129
      %s147 = sphi 0, %s147
      %s149 = sphi 0, %s147
      %s150 = sphi 0, %s149
      %s164 = sphi 0, %s150
      %s168 = sphi 0, %s168
      %s170 = sphi 0, %s168
      %s171 = sphi 0, %s170
      %s185 = sphi 0, %s171
      %s189 = sphi 0, %s189
      %s191 = sphi 0, %s189
      %s192 = sphi 0, %s191
      %s206 = sphi 0, %s192
      %s210 = sphi 0, %s210
      %s212 = sphi 0, %s210
      %s213 = sphi 0, %s212
      %s227 = sphi 0, %s213
      %s231 = sphi 0, %s231
      %s233 = sphi 0, %s231
      %s234 = sphi 0, %s233
      %s248 = sphi 0, %s234
      %s252 = sphi 0, %s252
      %s254 = sphi 0, %s252
      %s255 = sphi 0, %s254
      %s269 = sphi 0, %s255
      %s273 = sphi 0, %s273
      %s275 = sphi 0, %s273
      %s276 = sphi 0, %s275
      %s290 = sphi 0, %s276
      %s294 = sphi 0, %s294
      %s296 = sphi 0, %s294
      %s297 = sphi 0, %s296
      %s311 = sphi 0, %s297
      %s315 = sphi 0, %s315
      %s317 = sphi 0, %s315
      %s318 = sphi 0, %s317
      %s332 = sphi 0, %s318
      %s338 = sphi 0, %s340
      %s341 = sphi 0, %s338
      %s342 = sphi 0, %s341
      %s358 = sphi 0, %s342
    $region4: #{tpu_custom_call.1} parent=1 // loop_header_branch
      %32 = sbr.rel (%p30) target = $region8
    $region5: #{tpu_custom_call.1} parent=1 // loop_body
      %s34 = ssub.s32 %s29, 1
      %s35 = ssub.s32 %s29, 2
      %s36 = sadd.s32 %s29, 1
      %s37 = ssub.s32 %s29, %s36
      %p38 = scmp.eq.s32.totalorder %s37, 0
      %s40 = sadd.s32 %s39, 1
      %s41 = scalar_select %p38, %s39, %s40
      %p44 = pneg %p38
      %p45 = scmp.eq.s32.totalorder %s29, 1
      %p46 = por %p44, %p45
      %p47 = scmp.ne.s32.totalorder %s39, %s42
      %p48 = scmp.eq.s32.totalorder %s29, 0
      %p49 = por %p47, %p48
      %p50 = scmp.ne.s32.totalorder %s39, %s42
      %p51 = scmp.eq.s32.totalorder %s34, 1
      %p52 = por %p50, %p51
      %p53 = scmp.ne.s32.totalorder %s42, %s43
      %p54 = scmp.eq.s32.totalorder %s34, 0
      %p55 = por %p53, %p54
      %p56 = scmp.ne.s32.totalorder %s42, %s43
      %p57 = scmp.eq.s32.totalorder %s35, 1
      %p58 = por %p56, %p57
      %p60 = scmp.ne.s32.totalorder %s43, %s59
      %p61 = scmp.eq.s32.totalorder %s35, 0
      %p62 = por %p60, %p61
      %s64 = sadd.s32 %s63, 1
      %p67 = scmp.eq.s32.totalorder %s29, 1
      %p68 = scmp.ne.s32.totalorder %s63, %s65
      %p69 = scmp.eq.s32.totalorder %s29, 0
      %p70 = por %p68, %p69
      %p71 = scmp.ne.s32.totalorder %s63, %s65
      %p72 = scmp.eq.s32.totalorder %s34, 1
      %p73 = por %p71, %p72
      %p74 = scmp.ne.s32.totalorder %s65, %s66
      %p75 = scmp.eq.s32.totalorder %s34, 0
      %p76 = por %p74, %p75
      %p77 = scmp.ne.s32.totalorder %s65, %s66
      %p78 = scmp.eq.s32.totalorder %s35, 1
      %p79 = por %p77, %p78
      %p81 = scmp.ne.s32.totalorder %s66, %s80
      %p82 = scmp.eq.s32.totalorder %s35, 0
      %p83 = por %p81, %p82
      %s85 = sadd.s32 %s84, 1
      %p88 = scmp.eq.s32.totalorder %s29, 1
      %p89 = scmp.ne.s32.totalorder %s84, %s86
      %p90 = scmp.eq.s32.totalorder %s29, 0
      %p91 = por %p89, %p90
      %p92 = scmp.ne.s32.totalorder %s84, %s86
      %p93 = scmp.eq.s32.totalorder %s34, 1
      %p94 = por %p92, %p93
      %p95 = scmp.ne.s32.totalorder %s86, %s87
      %p96 = scmp.eq.s32.totalorder %s34, 0
      %p97 = por %p95, %p96
      %p98 = scmp.ne.s32.totalorder %s86, %s87
      %p99 = scmp.eq.s32.totalorder %s35, 1
      %p100 = por %p98, %p99
      %p102 = scmp.ne.s32.totalorder %s87, %s101
      %p103 = scmp.eq.s32.totalorder %s35, 0
      %p104 = por %p102, %p103
      %s106 = sadd.s32 %s105, 1
      %p109 = scmp.eq.s32.totalorder %s29, 1
      %p110 = scmp.ne.s32.totalorder %s105, %s107
      %p111 = scmp.eq.s32.totalorder %s29, 0
      %p112 = por %p110, %p111
      %p113 = scmp.ne.s32.totalorder %s105, %s107
      %p114 = scmp.eq.s32.totalorder %s34, 1
      %p115 = por %p113, %p114
      %p116 = scmp.ne.s32.totalorder %s107, %s108
      %p117 = scmp.eq.s32.totalorder %s34, 0
      %p118 = por %p116, %p117
      %p119 = scmp.ne.s32.totalorder %s107, %s108
      %p120 = scmp.eq.s32.totalorder %s35, 1
      %p121 = por %p119, %p120
      %p123 = scmp.ne.s32.totalorder %s108, %s122
      %p124 = scmp.eq.s32.totalorder %s35, 0
      %p125 = por %p123, %p124
      %s127 = sadd.s32 %s126, 1
      %p130 = scmp.eq.s32.totalorder %s29, 1
      %p131 = scmp.ne.s32.totalorder %s126, %s128
      %p132 = scmp.eq.s32.totalorder %s29, 0
      %p133 = por %p131, %p132
      %p134 = scmp.ne.s32.totalorder %s126, %s128
      %p135 = scmp.eq.s32.totalorder %s34, 1
      %p136 = por %p134, %p135
      %p137 = scmp.ne.s32.totalorder %s128, %s129
      %p138 = scmp.eq.s32.totalorder %s34, 0
      %p139 = por %p137, %p138
      %p140 = scmp.ne.s32.totalorder %s128, %s129
      %p141 = scmp.eq.s32.totalorder %s35, 1
      %p142 = por %p140, %p141
      %p144 = scmp.ne.s32.totalorder %s129, %s143
      %p145 = scmp.eq.s32.totalorder %s35, 0
      %p146 = por %p144, %p145
      %s148 = sadd.s32 %s147, 1
      %p151 = scmp.eq.s32.totalorder %s29, 1
      %p152 = scmp.ne.s32.totalorder %s147, %s149
      %p153 = scmp.eq.s32.totalorder %s29, 0
      %p154 = por %p152, %p153
      %p155 = scmp.ne.s32.totalorder %s147, %s149
      %p156 = scmp.eq.s32.totalorder %s34, 1
      %p157 = por %p155, %p156
      %p158 = scmp.ne.s32.totalorder %s149, %s150
      %p159 = scmp.eq.s32.totalorder %s34, 0
      %p160 = por %p158, %p159
      %p161 = scmp.ne.s32.totalorder %s149, %s150
      %p162 = scmp.eq.s32.totalorder %s35, 1
      %p163 = por %p161, %p162
      %p165 = scmp.ne.s32.totalorder %s150, %s164
      %p166 = scmp.eq.s32.totalorder %s35, 0
      %p167 = por %p165, %p166
      %s169 = sadd.s32 %s168, 1
      %p172 = scmp.eq.s32.totalorder %s29, 1
      %p173 = scmp.ne.s32.totalorder %s168, %s170
      %p174 = scmp.eq.s32.totalorder %s29, 0
      %p175 = por %p173, %p174
      %p176 = scmp.ne.s32.totalorder %s168, %s170
      %p177 = scmp.eq.s32.totalorder %s34, 1
      %p178 = por %p176, %p177
      %p179 = scmp.ne.s32.totalorder %s170, %s171
      %p180 = scmp.eq.s32.totalorder %s34, 0
      %p181 = por %p179, %p180
      %p182 = scmp.ne.s32.totalorder %s170, %s171
      %p183 = scmp.eq.s32.totalorder %s35, 1
      %p184 = por %p182, %p183
      %p186 = scmp.ne.s32.totalorder %s171, %s185
      %p187 = scmp.eq.s32.totalorder %s35, 0
      %p188 = por %p186, %p187
      %s190 = sadd.s32 %s189, 1
      %p193 = scmp.eq.s32.totalorder %s29, 1
      %p194 = scmp.ne.s32.totalorder %s189, %s191
      %p195 = scmp.eq.s32.totalorder %s29, 0
      %p196 = por %p194, %p195
      %p197 = scmp.ne.s32.totalorder %s189, %s191
      %p198 = scmp.eq.s32.totalorder %s34, 1
      %p199 = por %p197, %p198
      %p200 = scmp.ne.s32.totalorder %s191, %s192
      %p201 = scmp.eq.s32.totalorder %s34, 0
      %p202 = por %p200, %p201
      %p203 = scmp.ne.s32.totalorder %s191, %s192
      %p204 = scmp.eq.s32.totalorder %s35, 1
      %p205 = por %p203, %p204
      %p207 = scmp.ne.s32.totalorder %s192, %s206
      %p208 = scmp.eq.s32.totalorder %s35, 0
      %p209 = por %p207, %p208
      %s211 = sadd.s32 %s210, 1
      %p214 = scmp.eq.s32.totalorder %s29, 1
      %p215 = scmp.ne.s32.totalorder %s210, %s212
      %p216 = scmp.eq.s32.totalorder %s29, 0
      %p217 = por %p215, %p216
      %p218 = scmp.ne.s32.totalorder %s210, %s212
      %p219 = scmp.eq.s32.totalorder %s34, 1
      %p220 = por %p218, %p219
      %p221 = scmp.ne.s32.totalorder %s212, %s213
      %p222 = scmp.eq.s32.totalorder %s34, 0
      %p223 = por %p221, %p222
      %p224 = scmp.ne.s32.totalorder %s212, %s213
      %p225 = scmp.eq.s32.totalorder %s35, 1
      %p226 = por %p224, %p225
      %p228 = scmp.ne.s32.totalorder %s213, %s227
      %p229 = scmp.eq.s32.totalorder %s35, 0
      %p230 = por %p228, %p229
      %s232 = sadd.s32 %s231, 1
      %p235 = scmp.eq.s32.totalorder %s29, 1
      %p236 = scmp.ne.s32.totalorder %s231, %s233
      %p237 = scmp.eq.s32.totalorder %s29, 0
      %p238 = por %p236, %p237
      %p239 = scmp.ne.s32.totalorder %s231, %s233
      %p240 = scmp.eq.s32.totalorder %s34, 1
      %p241 = por %p239, %p240
      %p242 = scmp.ne.s32.totalorder %s233, %s234
      %p243 = scmp.eq.s32.totalorder %s34, 0
      %p244 = por %p242, %p243
      %p245 = scmp.ne.s32.totalorder %s233, %s234
      %p246 = scmp.eq.s32.totalorder %s35, 1
      %p247 = por %p245, %p246
      %p249 = scmp.ne.s32.totalorder %s234, %s248
      %p250 = scmp.eq.s32.totalorder %s35, 0
      %p251 = por %p249, %p250
      %s253 = sadd.s32 %s252, 1
      %p256 = scmp.eq.s32.totalorder %s29, 1
      %p257 = scmp.ne.s32.totalorder %s252, %s254
      %p258 = scmp.eq.s32.totalorder %s29, 0
      %p259 = por %p257, %p258
      %p260 = scmp.ne.s32.totalorder %s252, %s254
      %p261 = scmp.eq.s32.totalorder %s34, 1
      %p262 = por %p260, %p261
      %p263 = scmp.ne.s32.totalorder %s254, %s255
      %p264 = scmp.eq.s32.totalorder %s34, 0
      %p265 = por %p263, %p264
      %p266 = scmp.ne.s32.totalorder %s254, %s255
      %p267 = scmp.eq.s32.totalorder %s35, 1
      %p268 = por %p266, %p267
      %p270 = scmp.ne.s32.totalorder %s255, %s269
      %p271 = scmp.eq.s32.totalorder %s35, 0
      %p272 = por %p270, %p271
      %s274 = sadd.s32 %s273, 1
      %p277 = scmp.eq.s32.totalorder %s29, 1
      %p278 = scmp.ne.s32.totalorder %s273, %s275
      %p279 = scmp.eq.s32.totalorder %s29, 0
      %p280 = por %p278, %p279
      %p281 = scmp.ne.s32.totalorder %s273, %s275
      %p282 = scmp.eq.s32.totalorder %s34, 1
      %p283 = por %p281, %p282
      %p284 = scmp.ne.s32.totalorder %s275, %s276
      %p285 = scmp.eq.s32.totalorder %s34, 0
      %p286 = por %p284, %p285
      %p287 = scmp.ne.s32.totalorder %s275, %s276
      %p288 = scmp.eq.s32.totalorder %s35, 1
      %p289 = por %p287, %p288
      %p291 = scmp.ne.s32.totalorder %s276, %s290
      %p292 = scmp.eq.s32.totalorder %s35, 0
      %p293 = por %p291, %p292
      %s295 = sadd.s32 %s294, 1
      %p298 = scmp.eq.s32.totalorder %s29, 1
      %p299 = scmp.ne.s32.totalorder %s294, %s296
      %p300 = scmp.eq.s32.totalorder %s29, 0
      %p301 = por %p299, %p300
      %p302 = scmp.ne.s32.totalorder %s294, %s296
      %p303 = scmp.eq.s32.totalorder %s34, 1
      %p304 = por %p302, %p303
      %p305 = scmp.ne.s32.totalorder %s296, %s297
      %p306 = scmp.eq.s32.totalorder %s34, 0
      %p307 = por %p305, %p306
      %p308 = scmp.ne.s32.totalorder %s296, %s297
      %p309 = scmp.eq.s32.totalorder %s35, 1
      %p310 = por %p308, %p309
      %p312 = scmp.ne.s32.totalorder %s297, %s311
      %p313 = scmp.eq.s32.totalorder %s35, 0
      %p314 = por %p312, %p313
      %s316 = sadd.s32 %s315, 1
      %p319 = scmp.eq.s32.totalorder %s29, 1
      %p320 = scmp.ne.s32.totalorder %s315, %s317
      %p321 = scmp.eq.s32.totalorder %s29, 0
      %p322 = por %p320, %p321
      %p323 = scmp.ne.s32.totalorder %s315, %s317
      %p324 = scmp.eq.s32.totalorder %s34, 1
      %p325 = por %p323, %p324
      %p326 = scmp.ne.s32.totalorder %s317, %s318
      %p327 = scmp.eq.s32.totalorder %s34, 0
      %p328 = por %p326, %p327
      %p329 = scmp.ne.s32.totalorder %s317, %s318
      %p330 = scmp.eq.s32.totalorder %s35, 1
      %p331 = por %p329, %p330
      %p333 = scmp.ne.s32.totalorder %s318, %s332
      %p334 = scmp.eq.s32.totalorder %s35, 0
      %p335 = por %p333, %p334
      %s336 = ssub.s32 %s29, %s36
      %p337 = scmp.eq.s32.totalorder %s336, 0
      %s339 = sadd.s32 %s338, 1
      %s340 = scalar_select %p337, %s338, %s339
      %p343 = pneg %p337
      %p344 = scmp.eq.s32.totalorder %s29, 1
      %p345 = por %p343, %p344
      %p346 = scmp.ne.s32.totalorder %s338, %s341
      %p347 = scmp.eq.s32.totalorder %s29, 0
      %p348 = por %p346, %p347
      %p349 = scmp.ne.s32.totalorder %s338, %s341
      %p350 = scmp.eq.s32.totalorder %s34, 1
      %p351 = por %p349, %p350
      %p352 = scmp.ne.s32.totalorder %s341, %s342
      %p353 = scmp.eq.s32.totalorder %s34, 0
      %p354 = por %p352, %p353
      %p355 = scmp.ne.s32.totalorder %s341, %s342
      %p356 = scmp.eq.s32.totalorder %s35, 1
      %p357 = por %p355, %p356
      %p359 = scmp.ne.s32.totalorder %s342, %s358
      %p360 = scmp.eq.s32.totalorder %s35, 0
      %p361 = por %p359, %p360
      %p362 = scmp.le.s32.totalorder 1, %s29
      %p363 = scmp.lt.s32.totalorder %s29, 3
      %p364 = pnand %p362, %p363
      %p365 = pneg %p364
      // Predicated region
      $region9: #{tpu_custom_call.1} parent=5 // pred_check
        _
      $region10: #{tpu_custom_call.1} parent=5 // pred_check_branch
        %367 = sbr.rel (%p364) target = $region12
      $region11: #{tpu_custom_call.1} parent=5 // pred_region
        %s368 = ssub.s32 %s29, 1
        // Predicated region
        $region13: #{tpu_custom_call.1} parent=11 // pred_check
          %p369 = pneg %p76
        $region14: #{tpu_custom_call.1} parent=11 // pred_check_branch
          %371 = sbr.rel (%p369) target = $region16
        $region15: #{tpu_custom_call.1} parent=11 // pred_region
          %s373 = ssub.s32 2048, 2048
          %374 = vsyncadd [#allocation7], %s373
          %s375 = sshll.u32 [#allocation6], 4
          %s376 = int_to_ptr.vmem [resolvable:$true] %s375
          %381 = dma.hbm_to_vmem [thread:$0]  %s1, 2048, %s376, [#allocation7], 128, 128, 8
        $region16: #{tpu_custom_call.1} parent=11 // pred_fallthru
          _
        // Predicated region
        $region17: #{tpu_custom_call.1} parent=11 // pred_check
          %p382 = pneg %p97
        $region18: #{tpu_custom_call.1} parent=11 // pred_check_branch
          %384 = sbr.rel (%p382) target = $region20
        $region19: #{tpu_custom_call.1} parent=11 // pred_region
          %s386 = ssub.s32 2048, 2048
          %387 = vsyncadd [#allocation7], %s386
          %s388 = sshll.u32 [#allocation8], 4
          %s389 = int_to_ptr.vmem [resolvable:$true] %s388
          %394 = dma.hbm_to_vmem [thread:$0]  %s2, 2048, %s389, [#allocation7], 128, 128, 8
        $region20: #{tpu_custom_call.1} parent=11 // pred_fallthru
          _
        // Predicated region
        $region21: #{tpu_custom_call.1} parent=11 // pred_check
          %p395 = pneg %p118
        $region22: #{tpu_custom_call.1} parent=11 // pred_check_branch
          %397 = sbr.rel (%p395) target = $region24
        $region23: #{tpu_custom_call.1} parent=11 // pred_region
          _
        $region24: #{tpu_custom_call.1} parent=11 // pred_fallthru
          _
        // Predicated region
        $region25: #{tpu_custom_call.1} parent=11 // pred_check
          %p398 = pneg %p139
        $region26: #{tpu_custom_call.1} parent=11 // pred_check_branch
          %400 = sbr.rel (%p398) target = $region28
        $region27: #{tpu_custom_call.1} parent=11 // pred_region
          _
        $region28: #{tpu_custom_call.1} parent=11 // pred_fallthru
          _
        // Predicated region
        $region29: #{tpu_custom_call.1} parent=11 // pred_check
          %p401 = pneg %p160
        $region30: #{tpu_custom_call.1} parent=11 // pred_check_branch
          %403 = sbr.rel (%p401) target = $region32
        $region31: #{tpu_custom_call.1} parent=11 // pred_region
          %s405 = ssub.s32 12288, 12288
          %406 = vsyncadd [#allocation10], %s405
          %s407 = sshll.u32 [#allocation9], 4
          %s408 = int_to_ptr.vmem [resolvable:$true] %s407
          %413 = dma.hbm_to_vmem [thread:$0]  %s5, 12288, %s408, [#allocation10], 384, 384, 24
        $region32: #{tpu_custom_call.1} parent=11 // pred_fallthru
          _
        // Predicated region
        $region33: #{tpu_custom_call.1} parent=11 // pred_check
          %p414 = pneg %p181
        $region34: #{tpu_custom_call.1} parent=11 // pred_check_branch
          %416 = sbr.rel (%p414) target = $region36
        $region35: #{tpu_custom_call.1} parent=11 // pred_region
          %s418 = ssub.s32 4096, 4096
          %419 = vsyncadd [#allocation10], %s418
          %s420 = sshll.u32 [#allocation11], 4
          %s421 = int_to_ptr.vmem [resolvable:$true] %s420
          %426 = dma.hbm_to_vmem [thread:$0]  %s6, 4096, %s421, [#allocation10], 128, 128, 8
        $region36: #{tpu_custom_call.1} parent=11 // pred_fallthru
          _
        // Predicated region
        $region37: #{tpu_custom_call.1} parent=11 // pred_check
          %p427 = pneg %p202
        $region38: #{tpu_custom_call.1} parent=11 // pred_check_branch
          %429 = sbr.rel (%p427) target = $region40
        $region39: #{tpu_custom_call.1} parent=11 // pred_region
          _
        $region40: #{tpu_custom_call.1} parent=11 // pred_fallthru
          _
        // Predicated region
        $region41: #{tpu_custom_call.1} parent=11 // pred_check
          %p430 = pneg %p223
        $region42: #{tpu_custom_call.1} parent=11 // pred_check_branch
          %432 = sbr.rel (%p430) target = $region44
        $region43: #{tpu_custom_call.1} parent=11 // pred_region
          _
        $region44: #{tpu_custom_call.1} parent=11 // pred_fallthru
          _
        // Predicated region
        $region45: #{tpu_custom_call.1} parent=11 // pred_check
          %p433 = pneg %p244
        $region46: #{tpu_custom_call.1} parent=11 // pred_check_branch
          %435 = sbr.rel (%p433) target = $region48
        $region47: #{tpu_custom_call.1} parent=11 // pred_region
          _
        $region48: #{tpu_custom_call.1} parent=11 // pred_fallthru
          _
        // Predicated region
        $region49: #{tpu_custom_call.1} parent=11 // pred_check
          %p436 = pneg %p265
        $region50: #{tpu_custom_call.1} parent=11 // pred_check_branch
          %438 = sbr.rel (%p436) target = $region52
        $region51: #{tpu_custom_call.1} parent=11 // pred_region
          %s440 = ssub.s32 16384, 16384
          %441 = vsyncadd [#allocation13], %s440
          %s442 = sshll.u32 [#allocation12], 4
          %s443 = int_to_ptr.vmem [resolvable:$true] %s442
          %448 = dma.hbm_to_vmem [thread:$0]  %s10, 16384, %s443, [#allocation13], 512, 512, 32
        $region52: #{tpu_custom_call.1} parent=11 // pred_fallthru
          _
        // Predicated region
        $region53: #{tpu_custom_call.1} parent=11 // pred_check
          %p449 = pneg %p286
        $region54: #{tpu_custom_call.1} parent=11 // pred_check_branch
          %451 = sbr.rel (%p449) target = $region56
        $region55: #{tpu_custom_call.1} parent=11 // pred_region
          _
        $region56: #{tpu_custom_call.1} parent=11 // pred_fallthru
          _
        // Predicated region
        $region57: #{tpu_custom_call.1} parent=11 // pred_check
          %p452 = pneg %p307
        $region58: #{tpu_custom_call.1} parent=11 // pred_check_branch
          %454 = sbr.rel (%p452) target = $region60
        $region59: #{tpu_custom_call.1} parent=11 // pred_region
          %s456 = ssub.s32 16384, 16384
          %457 = vsyncadd [#allocation13], %s456
          %s458 = sshll.u32 [#allocation14], 4
          %s459 = int_to_ptr.vmem [resolvable:$true] %s458
          %464 = dma.hbm_to_vmem [thread:$0]  %s12, 16384, %s459, [#allocation13], 128, 128, 8
        $region60: #{tpu_custom_call.1} parent=11 // pred_fallthru
          _
        // Predicated region
        $region61: #{tpu_custom_call.1} parent=11 // pred_check
          %p465 = pneg %p328
        $region62: #{tpu_custom_call.1} parent=11 // pred_check_branch
          %467 = sbr.rel (%p465) target = $region64
        $region63: #{tpu_custom_call.1} parent=11 // pred_region
          _
        $region64: #{tpu_custom_call.1} parent=11 // pred_fallthru
          _
      $region12: #{tpu_custom_call.1} parent=5 // pred_fallthru
        _
      %p468 = scmp.lt.s32.totalorder %s29, 2
      // Predicated region
      $region65: #{tpu_custom_call.1} parent=5 // pred_check
        %p469 = pneg %p468
      $region66: #{tpu_custom_call.1} parent=5 // pred_check_branch
        %471 = sbr.rel (%p469) target = $region68
      $region67: #{tpu_custom_call.1} parent=5 // pred_region
        // Predicated region
        $region69: #{tpu_custom_call.1} parent=67 // pred_check
          %p472 = pneg %p49
        $region70: #{tpu_custom_call.1} parent=67 // pred_check_branch
          %474 = sbr.rel (%p472) target = $region72
        $region71: #{tpu_custom_call.1} parent=67 // pred_region
          %s475 = sand.u32 %s39, 1
          %s476 = scalar_lea.sflag [#allocation4], %s475
          %s477 = sand.u32 %s39, 1
          %s478 = smul.addr %s477, 512
          %s479 = scalar_lea.vmem [#allocation3], %s478
          %s480 = smul.u32 2, %s29
          %s482 = ssub.s32 8192, 8192
          %483 = vsyncadd %s476, %s482
          %s484 = smul.addr %s480, 32
          %s485 = smul.addr %s484, 128
          %s486 = scalar_lea.hbm %s0, %s485
          %s487 = sshll.u32 %s479, 4
          %s488 = int_to_ptr.vmem [resolvable:$true] %s487
          %493 = dma.hbm_to_vmem [thread:$0]  %s486, 8192, %s488, %s476, 256, 256, 16
        $region72: #{tpu_custom_call.1} parent=67 // pred_fallthru
          _
      $region68: #{tpu_custom_call.1} parent=5 // pred_fallthru
        _
      %p494 = scmp.le.s32.totalorder 1, %s29
      %p495 = scmp.lt.s32.totalorder %s29, 3
      %p496 = pnand %p494, %p495
      %p497 = pneg %p496
      // Predicated region
      $region73: #{tpu_custom_call.1} parent=5 // pred_check
        _
      $region74: #{tpu_custom_call.1} parent=5 // pred_check_branch
        %499 = sbr.rel (%p496) target = $region76
      $region75: #{tpu_custom_call.1} parent=5 // pred_region
        %s500 = ssub.s32 %s29, 1
        %s501 = sand.u32 %s42, 1
        %s502 = scalar_lea.sflag [#allocation4], %s501
        %s503 = sand.u32 %s42, 1
        %s504 = smul.addr %s503, 512
        %s505 = scalar_lea.vmem [#allocation3], %s504
        // Predicated region
        $region77: #{tpu_custom_call.1} parent=75 // pred_check
          %p506 = pneg %p55
        $region78: #{tpu_custom_call.1} parent=75 // pred_check_branch
          %508 = sbr.rel (%p506) target = $region80
        $region79: #{tpu_custom_call.1} parent=75 // pred_region
          %509 = dma.done %s502, 8192
        $region80: #{tpu_custom_call.1} parent=75 // pred_fallthru
          _
        // Predicated region
        $region81: #{tpu_custom_call.1} parent=75 // pred_check
          %p510 = pneg %p76
        $region82: #{tpu_custom_call.1} parent=75 // pred_check_branch
          %512 = sbr.rel (%p510) target = $region84
        $region83: #{tpu_custom_call.1} parent=75 // pred_region
          %513 = dma.done [#allocation7], 2048
        $region84: #{tpu_custom_call.1} parent=75 // pred_fallthru
          _
        // Predicated region
        $region85: #{tpu_custom_call.1} parent=75 // pred_check
          %p514 = pneg %p97
        $region86: #{tpu_custom_call.1} parent=75 // pred_check_branch
          %516 = sbr.rel (%p514) target = $region88
        $region87: #{tpu_custom_call.1} parent=75 // pred_region
          %517 = dma.done [#allocation7], 2048
        $region88: #{tpu_custom_call.1} parent=75 // pred_fallthru
          _
        // Predicated region
        $region89: #{tpu_custom_call.1} parent=75 // pred_check
          %p518 = pneg %p160
        $region90: #{tpu_custom_call.1} parent=75 // pred_check_branch
          %520 = sbr.rel (%p518) target = $region92
        $region91: #{tpu_custom_call.1} parent=75 // pred_region
          %521 = dma.done [#allocation10], 12288
        $region92: #{tpu_custom_call.1} parent=75 // pred_fallthru
          _
        // Predicated region
        $region93: #{tpu_custom_call.1} parent=75 // pred_check
          %p522 = pneg %p181
        $region94: #{tpu_custom_call.1} parent=75 // pred_check_branch
          %524 = sbr.rel (%p522) target = $region96
        $region95: #{tpu_custom_call.1} parent=75 // pred_region
          %525 = dma.done [#allocation10], 4096
        $region96: #{tpu_custom_call.1} parent=75 // pred_fallthru
          _
        // Predicated region
        $region97: #{tpu_custom_call.1} parent=75 // pred_check
          %p526 = pneg %p265
        $region98: #{tpu_custom_call.1} parent=75 // pred_check_branch
          %528 = sbr.rel (%p526) target = $region100
        $region99: #{tpu_custom_call.1} parent=75 // pred_region
          %529 = dma.done [#allocation13], 16384
        $region100: #{tpu_custom_call.1} parent=75 // pred_fallthru
          _
        // Predicated region
        $region101: #{tpu_custom_call.1} parent=75 // pred_check
          %p530 = pneg %p307
        $region102: #{tpu_custom_call.1} parent=75 // pred_check_branch
          %532 = sbr.rel (%p530) target = $region104
        $region103: #{tpu_custom_call.1} parent=75 // pred_region
          %533 = dma.done [#allocation13], 16384
        $region104: #{tpu_custom_call.1} parent=75 // pred_fallthru
          _
        %s534 = sand.u32 %s42, 1
        %s535 = scalar_lea.sflag [#allocation4], %s534
        %s536 = sand.u32 %s42, 1
        %s537 = smul.addr %s536, 512
        %s538 = scalar_lea.vmem [#allocation3], %s537
        %p539 = pneg %p55
        %p540 = pneg %p52
        %p541 = pneg %p76
        %p542 = pneg %p73
        %p543 = pneg %p97
        %p544 = pneg %p94
        %p545 = pneg %p118
        %p546 = pneg %p115
        %p547 = pneg %p139
        %p548 = pneg %p136
        %p549 = pneg %p160
        %p550 = pneg %p157
        %p551 = pneg %p181
        %p552 = pneg %p178
        %p553 = pneg %p202
        %p554 = pneg %p199
        %p555 = pneg %p223
        %p556 = pneg %p220
        %p557 = pneg %p244
        %p558 = pneg %p241
        %p559 = pneg %p265
        %p560 = pneg %p262
        %p561 = pneg %p286
        %p562 = pneg %p283
        %p563 = pneg %p307
        %p564 = pneg %p304
        %p565 = pneg %p328
        %p566 = pneg %p325
        %p567 = pneg %p354
        %p568 = pneg %p351
        %s569 = sand.u32 %s341, 1
        %s570 = scalar_lea.sflag [#allocation5], %s569
        %s571 = sand.u32 %s341, 1
        %s572 = smul.addr %s571, 512
        %s573 = scalar_lea.vmem [#allocation15], %s572
        %s574 = smul.u32 2, %s34
        %s575 = smul.u32 2, %s34
        %v577 = vld [vmem:[%s505] sm:$0xff]
        %v578 = vld [vmem:[%s505 + $0x8] sm:$0xff]
        %v579 = vld [vmem:[%s505 + $0x10] sm:$0xff]
        %v580 = vld [vmem:[%s505 + $0x18] sm:$0xff]
        %v581 = vld [vmem:[%s505 + $0x20] sm:$0xff]
        %v582 = vld [vmem:[%s505 + $0x28] sm:$0xff]
        %v583 = vld [vmem:[%s505 + $0x30] sm:$0xff]
        %v584 = vld [vmem:[%s505 + $0x38] sm:$0xff]
        %v585 = vld [vmem:[%s505 + $0x40] sm:$0xff]
        %v586 = vld [vmem:[%s505 + $0x48] sm:$0xff]
        %v587 = vld [vmem:[%s505 + $0x50] sm:$0xff]
        %v588 = vld [vmem:[%s505 + $0x58] sm:$0xff]
        %v589 = vld [vmem:[%s505 + $0x60] sm:$0xff]
        %v590 = vld [vmem:[%s505 + $0x68] sm:$0xff]
        %v591 = vld [vmem:[%s505 + $0x70] sm:$0xff]
        %v592 = vld [vmem:[%s505 + $0x78] sm:$0xff]
        %v593 = vld [vmem:[%s505 + $0x80] sm:$0xff]
        %v594 = vld [vmem:[%s505 + $0x88] sm:$0xff]
        %v595 = vld [vmem:[%s505 + $0x90] sm:$0xff]
        %v596 = vld [vmem:[%s505 + $0x98] sm:$0xff]
        %v597 = vld [vmem:[%s505 + $0xa0] sm:$0xff]
        %v598 = vld [vmem:[%s505 + $0xa8] sm:$0xff]
        %v599 = vld [vmem:[%s505 + $0xb0] sm:$0xff]
        %v600 = vld [vmem:[%s505 + $0xb8] sm:$0xff]
        %v601 = vld [vmem:[%s505 + $0xc0] sm:$0xff]
        %v602 = vld [vmem:[%s505 + $0xc8] sm:$0xff]
        %v603 = vld [vmem:[%s505 + $0xd0] sm:$0xff]
        %v604 = vld [vmem:[%s505 + $0xd8] sm:$0xff]
        %v605 = vld [vmem:[%s505 + $0xe0] sm:$0xff]
        %v606 = vld [vmem:[%s505 + $0xe8] sm:$0xff]
        %v607 = vld [vmem:[%s505 + $0xf0] sm:$0xff]
        %v608 = vld [vmem:[%s505 + $0xf8] sm:$0xff]
        %v609 = vld [vmem:[%s505 + $0x100] sm:$0xff]
        %v610 = vld [vmem:[%s505 + $0x108] sm:$0xff]
        %v611 = vld [vmem:[%s505 + $0x110] sm:$0xff]
        %v612 = vld [vmem:[%s505 + $0x118] sm:$0xff]
        %v613 = vld [vmem:[%s505 + $0x120] sm:$0xff]
        %v614 = vld [vmem:[%s505 + $0x128] sm:$0xff]
        %v615 = vld [vmem:[%s505 + $0x130] sm:$0xff]
        %v616 = vld [vmem:[%s505 + $0x138] sm:$0xff]
        %v617 = vld [vmem:[%s505 + $0x140] sm:$0xff]
        %v618 = vld [vmem:[%s505 + $0x148] sm:$0xff]
        %v619 = vld [vmem:[%s505 + $0x150] sm:$0xff]
        %v620 = vld [vmem:[%s505 + $0x158] sm:$0xff]
        %v621 = vld [vmem:[%s505 + $0x160] sm:$0xff]
        %v622 = vld [vmem:[%s505 + $0x168] sm:$0xff]
        %v623 = vld [vmem:[%s505 + $0x170] sm:$0xff]
        %v624 = vld [vmem:[%s505 + $0x178] sm:$0xff]
        %v625 = vld [vmem:[%s505 + $0x180] sm:$0xff]
        %v626 = vld [vmem:[%s505 + $0x188] sm:$0xff]
        %v627 = vld [vmem:[%s505 + $0x190] sm:$0xff]
        %v628 = vld [vmem:[%s505 + $0x198] sm:$0xff]
        %v629 = vld [vmem:[%s505 + $0x1a0] sm:$0xff]
        %v630 = vld [vmem:[%s505 + $0x1a8] sm:$0xff]
        %v631 = vld [vmem:[%s505 + $0x1b0] sm:$0xff]
        %v632 = vld [vmem:[%s505 + $0x1b8] sm:$0xff]
        %v633 = vld [vmem:[%s505 + $0x1c0] sm:$0xff]
        %v634 = vld [vmem:[%s505 + $0x1c8] sm:$0xff]
        %v635 = vld [vmem:[%s505 + $0x1d0] sm:$0xff]
        %v636 = vld [vmem:[%s505 + $0x1d8] sm:$0xff]
        %v637 = vld [vmem:[%s505 + $0x1e0] sm:$0xff]
        %v638 = vld [vmem:[%s505 + $0x1e8] sm:$0xff]
        %v639 = vld [vmem:[%s505 + $0x1f0] sm:$0xff]
        %v640 = vld [vmem:[%s505 + $0x1f8] sm:$0xff]
        %v641 = vld [vmem:[%s3] sm:$0x3]
        %v642 = vld [vmem:[%s4] sm:$0x3]
        %v643 = vadd.f32 %v577, %v578
        %644 = vadd.xlane.f32.xlu0 %v643
        %v645 = vpop.xlane.xlu0 %644
        %v646 = vadd.f32 %v579, %v580
        %647 = vadd.xlane.f32.xlu0 %v646
        %v648 = vpop.xlane.xlu0 %647
        %v649 = vadd.f32 %v581, %v582
        %650 = vadd.xlane.f32.xlu0 %v649
        %v651 = vpop.xlane.xlu0 %650
        %v652 = vadd.f32 %v583, %v584
        %653 = vadd.xlane.f32.xlu0 %v652
        %v654 = vpop.xlane.xlu0 %653
        %v655 = vadd.f32 %v585, %v586
        %656 = vadd.xlane.f32.xlu0 %v655
        %v657 = vpop.xlane.xlu0 %656
        %v658 = vadd.f32 %v587, %v588
        %659 = vadd.xlane.f32.xlu0 %v658
        %v660 = vpop.xlane.xlu0 %659
        %v661 = vadd.f32 %v589, %v590
        %662 = vadd.xlane.f32.xlu0 %v661
        %v663 = vpop.xlane.xlu0 %662
        %v664 = vadd.f32 %v591, %v592
        %665 = vadd.xlane.f32.xlu0 %v664
        %v666 = vpop.xlane.xlu0 %665
        %v667 = vadd.f32 %v593, %v594
        %668 = vadd.xlane.f32.xlu0 %v667
        %v669 = vpop.xlane.xlu0 %668
        %v670 = vadd.f32 %v595, %v596
        %671 = vadd.xlane.f32.xlu0 %v670
        %v672 = vpop.xlane.xlu0 %671
        %v673 = vadd.f32 %v597, %v598
        %674 = vadd.xlane.f32.xlu0 %v673
        %v675 = vpop.xlane.xlu0 %674
        %v676 = vadd.f32 %v599, %v600
        %677 = vadd.xlane.f32.xlu0 %v676
        %v678 = vpop.xlane.xlu0 %677
        %v679 = vadd.f32 %v601, %v602
        %680 = vadd.xlane.f32.xlu0 %v679
        %v681 = vpop.xlane.xlu0 %680
        %v682 = vadd.f32 %v603, %v604
        %683 = vadd.xlane.f32.xlu0 %v682
        %v684 = vpop.xlane.xlu0 %683
        %v685 = vadd.f32 %v605, %v606
        %686 = vadd.xlane.f32.xlu0 %v685
        %v687 = vpop.xlane.xlu0 %686
        %v688 = vadd.f32 %v607, %v608
        %689 = vadd.xlane.f32.xlu0 %v688
        %v690 = vpop.xlane.xlu0 %689
        %v691 = vadd.f32 %v609, %v610
        %692 = vadd.xlane.f32.xlu0 %v691
        %v693 = vpop.xlane.xlu0 %692
        %v694 = vadd.f32 %v611, %v612
        %695 = vadd.xlane.f32.xlu0 %v694
        %v696 = vpop.xlane.xlu0 %695
        %v697 = vadd.f32 %v613, %v614
        %698 = vadd.xlane.f32.xlu0 %v697
        %v699 = vpop.xlane.xlu0 %698
        %v700 = vadd.f32 %v615, %v616
        %701 = vadd.xlane.f32.xlu0 %v700
        %v702 = vpop.xlane.xlu0 %701
        %v703 = vadd.f32 %v617, %v618
        %704 = vadd.xlane.f32.xlu0 %v703
        %v705 = vpop.xlane.xlu0 %704
        %v706 = vadd.f32 %v619, %v620
        %707 = vadd.xlane.f32.xlu0 %v706
        %v708 = vpop.xlane.xlu0 %707
        %v709 = vadd.f32 %v621, %v622
        %710 = vadd.xlane.f32.xlu0 %v709
        %v711 = vpop.xlane.xlu0 %710
        %v712 = vadd.f32 %v623, %v624
        %713 = vadd.xlane.f32.xlu0 %v712
        %v714 = vpop.xlane.xlu0 %713
        %v715 = vadd.f32 %v625, %v626
        %716 = vadd.xlane.f32.xlu0 %v715
        %v717 = vpop.xlane.xlu0 %716
        %v718 = vadd.f32 %v627, %v628
        %719 = vadd.xlane.f32.xlu0 %v718
        %v720 = vpop.xlane.xlu0 %719
        %v721 = vadd.f32 %v629, %v630
        %722 = vadd.xlane.f32.xlu0 %v721
        %v723 = vpop.xlane.xlu0 %722
        %v724 = vadd.f32 %v631, %v632
        %725 = vadd.xlane.f32.xlu0 %v724
        %v726 = vpop.xlane.xlu0 %725
        %v727 = vadd.f32 %v633, %v634
        %728 = vadd.xlane.f32.xlu0 %v727
        %v729 = vpop.xlane.xlu0 %728
        %v730 = vadd.f32 %v635, %v636
        %731 = vadd.xlane.f32.xlu0 %v730
        %v732 = vpop.xlane.xlu0 %731
        %v733 = vadd.f32 %v637, %v638
        %734 = vadd.xlane.f32.xlu0 %v733
        %v735 = vpop.xlane.xlu0 %734
        %v736 = vadd.f32 %v639, %v640
        %737 = vadd.xlane.f32.xlu0 %v736
        %v738 = vpop.xlane.xlu0 %737
        %v739 = vrcp.pop 256.0
        %v740 = vmul.f32 %v645, %v739
        %v741 = vmul.f32 %v648, %v739
        %v742 = vmul.f32 %v651, %v739
        %v743 = vmul.f32 %v654, %v739
        %v744 = vmul.f32 %v657, %v739
        %v745 = vmul.f32 %v660, %v739
        %v746 = vmul.f32 %v663, %v739
        %v747 = vmul.f32 %v666, %v739
        %v748 = vmul.f32 %v669, %v739
        %v749 = vmul.f32 %v672, %v739
        %v750 = vmul.f32 %v675, %v739
        %v751 = vmul.f32 %v678, %v739
        %v752 = vmul.f32 %v681, %v739
        %v753 = vmul.f32 %v684, %v739
        %v754 = vmul.f32 %v687, %v739
        %v755 = vmul.f32 %v690, %v739
        %v756 = vmul.f32 %v693, %v739
        %v757 = vmul.f32 %v696, %v739
        %v758 = vmul.f32 %v699, %v739
        %v759 = vmul.f32 %v702, %v739
        %v760 = vmul.f32 %v705, %v739
        %v761 = vmul.f32 %v708, %v739
        %v762 = vmul.f32 %v711, %v739
        %v763 = vmul.f32 %v714, %v739
        %v764 = vmul.f32 %v717, %v739
        %v765 = vmul.f32 %v720, %v739
        %v766 = vmul.f32 %v723, %v739
        %v767 = vmul.f32 %v726, %v739
        %v768 = vmul.f32 %v729, %v739
        %v769 = vmul.f32 %v732, %v739
        %v770 = vmul.f32 %v735, %v739
        %v771 = vmul.f32 %v738, %v739
        %v772 = vsub.f32 %v577, %v740
        %v773 = vsub.f32 %v578, %v740
        %v774 = vsub.f32 %v579, %v741
        %v775 = vsub.f32 %v580, %v741
        %v776 = vsub.f32 %v581, %v742
        %v777 = vsub.f32 %v582, %v742
        %v778 = vsub.f32 %v583, %v743
        %v779 = vsub.f32 %v584, %v743
        %v780 = vsub.f32 %v585, %v744
        %v781 = vsub.f32 %v586, %v744
        %v782 = vsub.f32 %v587, %v745
        %v783 = vsub.f32 %v588, %v745
        %v784 = vsub.f32 %v589, %v746
        %v785 = vsub.f32 %v590, %v746
        %v786 = vsub.f32 %v591, %v747
        %v787 = vsub.f32 %v592, %v747
        %v788 = vsub.f32 %v593, %v748
        %v789 = vsub.f32 %v594, %v748
        %v790 = vsub.f32 %v595, %v749
        %v791 = vsub.f32 %v596, %v749
        %v792 = vsub.f32 %v597, %v750
        %v793 = vsub.f32 %v598, %v750
        %v794 = vsub.f32 %v599, %v751
        %v795 = vsub.f32 %v600, %v751
        %v796 = vsub.f32 %v601, %v752
        %v797 = vsub.f32 %v602, %v752
        %v798 = vsub.f32 %v603, %v753
        %v799 = vsub.f32 %v604, %v753
        %v800 = vsub.f32 %v605, %v754
        %v801 = vsub.f32 %v606, %v754
        %v802 = vsub.f32 %v607, %v755
        %v803 = vsub.f32 %v608, %v755
        %v804 = vsub.f32 %v609, %v756
        %v805 = vsub.f32 %v610, %v756
        %v806 = vsub.f32 %v611, %v757
        %v807 = vsub.f32 %v612, %v757
        %v808 = vsub.f32 %v613, %v758
        %v809 = vsub.f32 %v614, %v758
        %v810 = vsub.f32 %v615, %v759
        %v811 = vsub.f32 %v616, %v759
        %v812 = vsub.f32 %v617, %v760
        %v813 = vsub.f32 %v618, %v760
        %v814 = vsub.f32 %v619, %v761
        %v815 = vsub.f32 %v620, %v761
        %v816 = vsub.f32 %v621, %v762
        %v817 = vsub.f32 %v622, %v762
        %v818 = vsub.f32 %v623, %v763
        %v819 = vsub.f32 %v624, %v763
        %v820 = vsub.f32 %v625, %v764
        %v821 = vsub.f32 %v626, %v764
        %v822 = vsub.f32 %v627, %v765
        %v823 = vsub.f32 %v628, %v765
        %v824 = vsub.f32 %v629, %v766
        %v825 = vsub.f32 %v630, %v766
        %v826 = vsub.f32 %v631, %v767
        %v827 = vsub.f32 %v632, %v767
        %v828 = vsub.f32 %v633, %v768
        %v829 = vsub.f32 %v634, %v768
        %v830 = vsub.f32 %v635, %v769
        %v831 = vsub.f32 %v636, %v769
        %v832 = vsub.f32 %v637, %v770
        %v833 = vsub.f32 %v638, %v770
        %v834 = vsub.f32 %v639, %v771
        %v835 = vsub.f32 %v640, %v771
        %v836 = vmul.f32 %v772, %v772
        %v837 = vmul.f32 %v773, %v773
        %v838 = vmul.f32 %v774, %v774
        %v839 = vmul.f32 %v775, %v775
        %v840 = vmul.f32 %v776, %v776
        %v841 = vmul.f32 %v777, %v777
        %v842 = vmul.f32 %v778, %v778
        %v843 = vmul.f32 %v779, %v779
        %v844 = vmul.f32 %v780, %v780
        %v845 = vmul.f32 %v781, %v781
        %v846 = vmul.f32 %v782, %v782
        %v847 = vmul.f32 %v783, %v783
        %v848 = vmul.f32 %v784, %v784
        %v849 = vmul.f32 %v785, %v785
        %v850 = vmul.f32 %v786, %v786
        %v851 = vmul.f32 %v787, %v787
        %v852 = vmul.f32 %v788, %v788
        %v853 = vmul.f32 %v789, %v789
        %v854 = vmul.f32 %v790, %v790
        %v855 = vmul.f32 %v791, %v791
        %v856 = vmul.f32 %v792, %v792
        %v857 = vmul.f32 %v793, %v793
        %v858 = vmul.f32 %v794, %v794
        %v859 = vmul.f32 %v795, %v795
        %v860 = vmul.f32 %v796, %v796
        %v861 = vmul.f32 %v797, %v797
        %v862 = vmul.f32 %v798, %v798
        %v863 = vmul.f32 %v799, %v799
        %v864 = vmul.f32 %v800, %v800
        %v865 = vmul.f32 %v801, %v801
        %v866 = vmul.f32 %v802, %v802
        %v867 = vmul.f32 %v803, %v803
        %v868 = vmul.f32 %v804, %v804
        %v869 = vmul.f32 %v805, %v805
        %v870 = vmul.f32 %v806, %v806
        %v871 = vmul.f32 %v807, %v807
        %v872 = vmul.f32 %v808, %v808
        %v873 = vmul.f32 %v809, %v809
        %v874 = vmul.f32 %v810, %v810
        %v875 = vmul.f32 %v811, %v811
        %v876 = vmul.f32 %v812, %v812
        %v877 = vmul.f32 %v813, %v813
        %v878 = vmul.f32 %v814, %v814
        %v879 = vmul.f32 %v815, %v815
        %v880 = vmul.f32 %v816, %v816
        %v881 = vmul.f32 %v817, %v817
        %v882 = vmul.f32 %v818, %v818
        %v883 = vmul.f32 %v819, %v819
        %v884 = vmul.f32 %v820, %v820
        %v885 = vmul.f32 %v821, %v821
        %v886 = vmul.f32 %v822, %v822
        %v887 = vmul.f32 %v823, %v823
        %v888 = vmul.f32 %v824, %v824
        %v889 = vmul.f32 %v825, %v825
        %v890 = vmul.f32 %v826, %v826
        %v891 = vmul.f32 %v827, %v827
        %v892 = vmul.f32 %v828, %v828
        %v893 = vmul.f32 %v829, %v829
        %v894 = vmul.f32 %v830, %v830
        %v895 = vmul.f32 %v831, %v831
        %v896 = vmul.f32 %v832, %v832
        %v897 = vmul.f32 %v833, %v833
        %v898 = vmul.f32 %v834, %v834
        %v899 = vmul.f32 %v835, %v835
        %v900 = vadd.f32 %v836, %v837
        %901 = vadd.xlane.f32.xlu0 %v900
        %v902 = vpop.xlane.xlu0 %901
        %v903 = vadd.f32 %v838, %v839
        %904 = vadd.xlane.f32.xlu0 %v903
        %v905 = vpop.xlane.xlu0 %904
        %v906 = vadd.f32 %v840, %v841
        %907 = vadd.xlane.f32.xlu0 %v906
        %v908 = vpop.xlane.xlu0 %907
        %v909 = vadd.f32 %v842, %v843
        %910 = vadd.xlane.f32.xlu0 %v909
        %v911 = vpop.xlane.xlu0 %910
        %v912 = vadd.f32 %v844, %v845
        %913 = vadd.xlane.f32.xlu0 %v912
        %v914 = vpop.xlane.xlu0 %913
        %v915 = vadd.f32 %v846, %v847
        %916 = vadd.xlane.f32.xlu0 %v915
        %v917 = vpop.xlane.xlu0 %916
        %v918 = vadd.f32 %v848, %v849
        %919 = vadd.xlane.f32.xlu0 %v918
        %v920 = vpop.xlane.xlu0 %919
        %v921 = vadd.f32 %v850, %v851
        %922 = vadd.xlane.f32.xlu0 %v921
        %v923 = vpop.xlane.xlu0 %922
        %v924 = vadd.f32 %v852, %v853
        %925 = vadd.xlane.f32.xlu0 %v924
        %v926 = vpop.xlane.xlu0 %925
        %v927 = vadd.f32 %v854, %v855
        %928 = vadd.xlane.f32.xlu0 %v927
        %v929 = vpop.xlane.xlu0 %928
        %v930 = vadd.f32 %v856, %v857
        %931 = vadd.xlane.f32.xlu0 %v930
        %v932 = vpop.xlane.xlu0 %931
        %v933 = vadd.f32 %v858, %v859
        %934 = vadd.xlane.f32.xlu0 %v933
        %v935 = vpop.xlane.xlu0 %934
        %v936 = vadd.f32 %v860, %v861
        %937 = vadd.xlane.f32.xlu0 %v936
        %v938 = vpop.xlane.xlu0 %937
        %v939 = vadd.f32 %v862, %v863
        %940 = vadd.xlane.f32.xlu0 %v939
        %v941 = vpop.xlane.xlu0 %940
        %v942 = vadd.f32 %v864, %v865
        %943 = vadd.xlane.f32.xlu0 %v942
        %v944 = vpop.xlane.xlu0 %943
        %v945 = vadd.f32 %v866, %v867
        %946 = vadd.xlane.f32.xlu0 %v945
        %v947 = vpop.xlane.xlu0 %946
        %v948 = vadd.f32 %v868, %v869
        %949 = vadd.xlane.f32.xlu0 %v948
        %v950 = vpop.xlane.xlu0 %949
        %v951 = vadd.f32 %v870, %v871
        %952 = vadd.xlane.f32.xlu0 %v951
        %v953 = vpop.xlane.xlu0 %952
        %v954 = vadd.f32 %v872, %v873
        %955 = vadd.xlane.f32.xlu0 %v954
        %v956 = vpop.xlane.xlu0 %955
        %v957 = vadd.f32 %v874, %v875
        %958 = vadd.xlane.f32.xlu0 %v957
        %v959 = vpop.xlane.xlu0 %958
        %v960 = vadd.f32 %v876, %v877
        %961 = vadd.xlane.f32.xlu0 %v960
        %v962 = vpop.xlane.xlu0 %961
        %v963 = vadd.f32 %v878, %v879
        %964 = vadd.xlane.f32.xlu0 %v963
        %v965 = vpop.xlane.xlu0 %964
        %v966 = vadd.f32 %v880, %v881
        %967 = vadd.xlane.f32.xlu0 %v966
        %v968 = vpop.xlane.xlu0 %967
        %v969 = vadd.f32 %v882, %v883
        %970 = vadd.xlane.f32.xlu0 %v969
        %v971 = vpop.xlane.xlu0 %970
        %v972 = vadd.f32 %v884, %v885
        %973 = vadd.xlane.f32.xlu0 %v972
        %v974 = vpop.xlane.xlu0 %973
        %v975 = vadd.f32 %v886, %v887
        %976 = vadd.xlane.f32.xlu0 %v975
        %v977 = vpop.xlane.xlu0 %976
        %v978 = vadd.f32 %v888, %v889
        %979 = vadd.xlane.f32.xlu0 %v978
        %v980 = vpop.xlane.xlu0 %979
        %v981 = vadd.f32 %v890, %v891
        %982 = vadd.xlane.f32.xlu0 %v981
        %v983 = vpop.xlane.xlu0 %982
        %v984 = vadd.f32 %v892, %v893
        %985 = vadd.xlane.f32.xlu0 %v984
        %v986 = vpop.xlane.xlu0 %985
        %v987 = vadd.f32 %v894, %v895
        %988 = vadd.xlane.f32.xlu0 %v987
        %v989 = vpop.xlane.xlu0 %988
        %v990 = vadd.f32 %v896, %v897
        %991 = vadd.xlane.f32.xlu0 %v990
        %v992 = vpop.xlane.xlu0 %991
        %v993 = vadd.f32 %v898, %v899
        %994 = vadd.xlane.f32.xlu0 %v993
        %v995 = vpop.xlane.xlu0 %994
        %v996 = vmul.f32 %v902, %v739
        %v997 = vmul.f32 %v905, %v739
        %v998 = vmul.f32 %v908, %v739
        %v999 = vmul.f32 %v911, %v739
        %v1000 = vmul.f32 %v914, %v739
        %v1001 = vmul.f32 %v917, %v739
        %v1002 = vmul.f32 %v920, %v739
        %v1003 = vmul.f32 %v923, %v739
        %v1004 = vmul.f32 %v926, %v739
        %v1005 = vmul.f32 %v929, %v739
        %v1006 = vmul.f32 %v932, %v739
        %v1007 = vmul.f32 %v935, %v739
        %v1008 = vmul.f32 %v938, %v739
        %v1009 = vmul.f32 %v941, %v739
        %v1010 = vmul.f32 %v944, %v739
        %v1011 = vmul.f32 %v947, %v739
        %v1012 = vmul.f32 %v950, %v739
        %v1013 = vmul.f32 %v953, %v739
        %v1014 = vmul.f32 %v956, %v739
        %v1015 = vmul.f32 %v959, %v739
        %v1016 = vmul.f32 %v962, %v739
        %v1017 = vmul.f32 %v965, %v739
        %v1018 = vmul.f32 %v968, %v739
        %v1019 = vmul.f32 %v971, %v739
        %v1020 = vmul.f32 %v974, %v739
        %v1021 = vmul.f32 %v977, %v739
        %v1022 = vmul.f32 %v980, %v739
        %v1023 = vmul.f32 %v983, %v739
        %v1024 = vmul.f32 %v986, %v739
        %v1025 = vmul.f32 %v989, %v739
        %v1026 = vmul.f32 %v992, %v739
        %v1027 = vmul.f32 %v995, %v739
        %v1028 = vadd.f32 %v996, 1e-05
        %v1029 = vadd.f32 %v997, 1e-05
        %v1030 = vadd.f32 %v998, 1e-05
        %v1031 = vadd.f32 %v999, 1e-05
        %v1032 = vadd.f32 %v1000, 1e-05
        %v1033 = vadd.f32 %v1001, 1e-05
        %v1034 = vadd.f32 %v1002, 1e-05
        %v1035 = vadd.f32 %v1003, 1e-05
        %v1036 = vadd.f32 %v1004, 1e-05
        %v1037 = vadd.f32 %v1005, 1e-05
        %v1038 = vadd.f32 %v1006, 1e-05
        %v1039 = vadd.f32 %v1007, 1e-05
        %v1040 = vadd.f32 %v1008, 1e-05
        %v1041 = vadd.f32 %v1009, 1e-05
        %v1042 = vadd.f32 %v1010, 1e-05
        %v1043 = vadd.f32 %v1011, 1e-05
        %v1044 = vadd.f32 %v1012, 1e-05
        %v1045 = vadd.f32 %v1013, 1e-05
        %v1046 = vadd.f32 %v1014, 1e-05
        %v1047 = vadd.f32 %v1015, 1e-05
        %v1048 = vadd.f32 %v1016, 1e-05
        %v1049 = vadd.f32 %v1017, 1e-05
        %v1050 = vadd.f32 %v1018, 1e-05
        %v1051 = vadd.f32 %v1019, 1e-05
        %v1052 = vadd.f32 %v1020, 1e-05
        %v1053 = vadd.f32 %v1021, 1e-05
        %v1054 = vadd.f32 %v1022, 1e-05
        %v1055 = vadd.f32 %v1023, 1e-05
        %v1056 = vadd.f32 %v1024, 1e-05
        %v1057 = vadd.f32 %v1025, 1e-05
        %v1058 = vadd.f32 %v1026, 1e-05
        %v1059 = vadd.f32 %v1027, 1e-05
        %v1060 = vrsqrt.pop %v1028
        %v1061 = vrsqrt.pop %v1029
        %v1062 = vrsqrt.pop %v1030
        %v1063 = vrsqrt.pop %v1031
        %v1064 = vrsqrt.pop %v1032
        %v1065 = vrsqrt.pop %v1033
        %v1066 = vrsqrt.pop %v1034
        %v1067 = vrsqrt.pop %v1035
        %v1068 = vrsqrt.pop %v1036
        %v1069 = vrsqrt.pop %v1037
        %v1070 = vrsqrt.pop %v1038
        %v1071 = vrsqrt.pop %v1039
        %v1072 = vrsqrt.pop %v1040
        %v1073 = vrsqrt.pop %v1041
        %v1074 = vrsqrt.pop %v1042
        %v1075 = vrsqrt.pop %v1043
        %v1076 = vrsqrt.pop %v1044
        %v1077 = vrsqrt.pop %v1045
        %v1078 = vrsqrt.pop %v1046
        %v1079 = vrsqrt.pop %v1047
        %v1080 = vrsqrt.pop %v1048
        %v1081 = vrsqrt.pop %v1049
        %v1082 = vrsqrt.pop %v1050
        %v1083 = vrsqrt.pop %v1051
        %v1084 = vrsqrt.pop %v1052
        %v1085 = vrsqrt.pop %v1053
        %v1086 = vrsqrt.pop %v1054
        %v1087 = vrsqrt.pop %v1055
        %v1088 = vrsqrt.pop %v1056
        %v1089 = vrsqrt.pop %v1057
        %v1090 = vrsqrt.pop %v1058
        %v1091 = vrsqrt.pop %v1059
        %v1092 = vmul.f32 %v772, %v1060
        %v1093 = vmul.f32 %v773, %v1060
        %v1094 = vmul.f32 %v774, %v1061
        %v1095 = vmul.f32 %v775, %v1061
        %v1096 = vmul.f32 %v776, %v1062
        %v1097 = vmul.f32 %v777, %v1062
        %v1098 = vmul.f32 %v778, %v1063
        %v1099 = vmul.f32 %v779, %v1063
        %v1100 = vmul.f32 %v780, %v1064
        %v1101 = vmul.f32 %v781, %v1064
        %v1102 = vmul.f32 %v782, %v1065
        %v1103 = vmul.f32 %v783, %v1065
        %v1104 = vmul.f32 %v784, %v1066
        %v1105 = vmul.f32 %v785, %v1066
        %v1106 = vmul.f32 %v786, %v1067
        %v1107 = vmul.f32 %v787, %v1067
        %v1108 = vmul.f32 %v788, %v1068
        %v1109 = vmul.f32 %v789, %v1068
        %v1110 = vmul.f32 %v790, %v1069
        %v1111 = vmul.f32 %v791, %v1069
        %v1112 = vmul.f32 %v792, %v1070
        %v1113 = vmul.f32 %v793, %v1070
        %v1114 = vmul.f32 %v794, %v1071
        %v1115 = vmul.f32 %v795, %v1071
        %v1116 = vmul.f32 %v796, %v1072
        %v1117 = vmul.f32 %v797, %v1072
        %v1118 = vmul.f32 %v798, %v1073
        %v1119 = vmul.f32 %v799, %v1073
        %v1120 = vmul.f32 %v800, %v1074
        %v1121 = vmul.f32 %v801, %v1074
        %v1122 = vmul.f32 %v802, %v1075
        %v1123 = vmul.f32 %v803, %v1075
        %v1124 = vmul.f32 %v804, %v1076
        %v1125 = vmul.f32 %v805, %v1076
        %v1126 = vmul.f32 %v806, %v1077
        %v1127 = vmul.f32 %v807, %v1077
        %v1128 = vmul.f32 %v808, %v1078
        %v1129 = vmul.f32 %v809, %v1078
        %v1130 = vmul.f32 %v810, %v1079
        %v1131 = vmul.f32 %v811, %v1079
        %v1132 = vmul.f32 %v812, %v1080
        %v1133 = vmul.f32 %v813, %v1080
        %v1134 = vmul.f32 %v814, %v1081
        %v1135 = vmul.f32 %v815, %v1081
        %v1136 = vmul.f32 %v816, %v1082
        %v1137 = vmul.f32 %v817, %v1082
        %v1138 = vmul.f32 %v818, %v1083
        %v1139 = vmul.f32 %v819, %v1083
        %v1140 = vmul.f32 %v820, %v1084
        %v1141 = vmul.f32 %v821, %v1084
        %v1142 = vmul.f32 %v822, %v1085
        %v1143 = vmul.f32 %v823, %v1085
        %v1144 = vmul.f32 %v824, %v1086
        %v1145 = vmul.f32 %v825, %v1086
        %v1146 = vmul.f32 %v826, %v1087
        %v1147 = vmul.f32 %v827, %v1087
        %v1148 = vmul.f32 %v828, %v1088
        %v1149 = vmul.f32 %v829, %v1088
        %v1150 = vmul.f32 %v830, %v1089
        %v1151 = vmul.f32 %v831, %v1089
        %v1152 = vmul.f32 %v832, %v1090
        %v1153 = vmul.f32 %v833, %v1090
        %v1154 = vmul.f32 %v834, %v1091
        %v1155 = vmul.f32 %v835, %v1091
        %v1157 = vlaneseq
        %v1158 = vshrl.u32 %v1157, 7
        %v1159 = vsub.s32 0, %v1158
        %v1160 = vrot.slane %v641, %v1159
        %v1161 = vlaneseq
        %v1162 = vshrl.u32 %v1161, 7
        %v1163 = vsub.s32 1, %v1162
        %v1164 = vrot.slane %v641, %v1163
        %v1167 = vmul.f32 %v1092, %v1160
        %v1168 = vmul.f32 %v1093, %v1164
        %v1169 = vmul.f32 %v1094, %v1160
        %v1170 = vmul.f32 %v1095, %v1164
        %v1171 = vmul.f32 %v1096, %v1160
        %v1172 = vmul.f32 %v1097, %v1164
        %v1173 = vmul.f32 %v1098, %v1160
        %v1174 = vmul.f32 %v1099, %v1164
        %v1175 = vmul.f32 %v1100, %v1160
        %v1176 = vmul.f32 %v1101, %v1164
        %v1177 = vmul.f32 %v1102, %v1160
        %v1178 = vmul.f32 %v1103, %v1164
        %v1179 = vmul.f32 %v1104, %v1160
        %v1180 = vmul.f32 %v1105, %v1164
        %v1181 = vmul.f32 %v1106, %v1160
        %v1182 = vmul.f32 %v1107, %v1164
        %v1183 = vmul.f32 %v1108, %v1160
        %v1184 = vmul.f32 %v1109, %v1164
        %v1185 = vmul.f32 %v1110, %v1160
        %v1186 = vmul.f32 %v1111, %v1164
        %v1187 = vmul.f32 %v1112, %v1160
        %v1188 = vmul.f32 %v1113, %v1164
        %v1189 = vmul.f32 %v1114, %v1160
        %v1190 = vmul.f32 %v1115, %v1164
        %v1191 = vmul.f32 %v1116, %v1160
        %v1192 = vmul.f32 %v1117, %v1164
        %v1193 = vmul.f32 %v1118, %v1160
        %v1194 = vmul.f32 %v1119, %v1164
        %v1195 = vmul.f32 %v1120, %v1160
        %v1196 = vmul.f32 %v1121, %v1164
        %v1197 = vmul.f32 %v1122, %v1160
        %v1198 = vmul.f32 %v1123, %v1164
        %v1199 = vmul.f32 %v1124, %v1160
        %v1200 = vmul.f32 %v1125, %v1164
        %v1201 = vmul.f32 %v1126, %v1160
        %v1202 = vmul.f32 %v1127, %v1164
        %v1203 = vmul.f32 %v1128, %v1160
        %v1204 = vmul.f32 %v1129, %v1164
        %v1205 = vmul.f32 %v1130, %v1160
        %v1206 = vmul.f32 %v1131, %v1164
        %v1207 = vmul.f32 %v1132, %v1160
        %v1208 = vmul.f32 %v1133, %v1164
        %v1209 = vmul.f32 %v1134, %v1160
        %v1210 = vmul.f32 %v1135, %v1164
        %v1211 = vmul.f32 %v1136, %v1160
        %v1212 = vmul.f32 %v1137, %v1164
        %v1213 = vmul.f32 %v1138, %v1160
        %v1214 = vmul.f32 %v1139, %v1164
        %v1215 = vmul.f32 %v1140, %v1160
        %v1216 = vmul.f32 %v1141, %v1164
        %v1217 = vmul.f32 %v1142, %v1160
        %v1218 = vmul.f32 %v1143, %v1164
        %v1219 = vmul.f32 %v1144, %v1160
        %v1220 = vmul.f32 %v1145, %v1164
        %v1221 = vmul.f32 %v1146, %v1160
        %v1222 = vmul.f32 %v1147, %v1164
        %v1223 = vmul.f32 %v1148, %v1160
        %v1224 = vmul.f32 %v1149, %v1164
        %v1225 = vmul.f32 %v1150, %v1160
        %v1226 = vmul.f32 %v1151, %v1164
        %v1227 = vmul.f32 %v1152, %v1160
        %v1228 = vmul.f32 %v1153, %v1164
        %v1229 = vmul.f32 %v1154, %v1160
        %v1230 = vmul.f32 %v1155, %v1164
        %v1232 = vlaneseq
        %v1233 = vshrl.u32 %v1232, 7
        %v1234 = vsub.s32 0, %v1233
        %v1235 = vrot.slane %v642, %v1234
        %v1236 = vlaneseq
        %v1237 = vshrl.u32 %v1236, 7
        %v1238 = vsub.s32 1, %v1237
        %v1239 = vrot.slane %v642, %v1238
        %v1242 = vadd.f32 %v1167, %v1235
        %v1243 = vadd.f32 %v1168, %v1239
        %v1244 = vadd.f32 %v1169, %v1235
        %v1245 = vadd.f32 %v1170, %v1239
        %v1246 = vadd.f32 %v1171, %v1235
        %v1247 = vadd.f32 %v1172, %v1239
        %v1248 = vadd.f32 %v1173, %v1235
        %v1249 = vadd.f32 %v1174, %v1239
        %v1250 = vadd.f32 %v1175, %v1235
        %v1251 = vadd.f32 %v1176, %v1239
        %v1252 = vadd.f32 %v1177, %v1235
        %v1253 = vadd.f32 %v1178, %v1239
        %v1254 = vadd.f32 %v1179, %v1235
        %v1255 = vadd.f32 %v1180, %v1239
        %v1256 = vadd.f32 %v1181, %v1235
        %v1257 = vadd.f32 %v1182, %v1239
        %v1258 = vadd.f32 %v1183, %v1235
        %v1259 = vadd.f32 %v1184, %v1239
        %v1260 = vadd.f32 %v1185, %v1235
        %v1261 = vadd.f32 %v1186, %v1239
        %v1262 = vadd.f32 %v1187, %v1235
        %v1263 = vadd.f32 %v1188, %v1239
        %v1264 = vadd.f32 %v1189, %v1235
        %v1265 = vadd.f32 %v1190, %v1239
        %v1266 = vadd.f32 %v1191, %v1235
        %v1267 = vadd.f32 %v1192, %v1239
        %v1268 = vadd.f32 %v1193, %v1235
        %v1269 = vadd.f32 %v1194, %v1239
        %v1270 = vadd.f32 %v1195, %v1235
        %v1271 = vadd.f32 %v1196, %v1239
        %v1272 = vadd.f32 %v1197, %v1235
        %v1273 = vadd.f32 %v1198, %v1239
        %v1274 = vadd.f32 %v1199, %v1235
        %v1275 = vadd.f32 %v1200, %v1239
        %v1276 = vadd.f32 %v1201, %v1235
        %v1277 = vadd.f32 %v1202, %v1239
        %v1278 = vadd.f32 %v1203, %v1235
        %v1279 = vadd.f32 %v1204, %v1239
        %v1280 = vadd.f32 %v1205, %v1235
        %v1281 = vadd.f32 %v1206, %v1239
        %v1282 = vadd.f32 %v1207, %v1235
        %v1283 = vadd.f32 %v1208, %v1239
        %v1284 = vadd.f32 %v1209, %v1235
        %v1285 = vadd.f32 %v1210, %v1239
        %v1286 = vadd.f32 %v1211, %v1235
        %v1287 = vadd.f32 %v1212, %v1239
        %v1288 = vadd.f32 %v1213, %v1235
        %v1289 = vadd.f32 %v1214, %v1239
        %v1290 = vadd.f32 %v1215, %v1235
        %v1291 = vadd.f32 %v1216, %v1239
        %v1292 = vadd.f32 %v1217, %v1235
        %v1293 = vadd.f32 %v1218, %v1239
        %v1294 = vadd.f32 %v1219, %v1235
        %v1295 = vadd.f32 %v1220, %v1239
        %v1296 = vadd.f32 %v1221, %v1235
        %v1297 = vadd.f32 %v1222, %v1239
        %v1298 = vadd.f32 %v1223, %v1235
        %v1299 = vadd.f32 %v1224, %v1239
        %v1300 = vadd.f32 %v1225, %v1235
        %v1301 = vadd.f32 %v1226, %v1239
        %v1302 = vadd.f32 %v1227, %v1235
        %v1303 = vadd.f32 %v1228, %v1239
        %v1304 = vadd.f32 %v1229, %v1235
        %v1305 = vadd.f32 %v1230, %v1239
        %v1306 = vpack.c.bf16 %v1244, %v1242
        %v1307 = vpack.c.bf16 %v1245, %v1243
        %v1308 = vpack.c.bf16 %v1248, %v1246
        %v1309 = vpack.c.bf16 %v1249, %v1247
        %v1310 = vpack.c.bf16 %v1252, %v1250
        %v1311 = vpack.c.bf16 %v1253, %v1251
        %v1312 = vpack.c.bf16 %v1256, %v1254
        %v1313 = vpack.c.bf16 %v1257, %v1255
        %v1314 = vpack.c.bf16 %v1260, %v1258
        %v1315 = vpack.c.bf16 %v1261, %v1259
        %v1316 = vpack.c.bf16 %v1264, %v1262
        %v1317 = vpack.c.bf16 %v1265, %v1263
        %v1318 = vpack.c.bf16 %v1268, %v1266
        %v1319 = vpack.c.bf16 %v1269, %v1267
        %v1320 = vpack.c.bf16 %v1272, %v1270
        %v1321 = vpack.c.bf16 %v1273, %v1271
        %v1322 = vpack.c.bf16 %v1276, %v1274
        %v1323 = vpack.c.bf16 %v1277, %v1275
        %v1324 = vpack.c.bf16 %v1280, %v1278
        %v1325 = vpack.c.bf16 %v1281, %v1279
        %v1326 = vpack.c.bf16 %v1284, %v1282
        %v1327 = vpack.c.bf16 %v1285, %v1283
        %v1328 = vpack.c.bf16 %v1288, %v1286
        %v1329 = vpack.c.bf16 %v1289, %v1287
        %v1330 = vpack.c.bf16 %v1292, %v1290
        %v1331 = vpack.c.bf16 %v1293, %v1291
        %v1332 = vpack.c.bf16 %v1296, %v1294
        %v1333 = vpack.c.bf16 %v1297, %v1295
        %v1334 = vpack.c.bf16 %v1300, %v1298
        %v1335 = vpack.c.bf16 %v1301, %v1299
        %v1336 = vpack.c.bf16 %v1304, %v1302
        %v1337 = vpack.c.bf16 %v1305, %v1303
        %v1338 = vld [vmem:[#allocation9] sm:$0xff]
        %v1339 = vld [vmem:[#allocation9 + $0x8] sm:$0xff]
        %v1340 = vld [vmem:[#allocation9 + $0x10] sm:$0xff]
        %v1341 = vld [vmem:[#allocation9 + $0x18] sm:$0xff]
        %v1342 = vld [vmem:[#allocation9 + $0x20] sm:$0xff]
        %v1343 = vld [vmem:[#allocation9 + $0x28] sm:$0xff]
        %v1344 = vld [vmem:[#allocation9 + $0x30] sm:$0xff]
        %v1345 = vld [vmem:[#allocation9 + $0x38] sm:$0xff]
        %v1346 = vld [vmem:[#allocation9 + $0x40] sm:$0xff]
        %v1347 = vld [vmem:[#allocation9 + $0x48] sm:$0xff]
        %v1348 = vld [vmem:[#allocation9 + $0x50] sm:$0xff]
        %v1349 = vld [vmem:[#allocation9 + $0x58] sm:$0xff]
        %v1350 = vld [vmem:[#allocation9 + $0x60] sm:$0xff]
        %v1351 = vld [vmem:[#allocation9 + $0x68] sm:$0xff]
        %v1352 = vld [vmem:[#allocation9 + $0x70] sm:$0xff]
        %v1353 = vld [vmem:[#allocation9 + $0x78] sm:$0xff]
        %v1354 = vld [vmem:[#allocation9 + $0x80] sm:$0xff]
        %v1355 = vld [vmem:[#allocation9 + $0x88] sm:$0xff]
        %v1356 = vld [vmem:[#allocation9 + $0x90] sm:$0xff]
        %v1357 = vld [vmem:[#allocation9 + $0x98] sm:$0xff]
        %v1358 = vld [vmem:[#allocation9 + $0xa0] sm:$0xff]
        %v1359 = vld [vmem:[#allocation9 + $0xa8] sm:$0xff]
        %v1360 = vld [vmem:[#allocation9 + $0xb0] sm:$0xff]
        %v1361 = vld [vmem:[#allocation9 + $0xb8] sm:$0xff]
        %v1362 = vld [vmem:[#allocation9 + $0xc0] sm:$0xff]
        %v1363 = vld [vmem:[#allocation9 + $0xc8] sm:$0xff]
        %v1364 = vld [vmem:[#allocation9 + $0xd0] sm:$0xff]
        %v1365 = vld [vmem:[#allocation9 + $0xd8] sm:$0xff]
        %v1366 = vld [vmem:[#allocation9 + $0xe0] sm:$0xff]
        %v1367 = vld [vmem:[#allocation9 + $0xe8] sm:$0xff]
        %v1368 = vld [vmem:[#allocation9 + $0xf0] sm:$0xff]
        %v1369 = vld [vmem:[#allocation9 + $0xf8] sm:$0xff]
        %v1370 = vld [vmem:[#allocation9 + $0x100] sm:$0xff]
        %v1371 = vld [vmem:[#allocation9 + $0x108] sm:$0xff]
        %v1372 = vld [vmem:[#allocation9 + $0x110] sm:$0xff]
        %v1373 = vld [vmem:[#allocation9 + $0x118] sm:$0xff]
        %v1374 = vld [vmem:[#allocation9 + $0x120] sm:$0xff]
        %v1375 = vld [vmem:[#allocation9 + $0x128] sm:$0xff]
        %v1376 = vld [vmem:[#allocation9 + $0x130] sm:$0xff]
        %v1377 = vld [vmem:[#allocation9 + $0x138] sm:$0xff]
        %v1378 = vld [vmem:[#allocation9 + $0x140] sm:$0xff]
        %v1379 = vld [vmem:[#allocation9 + $0x148] sm:$0xff]
        %v1380 = vld [vmem:[#allocation9 + $0x150] sm:$0xff]
        %v1381 = vld [vmem:[#allocation9 + $0x158] sm:$0xff]
        %v1382 = vld [vmem:[#allocation9 + $0x160] sm:$0xff]
        %v1383 = vld [vmem:[#allocation9 + $0x168] sm:$0xff]
        %v1384 = vld [vmem:[#allocation9 + $0x170] sm:$0xff]
        %v1385 = vld [vmem:[#allocation9 + $0x178] sm:$0xff]
        %v1386 = vld [vmem:[#allocation9 + $0x180] sm:$0xff]
        %v1387 = vld [vmem:[#allocation9 + $0x188] sm:$0xff]
        %v1388 = vld [vmem:[#allocation9 + $0x190] sm:$0xff]
        %v1389 = vld [vmem:[#allocation9 + $0x198] sm:$0xff]
        %v1390 = vld [vmem:[#allocation9 + $0x1a0] sm:$0xff]
        %v1391 = vld [vmem:[#allocation9 + $0x1a8] sm:$0xff]
        %v1392 = vld [vmem:[#allocation9 + $0x1b0] sm:$0xff]
        %v1393 = vld [vmem:[#allocation9 + $0x1b8] sm:$0xff]
        %v1394 = vld [vmem:[#allocation9 + $0x1c0] sm:$0xff]
        %v1395 = vld [vmem:[#allocation9 + $0x1c8] sm:$0xff]
        %v1396 = vld [vmem:[#allocation9 + $0x1d0] sm:$0xff]
        %v1397 = vld [vmem:[#allocation9 + $0x1d8] sm:$0xff]
        %v1398 = vld [vmem:[#allocation9 + $0x1e0] sm:$0xff]
        %v1399 = vld [vmem:[#allocation9 + $0x1e8] sm:$0xff]
        %v1400 = vld [vmem:[#allocation9 + $0x1f0] sm:$0xff]
        %v1401 = vld [vmem:[#allocation9 + $0x1f8] sm:$0xff]
        %v1402 = vld [vmem:[#allocation9 + $0x200] sm:$0xff]
        %v1403 = vld [vmem:[#allocation9 + $0x208] sm:$0xff]
        %v1404 = vld [vmem:[#allocation9 + $0x210] sm:$0xff]
        %v1405 = vld [vmem:[#allocation9 + $0x218] sm:$0xff]
        %v1406 = vld [vmem:[#allocation9 + $0x220] sm:$0xff]
        %v1407 = vld [vmem:[#allocation9 + $0x228] sm:$0xff]
        %v1408 = vld [vmem:[#allocation9 + $0x230] sm:$0xff]
        %v1409 = vld [vmem:[#allocation9 + $0x238] sm:$0xff]
        %v1410 = vld [vmem:[#allocation9 + $0x240] sm:$0xff]
        %v1411 = vld [vmem:[#allocation9 + $0x248] sm:$0xff]
        %v1412 = vld [vmem:[#allocation9 + $0x250] sm:$0xff]
        %v1413 = vld [vmem:[#allocation9 + $0x258] sm:$0xff]
        %v1414 = vld [vmem:[#allocation9 + $0x260] sm:$0xff]
        %v1415 = vld [vmem:[#allocation9 + $0x268] sm:$0xff]
        %v1416 = vld [vmem:[#allocation9 + $0x270] sm:$0xff]
        %v1417 = vld [vmem:[#allocation9 + $0x278] sm:$0xff]
        %v1418 = vld [vmem:[#allocation9 + $0x280] sm:$0xff]
        %v1419 = vld [vmem:[#allocation9 + $0x288] sm:$0xff]
        %v1420 = vld [vmem:[#allocation9 + $0x290] sm:$0xff]
        %v1421 = vld [vmem:[#allocation9 + $0x298] sm:$0xff]
        %v1422 = vld [vmem:[#allocation9 + $0x2a0] sm:$0xff]
        %v1423 = vld [vmem:[#allocation9 + $0x2a8] sm:$0xff]
        %v1424 = vld [vmem:[#allocation9 + $0x2b0] sm:$0xff]
        %v1425 = vld [vmem:[#allocation9 + $0x2b8] sm:$0xff]
        %v1426 = vld [vmem:[#allocation9 + $0x2c0] sm:$0xff]
        %v1427 = vld [vmem:[#allocation9 + $0x2c8] sm:$0xff]
        %v1428 = vld [vmem:[#allocation9 + $0x2d0] sm:$0xff]
        %v1429 = vld [vmem:[#allocation9 + $0x2d8] sm:$0xff]
        %v1430 = vld [vmem:[#allocation9 + $0x2e0] sm:$0xff]
        %v1431 = vld [vmem:[#allocation9 + $0x2e8] sm:$0xff]
        %v1432 = vld [vmem:[#allocation9 + $0x2f0] sm:$0xff]
        %v1433 = vld [vmem:[#allocation9 + $0x2f8] sm:$0xff]
        %v1530 = vunpack.c.l.b16 %v1338
        %v1531 = vunpack.c.h.b16 %v1338
        %v1532 = vunpack.c.l.b16 %v1339
        %v1533 = vunpack.c.h.b16 %v1339
        %v1534 = vunpack.c.l.b16 %v1340
        %v1535 = vunpack.c.h.b16 %v1340
        %v1536 = vunpack.c.l.b16 %v1341
        %v1537 = vunpack.c.h.b16 %v1341
        %v1538 = vunpack.c.l.b16 %v1342
        %v1539 = vunpack.c.h.b16 %v1342
        %v1540 = vunpack.c.l.b16 %v1343
        %v1541 = vunpack.c.h.b16 %v1343
        %v1542 = vunpack.c.l.b16 %v1344
        %v1543 = vunpack.c.h.b16 %v1344
        %v1544 = vunpack.c.l.b16 %v1345
        %v1545 = vunpack.c.h.b16 %v1345
        %v1546 = vunpack.c.l.b16 %v1346
        %v1547 = vunpack.c.h.b16 %v1346
        %v1548 = vunpack.c.l.b16 %v1347
        %v1549 = vunpack.c.h.b16 %v1347
        %v1550 = vunpack.c.l.b16 %v1348
        %v1551 = vunpack.c.h.b16 %v1348
        %v1552 = vunpack.c.l.b16 %v1349
        %v1553 = vunpack.c.h.b16 %v1349
        %v1554 = vunpack.c.l.b16 %v1350
        %v1555 = vunpack.c.h.b16 %v1350
        %v1556 = vunpack.c.l.b16 %v1351
        %v1557 = vunpack.c.h.b16 %v1351
        %v1558 = vunpack.c.l.b16 %v1352
        %v1559 = vunpack.c.h.b16 %v1352
        %v1560 = vunpack.c.l.b16 %v1353
        %v1561 = vunpack.c.h.b16 %v1353
        %v1562 = vunpack.c.l.b16 %v1354
        %v1563 = vunpack.c.h.b16 %v1354
        %v1564 = vunpack.c.l.b16 %v1355
        %v1565 = vunpack.c.h.b16 %v1355
        %v1566 = vunpack.c.l.b16 %v1356
        %v1567 = vunpack.c.h.b16 %v1356
        %v1568 = vunpack.c.l.b16 %v1357
        %v1569 = vunpack.c.h.b16 %v1357
        %v1570 = vunpack.c.l.b16 %v1358
        %v1571 = vunpack.c.h.b16 %v1358
        %v1572 = vunpack.c.l.b16 %v1359
        %v1573 = vunpack.c.h.b16 %v1359
        %v1574 = vunpack.c.l.b16 %v1360
        %v1575 = vunpack.c.h.b16 %v1360
        %v1576 = vunpack.c.l.b16 %v1361
        %v1577 = vunpack.c.h.b16 %v1361
        %v1578 = vunpack.c.l.b16 %v1362
        %v1579 = vunpack.c.h.b16 %v1362
        %v1580 = vunpack.c.l.b16 %v1363
        %v1581 = vunpack.c.h.b16 %v1363
        %v1582 = vunpack.c.l.b16 %v1364
        %v1583 = vunpack.c.h.b16 %v1364
        %v1584 = vunpack.c.l.b16 %v1365
        %v1585 = vunpack.c.h.b16 %v1365
        %v1586 = vunpack.c.l.b16 %v1366
        %v1587 = vunpack.c.h.b16 %v1366
        %v1588 = vunpack.c.l.b16 %v1367
        %v1589 = vunpack.c.h.b16 %v1367
        %v1590 = vunpack.c.l.b16 %v1368
        %v1591 = vunpack.c.h.b16 %v1368
        %v1592 = vunpack.c.l.b16 %v1369
        %v1593 = vunpack.c.h.b16 %v1369
        %v1594 = vunpack.c.l.b16 %v1370
        %v1595 = vunpack.c.h.b16 %v1370
        %v1596 = vunpack.c.l.b16 %v1371
        %v1597 = vunpack.c.h.b16 %v1371
        %v1598 = vunpack.c.l.b16 %v1372
        %v1599 = vunpack.c.h.b16 %v1372
        %v1600 = vunpack.c.l.b16 %v1373
        %v1601 = vunpack.c.h.b16 %v1373
        %v1602 = vunpack.c.l.b16 %v1374
        %v1603 = vunpack.c.h.b16 %v1374
        %v1604 = vunpack.c.l.b16 %v1375
        %v1605 = vunpack.c.h.b16 %v1375
        %v1606 = vunpack.c.l.b16 %v1376
        %v1607 = vunpack.c.h.b16 %v1376
        %v1608 = vunpack.c.l.b16 %v1377
        %v1609 = vunpack.c.h.b16 %v1377
        %v1610 = vunpack.c.l.b16 %v1378
        %v1611 = vunpack.c.h.b16 %v1378
        %v1612 = vunpack.c.l.b16 %v1379
        %v1613 = vunpack.c.h.b16 %v1379
        %v1614 = vunpack.c.l.b16 %v1380
        %v1615 = vunpack.c.h.b16 %v1380
        %v1616 = vunpack.c.l.b16 %v1381
        %v1617 = vunpack.c.h.b16 %v1381
        %v1618 = vunpack.c.l.b16 %v1382
        %v1619 = vunpack.c.h.b16 %v1382
        %v1620 = vunpack.c.l.b16 %v1383
        %v1621 = vunpack.c.h.b16 %v1383
        %v1622 = vunpack.c.l.b16 %v1384
        %v1623 = vunpack.c.h.b16 %v1384
        %v1624 = vunpack.c.l.b16 %v1385
        %v1625 = vunpack.c.h.b16 %v1385
        %v1626 = vunpack.c.l.b16 %v1386
        %v1627 = vunpack.c.h.b16 %v1386
        %v1628 = vunpack.c.l.b16 %v1387
        %v1629 = vunpack.c.h.b16 %v1387
        %v1630 = vunpack.c.l.b16 %v1388
        %v1631 = vunpack.c.h.b16 %v1388
        %v1632 = vunpack.c.l.b16 %v1389
        %v1633 = vunpack.c.h.b16 %v1389
        %v1634 = vunpack.c.l.b16 %v1390
        %v1635 = vunpack.c.h.b16 %v1390
        %v1636 = vunpack.c.l.b16 %v1391
        %v1637 = vunpack.c.h.b16 %v1391
        %v1638 = vunpack.c.l.b16 %v1392
        %v1639 = vunpack.c.h.b16 %v1392
        %v1640 = vunpack.c.l.b16 %v1393
        %v1641 = vunpack.c.h.b16 %v1393
        %v1642 = vunpack.c.l.b16 %v1394
        %v1643 = vunpack.c.h.b16 %v1394
        %v1644 = vunpack.c.l.b16 %v1395
        %v1645 = vunpack.c.h.b16 %v1395
        %v1646 = vunpack.c.l.b16 %v1396
        %v1647 = vunpack.c.h.b16 %v1396
        %v1648 = vunpack.c.l.b16 %v1397
        %v1649 = vunpack.c.h.b16 %v1397
        %v1650 = vunpack.c.l.b16 %v1398
        %v1651 = vunpack.c.h.b16 %v1398
        %v1652 = vunpack.c.l.b16 %v1399
        %v1653 = vunpack.c.h.b16 %v1399
        %v1654 = vunpack.c.l.b16 %v1400
        %v1655 = vunpack.c.h.b16 %v1400
        %v1656 = vunpack.c.l.b16 %v1401
        %v1657 = vunpack.c.h.b16 %v1401
        %v1658 = vunpack.c.l.b16 %v1402
        %v1659 = vunpack.c.h.b16 %v1402
        %v1660 = vunpack.c.l.b16 %v1403
        %v1661 = vunpack.c.h.b16 %v1403
        %v1662 = vunpack.c.l.b16 %v1404
        %v1663 = vunpack.c.h.b16 %v1404
        %v1664 = vunpack.c.l.b16 %v1405
        %v1665 = vunpack.c.h.b16 %v1405
        %v1666 = vunpack.c.l.b16 %v1406
        %v1667 = vunpack.c.h.b16 %v1406
        %v1668 = vunpack.c.l.b16 %v1407
        %v1669 = vunpack.c.h.b16 %v1407
        %v1670 = vunpack.c.l.b16 %v1408
        %v1671 = vunpack.c.h.b16 %v1408
        %v1672 = vunpack.c.l.b16 %v1409
        %v1673 = vunpack.c.h.b16 %v1409
        %v1674 = vunpack.c.l.b16 %v1410
        %v1675 = vunpack.c.h.b16 %v1410
        %v1676 = vunpack.c.l.b16 %v1411
        %v1677 = vunpack.c.h.b16 %v1411
        %v1678 = vunpack.c.l.b16 %v1412
        %v1679 = vunpack.c.h.b16 %v1412
        %v1680 = vunpack.c.l.b16 %v1413
        %v1681 = vunpack.c.h.b16 %v1413
        %v1682 = vunpack.c.l.b16 %v1414
        %v1683 = vunpack.c.h.b16 %v1414
        %v1684 = vunpack.c.l.b16 %v1415
        %v1685 = vunpack.c.h.b16 %v1415
        %v1686 = vunpack.c.l.b16 %v1416
        %v1687 = vunpack.c.h.b16 %v1416
        %v1688 = vunpack.c.l.b16 %v1417
        %v1689 = vunpack.c.h.b16 %v1417
        %v1690 = vunpack.c.l.b16 %v1418
        %v1691 = vunpack.c.h.b16 %v1418
        %v1692 = vunpack.c.l.b16 %v1419
        %v1693 = vunpack.c.h.b16 %v1419
        %v1694 = vunpack.c.l.b16 %v1420
        %v1695 = vunpack.c.h.b16 %v1420
        %v1696 = vunpack.c.l.b16 %v1421
        %v1697 = vunpack.c.h.b16 %v1421
        %v1698 = vunpack.c.l.b16 %v1422
        %v1699 = vunpack.c.h.b16 %v1422
        %v1700 = vunpack.c.l.b16 %v1423
        %v1701 = vunpack.c.h.b16 %v1423
        %v1702 = vunpack.c.l.b16 %v1424
        %v1703 = vunpack.c.h.b16 %v1424
        %v1704 = vunpack.c.l.b16 %v1425
        %v1705 = vunpack.c.h.b16 %v1425
        %v1706 = vunpack.c.l.b16 %v1426
        %v1707 = vunpack.c.h.b16 %v1426
        %v1708 = vunpack.c.l.b16 %v1427
        %v1709 = vunpack.c.h.b16 %v1427
        %v1710 = vunpack.c.l.b16 %v1428
        %v1711 = vunpack.c.h.b16 %v1428
        %v1712 = vunpack.c.l.b16 %v1429
        %v1713 = vunpack.c.h.b16 %v1429
        %v1714 = vunpack.c.l.b16 %v1430
        %v1715 = vunpack.c.h.b16 %v1430
        %v1716 = vunpack.c.l.b16 %v1431
        %v1717 = vunpack.c.h.b16 %v1431
        %v1718 = vunpack.c.l.b16 %v1432
        %v1719 = vunpack.c.h.b16 %v1432
        %v1720 = vunpack.c.l.b16 %v1433
        %v1721 = vunpack.c.h.b16 %v1433
        %v1722 = vpack.c.b16 %v1536, %v1530
        %v1723 = vpack.c.b16 %v1537, %v1531
        %v1724 = vpack.c.b16 %v1538, %v1532
        %v1725 = vpack.c.b16 %v1539, %v1533
        %v1726 = vpack.c.b16 %v1540, %v1534
        %v1727 = vpack.c.b16 %v1541, %v1535
        %v1728 = vpack.c.b16 %v1548, %v1542
        %v1729 = vpack.c.b16 %v1549, %v1543
        %v1730 = vpack.c.b16 %v1550, %v1544
        %v1731 = vpack.c.b16 %v1551, %v1545
        %v1732 = vpack.c.b16 %v1552, %v1546
        %v1733 = vpack.c.b16 %v1553, %v1547
        %v1734 = vpack.c.b16 %v1560, %v1554
        %v1735 = vpack.c.b16 %v1561, %v1555
        %v1736 = vpack.c.b16 %v1562, %v1556
        %v1737 = vpack.c.b16 %v1563, %v1557
        %v1738 = vpack.c.b16 %v1564, %v1558
        %v1739 = vpack.c.b16 %v1565, %v1559
        %v1740 = vpack.c.b16 %v1572, %v1566
        %v1741 = vpack.c.b16 %v1573, %v1567
        %v1742 = vpack.c.b16 %v1574, %v1568
        %v1743 = vpack.c.b16 %v1575, %v1569
        %v1744 = vpack.c.b16 %v1576, %v1570
        %v1745 = vpack.c.b16 %v1577, %v1571
        %v1746 = vpack.c.b16 %v1584, %v1578
        %v1747 = vpack.c.b16 %v1585, %v1579
        %v1748 = vpack.c.b16 %v1586, %v1580
        %v1749 = vpack.c.b16 %v1587, %v1581
        %v1750 = vpack.c.b16 %v1588, %v1582
        %v1751 = vpack.c.b16 %v1589, %v1583
        %v1752 = vpack.c.b16 %v1596, %v1590
        %v1753 = vpack.c.b16 %v1597, %v1591
        %v1754 = vpack.c.b16 %v1598, %v1592
        %v1755 = vpack.c.b16 %v1599, %v1593
        %v1756 = vpack.c.b16 %v1600, %v1594
        %v1757 = vpack.c.b16 %v1601, %v1595
        %v1758 = vpack.c.b16 %v1608, %v1602
        %v1759 = vpack.c.b16 %v1609, %v1603
        %v1760 = vpack.c.b16 %v1610, %v1604
        %v1761 = vpack.c.b16 %v1611, %v1605
        %v1762 = vpack.c.b16 %v1612, %v1606
        %v1763 = vpack.c.b16 %v1613, %v1607
        %v1764 = vpack.c.b16 %v1620, %v1614
        %v1765 = vpack.c.b16 %v1621, %v1615
        %v1766 = vpack.c.b16 %v1622, %v1616
        %v1767 = vpack.c.b16 %v1623, %v1617
        %v1768 = vpack.c.b16 %v1624, %v1618
        %v1769 = vpack.c.b16 %v1625, %v1619
        %v1770 = vpack.c.b16 %v1632, %v1626
        %v1771 = vpack.c.b16 %v1633, %v1627
        %v1772 = vpack.c.b16 %v1634, %v1628
        %v1773 = vpack.c.b16 %v1635, %v1629
        %v1774 = vpack.c.b16 %v1636, %v1630
        %v1775 = vpack.c.b16 %v1637, %v1631
        %v1776 = vpack.c.b16 %v1644, %v1638
        %v1777 = vpack.c.b16 %v1645, %v1639
        %v1778 = vpack.c.b16 %v1646, %v1640
        %v1779 = vpack.c.b16 %v1647, %v1641
        %v1780 = vpack.c.b16 %v1648, %v1642
        %v1781 = vpack.c.b16 %v1649, %v1643
        %v1782 = vpack.c.b16 %v1656, %v1650
        %v1783 = vpack.c.b16 %v1657, %v1651
        %v1784 = vpack.c.b16 %v1658, %v1652
        %v1785 = vpack.c.b16 %v1659, %v1653
        %v1786 = vpack.c.b16 %v1660, %v1654
        %v1787 = vpack.c.b16 %v1661, %v1655
        %v1788 = vpack.c.b16 %v1668, %v1662
        %v1789 = vpack.c.b16 %v1669, %v1663
        %v1790 = vpack.c.b16 %v1670, %v1664
        %v1791 = vpack.c.b16 %v1671, %v1665
        %v1792 = vpack.c.b16 %v1672, %v1666
        %v1793 = vpack.c.b16 %v1673, %v1667
        %v1794 = vpack.c.b16 %v1680, %v1674
        %v1795 = vpack.c.b16 %v1681, %v1675
        %v1796 = vpack.c.b16 %v1682, %v1676
        %v1797 = vpack.c.b16 %v1683, %v1677
        %v1798 = vpack.c.b16 %v1684, %v1678
        %v1799 = vpack.c.b16 %v1685, %v1679
        %v1800 = vpack.c.b16 %v1692, %v1686
        %v1801 = vpack.c.b16 %v1693, %v1687
        %v1802 = vpack.c.b16 %v1694, %v1688
        %v1803 = vpack.c.b16 %v1695, %v1689
        %v1804 = vpack.c.b16 %v1696, %v1690
        %v1805 = vpack.c.b16 %v1697, %v1691
        %v1806 = vpack.c.b16 %v1704, %v1698
        %v1807 = vpack.c.b16 %v1705, %v1699
        %v1808 = vpack.c.b16 %v1706, %v1700
        %v1809 = vpack.c.b16 %v1707, %v1701
        %v1810 = vpack.c.b16 %v1708, %v1702
        %v1811 = vpack.c.b16 %v1709, %v1703
        %v1812 = vpack.c.b16 %v1716, %v1710
        %v1813 = vpack.c.b16 %v1717, %v1711
        %v1814 = vpack.c.b16 %v1718, %v1712
        %v1815 = vpack.c.b16 %v1719, %v1713
        %v1816 = vpack.c.b16 %v1720, %v1714
        %v1817 = vpack.c.b16 %v1721, %v1715
        %1914 = vmatprep.subr.bf16.mxu0 %v1723
        %1915 = vmatpush1.bf16.msra.mxu0 %v1722
        %1916 = vmatprep.subr.bf16.mxu0 %v1729
        %1917 = vmatpush1.bf16.msra.mxu0 %v1728
        %1918 = vmatprep.subr.bf16.mxu0 %v1735
        %1919 = vmatpush1.bf16.msra.mxu0 %v1734
        %1920 = vmatprep.subr.bf16.mxu0 %v1741
        %1921 = vmatpush1.bf16.msra.mxu0 %v1740
        %1922 = vmatprep.subr.bf16.mxu0 %v1747
        %1923 = vmatpush1.bf16.msra.mxu0 %v1746
        %1924 = vmatprep.subr.bf16.mxu0 %v1753
        %1925 = vmatpush1.bf16.msra.mxu0 %v1752
        %1926 = vmatprep.subr.bf16.mxu0 %v1759
        %1927 = vmatpush1.bf16.msra.mxu0 %v1758
        %1928 = vmatprep.subr.bf16.mxu0 %v1765
        %1929 = vmatpush1.bf16.msra.mxu0 %v1764
        %1930 = vmatprep.subr.bf16.mxu0 %v1771
        %1931 = vmatpush1.bf16.msra.mxu0 %v1770
        %1932 = vmatprep.subr.bf16.mxu0 %v1777
        %1933 = vmatpush1.bf16.msra.mxu0 %v1776
        %1934 = vmatprep.subr.bf16.mxu0 %v1783
        %1935 = vmatpush1.bf16.msra.mxu0 %v1782
        %1936 = vmatprep.subr.bf16.mxu0 %v1789
        %1937 = vmatpush1.bf16.msra.mxu0 %v1788
        %1938 = vmatprep.subr.bf16.mxu0 %v1795
        %1939 = vmatpush1.bf16.msra.mxu0 %v1794
        %1940 = vmatprep.subr.bf16.mxu0 %v1801
        %1941 = vmatpush1.bf16.msra.mxu0 %v1800
        %1942 = vmatprep.subr.bf16.mxu0 %v1807
        %1943 = vmatpush1.bf16.msra.mxu0 %v1806
        %1944 = vmatprep.subr.bf16.mxu0 %v1813
        %1945 = vmatpush1.bf16.msra.mxu0 %v1812
        %1946 = vmatprep.mubr.bf16.mxu0 %v1307
        %1947 = vmatmul.mubr.bf16.gmra.mrb[0].mxu0 %v1306
        %v1948 = vpop.f32.mrb[0].mxu0
        %v1949 = vadd.f32 0.0, %v1948
        %v1950 = vpop.f32.mrb[0].mxu0
        %v1951 = vadd.f32 0.0, %v1950
        %v1952 = vpop.f32.mrb[0].mxu0
        %v1953 = vadd.f32 0.0, %v1952
        %v1954 = vpop.f32.mrb[0].mxu0
        %v1955 = vadd.f32 0.0, %v1954
        %1956 = vmatprep.mubr.bf16.mxu0 %v1309
        %1957 = vmatmul.mubr.bf16.gmra.mrb[0].mxu0 %v1308
        %v1958 = vpop.f32.mrb[0].mxu0
        %v1959 = vadd.f32 0.0, %v1958
        %v1960 = vpop.f32.mrb[0].mxu0
        %v1961 = vadd.f32 0.0, %v1960
        %v1962 = vpop.f32.mrb[0].mxu0
        %v1963 = vadd.f32 0.0, %v1962
        %v1964 = vpop.f32.mrb[0].mxu0
        %v1965 = vadd.f32 0.0, %v1964
        %1966 = vmatprep.mubr.bf16.mxu0 %v1311
        %1967 = vmatmul.mubr.bf16.gmra.mrb[0].mxu0 %v1310
        %v1968 = vpop.f32.mrb[0].mxu0
        %v1969 = vadd.f32 0.0, %v1968
        %v1970 = vpop.f32.mrb[0].mxu0
        %v1971 = vadd.f32 0.0, %v1970
        %v1972 = vpop.f32.mrb[0].mxu0
        %v1973 = vadd.f32 0.0, %v1972
        %v1974 = vpop.f32.mrb[0].mxu0
        %v1975 = vadd.f32 0.0, %v1974
        %1976 = vmatprep.mubr.bf16.mxu0 %v1313
        %1977 = vmatmul.mubr.bf16.gmra.mrb[0].mxu0 %v1312
        %v1978 = vpop.f32.mrb[0].mxu0
        %v1979 = vadd.f32 0.0, %v1978
        %v1980 = vpop.f32.mrb[0].mxu0
        %v1981 = vadd.f32 0.0, %v1980
        %v1982 = vpop.f32.mrb[0].mxu0
        %v1983 = vadd.f32 0.0, %v1982
        %v1984 = vpop.f32.mrb[0].mxu0
        %v1985 = vadd.f32 0.0, %v1984
        %1986 = vmatprep.mubr.bf16.mxu0 %v1315
        %1987 = vmatmul.mubr.bf16.gmra.mrb[0].mxu0 %v1314
        %v1988 = vpop.f32.mrb[0].mxu0
        %v1989 = vadd.f32 0.0, %v1988
        %v1990 = vpop.f32.mrb[0].mxu0
        %v1991 = vadd.f32 0.0, %v1990
        %v1992 = vpop.f32.mrb[0].mxu0
        %v1993 = vadd.f32 0.0, %v1992
        %v1994 = vpop.f32.mrb[0].mxu0
        %v1995 = vadd.f32 0.0, %v1994
        %1996 = vmatprep.mubr.bf16.mxu0 %v1317
        %1997 = vmatmul.mubr.bf16.gmra.mrb[0].mxu0 %v1316
        %v1998 = vpop.f32.mrb[0].mxu0
        %v1999 = vadd.f32 0.0, %v1998
        %v2000 = vpop.f32.mrb[0].mxu0
        %v2001 = vadd.f32 0.0, %v2000
        %v2002 = vpop.f32.mrb[0].mxu0
        %v2003 = vadd.f32 0.0, %v2002
        %v2004 = vpop.f32.mrb[0].mxu0
        %v2005 = vadd.f32 0.0, %v2004
        %2006 = vmatprep.mubr.bf16.mxu0 %v1319
        %2007 = vmatmul.mubr.bf16.gmra.mrb[0].mxu0 %v1318
        %v2008 = vpop.f32.mrb[0].mxu0
        %v2009 = vadd.f32 0.0, %v2008
        %v2010 = vpop.f32.mrb[0].mxu0
        %v2011 = vadd.f32 0.0, %v2010
        %v2012 = vpop.f32.mrb[0].mxu0
        %v2013 = vadd.f32 0.0, %v2012
        %v2014 = vpop.f32.mrb[0].mxu0
        %v2015 = vadd.f32 0.0, %v2014
        %2016 = vmatprep.mubr.bf16.mxu0 %v1321
        %2017 = vmatmul.mubr.bf16.gmra.mrb[0].mxu0 %v1320
        %v2018 = vpop.f32.mrb[0].mxu0
        %v2019 = vadd.f32 0.0, %v2018
        %v2020 = vpop.f32.mrb[0].mxu0
        %v2021 = vadd.f32 0.0, %v2020
        %v2022 = vpop.f32.mrb[0].mxu0
        %v2023 = vadd.f32 0.0, %v2022
        %v2024 = vpop.f32.mrb[0].mxu0
        %v2025 = vadd.f32 0.0, %v2024
        %2026 = vmatprep.mubr.bf16.mxu0 %v1323
        %2027 = vmatmul.mubr.bf16.gmra.mrb[0].mxu0 %v1322
        %v2028 = vpop.f32.mrb[0].mxu0
        %v2029 = vadd.f32 0.0, %v2028
        %v2030 = vpop.f32.mrb[0].mxu0
        %v2031 = vadd.f32 0.0, %v2030
        %v2032 = vpop.f32.mrb[0].mxu0
        %v2033 = vadd.f32 0.0, %v2032
        %v2034 = vpop.f32.mrb[0].mxu0
        %v2035 = vadd.f32 0.0, %v2034
        %2036 = vmatprep.mubr.bf16.mxu0 %v1325
        %2037 = vmatmul.mubr.bf16.gmra.mrb[0].mxu0 %v1324
        %v2038 = vpop.f32.mrb[0].mxu0
        %v2039 = vadd.f32 0.0, %v2038
        %v2040 = vpop.f32.mrb[0].mxu0
        %v2041 = vadd.f32 0.0, %v2040
        %v2042 = vpop.f32.mrb[0].mxu0
        %v2043 = vadd.f32 0.0, %v2042
        %v2044 = vpop.f32.mrb[0].mxu0
        %v2045 = vadd.f32 0.0, %v2044
        %2046 = vmatprep.mubr.bf16.mxu0 %v1327
        %2047 = vmatmul.mubr.bf16.gmra.mrb[0].mxu0 %v1326
        %v2048 = vpop.f32.mrb[0].mxu0
        %v2049 = vadd.f32 0.0, %v2048
        %v2050 = vpop.f32.mrb[0].mxu0
        %v2051 = vadd.f32 0.0, %v2050
        %v2052 = vpop.f32.mrb[0].mxu0
        %v2053 = vadd.f32 0.0, %v2052
        %v2054 = vpop.f32.mrb[0].mxu0
        %v2055 = vadd.f32 0.0, %v2054
        %2056 = vmatprep.mubr.bf16.mxu0 %v1329
        %2057 = vmatmul.mubr.bf16.gmra.mrb[0].mxu0 %v1328
        %v2058 = vpop.f32.mrb[0].mxu0
        %v2059 = vadd.f32 0.0, %v2058
        %v2060 = vpop.f32.mrb[0].mxu0
        %v2061 = vadd.f32 0.0, %v2060
        %v2062 = vpop.f32.mrb[0].mxu0
        %v2063 = vadd.f32 0.0, %v2062
        %v2064 = vpop.f32.mrb[0].mxu0
        %v2065 = vadd.f32 0.0, %v2064
        %2066 = vmatprep.mubr.bf16.mxu0 %v1331
        %2067 = vmatmul.mubr.bf16.gmra.mrb[0].mxu0 %v1330
        %v2068 = vpop.f32.mrb[0].mxu0
        %v2069 = vadd.f32 0.0, %v2068
        %v2070 = vpop.f32.mrb[0].mxu0
        %v2071 = vadd.f32 0.0, %v2070
        %v2072 = vpop.f32.mrb[0].mxu0
        %v2073 = vadd.f32 0.0, %v2072
        %v2074 = vpop.f32.mrb[0].mxu0
        %v2075 = vadd.f32 0.0, %v2074
        %2076 = vmatprep.mubr.bf16.mxu0 %v1333
        %2077 = vmatmul.mubr.bf16.gmra.mrb[0].mxu0 %v1332
        %v2078 = vpop.f32.mrb[0].mxu0
        %v2079 = vadd.f32 0.0, %v2078
        %v2080 = vpop.f32.mrb[0].mxu0
        %v2081 = vadd.f32 0.0, %v2080
        %v2082 = vpop.f32.mrb[0].mxu0
        %v2083 = vadd.f32 0.0, %v2082
        %v2084 = vpop.f32.mrb[0].mxu0
        %v2085 = vadd.f32 0.0, %v2084
        %2086 = vmatprep.mubr.bf16.mxu0 %v1335
        %2087 = vmatmul.mubr.bf16.gmra.mrb[0].mxu0 %v1334
        %v2088 = vpop.f32.mrb[0].mxu0
        %v2089 = vadd.f32 0.0, %v2088
        %v2090 = vpop.f32.mrb[0].mxu0
        %v2091 = vadd.f32 0.0, %v2090
        %v2092 = vpop.f32.mrb[0].mxu0
        %v2093 = vadd.f32 0.0, %v2092
        %v2094 = vpop.f32.mrb[0].mxu0
        %v2095 = vadd.f32 0.0, %v2094
        %2096 = vmatprep.mubr.bf16.mxu0 %v1337
        %2097 = vmatmul.mubr.bf16.gmra.mrb[0].mxu0 %v1336
        %v2098 = vpop.f32.mrb[0].mxu0
        %v2099 = vadd.f32 0.0, %v2098
        %v2100 = vpop.f32.mrb[0].mxu0
        %v2101 = vadd.f32 0.0, %v2100
        %v2102 = vpop.f32.mrb[0].mxu0
        %v2103 = vadd.f32 0.0, %v2102
        %v2104 = vpop.f32.mrb[0].mxu0
        %v2105 = vadd.f32 0.0, %v2104
        %2106 = vdwg.mxu0
        %2107 = vmatprep.subr.bf16.mxu0 %v1725
        %2108 = vmatpush1.bf16.msra.mxu0 %v1724
        %2109 = vmatprep.subr.bf16.mxu0 %v1731
        %2110 = vmatpush1.bf16.msra.mxu0 %v1730
        %2111 = vmatprep.subr.bf16.mxu0 %v1737
        %2112 = vmatpush1.bf16.msra.mxu0 %v1736
        %2113 = vmatprep.subr.bf16.mxu0 %v1743
        %2114 = vmatpush1.bf16.msra.mxu0 %v1742
        %2115 = vmatprep.subr.bf16.mxu0 %v1749
        %2116 = vmatpush1.bf16.msra.mxu0 %v1748
        %2117 = vmatprep.subr.bf16.mxu0 %v1755
        %2118 = vmatpush1.bf16.msra.mxu0 %v1754
        %2119 = vmatprep.subr.bf16.mxu0 %v1761
        %2120 = vmatpush1.bf16.msra.mxu0 %v1760
        %2121 = vmatprep.subr.bf16.mxu0 %v1767
        %2122 = vmatpush1.bf16.msra.mxu0 %v1766
        %2123 = vmatprep.subr.bf16.mxu0 %v1773
        %2124 = vmatpush1.bf16.msra.mxu0 %v1772
        %2125 = vmatprep.subr.bf16.mxu0 %v1779
        %2126 = vmatpush1.bf16.msra.mxu0 %v1778
        %2127 = vmatprep.subr.bf16.mxu0 %v1785
        %2128 = vmatpush1.bf16.msra.mxu0 %v1784
        %2129 = vmatprep.subr.bf16.mxu0 %v1791
        %2130 = vmatpush1.bf16.msra.mxu0 %v1790
        %2131 = vmatprep.subr.bf16.mxu0 %v1797
        %2132 = vmatpush1.bf16.msra.mxu0 %v1796
        %2133 = vmatprep.subr.bf16.mxu0 %v1803
        %2134 = vmatpush1.bf16.msra.mxu0 %v1802
        %2135 = vmatprep.subr.bf16.mxu0 %v1809
        %2136 = vmatpush1.bf16.msra.mxu0 %v1808
        %2137 = vmatprep.subr.bf16.mxu0 %v1815
        %2138 = vmatpush1.bf16.msra.mxu0 %v1814
        %2139 = vmatprep.mubr.bf16.mxu0 %v1307
        %2140 = vmatmul.mubr.bf16.gmra.mrb[0].mxu0 %v1306
        %v2141 = vpop.f32.mrb[0].mxu0
        %v2142 = vadd.f32 0.0, %v2141
        %v2143 = vpop.f32.mrb[0].mxu0
        %v2144 = vadd.f32 0.0, %v2143
        %v2145 = vpop.f32.mrb[0].mxu0
        %v2146 = vadd.f32 0.0, %v2145
        %v2147 = vpop.f32.mrb[0].mxu0
        %v2148 = vadd.f32 0.0, %v2147
        %2149 = vmatprep.mubr.bf16.mxu0 %v1309
        %2150 = vmatmul.mubr.bf16.gmra.mrb[0].mxu0 %v1308
        %v2151 = vpop.f32.mrb[0].mxu0
        %v2152 = vadd.f32 0.0, %v2151
        %v2153 = vpop.f32.mrb[0].mxu0
        %v2154 = vadd.f32 0.0, %v2153
        %v2155 = vpop.f32.mrb[0].mxu0
        %v2156 = vadd.f32 0.0, %v2155
        %v2157 = vpop.f32.mrb[0].mxu0
        %v2158 = vadd.f32 0.0, %v2157
        %2159 = vmatprep.mubr.bf16.mxu0 %v1311
        %2160 = vmatmul.mubr.bf16.gmra.mrb[0].mxu0 %v1310
        %v2161 = vpop.f32.mrb[0].mxu0
        %v2162 = vadd.f32 0.0, %v2161
        %v2163 = vpop.f32.mrb[0].mxu0
        %v2164 = vadd.f32 0.0, %v2163
        %v2165 = vpop.f32.mrb[0].mxu0
        %v2166 = vadd.f32 0.0, %v2165
        %v2167 = vpop.f32.mrb[0].mxu0
        %v2168 = vadd.f32 0.0, %v2167
        %2169 = vmatprep.mubr.bf16.mxu0 %v1313
        %2170 = vmatmul.mubr.bf16.gmra.mrb[0].mxu0 %v1312
        %v2171 = vpop.f32.mrb[0].mxu0
        %v2172 = vadd.f32 0.0, %v2171
        %v2173 = vpop.f32.mrb[0].mxu0
        %v2174 = vadd.f32 0.0, %v2173
        %v2175 = vpop.f32.mrb[0].mxu0
        %v2176 = vadd.f32 0.0, %v2175
        %v2177 = vpop.f32.mrb[0].mxu0
        %v2178 = vadd.f32 0.0, %v2177
        %2179 = vmatprep.mubr.bf16.mxu0 %v1315
        %2180 = vmatmul.mubr.bf16.gmra.mrb[0].mxu0 %v1314
        %v2181 = vpop.f32.mrb[0].mxu0
        %v2182 = vadd.f32 0.0, %v2181
        %v2183 = vpop.f32.mrb[0].mxu0
        %v2184 = vadd.f32 0.0, %v2183
        %v2185 = vpop.f32.mrb[0].mxu0
        %v2186 = vadd.f32 0.0, %v2185
        %v2187 = vpop.f32.mrb[0].mxu0
        %v2188 = vadd.f32 0.0, %v2187
        %2189 = vmatprep.mubr.bf16.mxu0 %v1317
        %2190 = vmatmul.mubr.bf16.gmra.mrb[0].mxu0 %v1316
        %v2191 = vpop.f32.mrb[0].mxu0
        %v2192 = vadd.f32 0.0, %v2191
        %v2193 = vpop.f32.mrb[0].mxu0
        %v2194 = vadd.f32 0.0, %v2193
        %v2195 = vpop.f32.mrb[0].mxu0
        %v2196 = vadd.f32 0.0, %v2195
        %v2197 = vpop.f32.mrb[0].mxu0
        %v2198 = vadd.f32 0.0, %v2197
        %2199 = vmatprep.mubr.bf16.mxu0 %v1319
        %2200 = vmatmul.mubr.bf16.gmra.mrb[0].mxu0 %v1318
        %v2201 = vpop.f32.mrb[0].mxu0
        %v2202 = vadd.f32 0.0, %v2201
        %v2203 = vpop.f32.mrb[0].mxu0
        %v2204 = vadd.f32 0.0, %v2203
        %v2205 = vpop.f32.mrb[0].mxu0
        %v2206 = vadd.f32 0.0, %v2205
        %v2207 = vpop.f32.mrb[0].mxu0
        %v2208 = vadd.f32 0.0, %v2207
        %2209 = vmatprep.mubr.bf16.mxu0 %v1321
        %2210 = vmatmul.mubr.bf16.gmra.mrb[0].mxu0 %v1320
        %v2211 = vpop.f32.mrb[0].mxu0
        %v2212 = vadd.f32 0.0, %v2211
        %v2213 = vpop.f32.mrb[0].mxu0
        %v2214 = vadd.f32 0.0, %v2213
        %v2215 = vpop.f32.mrb[0].mxu0
        %v2216 = vadd.f32 0.0, %v2215
        %v2217 = vpop.f32.mrb[0].mxu0
        %v2218 = vadd.f32 0.0, %v2217
        %2219 = vmatprep.mubr.bf16.mxu0 %v1323
        %2220 = vmatmul.mubr.bf16.gmra.mrb[0].mxu0 %v1322
        %v2221 = vpop.f32.mrb[0].mxu0
        %v2222 = vadd.f32 0.0, %v2221
        %v2223 = vpop.f32.mrb[0].mxu0
        %v2224 = vadd.f32 0.0, %v2223
        %v2225 = vpop.f32.mrb[0].mxu0
        %v2226 = vadd.f32 0.0, %v2225
        %v2227 = vpop.f32.mrb[0].mxu0
        %v2228 = vadd.f32 0.0, %v2227
        %2229 = vmatprep.mubr.bf16.mxu0 %v1325
        %2230 = vmatmul.mubr.bf16.gmra.mrb[0].mxu0 %v1324
        %v2231 = vpop.f32.mrb[0].mxu0
        %v2232 = vadd.f32 0.0, %v2231
        %v2233 = vpop.f32.mrb[0].mxu0
        %v2234 = vadd.f32 0.0, %v2233
        %v2235 = vpop.f32.mrb[0].mxu0
        %v2236 = vadd.f32 0.0, %v2235
        %v2237 = vpop.f32.mrb[0].mxu0
        %v2238 = vadd.f32 0.0, %v2237
        %2239 = vmatprep.mubr.bf16.mxu0 %v1327
        %2240 = vmatmul.mubr.bf16.gmra.mrb[0].mxu0 %v1326
        %v2241 = vpop.f32.mrb[0].mxu0
        %v2242 = vadd.f32 0.0, %v2241
        %v2243 = vpop.f32.mrb[0].mxu0
        %v2244 = vadd.f32 0.0, %v2243
        %v2245 = vpop.f32.mrb[0].mxu0
        %v2246 = vadd.f32 0.0, %v2245
        %v2247 = vpop.f32.mrb[0].mxu0
        %v2248 = vadd.f32 0.0, %v2247
        %2249 = vmatprep.mubr.bf16.mxu0 %v1329
        %2250 = vmatmul.mubr.bf16.gmra.mrb[0].mxu0 %v1328
        %v2251 = vpop.f32.mrb[0].mxu0
        %v2252 = vadd.f32 0.0, %v2251
        %v2253 = vpop.f32.mrb[0].mxu0
        %v2254 = vadd.f32 0.0, %v2253
        %v2255 = vpop.f32.mrb[0].mxu0
        %v2256 = vadd.f32 0.0, %v2255
        %v2257 = vpop.f32.mrb[0].mxu0
        %v2258 = vadd.f32 0.0, %v2257
        %2259 = vmatprep.mubr.bf16.mxu0 %v1331
        %2260 = vmatmul.mubr.bf16.gmra.mrb[0].mxu0 %v1330
        %v2261 = vpop.f32.mrb[0].mxu0
        %v2262 = vadd.f32 0.0, %v2261
        %v2263 = vpop.f32.mrb[0].mxu0
        %v2264 = vadd.f32 0.0, %v2263
        %v2265 = vpop.f32.mrb[0].mxu0
        %v2266 = vadd.f32 0.0, %v2265
        %v2267 = vpop.f32.mrb[0].mxu0
        %v2268 = vadd.f32 0.0, %v2267
        %2269 = vmatprep.mubr.bf16.mxu0 %v1333
        %2270 = vmatmul.mubr.bf16.gmra.mrb[0].mxu0 %v1332
        %v2271 = vpop.f32.mrb[0].mxu0
        %v2272 = vadd.f32 0.0, %v2271
        %v2273 = vpop.f32.mrb[0].mxu0
        %v2274 = vadd.f32 0.0, %v2273
        %v2275 = vpop.f32.mrb[0].mxu0
        %v2276 = vadd.f32 0.0, %v2275
        %v2277 = vpop.f32.mrb[0].mxu0
        %v2278 = vadd.f32 0.0, %v2277
        %2279 = vmatprep.mubr.bf16.mxu0 %v1335
        %2280 = vmatmul.mubr.bf16.gmra.mrb[0].mxu0 %v1334
        %v2281 = vpop.f32.mrb[0].mxu0
        %v2282 = vadd.f32 0.0, %v2281
        %v2283 = vpop.f32.mrb[0].mxu0
        %v2284 = vadd.f32 0.0, %v2283
        %v2285 = vpop.f32.mrb[0].mxu0
        %v2286 = vadd.f32 0.0, %v2285
        %v2287 = vpop.f32.mrb[0].mxu0
        %v2288 = vadd.f32 0.0, %v2287
        %2289 = vmatprep.mubr.bf16.mxu0 %v1337
        %2290 = vmatmul.mubr.bf16.gmra.mrb[0].mxu0 %v1336
        %v2291 = vpop.f32.mrb[0].mxu0
        %v2292 = vadd.f32 0.0, %v2291
        %v2293 = vpop.f32.mrb[0].mxu0
        %v2294 = vadd.f32 0.0, %v2293
        %v2295 = vpop.f32.mrb[0].mxu0
        %v2296 = vadd.f32 0.0, %v2295
        %v2297 = vpop.f32.mrb[0].mxu0
        %v2298 = vadd.f32 0.0, %v2297
        %2299 = vdwg.mxu0
        %2300 = vmatprep.subr.bf16.mxu0 %v1727
        %2301 = vmatpush1.bf16.msra.mxu0 %v1726
        %2302 = vmatprep.subr.bf16.mxu0 %v1733
        %2303 = vmatpush1.bf16.msra.mxu0 %v1732
        %2304 = vmatprep.subr.bf16.mxu0 %v1739
        %2305 = vmatpush1.bf16.msra.mxu0 %v1738
        %2306 = vmatprep.subr.bf16.mxu0 %v1745
        %2307 = vmatpush1.bf16.msra.mxu0 %v1744
        %2308 = vmatprep.subr.bf16.mxu0 %v1751
        %2309 = vmatpush1.bf16.msra.mxu0 %v1750
        %2310 = vmatprep.subr.bf16.mxu0 %v1757
        %2311 = vmatpush1.bf16.msra.mxu0 %v1756
        %2312 = vmatprep.subr.bf16.mxu0 %v1763
        %2313 = vmatpush1.bf16.msra.mxu0 %v1762
        %2314 = vmatprep.subr.bf16.mxu0 %v1769
        %2315 = vmatpush1.bf16.msra.mxu0 %v1768
        %2316 = vmatprep.subr.bf16.mxu0 %v1775
        %2317 = vmatpush1.bf16.msra.mxu0 %v1774
        %2318 = vmatprep.subr.bf16.mxu0 %v1781
        %2319 = vmatpush1.bf16.msra.mxu0 %v1780
        %2320 = vmatprep.subr.bf16.mxu0 %v1787
        %2321 = vmatpush1.bf16.msra.mxu0 %v1786
        %2322 = vmatprep.subr.bf16.mxu0 %v1793
        %2323 = vmatpush1.bf16.msra.mxu0 %v1792
        %2324 = vmatprep.subr.bf16.mxu0 %v1799
        %2325 = vmatpush1.bf16.msra.mxu0 %v1798
        %2326 = vmatprep.subr.bf16.mxu0 %v1805
        %2327 = vmatpush1.bf16.msra.mxu0 %v1804
        %2328 = vmatprep.subr.bf16.mxu0 %v1811
        %2329 = vmatpush1.bf16.msra.mxu0 %v1810
        %2330 = vmatprep.subr.bf16.mxu0 %v1817
        %2331 = vmatpush1.bf16.msra.mxu0 %v1816
        %2332 = vmatprep.mubr.bf16.mxu0 %v1307
        %2333 = vmatmul.mubr.bf16.gmra.mrb[0].mxu0 %v1306
        %v2334 = vpop.f32.mrb[0].mxu0
        %v2335 = vadd.f32 0.0, %v2334
        %v2336 = vpop.f32.mrb[0].mxu0
        %v2337 = vadd.f32 0.0, %v2336
        %v2338 = vpop.f32.mrb[0].mxu0
        %v2339 = vadd.f32 0.0, %v2338
        %v2340 = vpop.f32.mrb[0].mxu0
        %v2341 = vadd.f32 0.0, %v2340
        %2342 = vmatprep.mubr.bf16.mxu0 %v1309
        %2343 = vmatmul.mubr.bf16.gmra.mrb[0].mxu0 %v1308
        %v2344 = vpop.f32.mrb[0].mxu0
        %v2345 = vadd.f32 0.0, %v2344
        %v2346 = vpop.f32.mrb[0].mxu0
        %v2347 = vadd.f32 0.0, %v2346
        %v2348 = vpop.f32.mrb[0].mxu0
        %v2349 = vadd.f32 0.0, %v2348
        %v2350 = vpop.f32.mrb[0].mxu0
        %v2351 = vadd.f32 0.0, %v2350
        %2352 = vmatprep.mubr.bf16.mxu0 %v1311
        %2353 = vmatmul.mubr.bf16.gmra.mrb[0].mxu0 %v1310
        %v2354 = vpop.f32.mrb[0].mxu0
        %v2355 = vadd.f32 0.0, %v2354
        %v2356 = vpop.f32.mrb[0].mxu0
        %v2357 = vadd.f32 0.0, %v2356
        %v2358 = vpop.f32.mrb[0].mxu0
        %v2359 = vadd.f32 0.0, %v2358
        %v2360 = vpop.f32.mrb[0].mxu0
        %v2361 = vadd.f32 0.0, %v2360
        %2362 = vmatprep.mubr.bf16.mxu0 %v1313
        %2363 = vmatmul.mubr.bf16.gmra.mrb[0].mxu0 %v1312
        %v2364 = vpop.f32.mrb[0].mxu0
        %v2365 = vadd.f32 0.0, %v2364
        %v2366 = vpop.f32.mrb[0].mxu0
        %v2367 = vadd.f32 0.0, %v2366
        %v2368 = vpop.f32.mrb[0].mxu0
        %v2369 = vadd.f32 0.0, %v2368
        %v2370 = vpop.f32.mrb[0].mxu0
        %v2371 = vadd.f32 0.0, %v2370
        %2372 = vmatprep.mubr.bf16.mxu0 %v1315
        %2373 = vmatmul.mubr.bf16.gmra.mrb[0].mxu0 %v1314
        %v2374 = vpop.f32.mrb[0].mxu0
        %v2375 = vadd.f32 0.0, %v2374
        %v2376 = vpop.f32.mrb[0].mxu0
        %v2377 = vadd.f32 0.0, %v2376
        %v2378 = vpop.f32.mrb[0].mxu0
        %v2379 = vadd.f32 0.0, %v2378
        %v2380 = vpop.f32.mrb[0].mxu0
        %v2381 = vadd.f32 0.0, %v2380
        %2382 = vmatprep.mubr.bf16.mxu0 %v1317
        %2383 = vmatmul.mubr.bf16.gmra.mrb[0].mxu0 %v1316
        %v2384 = vpop.f32.mrb[0].mxu0
        %v2385 = vadd.f32 0.0, %v2384
        %v2386 = vpop.f32.mrb[0].mxu0
        %v2387 = vadd.f32 0.0, %v2386
        %v2388 = vpop.f32.mrb[0].mxu0
        %v2389 = vadd.f32 0.0, %v2388
        %v2390 = vpop.f32.mrb[0].mxu0
        %v2391 = vadd.f32 0.0, %v2390
        %2392 = vmatprep.mubr.bf16.mxu0 %v1319
        %2393 = vmatmul.mubr.bf16.gmra.mrb[0].mxu0 %v1318
        %v2394 = vpop.f32.mrb[0].mxu0
        %v2395 = vadd.f32 0.0, %v2394
        %v2396 = vpop.f32.mrb[0].mxu0
        %v2397 = vadd.f32 0.0, %v2396
        %v2398 = vpop.f32.mrb[0].mxu0
        %v2399 = vadd.f32 0.0, %v2398
        %v2400 = vpop.f32.mrb[0].mxu0
        %v2401 = vadd.f32 0.0, %v2400
        %2402 = vmatprep.mubr.bf16.mxu0 %v1321
        %2403 = vmatmul.mubr.bf16.gmra.mrb[0].mxu0 %v1320
        %v2404 = vpop.f32.mrb[0].mxu0
        %v2405 = vadd.f32 0.0, %v2404
        %v2406 = vpop.f32.mrb[0].mxu0
        %v2407 = vadd.f32 0.0, %v2406
        %v2408 = vpop.f32.mrb[0].mxu0
        %v2409 = vadd.f32 0.0, %v2408
        %v2410 = vpop.f32.mrb[0].mxu0
        %v2411 = vadd.f32 0.0, %v2410
        %2412 = vmatprep.mubr.bf16.mxu0 %v1323
        %2413 = vmatmul.mubr.bf16.gmra.mrb[0].mxu0 %v1322
        %v2414 = vpop.f32.mrb[0].mxu0
        %v2415 = vadd.f32 0.0, %v2414
        %v2416 = vpop.f32.mrb[0].mxu0
        %v2417 = vadd.f32 0.0, %v2416
        %v2418 = vpop.f32.mrb[0].mxu0
        %v2419 = vadd.f32 0.0, %v2418
        %v2420 = vpop.f32.mrb[0].mxu0
        %v2421 = vadd.f32 0.0, %v2420
        %2422 = vmatprep.mubr.bf16.mxu0 %v1325
        %2423 = vmatmul.mubr.bf16.gmra.mrb[0].mxu0 %v1324
        %v2424 = vpop.f32.mrb[0].mxu0
        %v2425 = vadd.f32 0.0, %v2424
        %v2426 = vpop.f32.mrb[0].mxu0
        %v2427 = vadd.f32 0.0, %v2426
        %v2428 = vpop.f32.mrb[0].mxu0
        %v2429 = vadd.f32 0.0, %v2428
        %v2430 = vpop.f32.mrb[0].mxu0
        %v2431 = vadd.f32 0.0, %v2430
        %2432 = vmatprep.mubr.bf16.mxu0 %v1327
        %2433 = vmatmul.mubr.bf16.gmra.mrb[0].mxu0 %v1326
        %v2434 = vpop.f32.mrb[0].mxu0
        %v2435 = vadd.f32 0.0, %v2434
        %v2436 = vpop.f32.mrb[0].mxu0
        %v2437 = vadd.f32 0.0, %v2436
        %v2438 = vpop.f32.mrb[0].mxu0
        %v2439 = vadd.f32 0.0, %v2438
        %v2440 = vpop.f32.mrb[0].mxu0
        %v2441 = vadd.f32 0.0, %v2440
        %2442 = vmatprep.mubr.bf16.mxu0 %v1329
        %2443 = vmatmul.mubr.bf16.gmra.mrb[0].mxu0 %v1328
        %v2444 = vpop.f32.mrb[0].mxu0
        %v2445 = vadd.f32 0.0, %v2444
        %v2446 = vpop.f32.mrb[0].mxu0
        %v2447 = vadd.f32 0.0, %v2446
        %v2448 = vpop.f32.mrb[0].mxu0
        %v2449 = vadd.f32 0.0, %v2448
        %v2450 = vpop.f32.mrb[0].mxu0
        %v2451 = vadd.f32 0.0, %v2450
        %2452 = vmatprep.mubr.bf16.mxu0 %v1331
        %2453 = vmatmul.mubr.bf16.gmra.mrb[0].mxu0 %v1330
        %v2454 = vpop.f32.mrb[0].mxu0
        %v2455 = vadd.f32 0.0, %v2454
        %v2456 = vpop.f32.mrb[0].mxu0
        %v2457 = vadd.f32 0.0, %v2456
        %v2458 = vpop.f32.mrb[0].mxu0
        %v2459 = vadd.f32 0.0, %v2458
        %v2460 = vpop.f32.mrb[0].mxu0
        %v2461 = vadd.f32 0.0, %v2460
        %2462 = vmatprep.mubr.bf16.mxu0 %v1333
        %2463 = vmatmul.mubr.bf16.gmra.mrb[0].mxu0 %v1332
        %v2464 = vpop.f32.mrb[0].mxu0
        %v2465 = vadd.f32 0.0, %v2464
        %v2466 = vpop.f32.mrb[0].mxu0
        %v2467 = vadd.f32 0.0, %v2466
        %v2468 = vpop.f32.mrb[0].mxu0
        %v2469 = vadd.f32 0.0, %v2468
        %v2470 = vpop.f32.mrb[0].mxu0
        %v2471 = vadd.f32 0.0, %v2470
        %2472 = vmatprep.mubr.bf16.mxu0 %v1335
        %2473 = vmatmul.mubr.bf16.gmra.mrb[0].mxu0 %v1334
        %v2474 = vpop.f32.mrb[0].mxu0
        %v2475 = vadd.f32 0.0, %v2474
        %v2476 = vpop.f32.mrb[0].mxu0
        %v2477 = vadd.f32 0.0, %v2476
        %v2478 = vpop.f32.mrb[0].mxu0
        %v2479 = vadd.f32 0.0, %v2478
        %v2480 = vpop.f32.mrb[0].mxu0
        %v2481 = vadd.f32 0.0, %v2480
        %2482 = vmatprep.mubr.bf16.mxu0 %v1337
        %2483 = vmatmul.mubr.bf16.gmra.mrb[0].mxu0 %v1336
        %v2484 = vpop.f32.mrb[0].mxu0
        %v2485 = vadd.f32 0.0, %v2484
        %v2486 = vpop.f32.mrb[0].mxu0
        %v2487 = vadd.f32 0.0, %v2486
        %v2488 = vpop.f32.mrb[0].mxu0
        %v2489 = vadd.f32 0.0, %v2488
        %v2490 = vpop.f32.mrb[0].mxu0
        %v2491 = vadd.f32 0.0, %v2490
        %2492 = vdwg.mxu0
        %v2493 = vld [vmem:[#allocation6] sm:$0xff]
        %v2494 = vld [vmem:[#allocation6 + $0x8] sm:$0xff]
        %v2495 = vld [vmem:[#allocation6 + $0x10] sm:$0xff]
        %v2496 = vld [vmem:[#allocation6 + $0x18] sm:$0xff]
        %v2497 = vld [vmem:[#allocation6 + $0x20] sm:$0xff]
        %v2498 = vld [vmem:[#allocation6 + $0x28] sm:$0xff]
        %v2499 = vld [vmem:[#allocation6 + $0x30] sm:$0xff]
        %v2500 = vld [vmem:[#allocation6 + $0x38] sm:$0xff]
        %v2501 = vld [vmem:[#allocation6 + $0x40] sm:$0xff]
        %v2502 = vld [vmem:[#allocation6 + $0x48] sm:$0xff]
        %v2503 = vld [vmem:[#allocation6 + $0x50] sm:$0xff]
        %v2504 = vld [vmem:[#allocation6 + $0x58] sm:$0xff]
        %v2505 = vld [vmem:[#allocation6 + $0x60] sm:$0xff]
        %v2506 = vld [vmem:[#allocation6 + $0x68] sm:$0xff]
        %v2507 = vld [vmem:[#allocation6 + $0x70] sm:$0xff]
        %v2508 = vld [vmem:[#allocation6 + $0x78] sm:$0xff]
        %v2509 = vld [vmem:[#allocation8] sm:$0xff]
        %v2510 = vld [vmem:[#allocation8 + $0x8] sm:$0xff]
        %v2511 = vld [vmem:[#allocation8 + $0x10] sm:$0xff]
        %v2512 = vld [vmem:[#allocation8 + $0x18] sm:$0xff]
        %v2513 = vld [vmem:[#allocation8 + $0x20] sm:$0xff]
        %v2514 = vld [vmem:[#allocation8 + $0x28] sm:$0xff]
        %v2515 = vld [vmem:[#allocation8 + $0x30] sm:$0xff]
        %v2516 = vld [vmem:[#allocation8 + $0x38] sm:$0xff]
        %v2517 = vld [vmem:[#allocation8 + $0x40] sm:$0xff]
        %v2518 = vld [vmem:[#allocation8 + $0x48] sm:$0xff]
        %v2519 = vld [vmem:[#allocation8 + $0x50] sm:$0xff]
        %v2520 = vld [vmem:[#allocation8 + $0x58] sm:$0xff]
        %v2521 = vld [vmem:[#allocation8 + $0x60] sm:$0xff]
        %v2522 = vld [vmem:[#allocation8 + $0x68] sm:$0xff]
        %v2523 = vld [vmem:[#allocation8 + $0x70] sm:$0xff]
        %v2524 = vld [vmem:[#allocation8 + $0x78] sm:$0xff]
        %v2525 = vmul.f32 %v1949, %v2493
        %v2526 = vmul.f32 %v1953, %v2494
        %v2527 = vmul.f32 %v1959, %v2495
        %v2528 = vmul.f32 %v1963, %v2496
        %v2529 = vmul.f32 %v1969, %v2497
        %v2530 = vmul.f32 %v1973, %v2498
        %v2531 = vmul.f32 %v1979, %v2499
        %v2532 = vmul.f32 %v1983, %v2500
        %v2533 = vmul.f32 %v1989, %v2501
        %v2534 = vmul.f32 %v1993, %v2502
        %v2535 = vmul.f32 %v1999, %v2503
        %v2536 = vmul.f32 %v2003, %v2504
        %v2537 = vmul.f32 %v2009, %v2505
        %v2538 = vmul.f32 %v2013, %v2506
        %v2539 = vmul.f32 %v2019, %v2507
        %v2540 = vmul.f32 %v2023, %v2508
        %v2541 = vmul.f32 %v2029, %v2493
        %v2542 = vmul.f32 %v2033, %v2494
        %v2543 = vmul.f32 %v2039, %v2495
        %v2544 = vmul.f32 %v2043, %v2496
        %v2545 = vmul.f32 %v2049, %v2497
        %v2546 = vmul.f32 %v2053, %v2498
        %v2547 = vmul.f32 %v2059, %v2499
        %v2548 = vmul.f32 %v2063, %v2500
        %v2549 = vmul.f32 %v2069, %v2501
        %v2550 = vmul.f32 %v2073, %v2502
        %v2551 = vmul.f32 %v2079, %v2503
        %v2552 = vmul.f32 %v2083, %v2504
        %v2553 = vmul.f32 %v2089, %v2505
        %v2554 = vmul.f32 %v2093, %v2506
        %v2555 = vmul.f32 %v2099, %v2507
        %v2556 = vmul.f32 %v2103, %v2508
        %2557 = vrot.lane.b32.xlu0 %v1949, 64
        %v2558 = vpop.permute.xlu0 %2557
        %2559 = vrot.lane.b32.xlu0 %v1953, 64
        %v2560 = vpop.permute.xlu0 %2559
        %2561 = vrot.lane.b32.xlu0 %v1959, 64
        %v2562 = vpop.permute.xlu0 %2561
        %2563 = vrot.lane.b32.xlu0 %v1963, 64
        %v2564 = vpop.permute.xlu0 %2563
        %2565 = vrot.lane.b32.xlu0 %v1969, 64
        %v2566 = vpop.permute.xlu0 %2565
        %2567 = vrot.lane.b32.xlu0 %v1973, 64
        %v2568 = vpop.permute.xlu0 %2567
        %2569 = vrot.lane.b32.xlu0 %v1979, 64
        %v2570 = vpop.permute.xlu0 %2569
        %2571 = vrot.lane.b32.xlu0 %v1983, 64
        %v2572 = vpop.permute.xlu0 %2571
        %2573 = vrot.lane.b32.xlu0 %v1989, 64
        %v2574 = vpop.permute.xlu0 %2573
        %2575 = vrot.lane.b32.xlu0 %v1993, 64
        %v2576 = vpop.permute.xlu0 %2575
        %2577 = vrot.lane.b32.xlu0 %v1999, 64
        %v2578 = vpop.permute.xlu0 %2577
        %2579 = vrot.lane.b32.xlu0 %v2003, 64
        %v2580 = vpop.permute.xlu0 %2579
        %2581 = vrot.lane.b32.xlu0 %v2009, 64
        %v2582 = vpop.permute.xlu0 %2581
        %2583 = vrot.lane.b32.xlu0 %v2013, 64
        %v2584 = vpop.permute.xlu0 %2583
        %2585 = vrot.lane.b32.xlu0 %v2019, 64
        %v2586 = vpop.permute.xlu0 %2585
        %2587 = vrot.lane.b32.xlu0 %v2023, 64
        %v2588 = vpop.permute.xlu0 %2587
        %2589 = vrot.lane.b32.xlu0 %v2029, 64
        %v2590 = vpop.permute.xlu0 %2589
        %2591 = vrot.lane.b32.xlu0 %v2033, 64
        %v2592 = vpop.permute.xlu0 %2591
        %2593 = vrot.lane.b32.xlu0 %v2039, 64
        %v2594 = vpop.permute.xlu0 %2593
        %2595 = vrot.lane.b32.xlu0 %v2043, 64
        %v2596 = vpop.permute.xlu0 %2595
        %2597 = vrot.lane.b32.xlu0 %v2049, 64
        %v2598 = vpop.permute.xlu0 %2597
        %2599 = vrot.lane.b32.xlu0 %v2053, 64
        %v2600 = vpop.permute.xlu0 %2599
        %2601 = vrot.lane.b32.xlu0 %v2059, 64
        %v2602 = vpop.permute.xlu0 %2601
        %2603 = vrot.lane.b32.xlu0 %v2063, 64
        %v2604 = vpop.permute.xlu0 %2603
        %2605 = vrot.lane.b32.xlu0 %v2069, 64
        %v2606 = vpop.permute.xlu0 %2605
        %2607 = vrot.lane.b32.xlu0 %v2073, 64
        %v2608 = vpop.permute.xlu0 %2607
        %2609 = vrot.lane.b32.xlu0 %v2079, 64
        %v2610 = vpop.permute.xlu0 %2609
        %2611 = vrot.lane.b32.xlu0 %v2083, 64
        %v2612 = vpop.permute.xlu0 %2611
        %2613 = vrot.lane.b32.xlu0 %v2089, 64
        %v2614 = vpop.permute.xlu0 %2613
        %2615 = vrot.lane.b32.xlu0 %v2093, 64
        %v2616 = vpop.permute.xlu0 %2615
        %2617 = vrot.lane.b32.xlu0 %v2099, 64
        %v2618 = vpop.permute.xlu0 %2617
        %2619 = vrot.lane.b32.xlu0 %v2103, 64
        %v2620 = vpop.permute.xlu0 %2619
        %v2621 = vmul.f32 %v2558, %v2509
        %v2622 = vmul.f32 %v2560, %v2510
        %v2623 = vmul.f32 %v2562, %v2511
        %v2624 = vmul.f32 %v2564, %v2512
        %v2625 = vmul.f32 %v2566, %v2513
        %v2626 = vmul.f32 %v2568, %v2514
        %v2627 = vmul.f32 %v2570, %v2515
        %v2628 = vmul.f32 %v2572, %v2516
        %v2629 = vmul.f32 %v2574, %v2517
        %v2630 = vmul.f32 %v2576, %v2518
        %v2631 = vmul.f32 %v2578, %v2519
        %v2632 = vmul.f32 %v2580, %v2520
        %v2633 = vmul.f32 %v2582, %v2521
        %v2634 = vmul.f32 %v2584, %v2522
        %v2635 = vmul.f32 %v2586, %v2523
        %v2636 = vmul.f32 %v2588, %v2524
        %v2637 = vmul.f32 %v2590, %v2509
        %v2638 = vmul.f32 %v2592, %v2510
        %v2639 = vmul.f32 %v2594, %v2511
        %v2640 = vmul.f32 %v2596, %v2512
        %v2641 = vmul.f32 %v2598, %v2513
        %v2642 = vmul.f32 %v2600, %v2514
        %v2643 = vmul.f32 %v2602, %v2515
        %v2644 = vmul.f32 %v2604, %v2516
        %v2645 = vmul.f32 %v2606, %v2517
        %v2646 = vmul.f32 %v2608, %v2518
        %v2647 = vmul.f32 %v2610, %v2519
        %v2648 = vmul.f32 %v2612, %v2520
        %v2649 = vmul.f32 %v2614, %v2521
        %v2650 = vmul.f32 %v2616, %v2522
        %v2651 = vmul.f32 %v2618, %v2523
        %v2652 = vmul.f32 %v2620, %v2524
        %v2653 = vadd.f32 %v2525, %v2621
        %v2654 = vadd.f32 %v2526, %v2622
        %v2655 = vadd.f32 %v2527, %v2623
        %v2656 = vadd.f32 %v2528, %v2624
        %v2657 = vadd.f32 %v2529, %v2625
        %v2658 = vadd.f32 %v2530, %v2626
        %v2659 = vadd.f32 %v2531, %v2627
        %v2660 = vadd.f32 %v2532, %v2628
        %v2661 = vadd.f32 %v2533, %v2629
        %v2662 = vadd.f32 %v2534, %v2630
        %v2663 = vadd.f32 %v2535, %v2631
        %v2664 = vadd.f32 %v2536, %v2632
        %v2665 = vadd.f32 %v2537, %v2633
        %v2666 = vadd.f32 %v2538, %v2634
        %v2667 = vadd.f32 %v2539, %v2635
        %v2668 = vadd.f32 %v2540, %v2636
        %v2669 = vadd.f32 %v2541, %v2637
        %v2670 = vadd.f32 %v2542, %v2638
        %v2671 = vadd.f32 %v2543, %v2639
        %v2672 = vadd.f32 %v2544, %v2640
        %v2673 = vadd.f32 %v2545, %v2641
        %v2674 = vadd.f32 %v2546, %v2642
        %v2675 = vadd.f32 %v2547, %v2643
        %v2676 = vadd.f32 %v2548, %v2644
        %v2677 = vadd.f32 %v2549, %v2645
        %v2678 = vadd.f32 %v2550, %v2646
        %v2679 = vadd.f32 %v2551, %v2647
        %v2680 = vadd.f32 %v2552, %v2648
        %v2681 = vadd.f32 %v2553, %v2649
        %v2682 = vadd.f32 %v2554, %v2650
        %v2683 = vadd.f32 %v2555, %v2651
        %v2684 = vadd.f32 %v2556, %v2652
        %v2685 = vmul.f32 %v2142, %v2493
        %v2686 = vmul.f32 %v2146, %v2494
        %v2687 = vmul.f32 %v2152, %v2495
        %v2688 = vmul.f32 %v2156, %v2496
        %v2689 = vmul.f32 %v2162, %v2497
        %v2690 = vmul.f32 %v2166, %v2498
        %v2691 = vmul.f32 %v2172, %v2499
        %v2692 = vmul.f32 %v2176, %v2500
        %v2693 = vmul.f32 %v2182, %v2501
        %v2694 = vmul.f32 %v2186, %v2502
        %v2695 = vmul.f32 %v2192, %v2503
        %v2696 = vmul.f32 %v2196, %v2504
        %v2697 = vmul.f32 %v2202, %v2505
        %v2698 = vmul.f32 %v2206, %v2506
        %v2699 = vmul.f32 %v2212, %v2507
        %v2700 = vmul.f32 %v2216, %v2508
        %v2701 = vmul.f32 %v2222, %v2493
        %v2702 = vmul.f32 %v2226, %v2494
        %v2703 = vmul.f32 %v2232, %v2495
        %v2704 = vmul.f32 %v2236, %v2496
        %v2705 = vmul.f32 %v2242, %v2497
        %v2706 = vmul.f32 %v2246, %v2498
        %v2707 = vmul.f32 %v2252, %v2499
        %v2708 = vmul.f32 %v2256, %v2500
        %v2709 = vmul.f32 %v2262, %v2501
        %v2710 = vmul.f32 %v2266, %v2502
        %v2711 = vmul.f32 %v2272, %v2503
        %v2712 = vmul.f32 %v2276, %v2504
        %v2713 = vmul.f32 %v2282, %v2505
        %v2714 = vmul.f32 %v2286, %v2506
        %v2715 = vmul.f32 %v2292, %v2507
        %v2716 = vmul.f32 %v2296, %v2508
        %2717 = vrot.lane.b32.xlu0 %v2142, 64
        %v2718 = vpop.permute.xlu0 %2717
        %2719 = vrot.lane.b32.xlu0 %v2146, 64
        %v2720 = vpop.permute.xlu0 %2719
        %2721 = vrot.lane.b32.xlu0 %v2152, 64
        %v2722 = vpop.permute.xlu0 %2721
        %2723 = vrot.lane.b32.xlu0 %v2156, 64
        %v2724 = vpop.permute.xlu0 %2723
        %2725 = vrot.lane.b32.xlu0 %v2162, 64
        %v2726 = vpop.permute.xlu0 %2725
        %2727 = vrot.lane.b32.xlu0 %v2166, 64
        %v2728 = vpop.permute.xlu0 %2727
        %2729 = vrot.lane.b32.xlu0 %v2172, 64
        %v2730 = vpop.permute.xlu0 %2729
        %2731 = vrot.lane.b32.xlu0 %v2176, 64
        %v2732 = vpop.permute.xlu0 %2731
        %2733 = vrot.lane.b32.xlu0 %v2182, 64
        %v2734 = vpop.permute.xlu0 %2733
        %2735 = vrot.lane.b32.xlu0 %v2186, 64
        %v2736 = vpop.permute.xlu0 %2735
        %2737 = vrot.lane.b32.xlu0 %v2192, 64
        %v2738 = vpop.permute.xlu0 %2737
        %2739 = vrot.lane.b32.xlu0 %v2196, 64
        %v2740 = vpop.permute.xlu0 %2739
        %2741 = vrot.lane.b32.xlu0 %v2202, 64
        %v2742 = vpop.permute.xlu0 %2741
        %2743 = vrot.lane.b32.xlu0 %v2206, 64
        %v2744 = vpop.permute.xlu0 %2743
        %2745 = vrot.lane.b32.xlu0 %v2212, 64
        %v2746 = vpop.permute.xlu0 %2745
        %2747 = vrot.lane.b32.xlu0 %v2216, 64
        %v2748 = vpop.permute.xlu0 %2747
        %2749 = vrot.lane.b32.xlu0 %v2222, 64
        %v2750 = vpop.permute.xlu0 %2749
        %2751 = vrot.lane.b32.xlu0 %v2226, 64
        %v2752 = vpop.permute.xlu0 %2751
        %2753 = vrot.lane.b32.xlu0 %v2232, 64
        %v2754 = vpop.permute.xlu0 %2753
        %2755 = vrot.lane.b32.xlu0 %v2236, 64
        %v2756 = vpop.permute.xlu0 %2755
        %2757 = vrot.lane.b32.xlu0 %v2242, 64
        %v2758 = vpop.permute.xlu0 %2757
        %2759 = vrot.lane.b32.xlu0 %v2246, 64
        %v2760 = vpop.permute.xlu0 %2759
        %2761 = vrot.lane.b32.xlu0 %v2252, 64
        %v2762 = vpop.permute.xlu0 %2761
        %2763 = vrot.lane.b32.xlu0 %v2256, 64
        %v2764 = vpop.permute.xlu0 %2763
        %2765 = vrot.lane.b32.xlu0 %v2262, 64
        %v2766 = vpop.permute.xlu0 %2765
        %2767 = vrot.lane.b32.xlu0 %v2266, 64
        %v2768 = vpop.permute.xlu0 %2767
        %2769 = vrot.lane.b32.xlu0 %v2272, 64
        %v2770 = vpop.permute.xlu0 %2769
        %2771 = vrot.lane.b32.xlu0 %v2276, 64
        %v2772 = vpop.permute.xlu0 %2771
        %2773 = vrot.lane.b32.xlu0 %v2282, 64
        %v2774 = vpop.permute.xlu0 %2773
        %2775 = vrot.lane.b32.xlu0 %v2286, 64
        %v2776 = vpop.permute.xlu0 %2775
        %2777 = vrot.lane.b32.xlu0 %v2292, 64
        %v2778 = vpop.permute.xlu0 %2777
        %2779 = vrot.lane.b32.xlu0 %v2296, 64
        %v2780 = vpop.permute.xlu0 %2779
        %v2781 = vmul.f32 %v2718, %v2509
        %v2782 = vmul.f32 %v2720, %v2510
        %v2783 = vmul.f32 %v2722, %v2511
        %v2784 = vmul.f32 %v2724, %v2512
        %v2785 = vmul.f32 %v2726, %v2513
        %v2786 = vmul.f32 %v2728, %v2514
        %v2787 = vmul.f32 %v2730, %v2515
        %v2788 = vmul.f32 %v2732, %v2516
        %v2789 = vmul.f32 %v2734, %v2517
        %v2790 = vmul.f32 %v2736, %v2518
        %v2791 = vmul.f32 %v2738, %v2519
        %v2792 = vmul.f32 %v2740, %v2520
        %v2793 = vmul.f32 %v2742, %v2521
        %v2794 = vmul.f32 %v2744, %v2522
        %v2795 = vmul.f32 %v2746, %v2523
        %v2796 = vmul.f32 %v2748, %v2524
        %v2797 = vmul.f32 %v2750, %v2509
        %v2798 = vmul.f32 %v2752, %v2510
        %v2799 = vmul.f32 %v2754, %v2511
        %v2800 = vmul.f32 %v2756, %v2512
        %v2801 = vmul.f32 %v2758, %v2513
        %v2802 = vmul.f32 %v2760, %v2514
        %v2803 = vmul.f32 %v2762, %v2515
        %v2804 = vmul.f32 %v2764, %v2516
        %v2805 = vmul.f32 %v2766, %v2517
        %v2806 = vmul.f32 %v2768, %v2518
        %v2807 = vmul.f32 %v2770, %v2519
        %v2808 = vmul.f32 %v2772, %v2520
        %v2809 = vmul.f32 %v2774, %v2521
        %v2810 = vmul.f32 %v2776, %v2522
        %v2811 = vmul.f32 %v2778, %v2523
        %v2812 = vmul.f32 %v2780, %v2524
        %v2813 = vadd.f32 %v2685, %v2781
        %v2814 = vadd.f32 %v2686, %v2782
        %v2815 = vadd.f32 %v2687, %v2783
        %v2816 = vadd.f32 %v2688, %v2784
        %v2817 = vadd.f32 %v2689, %v2785
        %v2818 = vadd.f32 %v2690, %v2786
        %v2819 = vadd.f32 %v2691, %v2787
        %v2820 = vadd.f32 %v2692, %v2788
        %v2821 = vadd.f32 %v2693, %v2789
        %v2822 = vadd.f32 %v2694, %v2790
        %v2823 = vadd.f32 %v2695, %v2791
        %v2824 = vadd.f32 %v2696, %v2792
        %v2825 = vadd.f32 %v2697, %v2793
        %v2826 = vadd.f32 %v2698, %v2794
        %v2827 = vadd.f32 %v2699, %v2795
        %v2828 = vadd.f32 %v2700, %v2796
        %v2829 = vadd.f32 %v2701, %v2797
        %v2830 = vadd.f32 %v2702, %v2798
        %v2831 = vadd.f32 %v2703, %v2799
        %v2832 = vadd.f32 %v2704, %v2800
        %v2833 = vadd.f32 %v2705, %v2801
        %v2834 = vadd.f32 %v2706, %v2802
        %v2835 = vadd.f32 %v2707, %v2803
        %v2836 = vadd.f32 %v2708, %v2804
        %v2837 = vadd.f32 %v2709, %v2805
        %v2838 = vadd.f32 %v2710, %v2806
        %v2839 = vadd.f32 %v2711, %v2807
        %v2840 = vadd.f32 %v2712, %v2808
        %v2841 = vadd.f32 %v2713, %v2809
        %v2842 = vadd.f32 %v2714, %v2810
        %v2843 = vadd.f32 %v2715, %v2811
        %v2844 = vadd.f32 %v2716, %v2812
        %v2845 = vpack.c.bf16 %v2654, %v2653
        %v2846 = vpack.c.bf16 %v2656, %v2655
        %v2847 = vpack.c.bf16 %v2658, %v2657
        %v2848 = vpack.c.bf16 %v2660, %v2659
        %v2849 = vpack.c.bf16 %v2662, %v2661
        %v2850 = vpack.c.bf16 %v2664, %v2663
        %v2851 = vpack.c.bf16 %v2666, %v2665
        %v2852 = vpack.c.bf16 %v2668, %v2667
        %v2853 = vpack.c.bf16 %v2670, %v2669
        %v2854 = vpack.c.bf16 %v2672, %v2671
        %v2855 = vpack.c.bf16 %v2674, %v2673
        %v2856 = vpack.c.bf16 %v2676, %v2675
        %v2857 = vpack.c.bf16 %v2678, %v2677
        %v2858 = vpack.c.bf16 %v2680, %v2679
        %v2859 = vpack.c.bf16 %v2682, %v2681
        %v2860 = vpack.c.bf16 %v2684, %v2683
        %v2861 = vpack.c.bf16 %v2814, %v2813
        %v2862 = vpack.c.bf16 %v2816, %v2815
        %v2863 = vpack.c.bf16 %v2818, %v2817
        %v2864 = vpack.c.bf16 %v2820, %v2819
        %v2865 = vpack.c.bf16 %v2822, %v2821
        %v2866 = vpack.c.bf16 %v2824, %v2823
        %v2867 = vpack.c.bf16 %v2826, %v2825
        %v2868 = vpack.c.bf16 %v2828, %v2827
        %v2869 = vpack.c.bf16 %v2830, %v2829
        %v2870 = vpack.c.bf16 %v2832, %v2831
        %v2871 = vpack.c.bf16 %v2834, %v2833
        %v2872 = vpack.c.bf16 %v2836, %v2835
        %v2873 = vpack.c.bf16 %v2838, %v2837
        %v2874 = vpack.c.bf16 %v2840, %v2839
        %v2875 = vpack.c.bf16 %v2842, %v2841
        %v2876 = vpack.c.bf16 %v2844, %v2843
        %v2877 = vpack.c.bf16 %v2339, %v2335
        %v2878 = vpack.c.bf16 %v2349, %v2345
        %v2879 = vpack.c.bf16 %v2359, %v2355
        %v2880 = vpack.c.bf16 %v2369, %v2365
        %v2881 = vpack.c.bf16 %v2379, %v2375
        %v2882 = vpack.c.bf16 %v2389, %v2385
        %v2883 = vpack.c.bf16 %v2399, %v2395
        %v2884 = vpack.c.bf16 %v2409, %v2405
        %v2885 = vpack.c.bf16 %v2419, %v2415
        %v2886 = vpack.c.bf16 %v2429, %v2425
        %v2887 = vpack.c.bf16 %v2439, %v2435
        %v2888 = vpack.c.bf16 %v2449, %v2445
        %v2889 = vpack.c.bf16 %v2459, %v2455
        %v2890 = vpack.c.bf16 %v2469, %v2465
        %v2891 = vpack.c.bf16 %v2479, %v2475
        %v2892 = vpack.c.bf16 %v2489, %v2485
        %2893 = vmatprep.subr.bf16.mxu0 0
        %2894 = vmatpush1.bf16.xpose.msra.mxu0 %v2861
        %2895 = vmatprep.subr.bf16.mxu0 0
        %2896 = vmatpush1.bf16.xpose.msra.mxu0 %v2862
        %2897 = vmatprep.subr.bf16.mxu0 0
        %2898 = vmatpush1.bf16.xpose.msra.mxu0 %v2863
        %2899 = vmatprep.subr.bf16.mxu0 0
        %2900 = vmatpush1.bf16.xpose.msra.mxu0 %v2864
        %2901 = vmatprep.subr.bf16.mxu0 0
        %2902 = vmatpush1.bf16.xpose.msra.mxu0 %v2865
        %2903 = vmatprep.subr.bf16.mxu0 0
        %2904 = vmatpush1.bf16.xpose.msra.mxu0 %v2866
        %2905 = vmatprep.subr.bf16.mxu0 0
        %2906 = vmatpush1.bf16.xpose.msra.mxu0 %v2867
        %2907 = vmatprep.subr.bf16.mxu0 0
        %2908 = vmatpush1.bf16.xpose.msra.mxu0 %v2868
        %2909 = vmatprep.subr.bf16.mxu0 0
        %2910 = vmatpush1.bf16.xpose.msra.mxu0 0
        %2911 = vmatprep.subr.bf16.mxu0 0
        %2912 = vmatpush1.bf16.xpose.msra.mxu0 0
        %2913 = vmatprep.subr.bf16.mxu0 0
        %2914 = vmatpush1.bf16.xpose.msra.mxu0 0
        %2915 = vmatprep.subr.bf16.mxu0 0
        %2916 = vmatpush1.bf16.xpose.msra.mxu0 0
        %2917 = vmatprep.subr.bf16.mxu0 0
        %2918 = vmatpush1.bf16.xpose.msra.mxu0 0
        %2919 = vmatprep.subr.bf16.mxu0 0
        %2920 = vmatpush1.bf16.xpose.msra.mxu0 0
        %2921 = vmatprep.subr.bf16.mxu0 0
        %2922 = vmatpush1.bf16.xpose.msra.mxu0 0
        %2923 = vmatprep.subr.bf16.mxu0 0
        %2924 = vmatpush1.bf16.xpose.msra.mxu0 0
        %2925 = vmatprep.mubr.bf16.mxu0 0
        %2926 = vmatmul.mubr.bf16.gmra.mrb[0].mxu0 %v2845
        %v2927 = vpop.f32.mrb[0].mxu0
        %v2928 = vadd.f32 0.0, %v2927
        %v2929 = vpop.f32.mrb[0].mxu0
        %v2930 = vpop.f32.mrb[0].mxu0
        %v2931 = vadd.f32 0.0, %v2930
        %v2932 = vpop.f32.mrb[0].mxu0
        %2933 = vmatprep.mubr.bf16.mxu0 0
        %2934 = vmatmul.mubr.bf16.gmra.mrb[0].mxu0 %v2846
        %v2935 = vpop.f32.mrb[0].mxu0
        %v2936 = vadd.f32 0.0, %v2935
        %v2937 = vpop.f32.mrb[0].mxu0
        %v2938 = vpop.f32.mrb[0].mxu0
        %v2939 = vadd.f32 0.0, %v2938
        %v2940 = vpop.f32.mrb[0].mxu0
        %2941 = vmatprep.mubr.bf16.mxu0 0
        %2942 = vmatmul.mubr.bf16.gmra.mrb[0].mxu0 %v2847
        %v2943 = vpop.f32.mrb[0].mxu0
        %v2944 = vadd.f32 0.0, %v2943
        %v2945 = vpop.f32.mrb[0].mxu0
        %v2946 = vpop.f32.mrb[0].mxu0
        %v2947 = vadd.f32 0.0, %v2946
        %v2948 = vpop.f32.mrb[0].mxu0
        %2949 = vmatprep.mubr.bf16.mxu0 0
        %2950 = vmatmul.mubr.bf16.gmra.mrb[0].mxu0 %v2848
        %v2951 = vpop.f32.mrb[0].mxu0
        %v2952 = vadd.f32 0.0, %v2951
        %v2953 = vpop.f32.mrb[0].mxu0
        %v2954 = vpop.f32.mrb[0].mxu0
        %v2955 = vadd.f32 0.0, %v2954
        %v2956 = vpop.f32.mrb[0].mxu0
        %2957 = vmatprep.mubr.bf16.mxu0 0
        %2958 = vmatmul.mubr.bf16.gmra.mrb[0].mxu0 %v2849
        %v2959 = vpop.f32.mrb[0].mxu0
        %v2960 = vadd.f32 0.0, %v2959
        %v2961 = vpop.f32.mrb[0].mxu0
        %v2962 = vpop.f32.mrb[0].mxu0
        %v2963 = vadd.f32 0.0, %v2962
        %v2964 = vpop.f32.mrb[0].mxu0
        %2965 = vmatprep.mubr.bf16.mxu0 0
        %2966 = vmatmul.mubr.bf16.gmra.mrb[0].mxu0 %v2850
        %v2967 = vpop.f32.mrb[0].mxu0
        %v2968 = vadd.f32 0.0, %v2967
        %v2969 = vpop.f32.mrb[0].mxu0
        %v2970 = vpop.f32.mrb[0].mxu0
        %v2971 = vadd.f32 0.0, %v2970
        %v2972 = vpop.f32.mrb[0].mxu0
        %2973 = vmatprep.mubr.bf16.mxu0 0
        %2974 = vmatmul.mubr.bf16.gmra.mrb[0].mxu0 %v2851
        %v2975 = vpop.f32.mrb[0].mxu0
        %v2976 = vadd.f32 0.0, %v2975
        %v2977 = vpop.f32.mrb[0].mxu0
        %v2978 = vpop.f32.mrb[0].mxu0
        %v2979 = vadd.f32 0.0, %v2978
        %v2980 = vpop.f32.mrb[0].mxu0
        %2981 = vmatprep.mubr.bf16.mxu0 0
        %2982 = vmatmul.mubr.bf16.gmra.mrb[0].mxu0 %v2852
        %v2983 = vpop.f32.mrb[0].mxu0
        %v2984 = vadd.f32 0.0, %v2983
        %v2985 = vpop.f32.mrb[0].mxu0
        %v2986 = vpop.f32.mrb[0].mxu0
        %v2987 = vadd.f32 0.0, %v2986
        %v2988 = vpop.f32.mrb[0].mxu0
        %2989 = vdwg.mxu0
        %2990 = vmatprep.subr.bf16.mxu0 0
        %2991 = vmatpush1.bf16.xpose.msra.mxu0 %v2869
        %2992 = vmatprep.subr.bf16.mxu0 0
        %2993 = vmatpush1.bf16.xpose.msra.mxu0 %v2870
        %2994 = vmatprep.subr.bf16.mxu0 0
        %2995 = vmatpush1.bf16.xpose.msra.mxu0 %v2871
        %2996 = vmatprep.subr.bf16.mxu0 0
        %2997 = vmatpush1.bf16.xpose.msra.mxu0 %v2872
        %2998 = vmatprep.subr.bf16.mxu0 0
        %2999 = vmatpush1.bf16.xpose.msra.mxu0 %v2873
        %3000 = vmatprep.subr.bf16.mxu0 0
        %3001 = vmatpush1.bf16.xpose.msra.mxu0 %v2874
        %3002 = vmatprep.subr.bf16.mxu0 0
        %3003 = vmatpush1.bf16.xpose.msra.mxu0 %v2875
        %3004 = vmatprep.subr.bf16.mxu0 0
        %3005 = vmatpush1.bf16.xpose.msra.mxu0 %v2876
        %3006 = vmatprep.subr.bf16.mxu0 0
        %3007 = vmatpush1.bf16.xpose.msra.mxu0 0
        %3008 = vmatprep.subr.bf16.mxu0 0
        %3009 = vmatpush1.bf16.xpose.msra.mxu0 0
        %3010 = vmatprep.subr.bf16.mxu0 0
        %3011 = vmatpush1.bf16.xpose.msra.mxu0 0
        %3012 = vmatprep.subr.bf16.mxu0 0
        %3013 = vmatpush1.bf16.xpose.msra.mxu0 0
        %3014 = vmatprep.subr.bf16.mxu0 0
        %3015 = vmatpush1.bf16.xpose.msra.mxu0 0
        %3016 = vmatprep.subr.bf16.mxu0 0
        %3017 = vmatpush1.bf16.xpose.msra.mxu0 0
        %3018 = vmatprep.subr.bf16.mxu0 0
        %3019 = vmatpush1.bf16.xpose.msra.mxu0 0
        %3020 = vmatprep.subr.bf16.mxu0 0
        %3021 = vmatpush1.bf16.xpose.msra.mxu0 0
        %3022 = vmatprep.mubr.bf16.mxu0 0
        %3023 = vmatmul.mubr.bf16.gmra.mrb[0].mxu0 %v2853
        %v3024 = vpop.f32.mrb[0].mxu0
        %v3025 = vadd.f32 0.0, %v3024
        %v3026 = vpop.f32.mrb[0].mxu0
        %v3027 = vpop.f32.mrb[0].mxu0
        %v3028 = vadd.f32 0.0, %v3027
        %v3029 = vpop.f32.mrb[0].mxu0
        %3030 = vmatprep.mubr.bf16.mxu0 0
        %3031 = vmatmul.mubr.bf16.gmra.mrb[0].mxu0 %v2854
        %v3032 = vpop.f32.mrb[0].mxu0
        %v3033 = vadd.f32 0.0, %v3032
        %v3034 = vpop.f32.mrb[0].mxu0
        %v3035 = vpop.f32.mrb[0].mxu0
        %v3036 = vadd.f32 0.0, %v3035
        %v3037 = vpop.f32.mrb[0].mxu0
        %3038 = vmatprep.mubr.bf16.mxu0 0
        %3039 = vmatmul.mubr.bf16.gmra.mrb[0].mxu0 %v2855
        %v3040 = vpop.f32.mrb[0].mxu0
        %v3041 = vadd.f32 0.0, %v3040
        %v3042 = vpop.f32.mrb[0].mxu0
        %v3043 = vpop.f32.mrb[0].mxu0
        %v3044 = vadd.f32 0.0, %v3043
        %v3045 = vpop.f32.mrb[0].mxu0
        %3046 = vmatprep.mubr.bf16.mxu0 0
        %3047 = vmatmul.mubr.bf16.gmra.mrb[0].mxu0 %v2856
        %v3048 = vpop.f32.mrb[0].mxu0
        %v3049 = vadd.f32 0.0, %v3048
        %v3050 = vpop.f32.mrb[0].mxu0
        %v3051 = vpop.f32.mrb[0].mxu0
        %v3052 = vadd.f32 0.0, %v3051
        %v3053 = vpop.f32.mrb[0].mxu0
        %3054 = vmatprep.mubr.bf16.mxu0 0
        %3055 = vmatmul.mubr.bf16.gmra.mrb[0].mxu0 %v2857
        %v3056 = vpop.f32.mrb[0].mxu0
        %v3057 = vadd.f32 0.0, %v3056
        %v3058 = vpop.f32.mrb[0].mxu0
        %v3059 = vpop.f32.mrb[0].mxu0
        %v3060 = vadd.f32 0.0, %v3059
        %v3061 = vpop.f32.mrb[0].mxu0
        %3062 = vmatprep.mubr.bf16.mxu0 0
        %3063 = vmatmul.mubr.bf16.gmra.mrb[0].mxu0 %v2858
        %v3064 = vpop.f32.mrb[0].mxu0
        %v3065 = vadd.f32 0.0, %v3064
        %v3066 = vpop.f32.mrb[0].mxu0
        %v3067 = vpop.f32.mrb[0].mxu0
        %v3068 = vadd.f32 0.0, %v3067
        %v3069 = vpop.f32.mrb[0].mxu0
        %3070 = vmatprep.mubr.bf16.mxu0 0
        %3071 = vmatmul.mubr.bf16.gmra.mrb[0].mxu0 %v2859
        %v3072 = vpop.f32.mrb[0].mxu0
        %v3073 = vadd.f32 0.0, %v3072
        %v3074 = vpop.f32.mrb[0].mxu0
        %v3075 = vpop.f32.mrb[0].mxu0
        %v3076 = vadd.f32 0.0, %v3075
        %v3077 = vpop.f32.mrb[0].mxu0
        %3078 = vmatprep.mubr.bf16.mxu0 0
        %3079 = vmatmul.mubr.bf16.gmra.mrb[0].mxu0 %v2860
        %v3080 = vpop.f32.mrb[0].mxu0
        %v3081 = vadd.f32 0.0, %v3080
        %v3082 = vpop.f32.mrb[0].mxu0
        %v3083 = vpop.f32.mrb[0].mxu0
        %v3084 = vadd.f32 0.0, %v3083
        %v3085 = vpop.f32.mrb[0].mxu0
        %3086 = vdwg.mxu0
        %3087 = vmax.xlane.f32.xlu0 %v2928
        %v3088 = vpop.xlane.xlu0 %3087
        %3089 = vmax.xlane.f32.xlu0 %v2931
        %v3090 = vpop.xlane.xlu0 %3089
        %3091 = vmax.xlane.f32.xlu0 %v2936
        %v3092 = vpop.xlane.xlu0 %3091
        %3093 = vmax.xlane.f32.xlu0 %v2939
        %v3094 = vpop.xlane.xlu0 %3093
        %3095 = vmax.xlane.f32.xlu0 %v2944
        %v3096 = vpop.xlane.xlu0 %3095
        %3097 = vmax.xlane.f32.xlu0 %v2947
        %v3098 = vpop.xlane.xlu0 %3097
        %3099 = vmax.xlane.f32.xlu0 %v2952
        %v3100 = vpop.xlane.xlu0 %3099
        %3101 = vmax.xlane.f32.xlu0 %v2955
        %v3102 = vpop.xlane.xlu0 %3101
        %3103 = vmax.xlane.f32.xlu0 %v2960
        %v3104 = vpop.xlane.xlu0 %3103
        %3105 = vmax.xlane.f32.xlu0 %v2963
        %v3106 = vpop.xlane.xlu0 %3105
        %3107 = vmax.xlane.f32.xlu0 %v2968
        %v3108 = vpop.xlane.xlu0 %3107
        %3109 = vmax.xlane.f32.xlu0 %v2971
        %v3110 = vpop.xlane.xlu0 %3109
        %3111 = vmax.xlane.f32.xlu0 %v2976
        %v3112 = vpop.xlane.xlu0 %3111
        %3113 = vmax.xlane.f32.xlu0 %v2979
        %v3114 = vpop.xlane.xlu0 %3113
        %3115 = vmax.xlane.f32.xlu0 %v2984
        %v3116 = vpop.xlane.xlu0 %3115
        %3117 = vmax.xlane.f32.xlu0 %v2987
        %v3118 = vpop.xlane.xlu0 %3117
        %3119 = vmax.xlane.f32.xlu0 %v3025
        %v3120 = vpop.xlane.xlu0 %3119
        %3121 = vmax.xlane.f32.xlu0 %v3028
        %v3122 = vpop.xlane.xlu0 %3121
        %3123 = vmax.xlane.f32.xlu0 %v3033
        %v3124 = vpop.xlane.xlu0 %3123
        %3125 = vmax.xlane.f32.xlu0 %v3036
        %v3126 = vpop.xlane.xlu0 %3125
        %3127 = vmax.xlane.f32.xlu0 %v3041
        %v3128 = vpop.xlane.xlu0 %3127
        %3129 = vmax.xlane.f32.xlu0 %v3044
        %v3130 = vpop.xlane.xlu0 %3129
        %3131 = vmax.xlane.f32.xlu0 %v3049
        %v3132 = vpop.xlane.xlu0 %3131
        %3133 = vmax.xlane.f32.xlu0 %v3052
        %v3134 = vpop.xlane.xlu0 %3133
        %3135 = vmax.xlane.f32.xlu0 %v3057
        %v3136 = vpop.xlane.xlu0 %3135
        %3137 = vmax.xlane.f32.xlu0 %v3060
        %v3138 = vpop.xlane.xlu0 %3137
        %3139 = vmax.xlane.f32.xlu0 %v3065
        %v3140 = vpop.xlane.xlu0 %3139
        %3141 = vmax.xlane.f32.xlu0 %v3068
        %v3142 = vpop.xlane.xlu0 %3141
        %3143 = vmax.xlane.f32.xlu0 %v3073
        %v3144 = vpop.xlane.xlu0 %3143
        %3145 = vmax.xlane.f32.xlu0 %v3076
        %v3146 = vpop.xlane.xlu0 %3145
        %3147 = vmax.xlane.f32.xlu0 %v3081
        %v3148 = vpop.xlane.xlu0 %3147
        %3149 = vmax.xlane.f32.xlu0 %v3084
        %v3150 = vpop.xlane.xlu0 %3149
        %v3151 = vsub.f32 -inf, %v3088
        %v3152 = vsub.f32 -inf, %v3090
        %v3153 = vsub.f32 -inf, %v3092
        %v3154 = vsub.f32 -inf, %v3094
        %v3155 = vsub.f32 -inf, %v3096
        %v3156 = vsub.f32 -inf, %v3098
        %v3157 = vsub.f32 -inf, %v3100
        %v3158 = vsub.f32 -inf, %v3102
        %v3159 = vsub.f32 -inf, %v3104
        %v3160 = vsub.f32 -inf, %v3106
        %v3161 = vsub.f32 -inf, %v3108
        %v3162 = vsub.f32 -inf, %v3110
        %v3163 = vsub.f32 -inf, %v3112
        %v3164 = vsub.f32 -inf, %v3114
        %v3165 = vsub.f32 -inf, %v3116
        %v3166 = vsub.f32 -inf, %v3118
        %v3167 = vsub.f32 -inf, %v3120
        %v3168 = vsub.f32 -inf, %v3122
        %v3169 = vsub.f32 -inf, %v3124
        %v3170 = vsub.f32 -inf, %v3126
        %v3171 = vsub.f32 -inf, %v3128
        %v3172 = vsub.f32 -inf, %v3130
        %v3173 = vsub.f32 -inf, %v3132
        %v3174 = vsub.f32 -inf, %v3134
        %v3175 = vsub.f32 -inf, %v3136
        %v3176 = vsub.f32 -inf, %v3138
        %v3177 = vsub.f32 -inf, %v3140
        %v3178 = vsub.f32 -inf, %v3142
        %v3179 = vsub.f32 -inf, %v3144
        %v3180 = vsub.f32 -inf, %v3146
        %v3181 = vsub.f32 -inf, %v3148
        %v3182 = vsub.f32 -inf, %v3150
        %v3183 = vmul.f32 %v3151, 1.442695
        %v3184 = vpow.pop %v3183
        %v3185 = vmul.f32 %v3152, 1.442695
        %v3186 = vpow.pop %v3185
        %v3187 = vmul.f32 %v3153, 1.442695
        %v3188 = vpow.pop %v3187
        %v3189 = vmul.f32 %v3154, 1.442695
        %v3190 = vpow.pop %v3189
        %v3191 = vmul.f32 %v3155, 1.442695
        %v3192 = vpow.pop %v3191
        %v3193 = vmul.f32 %v3156, 1.442695
        %v3194 = vpow.pop %v3193
        %v3195 = vmul.f32 %v3157, 1.442695
        %v3196 = vpow.pop %v3195
        %v3197 = vmul.f32 %v3158, 1.442695
        %v3198 = vpow.pop %v3197
        %v3199 = vmul.f32 %v3159, 1.442695
        %v3200 = vpow.pop %v3199
        %v3201 = vmul.f32 %v3160, 1.442695
        %v3202 = vpow.pop %v3201
        %v3203 = vmul.f32 %v3161, 1.442695
        %v3204 = vpow.pop %v3203
        %v3205 = vmul.f32 %v3162, 1.442695
        %v3206 = vpow.pop %v3205
        %v3207 = vmul.f32 %v3163, 1.442695
        %v3208 = vpow.pop %v3207
        %v3209 = vmul.f32 %v3164, 1.442695
        %v3210 = vpow.pop %v3209
        %v3211 = vmul.f32 %v3165, 1.442695
        %v3212 = vpow.pop %v3211
        %v3213 = vmul.f32 %v3166, 1.442695
        %v3214 = vpow.pop %v3213
        %v3215 = vmul.f32 %v3167, 1.442695
        %v3216 = vpow.pop %v3215
        %v3217 = vmul.f32 %v3168, 1.442695
        %v3218 = vpow.pop %v3217
        %v3219 = vmul.f32 %v3169, 1.442695
        %v3220 = vpow.pop %v3219
        %v3221 = vmul.f32 %v3170, 1.442695
        %v3222 = vpow.pop %v3221
        %v3223 = vmul.f32 %v3171, 1.442695
        %v3224 = vpow.pop %v3223
        %v3225 = vmul.f32 %v3172, 1.442695
        %v3226 = vpow.pop %v3225
        %v3227 = vmul.f32 %v3173, 1.442695
        %v3228 = vpow.pop %v3227
        %v3229 = vmul.f32 %v3174, 1.442695
        %v3230 = vpow.pop %v3229
        %v3231 = vmul.f32 %v3175, 1.442695
        %v3232 = vpow.pop %v3231
        %v3233 = vmul.f32 %v3176, 1.442695
        %v3234 = vpow.pop %v3233
        %v3235 = vmul.f32 %v3177, 1.442695
        %v3236 = vpow.pop %v3235
        %v3237 = vmul.f32 %v3178, 1.442695
        %v3238 = vpow.pop %v3237
        %v3239 = vmul.f32 %v3179, 1.442695
        %v3240 = vpow.pop %v3239
        %v3241 = vmul.f32 %v3180, 1.442695
        %v3242 = vpow.pop %v3241
        %v3243 = vmul.f32 %v3181, 1.442695
        %v3244 = vpow.pop %v3243
        %v3245 = vmul.f32 %v3182, 1.442695
        %v3246 = vpow.pop %v3245
        %v3247 = vsub.f32 %v2928, %v3088
        %v3248 = vsub.f32 %v2931, %v3090
        %v3249 = vsub.f32 %v2936, %v3092
        %v3250 = vsub.f32 %v2939, %v3094
        %v3251 = vsub.f32 %v2944, %v3096
        %v3252 = vsub.f32 %v2947, %v3098
        %v3253 = vsub.f32 %v2952, %v3100
        %v3254 = vsub.f32 %v2955, %v3102
        %v3255 = vsub.f32 %v2960, %v3104
        %v3256 = vsub.f32 %v2963, %v3106
        %v3257 = vsub.f32 %v2968, %v3108
        %v3258 = vsub.f32 %v2971, %v3110
        %v3259 = vsub.f32 %v2976, %v3112
        %v3260 = vsub.f32 %v2979, %v3114
        %v3261 = vsub.f32 %v2984, %v3116
        %v3262 = vsub.f32 %v2987, %v3118
        %v3263 = vsub.f32 %v3025, %v3120
        %v3264 = vsub.f32 %v3028, %v3122
        %v3265 = vsub.f32 %v3033, %v3124
        %v3266 = vsub.f32 %v3036, %v3126
        %v3267 = vsub.f32 %v3041, %v3128
        %v3268 = vsub.f32 %v3044, %v3130
        %v3269 = vsub.f32 %v3049, %v3132
        %v3270 = vsub.f32 %v3052, %v3134
        %v3271 = vsub.f32 %v3057, %v3136
        %v3272 = vsub.f32 %v3060, %v3138
        %v3273 = vsub.f32 %v3065, %v3140
        %v3274 = vsub.f32 %v3068, %v3142
        %v3275 = vsub.f32 %v3073, %v3144
        %v3276 = vsub.f32 %v3076, %v3146
        %v3277 = vsub.f32 %v3081, %v3148
        %v3278 = vsub.f32 %v3084, %v3150
        %v3279 = vmul.f32 %v3247, 1.442695
        %v3280 = vpow.pop %v3279
        %v3281 = vmul.f32 %v3248, 1.442695
        %v3282 = vpow.pop %v3281
        %v3283 = vmul.f32 %v3249, 1.442695
        %v3284 = vpow.pop %v3283
        %v3285 = vmul.f32 %v3250, 1.442695
        %v3286 = vpow.pop %v3285
        %v3287 = vmul.f32 %v3251, 1.442695
        %v3288 = vpow.pop %v3287
        %v3289 = vmul.f32 %v3252, 1.442695
        %v3290 = vpow.pop %v3289
        %v3291 = vmul.f32 %v3253, 1.442695
        %v3292 = vpow.pop %v3291
        %v3293 = vmul.f32 %v3254, 1.442695
        %v3294 = vpow.pop %v3293
        %v3295 = vmul.f32 %v3255, 1.442695
        %v3296 = vpow.pop %v3295
        %v3297 = vmul.f32 %v3256, 1.442695
        %v3298 = vpow.pop %v3297
        %v3299 = vmul.f32 %v3257, 1.442695
        %v3300 = vpow.pop %v3299
        %v3301 = vmul.f32 %v3258, 1.442695
        %v3302 = vpow.pop %v3301
        %v3303 = vmul.f32 %v3259, 1.442695
        %v3304 = vpow.pop %v3303
        %v3305 = vmul.f32 %v3260, 1.442695
        %v3306 = vpow.pop %v3305
        %v3307 = vmul.f32 %v3261, 1.442695
        %v3308 = vpow.pop %v3307
        %v3309 = vmul.f32 %v3262, 1.442695
        %v3310 = vpow.pop %v3309
        %v3311 = vmul.f32 %v3263, 1.442695
        %v3312 = vpow.pop %v3311
        %v3313 = vmul.f32 %v3264, 1.442695
        %v3314 = vpow.pop %v3313
        %v3315 = vmul.f32 %v3265, 1.442695
        %v3316 = vpow.pop %v3315
        %v3317 = vmul.f32 %v3266, 1.442695
        %v3318 = vpow.pop %v3317
        %v3319 = vmul.f32 %v3267, 1.442695
        %v3320 = vpow.pop %v3319
        %v3321 = vmul.f32 %v3268, 1.442695
        %v3322 = vpow.pop %v3321
        %v3323 = vmul.f32 %v3269, 1.442695
        %v3324 = vpow.pop %v3323
        %v3325 = vmul.f32 %v3270, 1.442695
        %v3326 = vpow.pop %v3325
        %v3327 = vmul.f32 %v3271, 1.442695
        %v3328 = vpow.pop %v3327
        %v3329 = vmul.f32 %v3272, 1.442695
        %v3330 = vpow.pop %v3329
        %v3331 = vmul.f32 %v3273, 1.442695
        %v3332 = vpow.pop %v3331
        %v3333 = vmul.f32 %v3274, 1.442695
        %v3334 = vpow.pop %v3333
        %v3335 = vmul.f32 %v3275, 1.442695
        %v3336 = vpow.pop %v3335
        %v3337 = vmul.f32 %v3276, 1.442695
        %v3338 = vpow.pop %v3337
        %v3339 = vmul.f32 %v3277, 1.442695
        %v3340 = vpow.pop %v3339
        %v3341 = vmul.f32 %v3278, 1.442695
        %v3342 = vpow.pop %v3341
        %v3343 = vpack.c.bf16 %v3282, %v3280
        %v3344 = vpack.c.bf16 %v3286, %v3284
        %v3345 = vpack.c.bf16 %v3290, %v3288
        %v3346 = vpack.c.bf16 %v3294, %v3292
        %v3347 = vpack.c.bf16 %v3298, %v3296
        %v3348 = vpack.c.bf16 %v3302, %v3300
        %v3349 = vpack.c.bf16 %v3306, %v3304
        %v3350 = vpack.c.bf16 %v3310, %v3308
        %v3351 = vpack.c.bf16 %v3314, %v3312
        %v3352 = vpack.c.bf16 %v3318, %v3316
        %v3353 = vpack.c.bf16 %v3322, %v3320
        %v3354 = vpack.c.bf16 %v3326, %v3324
        %v3355 = vpack.c.bf16 %v3330, %v3328
        %v3356 = vpack.c.bf16 %v3334, %v3332
        %v3357 = vpack.c.bf16 %v3338, %v3336
        %v3358 = vpack.c.bf16 %v3342, %v3340
        %v3359 = vmul.f32 %v3184, 0.0
        %v3360 = vmul.f32 %v3186, 0.0
        %v3361 = vmul.f32 %v3188, 0.0
        %v3362 = vmul.f32 %v3190, 0.0
        %v3363 = vmul.f32 %v3192, 0.0
        %v3364 = vmul.f32 %v3194, 0.0
        %v3365 = vmul.f32 %v3196, 0.0
        %v3366 = vmul.f32 %v3198, 0.0
        %v3367 = vmul.f32 %v3200, 0.0
        %v3368 = vmul.f32 %v3202, 0.0
        %v3369 = vmul.f32 %v3204, 0.0
        %v3370 = vmul.f32 %v3206, 0.0
        %v3371 = vmul.f32 %v3208, 0.0
        %v3372 = vmul.f32 %v3210, 0.0
        %v3373 = vmul.f32 %v3212, 0.0
        %v3374 = vmul.f32 %v3214, 0.0
        %v3375 = vmul.f32 %v3216, 0.0
        %v3376 = vmul.f32 %v3218, 0.0
        %v3377 = vmul.f32 %v3220, 0.0
        %v3378 = vmul.f32 %v3222, 0.0
        %v3379 = vmul.f32 %v3224, 0.0
        %v3380 = vmul.f32 %v3226, 0.0
        %v3381 = vmul.f32 %v3228, 0.0
        %v3382 = vmul.f32 %v3230, 0.0
        %v3383 = vmul.f32 %v3232, 0.0
        %v3384 = vmul.f32 %v3234, 0.0
        %v3385 = vmul.f32 %v3236, 0.0
        %v3386 = vmul.f32 %v3238, 0.0
        %v3387 = vmul.f32 %v3240, 0.0
        %v3388 = vmul.f32 %v3242, 0.0
        %v3389 = vmul.f32 %v3244, 0.0
        %v3390 = vmul.f32 %v3246, 0.0
        %v3391 = vunpack.c.l.bf16 %v3343
        %v3392 = vunpack.c.h.bf16 %v3343
        %v3393 = vunpack.c.l.bf16 %v3344
        %v3394 = vunpack.c.h.bf16 %v3344
        %v3395 = vunpack.c.l.bf16 %v3345
        %v3396 = vunpack.c.h.bf16 %v3345
        %v3397 = vunpack.c.l.bf16 %v3346
        %v3398 = vunpack.c.h.bf16 %v3346
        %v3399 = vunpack.c.l.bf16 %v3347
        %v3400 = vunpack.c.h.bf16 %v3347
        %v3401 = vunpack.c.l.bf16 %v3348
        %v3402 = vunpack.c.h.bf16 %v3348
        %v3403 = vunpack.c.l.bf16 %v3349
        %v3404 = vunpack.c.h.bf16 %v3349
        %v3405 = vunpack.c.l.bf16 %v3350
        %v3406 = vunpack.c.h.bf16 %v3350
        %v3407 = vunpack.c.l.bf16 %v3351
        %v3408 = vunpack.c.h.bf16 %v3351
        %v3409 = vunpack.c.l.bf16 %v3352
        %v3410 = vunpack.c.h.bf16 %v3352
        %v3411 = vunpack.c.l.bf16 %v3353
        %v3412 = vunpack.c.h.bf16 %v3353
        %v3413 = vunpack.c.l.bf16 %v3354
        %v3414 = vunpack.c.h.bf16 %v3354
        %v3415 = vunpack.c.l.bf16 %v3355
        %v3416 = vunpack.c.h.bf16 %v3355
        %v3417 = vunpack.c.l.bf16 %v3356
        %v3418 = vunpack.c.h.bf16 %v3356
        %v3419 = vunpack.c.l.bf16 %v3357
        %v3420 = vunpack.c.h.bf16 %v3357
        %v3421 = vunpack.c.l.bf16 %v3358
        %v3422 = vunpack.c.h.bf16 %v3358
        %3423 = vadd.xlane.f32.xlu0 %v3391
        %v3424 = vpop.xlane.xlu0 %3423
        %3425 = vadd.xlane.f32.xlu0 %v3392
        %v3426 = vpop.xlane.xlu0 %3425
        %3427 = vadd.xlane.f32.xlu0 %v3393
        %v3428 = vpop.xlane.xlu0 %3427
        %3429 = vadd.xlane.f32.xlu0 %v3394
        %v3430 = vpop.xlane.xlu0 %3429
        %3431 = vadd.xlane.f32.xlu0 %v3395
        %v3432 = vpop.xlane.xlu0 %3431
        %3433 = vadd.xlane.f32.xlu0 %v3396
        %v3434 = vpop.xlane.xlu0 %3433
        %3435 = vadd.xlane.f32.xlu0 %v3397
        %v3436 = vpop.xlane.xlu0 %3435
        %3437 = vadd.xlane.f32.xlu0 %v3398
        %v3438 = vpop.xlane.xlu0 %3437
        %3439 = vadd.xlane.f32.xlu0 %v3399
        %v3440 = vpop.xlane.xlu0 %3439
        %3441 = vadd.xlane.f32.xlu0 %v3400
        %v3442 = vpop.xlane.xlu0 %3441
        %3443 = vadd.xlane.f32.xlu0 %v3401
        %v3444 = vpop.xlane.xlu0 %3443
        %3445 = vadd.xlane.f32.xlu0 %v3402
        %v3446 = vpop.xlane.xlu0 %3445
        %3447 = vadd.xlane.f32.xlu0 %v3403
        %v3448 = vpop.xlane.xlu0 %3447
        %3449 = vadd.xlane.f32.xlu0 %v3404
        %v3450 = vpop.xlane.xlu0 %3449
        %3451 = vadd.xlane.f32.xlu0 %v3405
        %v3452 = vpop.xlane.xlu0 %3451
        %3453 = vadd.xlane.f32.xlu0 %v3406
        %v3454 = vpop.xlane.xlu0 %3453
        %3455 = vadd.xlane.f32.xlu0 %v3407
        %v3456 = vpop.xlane.xlu0 %3455
        %3457 = vadd.xlane.f32.xlu0 %v3408
        %v3458 = vpop.xlane.xlu0 %3457
        %3459 = vadd.xlane.f32.xlu0 %v3409
        %v3460 = vpop.xlane.xlu0 %3459
        %3461 = vadd.xlane.f32.xlu0 %v3410
        %v3462 = vpop.xlane.xlu0 %3461
        %3463 = vadd.xlane.f32.xlu0 %v3411
        %v3464 = vpop.xlane.xlu0 %3463
        %3465 = vadd.xlane.f32.xlu0 %v3412
        %v3466 = vpop.xlane.xlu0 %3465
        %3467 = vadd.xlane.f32.xlu0 %v3413
        %v3468 = vpop.xlane.xlu0 %3467
        %3469 = vadd.xlane.f32.xlu0 %v3414
        %v3470 = vpop.xlane.xlu0 %3469
        %3471 = vadd.xlane.f32.xlu0 %v3415
        %v3472 = vpop.xlane.xlu0 %3471
        %3473 = vadd.xlane.f32.xlu0 %v3416
        %v3474 = vpop.xlane.xlu0 %3473
        %3475 = vadd.xlane.f32.xlu0 %v3417
        %v3476 = vpop.xlane.xlu0 %3475
        %3477 = vadd.xlane.f32.xlu0 %v3418
        %v3478 = vpop.xlane.xlu0 %3477
        %3479 = vadd.xlane.f32.xlu0 %v3419
        %v3480 = vpop.xlane.xlu0 %3479
        %3481 = vadd.xlane.f32.xlu0 %v3420
        %v3482 = vpop.xlane.xlu0 %3481
        %3483 = vadd.xlane.f32.xlu0 %v3421
        %v3484 = vpop.xlane.xlu0 %3483
        %3485 = vadd.xlane.f32.xlu0 %v3422
        %v3486 = vpop.xlane.xlu0 %3485
        %v3487 = vadd.f32 %v3359, %v3424
        %v3488 = vadd.f32 %v3360, %v3426
        %v3489 = vadd.f32 %v3361, %v3428
        %v3490 = vadd.f32 %v3362, %v3430
        %v3491 = vadd.f32 %v3363, %v3432
        %v3492 = vadd.f32 %v3364, %v3434
        %v3493 = vadd.f32 %v3365, %v3436
        %v3494 = vadd.f32 %v3366, %v3438
        %v3495 = vadd.f32 %v3367, %v3440
        %v3496 = vadd.f32 %v3368, %v3442
        %v3497 = vadd.f32 %v3369, %v3444
        %v3498 = vadd.f32 %v3370, %v3446
        %v3499 = vadd.f32 %v3371, %v3448
        %v3500 = vadd.f32 %v3372, %v3450
        %v3501 = vadd.f32 %v3373, %v3452
        %v3502 = vadd.f32 %v3374, %v3454
        %v3503 = vadd.f32 %v3375, %v3456
        %v3504 = vadd.f32 %v3376, %v3458
        %v3505 = vadd.f32 %v3377, %v3460
        %v3506 = vadd.f32 %v3378, %v3462
        %v3507 = vadd.f32 %v3379, %v3464
        %v3508 = vadd.f32 %v3380, %v3466
        %v3509 = vadd.f32 %v3381, %v3468
        %v3510 = vadd.f32 %v3382, %v3470
        %v3511 = vadd.f32 %v3383, %v3472
        %v3512 = vadd.f32 %v3384, %v3474
        %v3513 = vadd.f32 %v3385, %v3476
        %v3514 = vadd.f32 %v3386, %v3478
        %v3515 = vadd.f32 %v3387, %v3480
        %v3516 = vadd.f32 %v3388, %v3482
        %v3517 = vadd.f32 %v3389, %v3484
        %v3518 = vadd.f32 %v3390, %v3486
        %3519 = vmatprep.subr.bf16.mxu0 0
        %3520 = vmatpush1.bf16.msra.mxu0 %v2877
        %3521 = vmatprep.subr.bf16.mxu0 0
        %3522 = vmatpush1.bf16.msra.mxu0 %v2878
        %3523 = vmatprep.subr.bf16.mxu0 0
        %3524 = vmatpush1.bf16.msra.mxu0 %v2879
        %3525 = vmatprep.subr.bf16.mxu0 0
        %3526 = vmatpush1.bf16.msra.mxu0 %v2880
        %3527 = vmatprep.subr.bf16.mxu0 0
        %3528 = vmatpush1.bf16.msra.mxu0 %v2881
        %3529 = vmatprep.subr.bf16.mxu0 0
        %3530 = vmatpush1.bf16.msra.mxu0 %v2882
        %3531 = vmatprep.subr.bf16.mxu0 0
        %3532 = vmatpush1.bf16.msra.mxu0 %v2883
        %3533 = vmatprep.subr.bf16.mxu0 0
        %3534 = vmatpush1.bf16.msra.mxu0 %v2884
        %3535 = vmatprep.subr.bf16.mxu0 0
        %3536 = vmatpush1.bf16.msra.mxu0 0
        %3537 = vmatprep.subr.bf16.mxu0 0
        %3538 = vmatpush1.bf16.msra.mxu0 0
        %3539 = vmatprep.subr.bf16.mxu0 0
        %3540 = vmatpush1.bf16.msra.mxu0 0
        %3541 = vmatprep.subr.bf16.mxu0 0
        %3542 = vmatpush1.bf16.msra.mxu0 0
        %3543 = vmatprep.subr.bf16.mxu0 0
        %3544 = vmatpush1.bf16.msra.mxu0 0
        %3545 = vmatprep.subr.bf16.mxu0 0
        %3546 = vmatpush1.bf16.msra.mxu0 0
        %3547 = vmatprep.subr.bf16.mxu0 0
        %3548 = vmatpush1.bf16.msra.mxu0 0
        %3549 = vmatprep.subr.bf16.mxu0 0
        %3550 = vmatpush1.bf16.msra.mxu0 0
        %3551 = vmatprep.mubr.bf16.mxu0 0
        %3552 = vmatmul.mubr.bf16.gmra.mrb[0].mxu0 %v3343
        %v3553 = vpop.f32.mrb[0].mxu0
        %v3554 = vadd.f32 0.0, %v3553
        %v3555 = vpop.f32.mrb[0].mxu0
        %v3556 = vpop.f32.mrb[0].mxu0
        %v3557 = vadd.f32 0.0, %v3556
        %v3558 = vpop.f32.mrb[0].mxu0
        %3559 = vmatprep.mubr.bf16.mxu0 0
        %3560 = vmatmul.mubr.bf16.gmra.mrb[0].mxu0 %v3344
        %v3561 = vpop.f32.mrb[0].mxu0
        %v3562 = vadd.f32 0.0, %v3561
        %v3563 = vpop.f32.mrb[0].mxu0
        %v3564 = vpop.f32.mrb[0].mxu0
        %v3565 = vadd.f32 0.0, %v3564
        %v3566 = vpop.f32.mrb[0].mxu0
        %3567 = vmatprep.mubr.bf16.mxu0 0
        %3568 = vmatmul.mubr.bf16.gmra.mrb[0].mxu0 %v3345
        %v3569 = vpop.f32.mrb[0].mxu0
        %v3570 = vadd.f32 0.0, %v3569
        %v3571 = vpop.f32.mrb[0].mxu0
        %v3572 = vpop.f32.mrb[0].mxu0
        %v3573 = vadd.f32 0.0, %v3572
        %v3574 = vpop.f32.mrb[0].mxu0
        %3575 = vmatprep.mubr.bf16.mxu0 0
        %3576 = vmatmul.mubr.bf16.gmra.mrb[0].mxu0 %v3346
        %v3577 = vpop.f32.mrb[0].mxu0
        %v3578 = vadd.f32 0.0, %v3577
        %v3579 = vpop.f32.mrb[0].mxu0
        %v3580 = vpop.f32.mrb[0].mxu0
        %v3581 = vadd.f32 0.0, %v3580
        %v3582 = vpop.f32.mrb[0].mxu0
        %3583 = vmatprep.mubr.bf16.mxu0 0
        %3584 = vmatmul.mubr.bf16.gmra.mrb[0].mxu0 %v3347
        %v3585 = vpop.f32.mrb[0].mxu0
        %v3586 = vadd.f32 0.0, %v3585
        %v3587 = vpop.f32.mrb[0].mxu0
        %v3588 = vpop.f32.mrb[0].mxu0
        %v3589 = vadd.f32 0.0, %v3588
        %v3590 = vpop.f32.mrb[0].mxu0
        %3591 = vmatprep.mubr.bf16.mxu0 0
        %3592 = vmatmul.mubr.bf16.gmra.mrb[0].mxu0 %v3348
        %v3593 = vpop.f32.mrb[0].mxu0
        %v3594 = vadd.f32 0.0, %v3593
        %v3595 = vpop.f32.mrb[0].mxu0
        %v3596 = vpop.f32.mrb[0].mxu0
        %v3597 = vadd.f32 0.0, %v3596
        %v3598 = vpop.f32.mrb[0].mxu0
        %3599 = vmatprep.mubr.bf16.mxu0 0
        %3600 = vmatmul.mubr.bf16.gmra.mrb[0].mxu0 %v3349
        %v3601 = vpop.f32.mrb[0].mxu0
        %v3602 = vadd.f32 0.0, %v3601
        %v3603 = vpop.f32.mrb[0].mxu0
        %v3604 = vpop.f32.mrb[0].mxu0
        %v3605 = vadd.f32 0.0, %v3604
        %v3606 = vpop.f32.mrb[0].mxu0
        %3607 = vmatprep.mubr.bf16.mxu0 0
        %3608 = vmatmul.mubr.bf16.gmra.mrb[0].mxu0 %v3350
        %v3609 = vpop.f32.mrb[0].mxu0
        %v3610 = vadd.f32 0.0, %v3609
        %v3611 = vpop.f32.mrb[0].mxu0
        %v3612 = vpop.f32.mrb[0].mxu0
        %v3613 = vadd.f32 0.0, %v3612
        %v3614 = vpop.f32.mrb[0].mxu0
        %3615 = vdwg.mxu0
        %3616 = vmatprep.subr.bf16.mxu0 0
        %3617 = vmatpush1.bf16.msra.mxu0 %v2885
        %3618 = vmatprep.subr.bf16.mxu0 0
        %3619 = vmatpush1.bf16.msra.mxu0 %v2886
        %3620 = vmatprep.subr.bf16.mxu0 0
        %3621 = vmatpush1.bf16.msra.mxu0 %v2887
        %3622 = vmatprep.subr.bf16.mxu0 0
        %3623 = vmatpush1.bf16.msra.mxu0 %v2888
        %3624 = vmatprep.subr.bf16.mxu0 0
        %3625 = vmatpush1.bf16.msra.mxu0 %v2889
        %3626 = vmatprep.subr.bf16.mxu0 0
        %3627 = vmatpush1.bf16.msra.mxu0 %v2890
        %3628 = vmatprep.subr.bf16.mxu0 0
        %3629 = vmatpush1.bf16.msra.mxu0 %v2891
        %3630 = vmatprep.subr.bf16.mxu0 0
        %3631 = vmatpush1.bf16.msra.mxu0 %v2892
        %3632 = vmatprep.subr.bf16.mxu0 0
        %3633 = vmatpush1.bf16.msra.mxu0 0
        %3634 = vmatprep.subr.bf16.mxu0 0
        %3635 = vmatpush1.bf16.msra.mxu0 0
        %3636 = vmatprep.subr.bf16.mxu0 0
        %3637 = vmatpush1.bf16.msra.mxu0 0
        %3638 = vmatprep.subr.bf16.mxu0 0
        %3639 = vmatpush1.bf16.msra.mxu0 0
        %3640 = vmatprep.subr.bf16.mxu0 0
        %3641 = vmatpush1.bf16.msra.mxu0 0
        %3642 = vmatprep.subr.bf16.mxu0 0
        %3643 = vmatpush1.bf16.msra.mxu0 0
        %3644 = vmatprep.subr.bf16.mxu0 0
        %3645 = vmatpush1.bf16.msra.mxu0 0
        %3646 = vmatprep.subr.bf16.mxu0 0
        %3647 = vmatpush1.bf16.msra.mxu0 0
        %3648 = vmatprep.mubr.bf16.mxu0 0
        %3649 = vmatmul.mubr.bf16.gmra.mrb[0].mxu0 %v3351
        %v3650 = vpop.f32.mrb[0].mxu0
        %v3651 = vadd.f32 0.0, %v3650
        %v3652 = vpop.f32.mrb[0].mxu0
        %v3653 = vpop.f32.mrb[0].mxu0
        %v3654 = vadd.f32 0.0, %v3653
        %v3655 = vpop.f32.mrb[0].mxu0
        %3656 = vmatprep.mubr.bf16.mxu0 0
        %3657 = vmatmul.mubr.bf16.gmra.mrb[0].mxu0 %v3352
        %v3658 = vpop.f32.mrb[0].mxu0
        %v3659 = vadd.f32 0.0, %v3658
        %v3660 = vpop.f32.mrb[0].mxu0
        %v3661 = vpop.f32.mrb[0].mxu0
        %v3662 = vadd.f32 0.0, %v3661
        %v3663 = vpop.f32.mrb[0].mxu0
        %3664 = vmatprep.mubr.bf16.mxu0 0
        %3665 = vmatmul.mubr.bf16.gmra.mrb[0].mxu0 %v3353
        %v3666 = vpop.f32.mrb[0].mxu0
        %v3667 = vadd.f32 0.0, %v3666
        %v3668 = vpop.f32.mrb[0].mxu0
        %v3669 = vpop.f32.mrb[0].mxu0
        %v3670 = vadd.f32 0.0, %v3669
        %v3671 = vpop.f32.mrb[0].mxu0
        %3672 = vmatprep.mubr.bf16.mxu0 0
        %3673 = vmatmul.mubr.bf16.gmra.mrb[0].mxu0 %v3354
        %v3674 = vpop.f32.mrb[0].mxu0
        %v3675 = vadd.f32 0.0, %v3674
        %v3676 = vpop.f32.mrb[0].mxu0
        %v3677 = vpop.f32.mrb[0].mxu0
        %v3678 = vadd.f32 0.0, %v3677
        %v3679 = vpop.f32.mrb[0].mxu0
        %3680 = vmatprep.mubr.bf16.mxu0 0
        %3681 = vmatmul.mubr.bf16.gmra.mrb[0].mxu0 %v3355
        %v3682 = vpop.f32.mrb[0].mxu0
        %v3683 = vadd.f32 0.0, %v3682
        %v3684 = vpop.f32.mrb[0].mxu0
        %v3685 = vpop.f32.mrb[0].mxu0
        %v3686 = vadd.f32 0.0, %v3685
        %v3687 = vpop.f32.mrb[0].mxu0
        %3688 = vmatprep.mubr.bf16.mxu0 0
        %3689 = vmatmul.mubr.bf16.gmra.mrb[0].mxu0 %v3356
        %v3690 = vpop.f32.mrb[0].mxu0
        %v3691 = vadd.f32 0.0, %v3690
        %v3692 = vpop.f32.mrb[0].mxu0
        %v3693 = vpop.f32.mrb[0].mxu0
        %v3694 = vadd.f32 0.0, %v3693
        %v3695 = vpop.f32.mrb[0].mxu0
        %3696 = vmatprep.mubr.bf16.mxu0 0
        %3697 = vmatmul.mubr.bf16.gmra.mrb[0].mxu0 %v3357
        %v3698 = vpop.f32.mrb[0].mxu0
        %v3699 = vadd.f32 0.0, %v3698
        %v3700 = vpop.f32.mrb[0].mxu0
        %v3701 = vpop.f32.mrb[0].mxu0
        %v3702 = vadd.f32 0.0, %v3701
        %v3703 = vpop.f32.mrb[0].mxu0
        %3704 = vmatprep.mubr.bf16.mxu0 0
        %3705 = vmatmul.mubr.bf16.gmra.mrb[0].mxu0 %v3358
        %v3706 = vpop.f32.mrb[0].mxu0
        %v3707 = vadd.f32 0.0, %v3706
        %v3708 = vpop.f32.mrb[0].mxu0
        %v3709 = vpop.f32.mrb[0].mxu0
        %v3710 = vadd.f32 0.0, %v3709
        %v3711 = vpop.f32.mrb[0].mxu0
        %3712 = vdwg.mxu0
        %v3713 = vadd.f32 %v3359, %v3554
        %v3714 = vadd.f32 %v3360, %v3557
        %v3715 = vadd.f32 %v3361, %v3562
        %v3716 = vadd.f32 %v3362, %v3565
        %v3717 = vadd.f32 %v3363, %v3570
        %v3718 = vadd.f32 %v3364, %v3573
        %v3719 = vadd.f32 %v3365, %v3578
        %v3720 = vadd.f32 %v3366, %v3581
        %v3721 = vadd.f32 %v3367, %v3586
        %v3722 = vadd.f32 %v3368, %v3589
        %v3723 = vadd.f32 %v3369, %v3594
        %v3724 = vadd.f32 %v3370, %v3597
        %v3725 = vadd.f32 %v3371, %v3602
        %v3726 = vadd.f32 %v3372, %v3605
        %v3727 = vadd.f32 %v3373, %v3610
        %v3728 = vadd.f32 %v3374, %v3613
        %v3729 = vadd.f32 %v3375, %v3651
        %v3730 = vadd.f32 %v3376, %v3654
        %v3731 = vadd.f32 %v3377, %v3659
        %v3732 = vadd.f32 %v3378, %v3662
        %v3733 = vadd.f32 %v3379, %v3667
        %v3734 = vadd.f32 %v3380, %v3670
        %v3735 = vadd.f32 %v3381, %v3675
        %v3736 = vadd.f32 %v3382, %v3678
        %v3737 = vadd.f32 %v3383, %v3683
        %v3738 = vadd.f32 %v3384, %v3686
        %v3739 = vadd.f32 %v3385, %v3691
        %v3740 = vadd.f32 %v3386, %v3694
        %v3741 = vadd.f32 %v3387, %v3699
        %v3742 = vadd.f32 %v3388, %v3702
        %v3743 = vadd.f32 %v3389, %v3707
        %v3744 = vadd.f32 %v3390, %v3710
        %v3745 = vrcp.pop %v3487
        %v3746 = vrcp.pop %v3488
        %v3747 = vrcp.pop %v3489
        %v3748 = vrcp.pop %v3490
        %v3749 = vrcp.pop %v3491
        %v3750 = vrcp.pop %v3492
        %v3751 = vrcp.pop %v3493
        %v3752 = vrcp.pop %v3494
        %v3753 = vrcp.pop %v3495
        %v3754 = vrcp.pop %v3496
        %v3755 = vrcp.pop %v3497
        %v3756 = vrcp.pop %v3498
        %v3757 = vrcp.pop %v3499
        %v3758 = vrcp.pop %v3500
        %v3759 = vrcp.pop %v3501
        %v3760 = vrcp.pop %v3502
        %v3761 = vrcp.pop %v3503
        %v3762 = vrcp.pop %v3504
        %v3763 = vrcp.pop %v3505
        %v3764 = vrcp.pop %v3506
        %v3765 = vrcp.pop %v3507
        %v3766 = vrcp.pop %v3508
        %v3767 = vrcp.pop %v3509
        %v3768 = vrcp.pop %v3510
        %v3769 = vrcp.pop %v3511
        %v3770 = vrcp.pop %v3512
        %v3771 = vrcp.pop %v3513
        %v3772 = vrcp.pop %v3514
        %v3773 = vrcp.pop %v3515
        %v3774 = vrcp.pop %v3516
        %v3775 = vrcp.pop %v3517
        %v3776 = vrcp.pop %v3518
        %v3777 = vmul.f32 %v3713, %v3745
        %v3778 = vmul.f32 %v3714, %v3746
        %v3779 = vmul.f32 %v3715, %v3747
        %v3780 = vmul.f32 %v3716, %v3748
        %v3781 = vmul.f32 %v3717, %v3749
        %v3782 = vmul.f32 %v3718, %v3750
        %v3783 = vmul.f32 %v3719, %v3751
        %v3784 = vmul.f32 %v3720, %v3752
        %v3785 = vmul.f32 %v3721, %v3753
        %v3786 = vmul.f32 %v3722, %v3754
        %v3787 = vmul.f32 %v3723, %v3755
        %v3788 = vmul.f32 %v3724, %v3756
        %v3789 = vmul.f32 %v3725, %v3757
        %v3790 = vmul.f32 %v3726, %v3758
        %v3791 = vmul.f32 %v3727, %v3759
        %v3792 = vmul.f32 %v3728, %v3760
        %v3793 = vmul.f32 %v3729, %v3761
        %v3794 = vmul.f32 %v3730, %v3762
        %v3795 = vmul.f32 %v3731, %v3763
        %v3796 = vmul.f32 %v3732, %v3764
        %v3797 = vmul.f32 %v3733, %v3765
        %v3798 = vmul.f32 %v3734, %v3766
        %v3799 = vmul.f32 %v3735, %v3767
        %v3800 = vmul.f32 %v3736, %v3768
        %v3801 = vmul.f32 %v3737, %v3769
        %v3802 = vmul.f32 %v3738, %v3770
        %v3803 = vmul.f32 %v3739, %v3771
        %v3804 = vmul.f32 %v3740, %v3772
        %v3805 = vmul.f32 %v3741, %v3773
        %v3806 = vmul.f32 %v3742, %v3774
        %v3807 = vmul.f32 %v3743, %v3775
        %v3808 = vmul.f32 %v3744, %v3776
        %3809 = vst [vmem:[#allocation2] sm:$0xff] %v3777
        %3810 = vst [vmem:[#allocation2 + $0x10] sm:$0xff] %v3778
        %3811 = vst [vmem:[#allocation2 + $0x20] sm:$0xff] %v3779
        %3812 = vst [vmem:[#allocation2 + $0x30] sm:$0xff] %v3780
        %3813 = vst [vmem:[#allocation2 + $0x40] sm:$0xff] %v3781
        %3814 = vst [vmem:[#allocation2 + $0x50] sm:$0xff] %v3782
        %3815 = vst [vmem:[#allocation2 + $0x60] sm:$0xff] %v3783
        %3816 = vst [vmem:[#allocation2 + $0x70] sm:$0xff] %v3784
        %3817 = vst [vmem:[#allocation2 + $0x80] sm:$0xff] %v3785
        %3818 = vst [vmem:[#allocation2 + $0x90] sm:$0xff] %v3786
        %3819 = vst [vmem:[#allocation2 + $0xa0] sm:$0xff] %v3787
        %3820 = vst [vmem:[#allocation2 + $0xb0] sm:$0xff] %v3788
        %3821 = vst [vmem:[#allocation2 + $0xc0] sm:$0xff] %v3789
        %3822 = vst [vmem:[#allocation2 + $0xd0] sm:$0xff] %v3790
        %3823 = vst [vmem:[#allocation2 + $0xe0] sm:$0xff] %v3791
        %3824 = vst [vmem:[#allocation2 + $0xf0] sm:$0xff] %v3792
        %3825 = vst [vmem:[#allocation2 + $0x100] sm:$0xff] %v3793
        %3826 = vst [vmem:[#allocation2 + $0x110] sm:$0xff] %v3794
        %3827 = vst [vmem:[#allocation2 + $0x120] sm:$0xff] %v3795
        %3828 = vst [vmem:[#allocation2 + $0x130] sm:$0xff] %v3796
        %3829 = vst [vmem:[#allocation2 + $0x140] sm:$0xff] %v3797
        %3830 = vst [vmem:[#allocation2 + $0x150] sm:$0xff] %v3798
        %3831 = vst [vmem:[#allocation2 + $0x160] sm:$0xff] %v3799
        %3832 = vst [vmem:[#allocation2 + $0x170] sm:$0xff] %v3800
        %3833 = vst [vmem:[#allocation2 + $0x180] sm:$0xff] %v3801
        %3834 = vst [vmem:[#allocation2 + $0x190] sm:$0xff] %v3802
        %3835 = vst [vmem:[#allocation2 + $0x1a0] sm:$0xff] %v3803
        %3836 = vst [vmem:[#allocation2 + $0x1b0] sm:$0xff] %v3804
        %3837 = vst [vmem:[#allocation2 + $0x1c0] sm:$0xff] %v3805
        %3838 = vst [vmem:[#allocation2 + $0x1d0] sm:$0xff] %v3806
        %3839 = vst [vmem:[#allocation2 + $0x1e0] sm:$0xff] %v3807
        %3840 = vst [vmem:[#allocation2 + $0x1f0] sm:$0xff] %v3808
        %v3841 = vmul.f32 %v1951, %v2493
        %v3842 = vmul.f32 %v1955, %v2494
        %v3843 = vmul.f32 %v1961, %v2495
        %v3844 = vmul.f32 %v1965, %v2496
        %v3845 = vmul.f32 %v1971, %v2497
        %v3846 = vmul.f32 %v1975, %v2498
        %v3847 = vmul.f32 %v1981, %v2499
        %v3848 = vmul.f32 %v1985, %v2500
        %v3849 = vmul.f32 %v1991, %v2501
        %v3850 = vmul.f32 %v1995, %v2502
        %v3851 = vmul.f32 %v2001, %v2503
        %v3852 = vmul.f32 %v2005, %v2504
        %v3853 = vmul.f32 %v2011, %v2505
        %v3854 = vmul.f32 %v2015, %v2506
        %v3855 = vmul.f32 %v2021, %v2507
        %v3856 = vmul.f32 %v2025, %v2508
        %v3857 = vmul.f32 %v2031, %v2493
        %v3858 = vmul.f32 %v2035, %v2494
        %v3859 = vmul.f32 %v2041, %v2495
        %v3860 = vmul.f32 %v2045, %v2496
        %v3861 = vmul.f32 %v2051, %v2497
        %v3862 = vmul.f32 %v2055, %v2498
        %v3863 = vmul.f32 %v2061, %v2499
        %v3864 = vmul.f32 %v2065, %v2500
        %v3865 = vmul.f32 %v2071, %v2501
        %v3866 = vmul.f32 %v2075, %v2502
        %v3867 = vmul.f32 %v2081, %v2503
        %v3868 = vmul.f32 %v2085, %v2504
        %v3869 = vmul.f32 %v2091, %v2505
        %v3870 = vmul.f32 %v2095, %v2506
        %v3871 = vmul.f32 %v2101, %v2507
        %v3872 = vmul.f32 %v2105, %v2508
        %3873 = vrot.lane.b32.xlu0 %v1951, 64
        %v3874 = vpop.permute.xlu0 %3873
        %3875 = vrot.lane.b32.xlu0 %v1955, 64
        %v3876 = vpop.permute.xlu0 %3875
        %3877 = vrot.lane.b32.xlu0 %v1961, 64
        %v3878 = vpop.permute.xlu0 %3877
        %3879 = vrot.lane.b32.xlu0 %v1965, 64
        %v3880 = vpop.permute.xlu0 %3879
        %3881 = vrot.lane.b32.xlu0 %v1971, 64
        %v3882 = vpop.permute.xlu0 %3881
        %3883 = vrot.lane.b32.xlu0 %v1975, 64
        %v3884 = vpop.permute.xlu0 %3883
        %3885 = vrot.lane.b32.xlu0 %v1981, 64
        %v3886 = vpop.permute.xlu0 %3885
        %3887 = vrot.lane.b32.xlu0 %v1985, 64
        %v3888 = vpop.permute.xlu0 %3887
        %3889 = vrot.lane.b32.xlu0 %v1991, 64
        %v3890 = vpop.permute.xlu0 %3889
        %3891 = vrot.lane.b32.xlu0 %v1995, 64
        %v3892 = vpop.permute.xlu0 %3891
        %3893 = vrot.lane.b32.xlu0 %v2001, 64
        %v3894 = vpop.permute.xlu0 %3893
        %3895 = vrot.lane.b32.xlu0 %v2005, 64
        %v3896 = vpop.permute.xlu0 %3895
        %3897 = vrot.lane.b32.xlu0 %v2011, 64
        %v3898 = vpop.permute.xlu0 %3897
        %3899 = vrot.lane.b32.xlu0 %v2015, 64
        %v3900 = vpop.permute.xlu0 %3899
        %3901 = vrot.lane.b32.xlu0 %v2021, 64
        %v3902 = vpop.permute.xlu0 %3901
        %3903 = vrot.lane.b32.xlu0 %v2025, 64
        %v3904 = vpop.permute.xlu0 %3903
        %3905 = vrot.lane.b32.xlu0 %v2031, 64
        %v3906 = vpop.permute.xlu0 %3905
        %3907 = vrot.lane.b32.xlu0 %v2035, 64
        %v3908 = vpop.permute.xlu0 %3907
        %3909 = vrot.lane.b32.xlu0 %v2041, 64
        %v3910 = vpop.permute.xlu0 %3909
        %3911 = vrot.lane.b32.xlu0 %v2045, 64
        %v3912 = vpop.permute.xlu0 %3911
        %3913 = vrot.lane.b32.xlu0 %v2051, 64
        %v3914 = vpop.permute.xlu0 %3913
        %3915 = vrot.lane.b32.xlu0 %v2055, 64
        %v3916 = vpop.permute.xlu0 %3915
        %3917 = vrot.lane.b32.xlu0 %v2061, 64
        %v3918 = vpop.permute.xlu0 %3917
        %3919 = vrot.lane.b32.xlu0 %v2065, 64
        %v3920 = vpop.permute.xlu0 %3919
        %3921 = vrot.lane.b32.xlu0 %v2071, 64
        %v3922 = vpop.permute.xlu0 %3921
        %3923 = vrot.lane.b32.xlu0 %v2075, 64
        %v3924 = vpop.permute.xlu0 %3923
        %3925 = vrot.lane.b32.xlu0 %v2081, 64
        %v3926 = vpop.permute.xlu0 %3925
        %3927 = vrot.lane.b32.xlu0 %v2085, 64
        %v3928 = vpop.permute.xlu0 %3927
        %3929 = vrot.lane.b32.xlu0 %v2091, 64
        %v3930 = vpop.permute.xlu0 %3929
        %3931 = vrot.lane.b32.xlu0 %v2095, 64
        %v3932 = vpop.permute.xlu0 %3931
        %3933 = vrot.lane.b32.xlu0 %v2101, 64
        %v3934 = vpop.permute.xlu0 %3933
        %3935 = vrot.lane.b32.xlu0 %v2105, 64
        %v3936 = vpop.permute.xlu0 %3935
        %v3937 = vmul.f32 %v3874, %v2509
        %v3938 = vmul.f32 %v3876, %v2510
        %v3939 = vmul.f32 %v3878, %v2511
        %v3940 = vmul.f32 %v3880, %v2512
        %v3941 = vmul.f32 %v3882, %v2513
        %v3942 = vmul.f32 %v3884, %v2514
        %v3943 = vmul.f32 %v3886, %v2515
        %v3944 = vmul.f32 %v3888, %v2516
        %v3945 = vmul.f32 %v3890, %v2517
        %v3946 = vmul.f32 %v3892, %v2518
        %v3947 = vmul.f32 %v3894, %v2519
        %v3948 = vmul.f32 %v3896, %v2520
        %v3949 = vmul.f32 %v3898, %v2521
        %v3950 = vmul.f32 %v3900, %v2522
        %v3951 = vmul.f32 %v3902, %v2523
        %v3952 = vmul.f32 %v3904, %v2524
        %v3953 = vmul.f32 %v3906, %v2509
        %v3954 = vmul.f32 %v3908, %v2510
        %v3955 = vmul.f32 %v3910, %v2511
        %v3956 = vmul.f32 %v3912, %v2512
        %v3957 = vmul.f32 %v3914, %v2513
        %v3958 = vmul.f32 %v3916, %v2514
        %v3959 = vmul.f32 %v3918, %v2515
        %v3960 = vmul.f32 %v3920, %v2516
        %v3961 = vmul.f32 %v3922, %v2517
        %v3962 = vmul.f32 %v3924, %v2518
        %v3963 = vmul.f32 %v3926, %v2519
        %v3964 = vmul.f32 %v3928, %v2520
        %v3965 = vmul.f32 %v3930, %v2521
        %v3966 = vmul.f32 %v3932, %v2522
        %v3967 = vmul.f32 %v3934, %v2523
        %v3968 = vmul.f32 %v3936, %v2524
        %v3969 = vadd.f32 %v3841, %v3937
        %v3970 = vadd.f32 %v3842, %v3938
        %v3971 = vadd.f32 %v3843, %v3939
        %v3972 = vadd.f32 %v3844, %v3940
        %v3973 = vadd.f32 %v3845, %v3941
        %v3974 = vadd.f32 %v3846, %v3942
        %v3975 = vadd.f32 %v3847, %v3943
        %v3976 = vadd.f32 %v3848, %v3944
        %v3977 = vadd.f32 %v3849, %v3945
        %v3978 = vadd.f32 %v3850, %v3946
        %v3979 = vadd.f32 %v3851, %v3947
        %v3980 = vadd.f32 %v3852, %v3948
        %v3981 = vadd.f32 %v3853, %v3949
        %v3982 = vadd.f32 %v3854, %v3950
        %v3983 = vadd.f32 %v3855, %v3951
        %v3984 = vadd.f32 %v3856, %v3952
        %v3985 = vadd.f32 %v3857, %v3953
        %v3986 = vadd.f32 %v3858, %v3954
        %v3987 = vadd.f32 %v3859, %v3955
        %v3988 = vadd.f32 %v3860, %v3956
        %v3989 = vadd.f32 %v3861, %v3957
        %v3990 = vadd.f32 %v3862, %v3958
        %v3991 = vadd.f32 %v3863, %v3959
        %v3992 = vadd.f32 %v3864, %v3960
        %v3993 = vadd.f32 %v3865, %v3961
        %v3994 = vadd.f32 %v3866, %v3962
        %v3995 = vadd.f32 %v3867, %v3963
        %v3996 = vadd.f32 %v3868, %v3964
        %v3997 = vadd.f32 %v3869, %v3965
        %v3998 = vadd.f32 %v3870, %v3966
        %v3999 = vadd.f32 %v3871, %v3967
        %v4000 = vadd.f32 %v3872, %v3968
        %v4001 = vmul.f32 %v2144, %v2493
        %v4002 = vmul.f32 %v2148, %v2494
        %v4003 = vmul.f32 %v2154, %v2495
        %v4004 = vmul.f32 %v2158, %v2496
        %v4005 = vmul.f32 %v2164, %v2497
        %v4006 = vmul.f32 %v2168, %v2498
        %v4007 = vmul.f32 %v2174, %v2499
        %v4008 = vmul.f32 %v2178, %v2500
        %v4009 = vmul.f32 %v2184, %v2501
        %v4010 = vmul.f32 %v2188, %v2502
        %v4011 = vmul.f32 %v2194, %v2503
        %v4012 = vmul.f32 %v2198, %v2504
        %v4013 = vmul.f32 %v2204, %v2505
        %v4014 = vmul.f32 %v2208, %v2506
        %v4015 = vmul.f32 %v2214, %v2507
        %v4016 = vmul.f32 %v2218, %v2508
        %v4017 = vmul.f32 %v2224, %v2493
        %v4018 = vmul.f32 %v2228, %v2494
        %v4019 = vmul.f32 %v2234, %v2495
        %v4020 = vmul.f32 %v2238, %v2496
        %v4021 = vmul.f32 %v2244, %v2497
        %v4022 = vmul.f32 %v2248, %v2498
        %v4023 = vmul.f32 %v2254, %v2499
        %v4024 = vmul.f32 %v2258, %v2500
        %v4025 = vmul.f32 %v2264, %v2501
        %v4026 = vmul.f32 %v2268, %v2502
        %v4027 = vmul.f32 %v2274, %v2503
        %v4028 = vmul.f32 %v2278, %v2504
        %v4029 = vmul.f32 %v2284, %v2505
        %v4030 = vmul.f32 %v2288, %v2506
        %v4031 = vmul.f32 %v2294, %v2507
        %v4032 = vmul.f32 %v2298, %v2508
        %4033 = vrot.lane.b32.xlu0 %v2144, 64
        %v4034 = vpop.permute.xlu0 %4033
        %4035 = vrot.lane.b32.xlu0 %v2148, 64
        %v4036 = vpop.permute.xlu0 %4035
        %4037 = vrot.lane.b32.xlu0 %v2154, 64
        %v4038 = vpop.permute.xlu0 %4037
        %4039 = vrot.lane.b32.xlu0 %v2158, 64
        %v4040 = vpop.permute.xlu0 %4039
        %4041 = vrot.lane.b32.xlu0 %v2164, 64
        %v4042 = vpop.permute.xlu0 %4041
        %4043 = vrot.lane.b32.xlu0 %v2168, 64
        %v4044 = vpop.permute.xlu0 %4043
        %4045 = vrot.lane.b32.xlu0 %v2174, 64
        %v4046 = vpop.permute.xlu0 %4045
        %4047 = vrot.lane.b32.xlu0 %v2178, 64
        %v4048 = vpop.permute.xlu0 %4047
        %4049 = vrot.lane.b32.xlu0 %v2184, 64
        %v4050 = vpop.permute.xlu0 %4049
        %4051 = vrot.lane.b32.xlu0 %v2188, 64
        %v4052 = vpop.permute.xlu0 %4051
        %4053 = vrot.lane.b32.xlu0 %v2194, 64
        %v4054 = vpop.permute.xlu0 %4053
        %4055 = vrot.lane.b32.xlu0 %v2198, 64
        %v4056 = vpop.permute.xlu0 %4055
        %4057 = vrot.lane.b32.xlu0 %v2204, 64
        %v4058 = vpop.permute.xlu0 %4057
        %4059 = vrot.lane.b32.xlu0 %v2208, 64
        %v4060 = vpop.permute.xlu0 %4059
        %4061 = vrot.lane.b32.xlu0 %v2214, 64
        %v4062 = vpop.permute.xlu0 %4061
        %4063 = vrot.lane.b32.xlu0 %v2218, 64
        %v4064 = vpop.permute.xlu0 %4063
        %4065 = vrot.lane.b32.xlu0 %v2224, 64
        %v4066 = vpop.permute.xlu0 %4065
        %4067 = vrot.lane.b32.xlu0 %v2228, 64
        %v4068 = vpop.permute.xlu0 %4067
        %4069 = vrot.lane.b32.xlu0 %v2234, 64
        %v4070 = vpop.permute.xlu0 %4069
        %4071 = vrot.lane.b32.xlu0 %v2238, 64
        %v4072 = vpop.permute.xlu0 %4071
        %4073 = vrot.lane.b32.xlu0 %v2244, 64
        %v4074 = vpop.permute.xlu0 %4073
        %4075 = vrot.lane.b32.xlu0 %v2248, 64
        %v4076 = vpop.permute.xlu0 %4075
        %4077 = vrot.lane.b32.xlu0 %v2254, 64
        %v4078 = vpop.permute.xlu0 %4077
        %4079 = vrot.lane.b32.xlu0 %v2258, 64
        %v4080 = vpop.permute.xlu0 %4079
        %4081 = vrot.lane.b32.xlu0 %v2264, 64
        %v4082 = vpop.permute.xlu0 %4081
        %4083 = vrot.lane.b32.xlu0 %v2268, 64
        %v4084 = vpop.permute.xlu0 %4083
        %4085 = vrot.lane.b32.xlu0 %v2274, 64
        %v4086 = vpop.permute.xlu0 %4085
        %4087 = vrot.lane.b32.xlu0 %v2278, 64
        %v4088 = vpop.permute.xlu0 %4087
        %4089 = vrot.lane.b32.xlu0 %v2284, 64
        %v4090 = vpop.permute.xlu0 %4089
        %4091 = vrot.lane.b32.xlu0 %v2288, 64
        %v4092 = vpop.permute.xlu0 %4091
        %4093 = vrot.lane.b32.xlu0 %v2294, 64
        %v4094 = vpop.permute.xlu0 %4093
        %4095 = vrot.lane.b32.xlu0 %v2298, 64
        %v4096 = vpop.permute.xlu0 %4095
        %v4097 = vmul.f32 %v4034, %v2509
        %v4098 = vmul.f32 %v4036, %v2510
        %v4099 = vmul.f32 %v4038, %v2511
        %v4100 = vmul.f32 %v4040, %v2512
        %v4101 = vmul.f32 %v4042, %v2513
        %v4102 = vmul.f32 %v4044, %v2514
        %v4103 = vmul.f32 %v4046, %v2515
        %v4104 = vmul.f32 %v4048, %v2516
        %v4105 = vmul.f32 %v4050, %v2517
        %v4106 = vmul.f32 %v4052, %v2518
        %v4107 = vmul.f32 %v4054, %v2519
        %v4108 = vmul.f32 %v4056, %v2520
        %v4109 = vmul.f32 %v4058, %v2521
        %v4110 = vmul.f32 %v4060, %v2522
        %v4111 = vmul.f32 %v4062, %v2523
        %v4112 = vmul.f32 %v4064, %v2524
        %v4113 = vmul.f32 %v4066, %v2509
        %v4114 = vmul.f32 %v4068, %v2510
        %v4115 = vmul.f32 %v4070, %v2511
        %v4116 = vmul.f32 %v4072, %v2512
        %v4117 = vmul.f32 %v4074, %v2513
        %v4118 = vmul.f32 %v4076, %v2514
        %v4119 = vmul.f32 %v4078, %v2515
        %v4120 = vmul.f32 %v4080, %v2516
        %v4121 = vmul.f32 %v4082, %v2517
        %v4122 = vmul.f32 %v4084, %v2518
        %v4123 = vmul.f32 %v4086, %v2519
        %v4124 = vmul.f32 %v4088, %v2520
        %v4125 = vmul.f32 %v4090, %v2521
        %v4126 = vmul.f32 %v4092, %v2522
        %v4127 = vmul.f32 %v4094, %v2523
        %v4128 = vmul.f32 %v4096, %v2524
        %v4129 = vadd.f32 %v4001, %v4097
        %v4130 = vadd.f32 %v4002, %v4098
        %v4131 = vadd.f32 %v4003, %v4099
        %v4132 = vadd.f32 %v4004, %v4100
        %v4133 = vadd.f32 %v4005, %v4101
        %v4134 = vadd.f32 %v4006, %v4102
        %v4135 = vadd.f32 %v4007, %v4103
        %v4136 = vadd.f32 %v4008, %v4104
        %v4137 = vadd.f32 %v4009, %v4105
        %v4138 = vadd.f32 %v4010, %v4106
        %v4139 = vadd.f32 %v4011, %v4107
        %v4140 = vadd.f32 %v4012, %v4108
        %v4141 = vadd.f32 %v4013, %v4109
        %v4142 = vadd.f32 %v4014, %v4110
        %v4143 = vadd.f32 %v4015, %v4111
        %v4144 = vadd.f32 %v4016, %v4112
        %v4145 = vadd.f32 %v4017, %v4113
        %v4146 = vadd.f32 %v4018, %v4114
        %v4147 = vadd.f32 %v4019, %v4115
        %v4148 = vadd.f32 %v4020, %v4116
        %v4149 = vadd.f32 %v4021, %v4117
        %v4150 = vadd.f32 %v4022, %v4118
        %v4151 = vadd.f32 %v4023, %v4119
        %v4152 = vadd.f32 %v4024, %v4120
        %v4153 = vadd.f32 %v4025, %v4121
        %v4154 = vadd.f32 %v4026, %v4122
        %v4155 = vadd.f32 %v4027, %v4123
        %v4156 = vadd.f32 %v4028, %v4124
        %v4157 = vadd.f32 %v4029, %v4125
        %v4158 = vadd.f32 %v4030, %v4126
        %v4159 = vadd.f32 %v4031, %v4127
        %v4160 = vadd.f32 %v4032, %v4128
        %v4161 = vpack.c.bf16 %v3970, %v3969
        %v4162 = vpack.c.bf16 %v3972, %v3971
        %v4163 = vpack.c.bf16 %v3974, %v3973
        %v4164 = vpack.c.bf16 %v3976, %v3975
        %v4165 = vpack.c.bf16 %v3978, %v3977
        %v4166 = vpack.c.bf16 %v3980, %v3979
        %v4167 = vpack.c.bf16 %v3982, %v3981
        %v4168 = vpack.c.bf16 %v3984, %v3983
        %v4169 = vpack.c.bf16 %v3986, %v3985
        %v4170 = vpack.c.bf16 %v3988, %v3987
        %v4171 = vpack.c.bf16 %v3990, %v3989
        %v4172 = vpack.c.bf16 %v3992, %v3991
        %v4173 = vpack.c.bf16 %v3994, %v3993
        %v4174 = vpack.c.bf16 %v3996, %v3995
        %v4175 = vpack.c.bf16 %v3998, %v3997
        %v4176 = vpack.c.bf16 %v4000, %v3999
        %v4177 = vpack.c.bf16 %v4130, %v4129
        %v4178 = vpack.c.bf16 %v4132, %v4131
        %v4179 = vpack.c.bf16 %v4134, %v4133
        %v4180 = vpack.c.bf16 %v4136, %v4135
        %v4181 = vpack.c.bf16 %v4138, %v4137
        %v4182 = vpack.c.bf16 %v4140, %v4139
        %v4183 = vpack.c.bf16 %v4142, %v4141
        %v4184 = vpack.c.bf16 %v4144, %v4143
        %v4185 = vpack.c.bf16 %v4146, %v4145
        %v4186 = vpack.c.bf16 %v4148, %v4147
        %v4187 = vpack.c.bf16 %v4150, %v4149
        %v4188 = vpack.c.bf16 %v4152, %v4151
        %v4189 = vpack.c.bf16 %v4154, %v4153
        %v4190 = vpack.c.bf16 %v4156, %v4155
        %v4191 = vpack.c.bf16 %v4158, %v4157
        %v4192 = vpack.c.bf16 %v4160, %v4159
        %v4193 = vpack.c.bf16 %v2341, %v2337
        %v4194 = vpack.c.bf16 %v2351, %v2347
        %v4195 = vpack.c.bf16 %v2361, %v2357
        %v4196 = vpack.c.bf16 %v2371, %v2367
        %v4197 = vpack.c.bf16 %v2381, %v2377
        %v4198 = vpack.c.bf16 %v2391, %v2387
        %v4199 = vpack.c.bf16 %v2401, %v2397
        %v4200 = vpack.c.bf16 %v2411, %v2407
        %v4201 = vpack.c.bf16 %v2421, %v2417
        %v4202 = vpack.c.bf16 %v2431, %v2427
        %v4203 = vpack.c.bf16 %v2441, %v2437
        %v4204 = vpack.c.bf16 %v2451, %v2447
        %v4205 = vpack.c.bf16 %v2461, %v2457
        %v4206 = vpack.c.bf16 %v2471, %v2467
        %v4207 = vpack.c.bf16 %v2481, %v2477
        %v4208 = vpack.c.bf16 %v2491, %v2487
        %4209 = vmatprep.subr.bf16.mxu0 0
        %4210 = vmatpush1.bf16.xpose.msra.mxu0 %v4177
        %4211 = vmatprep.subr.bf16.mxu0 0
        %4212 = vmatpush1.bf16.xpose.msra.mxu0 %v4178
        %4213 = vmatprep.subr.bf16.mxu0 0
        %4214 = vmatpush1.bf16.xpose.msra.mxu0 %v4179
        %4215 = vmatprep.subr.bf16.mxu0 0
        %4216 = vmatpush1.bf16.xpose.msra.mxu0 %v4180
        %4217 = vmatprep.subr.bf16.mxu0 0
        %4218 = vmatpush1.bf16.xpose.msra.mxu0 %v4181
        %4219 = vmatprep.subr.bf16.mxu0 0
        %4220 = vmatpush1.bf16.xpose.msra.mxu0 %v4182
        %4221 = vmatprep.subr.bf16.mxu0 0
        %4222 = vmatpush1.bf16.xpose.msra.mxu0 %v4183
        %4223 = vmatprep.subr.bf16.mxu0 0
        %4224 = vmatpush1.bf16.xpose.msra.mxu0 %v4184
        %4225 = vmatprep.subr.bf16.mxu0 0
        %4226 = vmatpush1.bf16.xpose.msra.mxu0 0
        %4227 = vmatprep.subr.bf16.mxu0 0
        %4228 = vmatpush1.bf16.xpose.msra.mxu0 0
        %4229 = vmatprep.subr.bf16.mxu0 0
        %4230 = vmatpush1.bf16.xpose.msra.mxu0 0
        %4231 = vmatprep.subr.bf16.mxu0 0
        %4232 = vmatpush1.bf16.xpose.msra.mxu0 0
        %4233 = vmatprep.subr.bf16.mxu0 0
        %4234 = vmatpush1.bf16.xpose.msra.mxu0 0
        %4235 = vmatprep.subr.bf16.mxu0 0
        %4236 = vmatpush1.bf16.xpose.msra.mxu0 0
        %4237 = vmatprep.subr.bf16.mxu0 0
        %4238 = vmatpush1.bf16.xpose.msra.mxu0 0
        %4239 = vmatprep.subr.bf16.mxu0 0
        %4240 = vmatpush1.bf16.xpose.msra.mxu0 0
        %4241 = vmatprep.mubr.bf16.mxu0 0
        %4242 = vmatmul.mubr.bf16.gmra.mrb[0].mxu0 %v4161
        %v4243 = vpop.f32.mrb[0].mxu0
        %v4244 = vadd.f32 0.0, %v4243
        %v4245 = vpop.f32.mrb[0].mxu0
        %v4246 = vpop.f32.mrb[0].mxu0
        %v4247 = vadd.f32 0.0, %v4246
        %v4248 = vpop.f32.mrb[0].mxu0
        %4249 = vmatprep.mubr.bf16.mxu0 0
        %4250 = vmatmul.mubr.bf16.gmra.mrb[0].mxu0 %v4162
        %v4251 = vpop.f32.mrb[0].mxu0
        %v4252 = vadd.f32 0.0, %v4251
        %v4253 = vpop.f32.mrb[0].mxu0
        %v4254 = vpop.f32.mrb[0].mxu0
        %v4255 = vadd.f32 0.0, %v4254
        %v4256 = vpop.f32.mrb[0].mxu0
        %4257 = vmatprep.mubr.bf16.mxu0 0
        %4258 = vmatmul.mubr.bf16.gmra.mrb[0].mxu0 %v4163
        %v4259 = vpop.f32.mrb[0].mxu0
        %v4260 = vadd.f32 0.0, %v4259
        %v4261 = vpop.f32.mrb[0].mxu0
        %v4262 = vpop.f32.mrb[0].mxu0
        %v4263 = vadd.f32 0.0, %v4262
        %v4264 = vpop.f32.mrb[0].mxu0
        %4265 = vmatprep.mubr.bf16.mxu0 0
        %4266 = vmatmul.mubr.bf16.gmra.mrb[0].mxu0 %v4164
        %v4267 = vpop.f32.mrb[0].mxu0
        %v4268 = vadd.f32 0.0, %v4267
        %v4269 = vpop.f32.mrb[0].mxu0
        %v4270 = vpop.f32.mrb[0].mxu0
        %v4271 = vadd.f32 0.0, %v4270
        %v4272 = vpop.f32.mrb[0].mxu0
        %4273 = vmatprep.mubr.bf16.mxu0 0
        %4274 = vmatmul.mubr.bf16.gmra.mrb[0].mxu0 %v4165
        %v4275 = vpop.f32.mrb[0].mxu0
        %v4276 = vadd.f32 0.0, %v4275
        %v4277 = vpop.f32.mrb[0].mxu0
        %v4278 = vpop.f32.mrb[0].mxu0
        %v4279 = vadd.f32 0.0, %v4278
        %v4280 = vpop.f32.mrb[0].mxu0
        %4281 = vmatprep.mubr.bf16.mxu0 0
        %4282 = vmatmul.mubr.bf16.gmra.mrb[0].mxu0 %v4166
        %v4283 = vpop.f32.mrb[0].mxu0
        %v4284 = vadd.f32 0.0, %v4283
        %v4285 = vpop.f32.mrb[0].mxu0
        %v4286 = vpop.f32.mrb[0].mxu0
        %v4287 = vadd.f32 0.0, %v4286
        %v4288 = vpop.f32.mrb[0].mxu0
        %4289 = vmatprep.mubr.bf16.mxu0 0
        %4290 = vmatmul.mubr.bf16.gmra.mrb[0].mxu0 %v4167
        %v4291 = vpop.f32.mrb[0].mxu0
        %v4292 = vadd.f32 0.0, %v4291
        %v4293 = vpop.f32.mrb[0].mxu0
        %v4294 = vpop.f32.mrb[0].mxu0
        %v4295 = vadd.f32 0.0, %v4294
        %v4296 = vpop.f32.mrb[0].mxu0
        %4297 = vmatprep.mubr.bf16.mxu0 0
        %4298 = vmatmul.mubr.bf16.gmra.mrb[0].mxu0 %v4168
        %v4299 = vpop.f32.mrb[0].mxu0
        %v4300 = vadd.f32 0.0, %v4299
        %v4301 = vpop.f32.mrb[0].mxu0
        %v4302 = vpop.f32.mrb[0].mxu0
        %v4303 = vadd.f32 0.0, %v4302
        %v4304 = vpop.f32.mrb[0].mxu0
        %4305 = vdwg.mxu0
        %4306 = vmatprep.subr.bf16.mxu0 0
        %4307 = vmatpush1.bf16.xpose.msra.mxu0 %v4185
        %4308 = vmatprep.subr.bf16.mxu0 0
        %4309 = vmatpush1.bf16.xpose.msra.mxu0 %v4186
        %4310 = vmatprep.subr.bf16.mxu0 0
        %4311 = vmatpush1.bf16.xpose.msra.mxu0 %v4187
        %4312 = vmatprep.subr.bf16.mxu0 0
        %4313 = vmatpush1.bf16.xpose.msra.mxu0 %v4188
        %4314 = vmatprep.subr.bf16.mxu0 0
        %4315 = vmatpush1.bf16.xpose.msra.mxu0 %v4189
        %4316 = vmatprep.subr.bf16.mxu0 0
        %4317 = vmatpush1.bf16.xpose.msra.mxu0 %v4190
        %4318 = vmatprep.subr.bf16.mxu0 0
        %4319 = vmatpush1.bf16.xpose.msra.mxu0 %v4191
        %4320 = vmatprep.subr.bf16.mxu0 0
        %4321 = vmatpush1.bf16.xpose.msra.mxu0 %v4192
        %4322 = vmatprep.subr.bf16.mxu0 0
        %4323 = vmatpush1.bf16.xpose.msra.mxu0 0
        %4324 = vmatprep.subr.bf16.mxu0 0
        %4325 = vmatpush1.bf16.xpose.msra.mxu0 0
        %4326 = vmatprep.subr.bf16.mxu0 0
        %4327 = vmatpush1.bf16.xpose.msra.mxu0 0
        %4328 = vmatprep.subr.bf16.mxu0 0
        %4329 = vmatpush1.bf16.xpose.msra.mxu0 0
        %4330 = vmatprep.subr.bf16.mxu0 0
        %4331 = vmatpush1.bf16.xpose.msra.mxu0 0
        %4332 = vmatprep.subr.bf16.mxu0 0
        %4333 = vmatpush1.bf16.xpose.msra.mxu0 0
        %4334 = vmatprep.subr.bf16.mxu0 0
        %4335 = vmatpush1.bf16.xpose.msra.mxu0 0
        %4336 = vmatprep.subr.bf16.mxu0 0
        %4337 = vmatpush1.bf16.xpose.msra.mxu0 0
        %4338 = vmatprep.mubr.bf16.mxu0 0
        %4339 = vmatmul.mubr.bf16.gmra.mrb[0].mxu0 %v4169
        %v4340 = vpop.f32.mrb[0].mxu0
        %v4341 = vadd.f32 0.0, %v4340
        %v4342 = vpop.f32.mrb[0].mxu0
        %v4343 = vpop.f32.mrb[0].mxu0
        %v4344 = vadd.f32 0.0, %v4343
        %v4345 = vpop.f32.mrb[0].mxu0
        %4346 = vmatprep.mubr.bf16.mxu0 0
        %4347 = vmatmul.mubr.bf16.gmra.mrb[0].mxu0 %v4170
        %v4348 = vpop.f32.mrb[0].mxu0
        %v4349 = vadd.f32 0.0, %v4348
        %v4350 = vpop.f32.mrb[0].mxu0
        %v4351 = vpop.f32.mrb[0].mxu0
        %v4352 = vadd.f32 0.0, %v4351
        %v4353 = vpop.f32.mrb[0].mxu0
        %4354 = vmatprep.mubr.bf16.mxu0 0
        %4355 = vmatmul.mubr.bf16.gmra.mrb[0].mxu0 %v4171
        %v4356 = vpop.f32.mrb[0].mxu0
        %v4357 = vadd.f32 0.0, %v4356
        %v4358 = vpop.f32.mrb[0].mxu0
        %v4359 = vpop.f32.mrb[0].mxu0
        %v4360 = vadd.f32 0.0, %v4359
        %v4361 = vpop.f32.mrb[0].mxu0
        %4362 = vmatprep.mubr.bf16.mxu0 0
        %4363 = vmatmul.mubr.bf16.gmra.mrb[0].mxu0 %v4172
        %v4364 = vpop.f32.mrb[0].mxu0
        %v4365 = vadd.f32 0.0, %v4364
        %v4366 = vpop.f32.mrb[0].mxu0
        %v4367 = vpop.f32.mrb[0].mxu0
        %v4368 = vadd.f32 0.0, %v4367
        %v4369 = vpop.f32.mrb[0].mxu0
        %4370 = vmatprep.mubr.bf16.mxu0 0
        %4371 = vmatmul.mubr.bf16.gmra.mrb[0].mxu0 %v4173
        %v4372 = vpop.f32.mrb[0].mxu0
        %v4373 = vadd.f32 0.0, %v4372
        %v4374 = vpop.f32.mrb[0].mxu0
        %v4375 = vpop.f32.mrb[0].mxu0
        %v4376 = vadd.f32 0.0, %v4375
        %v4377 = vpop.f32.mrb[0].mxu0
        %4378 = vmatprep.mubr.bf16.mxu0 0
        %4379 = vmatmul.mubr.bf16.gmra.mrb[0].mxu0 %v4174
        %v4380 = vpop.f32.mrb[0].mxu0
        %v4381 = vadd.f32 0.0, %v4380
        %v4382 = vpop.f32.mrb[0].mxu0
        %v4383 = vpop.f32.mrb[0].mxu0
        %v4384 = vadd.f32 0.0, %v4383
        %v4385 = vpop.f32.mrb[0].mxu0
        %4386 = vmatprep.mubr.bf16.mxu0 0
        %4387 = vmatmul.mubr.bf16.gmra.mrb[0].mxu0 %v4175
        %v4388 = vpop.f32.mrb[0].mxu0
        %v4389 = vadd.f32 0.0, %v4388
        %v4390 = vpop.f32.mrb[0].mxu0
        %v4391 = vpop.f32.mrb[0].mxu0
        %v4392 = vadd.f32 0.0, %v4391
        %v4393 = vpop.f32.mrb[0].mxu0
        %4394 = vmatprep.mubr.bf16.mxu0 0
        %4395 = vmatmul.mubr.bf16.gmra.mrb[0].mxu0 %v4176
        %v4396 = vpop.f32.mrb[0].mxu0
        %v4397 = vadd.f32 0.0, %v4396
        %v4398 = vpop.f32.mrb[0].mxu0
        %v4399 = vpop.f32.mrb[0].mxu0
        %v4400 = vadd.f32 0.0, %v4399
        %v4401 = vpop.f32.mrb[0].mxu0
        %4402 = vdwg.mxu0
        %4403 = vmax.xlane.f32.xlu0 %v4244
        %v4404 = vpop.xlane.xlu0 %4403
        %4405 = vmax.xlane.f32.xlu0 %v4247
        %v4406 = vpop.xlane.xlu0 %4405
        %4407 = vmax.xlane.f32.xlu0 %v4252
        %v4408 = vpop.xlane.xlu0 %4407
        %4409 = vmax.xlane.f32.xlu0 %v4255
        %v4410 = vpop.xlane.xlu0 %4409
        %4411 = vmax.xlane.f32.xlu0 %v4260
        %v4412 = vpop.xlane.xlu0 %4411
        %4413 = vmax.xlane.f32.xlu0 %v4263
        %v4414 = vpop.xlane.xlu0 %4413
        %4415 = vmax.xlane.f32.xlu0 %v4268
        %v4416 = vpop.xlane.xlu0 %4415
        %4417 = vmax.xlane.f32.xlu0 %v4271
        %v4418 = vpop.xlane.xlu0 %4417
        %4419 = vmax.xlane.f32.xlu0 %v4276
        %v4420 = vpop.xlane.xlu0 %4419
        %4421 = vmax.xlane.f32.xlu0 %v4279
        %v4422 = vpop.xlane.xlu0 %4421
        %4423 = vmax.xlane.f32.xlu0 %v4284
        %v4424 = vpop.xlane.xlu0 %4423
        %4425 = vmax.xlane.f32.xlu0 %v4287
        %v4426 = vpop.xlane.xlu0 %4425
        %4427 = vmax.xlane.f32.xlu0 %v4292
        %v4428 = vpop.xlane.xlu0 %4427
        %4429 = vmax.xlane.f32.xlu0 %v4295
        %v4430 = vpop.xlane.xlu0 %4429
        %4431 = vmax.xlane.f32.xlu0 %v4300
        %v4432 = vpop.xlane.xlu0 %4431
        %4433 = vmax.xlane.f32.xlu0 %v4303
        %v4434 = vpop.xlane.xlu0 %4433
        %4435 = vmax.xlane.f32.xlu0 %v4341
        %v4436 = vpop.xlane.xlu0 %4435
        %4437 = vmax.xlane.f32.xlu0 %v4344
        %v4438 = vpop.xlane.xlu0 %4437
        %4439 = vmax.xlane.f32.xlu0 %v4349
        %v4440 = vpop.xlane.xlu0 %4439
        %4441 = vmax.xlane.f32.xlu0 %v4352
        %v4442 = vpop.xlane.xlu0 %4441
        %4443 = vmax.xlane.f32.xlu0 %v4357
        %v4444 = vpop.xlane.xlu0 %4443
        %4445 = vmax.xlane.f32.xlu0 %v4360
        %v4446 = vpop.xlane.xlu0 %4445
        %4447 = vmax.xlane.f32.xlu0 %v4365
        %v4448 = vpop.xlane.xlu0 %4447
        %4449 = vmax.xlane.f32.xlu0 %v4368
        %v4450 = vpop.xlane.xlu0 %4449
        %4451 = vmax.xlane.f32.xlu0 %v4373
        %v4452 = vpop.xlane.xlu0 %4451
        %4453 = vmax.xlane.f32.xlu0 %v4376
        %v4454 = vpop.xlane.xlu0 %4453
        %4455 = vmax.xlane.f32.xlu0 %v4381
        %v4456 = vpop.xlane.xlu0 %4455
        %4457 = vmax.xlane.f32.xlu0 %v4384
        %v4458 = vpop.xlane.xlu0 %4457
        %4459 = vmax.xlane.f32.xlu0 %v4389
        %v4460 = vpop.xlane.xlu0 %4459
        %4461 = vmax.xlane.f32.xlu0 %v4392
        %v4462 = vpop.xlane.xlu0 %4461
        %4463 = vmax.xlane.f32.xlu0 %v4397
        %v4464 = vpop.xlane.xlu0 %4463
        %4465 = vmax.xlane.f32.xlu0 %v4400
        %v4466 = vpop.xlane.xlu0 %4465
        %v4467 = vsub.f32 -inf, %v4404
        %v4468 = vsub.f32 -inf, %v4406
        %v4469 = vsub.f32 -inf, %v4408
        %v4470 = vsub.f32 -inf, %v4410
        %v4471 = vsub.f32 -inf, %v4412
        %v4472 = vsub.f32 -inf, %v4414
        %v4473 = vsub.f32 -inf, %v4416
        %v4474 = vsub.f32 -inf, %v4418
        %v4475 = vsub.f32 -inf, %v4420
        %v4476 = vsub.f32 -inf, %v4422
        %v4477 = vsub.f32 -inf, %v4424
        %v4478 = vsub.f32 -inf, %v4426
        %v4479 = vsub.f32 -inf, %v4428
        %v4480 = vsub.f32 -inf, %v4430
        %v4481 = vsub.f32 -inf, %v4432
        %v4482 = vsub.f32 -inf, %v4434
        %v4483 = vsub.f32 -inf, %v4436
        %v4484 = vsub.f32 -inf, %v4438
        %v4485 = vsub.f32 -inf, %v4440
        %v4486 = vsub.f32 -inf, %v4442
        %v4487 = vsub.f32 -inf, %v4444
        %v4488 = vsub.f32 -inf, %v4446
        %v4489 = vsub.f32 -inf, %v4448
        %v4490 = vsub.f32 -inf, %v4450
        %v4491 = vsub.f32 -inf, %v4452
        %v4492 = vsub.f32 -inf, %v4454
        %v4493 = vsub.f32 -inf, %v4456
        %v4494 = vsub.f32 -inf, %v4458
        %v4495 = vsub.f32 -inf, %v4460
        %v4496 = vsub.f32 -inf, %v4462
        %v4497 = vsub.f32 -inf, %v4464
        %v4498 = vsub.f32 -inf, %v4466
        %v4499 = vmul.f32 %v4467, 1.442695
        %v4500 = vpow.pop %v4499
        %v4501 = vmul.f32 %v4468, 1.442695
        %v4502 = vpow.pop %v4501
        %v4503 = vmul.f32 %v4469, 1.442695
        %v4504 = vpow.pop %v4503
        %v4505 = vmul.f32 %v4470, 1.442695
        %v4506 = vpow.pop %v4505
        %v4507 = vmul.f32 %v4471, 1.442695
        %v4508 = vpow.pop %v4507
        %v4509 = vmul.f32 %v4472, 1.442695
        %v4510 = vpow.pop %v4509
        %v4511 = vmul.f32 %v4473, 1.442695
        %v4512 = vpow.pop %v4511
        %v4513 = vmul.f32 %v4474, 1.442695
        %v4514 = vpow.pop %v4513
        %v4515 = vmul.f32 %v4475, 1.442695
        %v4516 = vpow.pop %v4515
        %v4517 = vmul.f32 %v4476, 1.442695
        %v4518 = vpow.pop %v4517
        %v4519 = vmul.f32 %v4477, 1.442695
        %v4520 = vpow.pop %v4519
        %v4521 = vmul.f32 %v4478, 1.442695
        %v4522 = vpow.pop %v4521
        %v4523 = vmul.f32 %v4479, 1.442695
        %v4524 = vpow.pop %v4523
        %v4525 = vmul.f32 %v4480, 1.442695
        %v4526 = vpow.pop %v4525
        %v4527 = vmul.f32 %v4481, 1.442695
        %v4528 = vpow.pop %v4527
        %v4529 = vmul.f32 %v4482, 1.442695
        %v4530 = vpow.pop %v4529
        %v4531 = vmul.f32 %v4483, 1.442695
        %v4532 = vpow.pop %v4531
        %v4533 = vmul.f32 %v4484, 1.442695
        %v4534 = vpow.pop %v4533
        %v4535 = vmul.f32 %v4485, 1.442695
        %v4536 = vpow.pop %v4535
        %v4537 = vmul.f32 %v4486, 1.442695
        %v4538 = vpow.pop %v4537
        %v4539 = vmul.f32 %v4487, 1.442695
        %v4540 = vpow.pop %v4539
        %v4541 = vmul.f32 %v4488, 1.442695
        %v4542 = vpow.pop %v4541
        %v4543 = vmul.f32 %v4489, 1.442695
        %v4544 = vpow.pop %v4543
        %v4545 = vmul.f32 %v4490, 1.442695
        %v4546 = vpow.pop %v4545
        %v4547 = vmul.f32 %v4491, 1.442695
        %v4548 = vpow.pop %v4547
        %v4549 = vmul.f32 %v4492, 1.442695
        %v4550 = vpow.pop %v4549
        %v4551 = vmul.f32 %v4493, 1.442695
        %v4552 = vpow.pop %v4551
        %v4553 = vmul.f32 %v4494, 1.442695
        %v4554 = vpow.pop %v4553
        %v4555 = vmul.f32 %v4495, 1.442695
        %v4556 = vpow.pop %v4555
        %v4557 = vmul.f32 %v4496, 1.442695
        %v4558 = vpow.pop %v4557
        %v4559 = vmul.f32 %v4497, 1.442695
        %v4560 = vpow.pop %v4559
        %v4561 = vmul.f32 %v4498, 1.442695
        %v4562 = vpow.pop %v4561
        %v4563 = vsub.f32 %v4244, %v4404
        %v4564 = vsub.f32 %v4247, %v4406
        %v4565 = vsub.f32 %v4252, %v4408
        %v4566 = vsub.f32 %v4255, %v4410
        %v4567 = vsub.f32 %v4260, %v4412
        %v4568 = vsub.f32 %v4263, %v4414
        %v4569 = vsub.f32 %v4268, %v4416
        %v4570 = vsub.f32 %v4271, %v4418
        %v4571 = vsub.f32 %v4276, %v4420
        %v4572 = vsub.f32 %v4279, %v4422
        %v4573 = vsub.f32 %v4284, %v4424
        %v4574 = vsub.f32 %v4287, %v4426
        %v4575 = vsub.f32 %v4292, %v4428
        %v4576 = vsub.f32 %v4295, %v4430
        %v4577 = vsub.f32 %v4300, %v4432
        %v4578 = vsub.f32 %v4303, %v4434
        %v4579 = vsub.f32 %v4341, %v4436
        %v4580 = vsub.f32 %v4344, %v4438
        %v4581 = vsub.f32 %v4349, %v4440
        %v4582 = vsub.f32 %v4352, %v4442
        %v4583 = vsub.f32 %v4357, %v4444
        %v4584 = vsub.f32 %v4360, %v4446
        %v4585 = vsub.f32 %v4365, %v4448
        %v4586 = vsub.f32 %v4368, %v4450
        %v4587 = vsub.f32 %v4373, %v4452
        %v4588 = vsub.f32 %v4376, %v4454
        %v4589 = vsub.f32 %v4381, %v4456
        %v4590 = vsub.f32 %v4384, %v4458
        %v4591 = vsub.f32 %v4389, %v4460
        %v4592 = vsub.f32 %v4392, %v4462
        %v4593 = vsub.f32 %v4397, %v4464
        %v4594 = vsub.f32 %v4400, %v4466
        %v4595 = vmul.f32 %v4563, 1.442695
        %v4596 = vpow.pop %v4595
        %v4597 = vmul.f32 %v4564, 1.442695
        %v4598 = vpow.pop %v4597
        %v4599 = vmul.f32 %v4565, 1.442695
        %v4600 = vpow.pop %v4599
        %v4601 = vmul.f32 %v4566, 1.442695
        %v4602 = vpow.pop %v4601
        %v4603 = vmul.f32 %v4567, 1.442695
        %v4604 = vpow.pop %v4603
        %v4605 = vmul.f32 %v4568, 1.442695
        %v4606 = vpow.pop %v4605
        %v4607 = vmul.f32 %v4569, 1.442695
        %v4608 = vpow.pop %v4607
        %v4609 = vmul.f32 %v4570, 1.442695
        %v4610 = vpow.pop %v4609
        %v4611 = vmul.f32 %v4571, 1.442695
        %v4612 = vpow.pop %v4611
        %v4613 = vmul.f32 %v4572, 1.442695
        %v4614 = vpow.pop %v4613
        %v4615 = vmul.f32 %v4573, 1.442695
        %v4616 = vpow.pop %v4615
        %v4617 = vmul.f32 %v4574, 1.442695
        %v4618 = vpow.pop %v4617
        %v4619 = vmul.f32 %v4575, 1.442695
        %v4620 = vpow.pop %v4619
        %v4621 = vmul.f32 %v4576, 1.442695
        %v4622 = vpow.pop %v4621
        %v4623 = vmul.f32 %v4577, 1.442695
        %v4624 = vpow.pop %v4623
        %v4625 = vmul.f32 %v4578, 1.442695
        %v4626 = vpow.pop %v4625
        %v4627 = vmul.f32 %v4579, 1.442695
        %v4628 = vpow.pop %v4627
        %v4629 = vmul.f32 %v4580, 1.442695
        %v4630 = vpow.pop %v4629
        %v4631 = vmul.f32 %v4581, 1.442695
        %v4632 = vpow.pop %v4631
        %v4633 = vmul.f32 %v4582, 1.442695
        %v4634 = vpow.pop %v4633
        %v4635 = vmul.f32 %v4583, 1.442695
        %v4636 = vpow.pop %v4635
        %v4637 = vmul.f32 %v4584, 1.442695
        %v4638 = vpow.pop %v4637
        %v4639 = vmul.f32 %v4585, 1.442695
        %v4640 = vpow.pop %v4639
        %v4641 = vmul.f32 %v4586, 1.442695
        %v4642 = vpow.pop %v4641
        %v4643 = vmul.f32 %v4587, 1.442695
        %v4644 = vpow.pop %v4643
        %v4645 = vmul.f32 %v4588, 1.442695
        %v4646 = vpow.pop %v4645
        %v4647 = vmul.f32 %v4589, 1.442695
        %v4648 = vpow.pop %v4647
        %v4649 = vmul.f32 %v4590, 1.442695
        %v4650 = vpow.pop %v4649
        %v4651 = vmul.f32 %v4591, 1.442695
        %v4652 = vpow.pop %v4651
        %v4653 = vmul.f32 %v4592, 1.442695
        %v4654 = vpow.pop %v4653
        %v4655 = vmul.f32 %v4593, 1.442695
        %v4656 = vpow.pop %v4655
        %v4657 = vmul.f32 %v4594, 1.442695
        %v4658 = vpow.pop %v4657
        %v4659 = vpack.c.bf16 %v4598, %v4596
        %v4660 = vpack.c.bf16 %v4602, %v4600
        %v4661 = vpack.c.bf16 %v4606, %v4604
        %v4662 = vpack.c.bf16 %v4610, %v4608
        %v4663 = vpack.c.bf16 %v4614, %v4612
        %v4664 = vpack.c.bf16 %v4618, %v4616
        %v4665 = vpack.c.bf16 %v4622, %v4620
        %v4666 = vpack.c.bf16 %v4626, %v4624
        %v4667 = vpack.c.bf16 %v4630, %v4628
        %v4668 = vpack.c.bf16 %v4634, %v4632
        %v4669 = vpack.c.bf16 %v4638, %v4636
        %v4670 = vpack.c.bf16 %v4642, %v4640
        %v4671 = vpack.c.bf16 %v4646, %v4644
        %v4672 = vpack.c.bf16 %v4650, %v4648
        %v4673 = vpack.c.bf16 %v4654, %v4652
        %v4674 = vpack.c.bf16 %v4658, %v4656
        %v4675 = vmul.f32 %v4500, 0.0
        %v4676 = vmul.f32 %v4502, 0.0
        %v4677 = vmul.f32 %v4504, 0.0
        %v4678 = vmul.f32 %v4506, 0.0
        %v4679 = vmul.f32 %v4508, 0.0
        %v4680 = vmul.f32 %v4510, 0.0
        %v4681 = vmul.f32 %v4512, 0.0
        %v4682 = vmul.f32 %v4514, 0.0
        %v4683 = vmul.f32 %v4516, 0.0
        %v4684 = vmul.f32 %v4518, 0.0
        %v4685 = vmul.f32 %v4520, 0.0
        %v4686 = vmul.f32 %v4522, 0.0
        %v4687 = vmul.f32 %v4524, 0.0
        %v4688 = vmul.f32 %v4526, 0.0
        %v4689 = vmul.f32 %v4528, 0.0
        %v4690 = vmul.f32 %v4530, 0.0
        %v4691 = vmul.f32 %v4532, 0.0
        %v4692 = vmul.f32 %v4534, 0.0
        %v4693 = vmul.f32 %v4536, 0.0
        %v4694 = vmul.f32 %v4538, 0.0
        %v4695 = vmul.f32 %v4540, 0.0
        %v4696 = vmul.f32 %v4542, 0.0
        %v4697 = vmul.f32 %v4544, 0.0
        %v4698 = vmul.f32 %v4546, 0.0
        %v4699 = vmul.f32 %v4548, 0.0
        %v4700 = vmul.f32 %v4550, 0.0
        %v4701 = vmul.f32 %v4552, 0.0
        %v4702 = vmul.f32 %v4554, 0.0
        %v4703 = vmul.f32 %v4556, 0.0
        %v4704 = vmul.f32 %v4558, 0.0
        %v4705 = vmul.f32 %v4560, 0.0
        %v4706 = vmul.f32 %v4562, 0.0
        %v4707 = vunpack.c.l.bf16 %v4659
        %v4708 = vunpack.c.h.bf16 %v4659
        %v4709 = vunpack.c.l.bf16 %v4660
        %v4710 = vunpack.c.h.bf16 %v4660
        %v4711 = vunpack.c.l.bf16 %v4661
        %v4712 = vunpack.c.h.bf16 %v4661
        %v4713 = vunpack.c.l.bf16 %v4662
        %v4714 = vunpack.c.h.bf16 %v4662
        %v4715 = vunpack.c.l.bf16 %v4663
        %v4716 = vunpack.c.h.bf16 %v4663
        %v4717 = vunpack.c.l.bf16 %v4664
        %v4718 = vunpack.c.h.bf16 %v4664
        %v4719 = vunpack.c.l.bf16 %v4665
        %v4720 = vunpack.c.h.bf16 %v4665
        %v4721 = vunpack.c.l.bf16 %v4666
        %v4722 = vunpack.c.h.bf16 %v4666
        %v4723 = vunpack.c.l.bf16 %v4667
        %v4724 = vunpack.c.h.bf16 %v4667
        %v4725 = vunpack.c.l.bf16 %v4668
        %v4726 = vunpack.c.h.bf16 %v4668
        %v4727 = vunpack.c.l.bf16 %v4669
        %v4728 = vunpack.c.h.bf16 %v4669
        %v4729 = vunpack.c.l.bf16 %v4670
        %v4730 = vunpack.c.h.bf16 %v4670
        %v4731 = vunpack.c.l.bf16 %v4671
        %v4732 = vunpack.c.h.bf16 %v4671
        %v4733 = vunpack.c.l.bf16 %v4672
        %v4734 = vunpack.c.h.bf16 %v4672
        %v4735 = vunpack.c.l.bf16 %v4673
        %v4736 = vunpack.c.h.bf16 %v4673
        %v4737 = vunpack.c.l.bf16 %v4674
        %v4738 = vunpack.c.h.bf16 %v4674
        %4739 = vadd.xlane.f32.xlu0 %v4707
        %v4740 = vpop.xlane.xlu0 %4739
        %4741 = vadd.xlane.f32.xlu0 %v4708
        %v4742 = vpop.xlane.xlu0 %4741
        %4743 = vadd.xlane.f32.xlu0 %v4709
        %v4744 = vpop.xlane.xlu0 %4743
        %4745 = vadd.xlane.f32.xlu0 %v4710
        %v4746 = vpop.xlane.xlu0 %4745
        %4747 = vadd.xlane.f32.xlu0 %v4711
        %v4748 = vpop.xlane.xlu0 %4747
        %4749 = vadd.xlane.f32.xlu0 %v4712
        %v4750 = vpop.xlane.xlu0 %4749
        %4751 = vadd.xlane.f32.xlu0 %v4713
        %v4752 = vpop.xlane.xlu0 %4751
        %4753 = vadd.xlane.f32.xlu0 %v4714
        %v4754 = vpop.xlane.xlu0 %4753
        %4755 = vadd.xlane.f32.xlu0 %v4715
        %v4756 = vpop.xlane.xlu0 %4755
        %4757 = vadd.xlane.f32.xlu0 %v4716
        %v4758 = vpop.xlane.xlu0 %4757
        %4759 = vadd.xlane.f32.xlu0 %v4717
        %v4760 = vpop.xlane.xlu0 %4759
        %4761 = vadd.xlane.f32.xlu0 %v4718
        %v4762 = vpop.xlane.xlu0 %4761
        %4763 = vadd.xlane.f32.xlu0 %v4719
        %v4764 = vpop.xlane.xlu0 %4763
        %4765 = vadd.xlane.f32.xlu0 %v4720
        %v4766 = vpop.xlane.xlu0 %4765
        %4767 = vadd.xlane.f32.xlu0 %v4721
        %v4768 = vpop.xlane.xlu0 %4767
        %4769 = vadd.xlane.f32.xlu0 %v4722
        %v4770 = vpop.xlane.xlu0 %4769
        %4771 = vadd.xlane.f32.xlu0 %v4723
        %v4772 = vpop.xlane.xlu0 %4771
        %4773 = vadd.xlane.f32.xlu0 %v4724
        %v4774 = vpop.xlane.xlu0 %4773
        %4775 = vadd.xlane.f32.xlu0 %v4725
        %v4776 = vpop.xlane.xlu0 %4775
        %4777 = vadd.xlane.f32.xlu0 %v4726
        %v4778 = vpop.xlane.xlu0 %4777
        %4779 = vadd.xlane.f32.xlu0 %v4727
        %v4780 = vpop.xlane.xlu0 %4779
        %4781 = vadd.xlane.f32.xlu0 %v4728
        %v4782 = vpop.xlane.xlu0 %4781
        %4783 = vadd.xlane.f32.xlu0 %v4729
        %v4784 = vpop.xlane.xlu0 %4783
        %4785 = vadd.xlane.f32.xlu0 %v4730
        %v4786 = vpop.xlane.xlu0 %4785
        %4787 = vadd.xlane.f32.xlu0 %v4731
        %v4788 = vpop.xlane.xlu0 %4787
        %4789 = vadd.xlane.f32.xlu0 %v4732
        %v4790 = vpop.xlane.xlu0 %4789
        %4791 = vadd.xlane.f32.xlu0 %v4733
        %v4792 = vpop.xlane.xlu0 %4791
        %4793 = vadd.xlane.f32.xlu0 %v4734
        %v4794 = vpop.xlane.xlu0 %4793
        %4795 = vadd.xlane.f32.xlu0 %v4735
        %v4796 = vpop.xlane.xlu0 %4795
        %4797 = vadd.xlane.f32.xlu0 %v4736
        %v4798 = vpop.xlane.xlu0 %4797
        %4799 = vadd.xlane.f32.xlu0 %v4737
        %v4800 = vpop.xlane.xlu0 %4799
        %4801 = vadd.xlane.f32.xlu0 %v4738
        %v4802 = vpop.xlane.xlu0 %4801
        %v4803 = vadd.f32 %v4675, %v4740
        %v4804 = vadd.f32 %v4676, %v4742
        %v4805 = vadd.f32 %v4677, %v4744
        %v4806 = vadd.f32 %v4678, %v4746
        %v4807 = vadd.f32 %v4679, %v4748
        %v4808 = vadd.f32 %v4680, %v4750
        %v4809 = vadd.f32 %v4681, %v4752
        %v4810 = vadd.f32 %v4682, %v4754
        %v4811 = vadd.f32 %v4683, %v4756
        %v4812 = vadd.f32 %v4684, %v4758
        %v4813 = vadd.f32 %v4685, %v4760
        %v4814 = vadd.f32 %v4686, %v4762
        %v4815 = vadd.f32 %v4687, %v4764
        %v4816 = vadd.f32 %v4688, %v4766
        %v4817 = vadd.f32 %v4689, %v4768
        %v4818 = vadd.f32 %v4690, %v4770
        %v4819 = vadd.f32 %v4691, %v4772
        %v4820 = vadd.f32 %v4692, %v4774
        %v4821 = vadd.f32 %v4693, %v4776
        %v4822 = vadd.f32 %v4694, %v4778
        %v4823 = vadd.f32 %v4695, %v4780
        %v4824 = vadd.f32 %v4696, %v4782
        %v4825 = vadd.f32 %v4697, %v4784
        %v4826 = vadd.f32 %v4698, %v4786
        %v4827 = vadd.f32 %v4699, %v4788
        %v4828 = vadd.f32 %v4700, %v4790
        %v4829 = vadd.f32 %v4701, %v4792
        %v4830 = vadd.f32 %v4702, %v4794
        %v4831 = vadd.f32 %v4703, %v4796
        %v4832 = vadd.f32 %v4704, %v4798
        %v4833 = vadd.f32 %v4705, %v4800
        %v4834 = vadd.f32 %v4706, %v4802
        %4835 = vmatprep.subr.bf16.mxu0 0
        %4836 = vmatpush1.bf16.msra.mxu0 %v4193
        %4837 = vmatprep.subr.bf16.mxu0 0
        %4838 = vmatpush1.bf16.msra.mxu0 %v4194
        %4839 = vmatprep.subr.bf16.mxu0 0
        %4840 = vmatpush1.bf16.msra.mxu0 %v4195
        %4841 = vmatprep.subr.bf16.mxu0 0
        %4842 = vmatpush1.bf16.msra.mxu0 %v4196
        %4843 = vmatprep.subr.bf16.mxu0 0
        %4844 = vmatpush1.bf16.msra.mxu0 %v4197
        %4845 = vmatprep.subr.bf16.mxu0 0
        %4846 = vmatpush1.bf16.msra.mxu0 %v4198
        %4847 = vmatprep.subr.bf16.mxu0 0
        %4848 = vmatpush1.bf16.msra.mxu0 %v4199
        %4849 = vmatprep.subr.bf16.mxu0 0
        %4850 = vmatpush1.bf16.msra.mxu0 %v4200
        %4851 = vmatprep.subr.bf16.mxu0 0
        %4852 = vmatpush1.bf16.msra.mxu0 0
        %4853 = vmatprep.subr.bf16.mxu0 0
        %4854 = vmatpush1.bf16.msra.mxu0 0
        %4855 = vmatprep.subr.bf16.mxu0 0
        %4856 = vmatpush1.bf16.msra.mxu0 0
        %4857 = vmatprep.subr.bf16.mxu0 0
        %4858 = vmatpush1.bf16.msra.mxu0 0
        %4859 = vmatprep.subr.bf16.mxu0 0
        %4860 = vmatpush1.bf16.msra.mxu0 0
        %4861 = vmatprep.subr.bf16.mxu0 0
        %4862 = vmatpush1.bf16.msra.mxu0 0
        %4863 = vmatprep.subr.bf16.mxu0 0
        %4864 = vmatpush1.bf16.msra.mxu0 0
        %4865 = vmatprep.subr.bf16.mxu0 0
        %4866 = vmatpush1.bf16.msra.mxu0 0
        %4867 = vmatprep.mubr.bf16.mxu0 0
        %4868 = vmatmul.mubr.bf16.gmra.mrb[0].mxu0 %v4659
        %v4869 = vpop.f32.mrb[0].mxu0
        %v4870 = vadd.f32 0.0, %v4869
        %v4871 = vpop.f32.mrb[0].mxu0
        %v4872 = vpop.f32.mrb[0].mxu0
        %v4873 = vadd.f32 0.0, %v4872
        %v4874 = vpop.f32.mrb[0].mxu0
        %4875 = vmatprep.mubr.bf16.mxu0 0
        %4876 = vmatmul.mubr.bf16.gmra.mrb[0].mxu0 %v4660
        %v4877 = vpop.f32.mrb[0].mxu0
        %v4878 = vadd.f32 0.0, %v4877
        %v4879 = vpop.f32.mrb[0].mxu0
        %v4880 = vpop.f32.mrb[0].mxu0
        %v4881 = vadd.f32 0.0, %v4880
        %v4882 = vpop.f32.mrb[0].mxu0
        %4883 = vmatprep.mubr.bf16.mxu0 0
        %4884 = vmatmul.mubr.bf16.gmra.mrb[0].mxu0 %v4661
        %v4885 = vpop.f32.mrb[0].mxu0
        %v4886 = vadd.f32 0.0, %v4885
        %v4887 = vpop.f32.mrb[0].mxu0
        %v4888 = vpop.f32.mrb[0].mxu0
        %v4889 = vadd.f32 0.0, %v4888
        %v4890 = vpop.f32.mrb[0].mxu0
        %4891 = vmatprep.mubr.bf16.mxu0 0
        %4892 = vmatmul.mubr.bf16.gmra.mrb[0].mxu0 %v4662
        %v4893 = vpop.f32.mrb[0].mxu0
        %v4894 = vadd.f32 0.0, %v4893
        %v4895 = vpop.f32.mrb[0].mxu0
        %v4896 = vpop.f32.mrb[0].mxu0
        %v4897 = vadd.f32 0.0, %v4896
        %v4898 = vpop.f32.mrb[0].mxu0
        %4899 = vmatprep.mubr.bf16.mxu0 0
        %4900 = vmatmul.mubr.bf16.gmra.mrb[0].mxu0 %v4663
        %v4901 = vpop.f32.mrb[0].mxu0
        %v4902 = vadd.f32 0.0, %v4901
        %v4903 = vpop.f32.mrb[0].mxu0
        %v4904 = vpop.f32.mrb[0].mxu0
        %v4905 = vadd.f32 0.0, %v4904
        %v4906 = vpop.f32.mrb[0].mxu0
        %4907 = vmatprep.mubr.bf16.mxu0 0
        %4908 = vmatmul.mubr.bf16.gmra.mrb[0].mxu0 %v4664
        %v4909 = vpop.f32.mrb[0].mxu0
        %v4910 = vadd.f32 0.0, %v4909
        %v4911 = vpop.f32.mrb[0].mxu0
        %v4912 = vpop.f32.mrb[0].mxu0
        %v4913 = vadd.f32 0.0, %v4912
        %v4914 = vpop.f32.mrb[0].mxu0
        %4915 = vmatprep.mubr.bf16.mxu0 0
        %4916 = vmatmul.mubr.bf16.gmra.mrb[0].mxu0 %v4665
        %v4917 = vpop.f32.mrb[0].mxu0
        %v4918 = vadd.f32 0.0, %v4917
        %v4919 = vpop.f32.mrb[0].mxu0
        %v4920 = vpop.f32.mrb[0].mxu0
        %v4921 = vadd.f32 0.0, %v4920
        %v4922 = vpop.f32.mrb[0].mxu0
        %4923 = vmatprep.mubr.bf16.mxu0 0
        %4924 = vmatmul.mubr.bf16.gmra.mrb[0].mxu0 %v4666
        %v4925 = vpop.f32.mrb[0].mxu0
        %v4926 = vadd.f32 0.0, %v4925
        %v4927 = vpop.f32.mrb[0].mxu0
        %v4928 = vpop.f32.mrb[0].mxu0
        %v4929 = vadd.f32 0.0, %v4928
        %v4930 = vpop.f32.mrb[0].mxu0
        %4931 = vdwg.mxu0
        %4932 = vmatprep.subr.bf16.mxu0 0
        %4933 = vmatpush1.bf16.msra.mxu0 %v4201
        %4934 = vmatprep.subr.bf16.mxu0 0
        %4935 = vmatpush1.bf16.msra.mxu0 %v4202
        %4936 = vmatprep.subr.bf16.mxu0 0
        %4937 = vmatpush1.bf16.msra.mxu0 %v4203
        %4938 = vmatprep.subr.bf16.mxu0 0
        %4939 = vmatpush1.bf16.msra.mxu0 %v4204
        %4940 = vmatprep.subr.bf16.mxu0 0
        %4941 = vmatpush1.bf16.msra.mxu0 %v4205
        %4942 = vmatprep.subr.bf16.mxu0 0
        %4943 = vmatpush1.bf16.msra.mxu0 %v4206
        %4944 = vmatprep.subr.bf16.mxu0 0
        %4945 = vmatpush1.bf16.msra.mxu0 %v4207
        %4946 = vmatprep.subr.bf16.mxu0 0
        %4947 = vmatpush1.bf16.msra.mxu0 %v4208
        %4948 = vmatprep.subr.bf16.mxu0 0
        %4949 = vmatpush1.bf16.msra.mxu0 0
        %4950 = vmatprep.subr.bf16.mxu0 0
        %4951 = vmatpush1.bf16.msra.mxu0 0
        %4952 = vmatprep.subr.bf16.mxu0 0
        %4953 = vmatpush1.bf16.msra.mxu0 0
        %4954 = vmatprep.subr.bf16.mxu0 0
        %4955 = vmatpush1.bf16.msra.mxu0 0
        %4956 = vmatprep.subr.bf16.mxu0 0
        %4957 = vmatpush1.bf16.msra.mxu0 0
        %4958 = vmatprep.subr.bf16.mxu0 0
        %4959 = vmatpush1.bf16.msra.mxu0 0
        %4960 = vmatprep.subr.bf16.mxu0 0
        %4961 = vmatpush1.bf16.msra.mxu0 0
        %4962 = vmatprep.subr.bf16.mxu0 0
        %4963 = vmatpush1.bf16.msra.mxu0 0
        %4964 = vmatprep.mubr.bf16.mxu0 0
        %4965 = vmatmul.mubr.bf16.gmra.mrb[0].mxu0 %v4667
        %v4966 = vpop.f32.mrb[0].mxu0
        %v4967 = vadd.f32 0.0, %v4966
        %v4968 = vpop.f32.mrb[0].mxu0
        %v4969 = vpop.f32.mrb[0].mxu0
        %v4970 = vadd.f32 0.0, %v4969
        %v4971 = vpop.f32.mrb[0].mxu0
        %4972 = vmatprep.mubr.bf16.mxu0 0
        %4973 = vmatmul.mubr.bf16.gmra.mrb[0].mxu0 %v4668
        %v4974 = vpop.f32.mrb[0].mxu0
        %v4975 = vadd.f32 0.0, %v4974
        %v4976 = vpop.f32.mrb[0].mxu0
        %v4977 = vpop.f32.mrb[0].mxu0
        %v4978 = vadd.f32 0.0, %v4977
        %v4979 = vpop.f32.mrb[0].mxu0
        %4980 = vmatprep.mubr.bf16.mxu0 0
        %4981 = vmatmul.mubr.bf16.gmra.mrb[0].mxu0 %v4669
        %v4982 = vpop.f32.mrb[0].mxu0
        %v4983 = vadd.f32 0.0, %v4982
        %v4984 = vpop.f32.mrb[0].mxu0
        %v4985 = vpop.f32.mrb[0].mxu0
        %v4986 = vadd.f32 0.0, %v4985
        %v4987 = vpop.f32.mrb[0].mxu0
        %4988 = vmatprep.mubr.bf16.mxu0 0
        %4989 = vmatmul.mubr.bf16.gmra.mrb[0].mxu0 %v4670
        %v4990 = vpop.f32.mrb[0].mxu0
        %v4991 = vadd.f32 0.0, %v4990
        %v4992 = vpop.f32.mrb[0].mxu0
        %v4993 = vpop.f32.mrb[0].mxu0
        %v4994 = vadd.f32 0.0, %v4993
        %v4995 = vpop.f32.mrb[0].mxu0
        %4996 = vmatprep.mubr.bf16.mxu0 0
        %4997 = vmatmul.mubr.bf16.gmra.mrb[0].mxu0 %v4671
        %v4998 = vpop.f32.mrb[0].mxu0
        %v4999 = vadd.f32 0.0, %v4998
        %v5000 = vpop.f32.mrb[0].mxu0
        %v5001 = vpop.f32.mrb[0].mxu0
        %v5002 = vadd.f32 0.0, %v5001
        %v5003 = vpop.f32.mrb[0].mxu0
        %5004 = vmatprep.mubr.bf16.mxu0 0
        %5005 = vmatmul.mubr.bf16.gmra.mrb[0].mxu0 %v4672
        %v5006 = vpop.f32.mrb[0].mxu0
        %v5007 = vadd.f32 0.0, %v5006
        %v5008 = vpop.f32.mrb[0].mxu0
        %v5009 = vpop.f32.mrb[0].mxu0
        %v5010 = vadd.f32 0.0, %v5009
        %v5011 = vpop.f32.mrb[0].mxu0
        %5012 = vmatprep.mubr.bf16.mxu0 0
        %5013 = vmatmul.mubr.bf16.gmra.mrb[0].mxu0 %v4673
        %v5014 = vpop.f32.mrb[0].mxu0
        %v5015 = vadd.f32 0.0, %v5014
        %v5016 = vpop.f32.mrb[0].mxu0
        %v5017 = vpop.f32.mrb[0].mxu0
        %v5018 = vadd.f32 0.0, %v5017
        %v5019 = vpop.f32.mrb[0].mxu0
        %5020 = vmatprep.mubr.bf16.mxu0 0
        %5021 = vmatmul.mubr.bf16.gmra.mrb[0].mxu0 %v4674
        %v5022 = vpop.f32.mrb[0].mxu0
        %v5023 = vadd.f32 0.0, %v5022
        %v5024 = vpop.f32.mrb[0].mxu0
        %v5025 = vpop.f32.mrb[0].mxu0
        %v5026 = vadd.f32 0.0, %v5025
        %v5027 = vpop.f32.mrb[0].mxu0
        %5028 = vdwg.mxu0
        %v5029 = vadd.f32 %v4675, %v4870
        %v5030 = vadd.f32 %v4676, %v4873
        %v5031 = vadd.f32 %v4677, %v4878
        %v5032 = vadd.f32 %v4678, %v4881
        %v5033 = vadd.f32 %v4679, %v4886
        %v5034 = vadd.f32 %v4680, %v4889
        %v5035 = vadd.f32 %v4681, %v4894
        %v5036 = vadd.f32 %v4682, %v4897
        %v5037 = vadd.f32 %v4683, %v4902
        %v5038 = vadd.f32 %v4684, %v4905
        %v5039 = vadd.f32 %v4685, %v4910
        %v5040 = vadd.f32 %v4686, %v4913
        %v5041 = vadd.f32 %v4687, %v4918
        %v5042 = vadd.f32 %v4688, %v4921
        %v5043 = vadd.f32 %v4689, %v4926
        %v5044 = vadd.f32 %v4690, %v4929
        %v5045 = vadd.f32 %v4691, %v4967
        %v5046 = vadd.f32 %v4692, %v4970
        %v5047 = vadd.f32 %v4693, %v4975
        %v5048 = vadd.f32 %v4694, %v4978
        %v5049 = vadd.f32 %v4695, %v4983
        %v5050 = vadd.f32 %v4696, %v4986
        %v5051 = vadd.f32 %v4697, %v4991
        %v5052 = vadd.f32 %v4698, %v4994
        %v5053 = vadd.f32 %v4699, %v4999
        %v5054 = vadd.f32 %v4700, %v5002
        %v5055 = vadd.f32 %v4701, %v5007
        %v5056 = vadd.f32 %v4702, %v5010
        %v5057 = vadd.f32 %v4703, %v5015
        %v5058 = vadd.f32 %v4704, %v5018
        %v5059 = vadd.f32 %v4705, %v5023
        %v5060 = vadd.f32 %v4706, %v5026
        %v5061 = vrcp.pop %v4803
        %v5062 = vrcp.pop %v4804
        %v5063 = vrcp.pop %v4805
        %v5064 = vrcp.pop %v4806
        %v5065 = vrcp.pop %v4807
        %v5066 = vrcp.pop %v4808
        %v5067 = vrcp.pop %v4809
        %v5068 = vrcp.pop %v4810
        %v5069 = vrcp.pop %v4811
        %v5070 = vrcp.pop %v4812
        %v5071 = vrcp.pop %v4813
        %v5072 = vrcp.pop %v4814
        %v5073 = vrcp.pop %v4815
        %v5074 = vrcp.pop %v4816
        %v5075 = vrcp.pop %v4817
        %v5076 = vrcp.pop %v4818
        %v5077 = vrcp.pop %v4819
        %v5078 = vrcp.pop %v4820
        %v5079 = vrcp.pop %v4821
        %v5080 = vrcp.pop %v4822
        %v5081 = vrcp.pop %v4823
        %v5082 = vrcp.pop %v4824
        %v5083 = vrcp.pop %v4825
        %v5084 = vrcp.pop %v4826
        %v5085 = vrcp.pop %v4827
        %v5086 = vrcp.pop %v4828
        %v5087 = vrcp.pop %v4829
        %v5088 = vrcp.pop %v4830
        %v5089 = vrcp.pop %v4831
        %v5090 = vrcp.pop %v4832
        %v5091 = vrcp.pop %v4833
        %v5092 = vrcp.pop %v4834
        %v5093 = vmul.f32 %v5029, %v5061
        %v5094 = vmul.f32 %v5030, %v5062
        %v5095 = vmul.f32 %v5031, %v5063
        %v5096 = vmul.f32 %v5032, %v5064
        %v5097 = vmul.f32 %v5033, %v5065
        %v5098 = vmul.f32 %v5034, %v5066
        %v5099 = vmul.f32 %v5035, %v5067
        %v5100 = vmul.f32 %v5036, %v5068
        %v5101 = vmul.f32 %v5037, %v5069
        %v5102 = vmul.f32 %v5038, %v5070
        %v5103 = vmul.f32 %v5039, %v5071
        %v5104 = vmul.f32 %v5040, %v5072
        %v5105 = vmul.f32 %v5041, %v5073
        %v5106 = vmul.f32 %v5042, %v5074
        %v5107 = vmul.f32 %v5043, %v5075
        %v5108 = vmul.f32 %v5044, %v5076
        %v5109 = vmul.f32 %v5045, %v5077
        %v5110 = vmul.f32 %v5046, %v5078
        %v5111 = vmul.f32 %v5047, %v5079
        %v5112 = vmul.f32 %v5048, %v5080
        %v5113 = vmul.f32 %v5049, %v5081
        %v5114 = vmul.f32 %v5050, %v5082
        %v5115 = vmul.f32 %v5051, %v5083
        %v5116 = vmul.f32 %v5052, %v5084
        %v5117 = vmul.f32 %v5053, %v5085
        %v5118 = vmul.f32 %v5054, %v5086
        %v5119 = vmul.f32 %v5055, %v5087
        %v5120 = vmul.f32 %v5056, %v5088
        %v5121 = vmul.f32 %v5057, %v5089
        %v5122 = vmul.f32 %v5058, %v5090
        %v5123 = vmul.f32 %v5059, %v5091
        %v5124 = vmul.f32 %v5060, %v5092
        %5125 = vst [vmem:[#allocation2 + $0x8] sm:$0xff] %v5093
        %5126 = vst [vmem:[#allocation2 + $0x18] sm:$0xff] %v5094
        %5127 = vst [vmem:[#allocation2 + $0x28] sm:$0xff] %v5095
        %5128 = vst [vmem:[#allocation2 + $0x38] sm:$0xff] %v5096
        %5129 = vst [vmem:[#allocation2 + $0x48] sm:$0xff] %v5097
        %5130 = vst [vmem:[#allocation2 + $0x58] sm:$0xff] %v5098
        %5131 = vst [vmem:[#allocation2 + $0x68] sm:$0xff] %v5099
        %5132 = vst [vmem:[#allocation2 + $0x78] sm:$0xff] %v5100
        %5133 = vst [vmem:[#allocation2 + $0x88] sm:$0xff] %v5101
        %5134 = vst [vmem:[#allocation2 + $0x98] sm:$0xff] %v5102
        %5135 = vst [vmem:[#allocation2 + $0xa8] sm:$0xff] %v5103
        %5136 = vst [vmem:[#allocation2 + $0xb8] sm:$0xff] %v5104
        %5137 = vst [vmem:[#allocation2 + $0xc8] sm:$0xff] %v5105
        %5138 = vst [vmem:[#allocation2 + $0xd8] sm:$0xff] %v5106
        %5139 = vst [vmem:[#allocation2 + $0xe8] sm:$0xff] %v5107
        %5140 = vst [vmem:[#allocation2 + $0xf8] sm:$0xff] %v5108
        %5141 = vst [vmem:[#allocation2 + $0x108] sm:$0xff] %v5109
        %5142 = vst [vmem:[#allocation2 + $0x118] sm:$0xff] %v5110
        %5143 = vst [vmem:[#allocation2 + $0x128] sm:$0xff] %v5111
        %5144 = vst [vmem:[#allocation2 + $0x138] sm:$0xff] %v5112
        %5145 = vst [vmem:[#allocation2 + $0x148] sm:$0xff] %v5113
        %5146 = vst [vmem:[#allocation2 + $0x158] sm:$0xff] %v5114
        %5147 = vst [vmem:[#allocation2 + $0x168] sm:$0xff] %v5115
        %5148 = vst [vmem:[#allocation2 + $0x178] sm:$0xff] %v5116
        %5149 = vst [vmem:[#allocation2 + $0x188] sm:$0xff] %v5117
        %5150 = vst [vmem:[#allocation2 + $0x198] sm:$0xff] %v5118
        %5151 = vst [vmem:[#allocation2 + $0x1a8] sm:$0xff] %v5119
        %5152 = vst [vmem:[#allocation2 + $0x1b8] sm:$0xff] %v5120
        %5153 = vst [vmem:[#allocation2 + $0x1c8] sm:$0xff] %v5121
        %5154 = vst [vmem:[#allocation2 + $0x1d8] sm:$0xff] %v5122
        %5155 = vst [vmem:[#allocation2 + $0x1e8] sm:$0xff] %v5123
        %5156 = vst [vmem:[#allocation2 + $0x1f8] sm:$0xff] %v5124
        %v5157 = vld [vmem:[#allocation2] sm:$0xff]
        %v5158 = vld [vmem:[#allocation2 + $0x8] sm:$0xff]
        %v5159 = vld [vmem:[#allocation2 + $0x10] sm:$0xff]
        %v5160 = vld [vmem:[#allocation2 + $0x18] sm:$0xff]
        %v5161 = vld [vmem:[#allocation2 + $0x20] sm:$0xff]
        %v5162 = vld [vmem:[#allocation2 + $0x28] sm:$0xff]
        %v5163 = vld [vmem:[#allocation2 + $0x30] sm:$0xff]
        %v5164 = vld [vmem:[#allocation2 + $0x38] sm:$0xff]
        %v5165 = vld [vmem:[#allocation2 + $0x40] sm:$0xff]
        %v5166 = vld [vmem:[#allocation2 + $0x48] sm:$0xff]
        %v5167 = vld [vmem:[#allocation2 + $0x50] sm:$0xff]
        %v5168 = vld [vmem:[#allocation2 + $0x58] sm:$0xff]
        %v5169 = vld [vmem:[#allocation2 + $0x60] sm:$0xff]
        %v5170 = vld [vmem:[#allocation2 + $0x68] sm:$0xff]
        %v5171 = vld [vmem:[#allocation2 + $0x70] sm:$0xff]
        %v5172 = vld [vmem:[#allocation2 + $0x78] sm:$0xff]
        %v5173 = vld [vmem:[#allocation2 + $0x80] sm:$0xff]
        %v5174 = vld [vmem:[#allocation2 + $0x88] sm:$0xff]
        %v5175 = vld [vmem:[#allocation2 + $0x90] sm:$0xff]
        %v5176 = vld [vmem:[#allocation2 + $0x98] sm:$0xff]
        %v5177 = vld [vmem:[#allocation2 + $0xa0] sm:$0xff]
        %v5178 = vld [vmem:[#allocation2 + $0xa8] sm:$0xff]
        %v5179 = vld [vmem:[#allocation2 + $0xb0] sm:$0xff]
        %v5180 = vld [vmem:[#allocation2 + $0xb8] sm:$0xff]
        %v5181 = vld [vmem:[#allocation2 + $0xc0] sm:$0xff]
        %v5182 = vld [vmem:[#allocation2 + $0xc8] sm:$0xff]
        %v5183 = vld [vmem:[#allocation2 + $0xd0] sm:$0xff]
        %v5184 = vld [vmem:[#allocation2 + $0xd8] sm:$0xff]
        %v5185 = vld [vmem:[#allocation2 + $0xe0] sm:$0xff]
        %v5186 = vld [vmem:[#allocation2 + $0xe8] sm:$0xff]
        %v5187 = vld [vmem:[#allocation2 + $0xf0] sm:$0xff]
        %v5188 = vld [vmem:[#allocation2 + $0xf8] sm:$0xff]
        %v5189 = vld [vmem:[#allocation2 + $0x100] sm:$0xff]
        %v5190 = vld [vmem:[#allocation2 + $0x108] sm:$0xff]
        %v5191 = vld [vmem:[#allocation2 + $0x110] sm:$0xff]
        %v5192 = vld [vmem:[#allocation2 + $0x118] sm:$0xff]
        %v5193 = vld [vmem:[#allocation2 + $0x120] sm:$0xff]
        %v5194 = vld [vmem:[#allocation2 + $0x128] sm:$0xff]
        %v5195 = vld [vmem:[#allocation2 + $0x130] sm:$0xff]
        %v5196 = vld [vmem:[#allocation2 + $0x138] sm:$0xff]
        %v5197 = vld [vmem:[#allocation2 + $0x140] sm:$0xff]
        %v5198 = vld [vmem:[#allocation2 + $0x148] sm:$0xff]
        %v5199 = vld [vmem:[#allocation2 + $0x150] sm:$0xff]
        %v5200 = vld [vmem:[#allocation2 + $0x158] sm:$0xff]
        %v5201 = vld [vmem:[#allocation2 + $0x160] sm:$0xff]
        %v5202 = vld [vmem:[#allocation2 + $0x168] sm:$0xff]
        %v5203 = vld [vmem:[#allocation2 + $0x170] sm:$0xff]
        %v5204 = vld [vmem:[#allocation2 + $0x178] sm:$0xff]
        %v5205 = vld [vmem:[#allocation2 + $0x180] sm:$0xff]
        %v5206 = vld [vmem:[#allocation2 + $0x188] sm:$0xff]
        %v5207 = vld [vmem:[#allocation2 + $0x190] sm:$0xff]
        %v5208 = vld [vmem:[#allocation2 + $0x198] sm:$0xff]
        %v5209 = vld [vmem:[#allocation2 + $0x1a0] sm:$0xff]
        %v5210 = vld [vmem:[#allocation2 + $0x1a8] sm:$0xff]
        %v5211 = vld [vmem:[#allocation2 + $0x1b0] sm:$0xff]
        %v5212 = vld [vmem:[#allocation2 + $0x1b8] sm:$0xff]
        %v5213 = vld [vmem:[#allocation2 + $0x1c0] sm:$0xff]
        %v5214 = vld [vmem:[#allocation2 + $0x1c8] sm:$0xff]
        %v5215 = vld [vmem:[#allocation2 + $0x1d0] sm:$0xff]
        %v5216 = vld [vmem:[#allocation2 + $0x1d8] sm:$0xff]
        %v5217 = vld [vmem:[#allocation2 + $0x1e0] sm:$0xff]
        %v5218 = vld [vmem:[#allocation2 + $0x1e8] sm:$0xff]
        %v5219 = vld [vmem:[#allocation2 + $0x1f0] sm:$0xff]
        %v5220 = vld [vmem:[#allocation2 + $0x1f8] sm:$0xff]
        %v5221 = vpack.c.bf16 %v5159, %v5157
        %v5222 = vpack.c.bf16 %v5160, %v5158
        %v5223 = vpack.c.bf16 %v5163, %v5161
        %v5224 = vpack.c.bf16 %v5164, %v5162
        %v5225 = vpack.c.bf16 %v5167, %v5165
        %v5226 = vpack.c.bf16 %v5168, %v5166
        %v5227 = vpack.c.bf16 %v5171, %v5169
        %v5228 = vpack.c.bf16 %v5172, %v5170
        %v5229 = vpack.c.bf16 %v5175, %v5173
        %v5230 = vpack.c.bf16 %v5176, %v5174
        %v5231 = vpack.c.bf16 %v5179, %v5177
        %v5232 = vpack.c.bf16 %v5180, %v5178
        %v5233 = vpack.c.bf16 %v5183, %v5181
        %v5234 = vpack.c.bf16 %v5184, %v5182
        %v5235 = vpack.c.bf16 %v5187, %v5185
        %v5236 = vpack.c.bf16 %v5188, %v5186
        %v5237 = vpack.c.bf16 %v5191, %v5189
        %v5238 = vpack.c.bf16 %v5192, %v5190
        %v5239 = vpack.c.bf16 %v5195, %v5193
        %v5240 = vpack.c.bf16 %v5196, %v5194
        %v5241 = vpack.c.bf16 %v5199, %v5197
        %v5242 = vpack.c.bf16 %v5200, %v5198
        %v5243 = vpack.c.bf16 %v5203, %v5201
        %v5244 = vpack.c.bf16 %v5204, %v5202
        %v5245 = vpack.c.bf16 %v5207, %v5205
        %v5246 = vpack.c.bf16 %v5208, %v5206
        %v5247 = vpack.c.bf16 %v5211, %v5209
        %v5248 = vpack.c.bf16 %v5212, %v5210
        %v5249 = vpack.c.bf16 %v5215, %v5213
        %v5250 = vpack.c.bf16 %v5216, %v5214
        %v5251 = vpack.c.bf16 %v5219, %v5217
        %v5252 = vpack.c.bf16 %v5220, %v5218
        %v5253 = vld [vmem:[#allocation11] sm:$0xff]
        %v5254 = vld [vmem:[#allocation11 + $0x8] sm:$0xff]
        %v5255 = vld [vmem:[#allocation11 + $0x10] sm:$0xff]
        %v5256 = vld [vmem:[#allocation11 + $0x18] sm:$0xff]
        %v5257 = vld [vmem:[#allocation11 + $0x20] sm:$0xff]
        %v5258 = vld [vmem:[#allocation11 + $0x28] sm:$0xff]
        %v5259 = vld [vmem:[#allocation11 + $0x30] sm:$0xff]
        %v5260 = vld [vmem:[#allocation11 + $0x38] sm:$0xff]
        %v5261 = vld [vmem:[#allocation11 + $0x40] sm:$0xff]
        %v5262 = vld [vmem:[#allocation11 + $0x48] sm:$0xff]
        %v5263 = vld [vmem:[#allocation11 + $0x50] sm:$0xff]
        %v5264 = vld [vmem:[#allocation11 + $0x58] sm:$0xff]
        %v5265 = vld [vmem:[#allocation11 + $0x60] sm:$0xff]
        %v5266 = vld [vmem:[#allocation11 + $0x68] sm:$0xff]
        %v5267 = vld [vmem:[#allocation11 + $0x70] sm:$0xff]
        %v5268 = vld [vmem:[#allocation11 + $0x78] sm:$0xff]
        %v5269 = vld [vmem:[#allocation11 + $0x80] sm:$0xff]
        %v5270 = vld [vmem:[#allocation11 + $0x88] sm:$0xff]
        %v5271 = vld [vmem:[#allocation11 + $0x90] sm:$0xff]
        %v5272 = vld [vmem:[#allocation11 + $0x98] sm:$0xff]
        %v5273 = vld [vmem:[#allocation11 + $0xa0] sm:$0xff]
        %v5274 = vld [vmem:[#allocation11 + $0xa8] sm:$0xff]
        %v5275 = vld [vmem:[#allocation11 + $0xb0] sm:$0xff]
        %v5276 = vld [vmem:[#allocation11 + $0xb8] sm:$0xff]
        %v5277 = vld [vmem:[#allocation11 + $0xc0] sm:$0xff]
        %v5278 = vld [vmem:[#allocation11 + $0xc8] sm:$0xff]
        %v5279 = vld [vmem:[#allocation11 + $0xd0] sm:$0xff]
        %v5280 = vld [vmem:[#allocation11 + $0xd8] sm:$0xff]
        %v5281 = vld [vmem:[#allocation11 + $0xe0] sm:$0xff]
        %v5282 = vld [vmem:[#allocation11 + $0xe8] sm:$0xff]
        %v5283 = vld [vmem:[#allocation11 + $0xf0] sm:$0xff]
        %v5284 = vld [vmem:[#allocation11 + $0xf8] sm:$0xff]
        %v5285 = vld [vmem:[%s7] sm:$0x3]
        %v5287 = vlaneseq
        %v5288 = vshrl.u32 %v5287, 7
        %v5289 = vsub.s32 0, %v5288
        %v5290 = vrot.slane %v5285, %v5289
        %v5291 = vlaneseq
        %v5292 = vshrl.u32 %v5291, 7
        %v5293 = vsub.s32 1, %v5292
        %v5294 = vrot.slane %v5285, %v5293
        %v5329 = vunpack.c.l.b16 %v5253
        %v5330 = vunpack.c.h.b16 %v5253
        %v5331 = vunpack.c.l.b16 %v5254
        %v5332 = vunpack.c.h.b16 %v5254
        %v5333 = vunpack.c.l.b16 %v5255
        %v5334 = vunpack.c.h.b16 %v5255
        %v5335 = vunpack.c.l.b16 %v5256
        %v5336 = vunpack.c.h.b16 %v5256
        %v5337 = vunpack.c.l.b16 %v5257
        %v5338 = vunpack.c.h.b16 %v5257
        %v5339 = vunpack.c.l.b16 %v5258
        %v5340 = vunpack.c.h.b16 %v5258
        %v5341 = vunpack.c.l.b16 %v5259
        %v5342 = vunpack.c.h.b16 %v5259
        %v5343 = vunpack.c.l.b16 %v5260
        %v5344 = vunpack.c.h.b16 %v5260
        %v5345 = vunpack.c.l.b16 %v5261
        %v5346 = vunpack.c.h.b16 %v5261
        %v5347 = vunpack.c.l.b16 %v5262
        %v5348 = vunpack.c.h.b16 %v5262
        %v5349 = vunpack.c.l.b16 %v5263
        %v5350 = vunpack.c.h.b16 %v5263
        %v5351 = vunpack.c.l.b16 %v5264
        %v5352 = vunpack.c.h.b16 %v5264
        %v5353 = vunpack.c.l.b16 %v5265
        %v5354 = vunpack.c.h.b16 %v5265
        %v5355 = vunpack.c.l.b16 %v5266
        %v5356 = vunpack.c.h.b16 %v5266
        %v5357 = vunpack.c.l.b16 %v5267
        %v5358 = vunpack.c.h.b16 %v5267
        %v5359 = vunpack.c.l.b16 %v5268
        %v5360 = vunpack.c.h.b16 %v5268
        %v5361 = vunpack.c.l.b16 %v5269
        %v5362 = vunpack.c.h.b16 %v5269
        %v5363 = vunpack.c.l.b16 %v5270
        %v5364 = vunpack.c.h.b16 %v5270
        %v5365 = vunpack.c.l.b16 %v5271
        %v5366 = vunpack.c.h.b16 %v5271
        %v5367 = vunpack.c.l.b16 %v5272
        %v5368 = vunpack.c.h.b16 %v5272
        %v5369 = vunpack.c.l.b16 %v5273
        %v5370 = vunpack.c.h.b16 %v5273
        %v5371 = vunpack.c.l.b16 %v5274
        %v5372 = vunpack.c.h.b16 %v5274
        %v5373 = vunpack.c.l.b16 %v5275
        %v5374 = vunpack.c.h.b16 %v5275
        %v5375 = vunpack.c.l.b16 %v5276
        %v5376 = vunpack.c.h.b16 %v5276
        %v5377 = vunpack.c.l.b16 %v5277
        %v5378 = vunpack.c.h.b16 %v5277
        %v5379 = vunpack.c.l.b16 %v5278
        %v5380 = vunpack.c.h.b16 %v5278
        %v5381 = vunpack.c.l.b16 %v5279
        %v5382 = vunpack.c.h.b16 %v5279
        %v5383 = vunpack.c.l.b16 %v5280
        %v5384 = vunpack.c.h.b16 %v5280
        %v5385 = vunpack.c.l.b16 %v5281
        %v5386 = vunpack.c.h.b16 %v5281
        %v5387 = vunpack.c.l.b16 %v5282
        %v5388 = vunpack.c.h.b16 %v5282
        %v5389 = vunpack.c.l.b16 %v5283
        %v5390 = vunpack.c.h.b16 %v5283
        %v5391 = vunpack.c.l.b16 %v5284
        %v5392 = vunpack.c.h.b16 %v5284
        %v5393 = vpack.c.b16 %v5331, %v5329
        %v5394 = vpack.c.b16 %v5332, %v5330
        %v5395 = vpack.c.b16 %v5335, %v5333
        %v5396 = vpack.c.b16 %v5336, %v5334
        %v5397 = vpack.c.b16 %v5339, %v5337
        %v5398 = vpack.c.b16 %v5340, %v5338
        %v5399 = vpack.c.b16 %v5343, %v5341
        %v5400 = vpack.c.b16 %v5344, %v5342
        %v5401 = vpack.c.b16 %v5347, %v5345
        %v5402 = vpack.c.b16 %v5348, %v5346
        %v5403 = vpack.c.b16 %v5351, %v5349
        %v5404 = vpack.c.b16 %v5352, %v5350
        %v5405 = vpack.c.b16 %v5355, %v5353
        %v5406 = vpack.c.b16 %v5356, %v5354
        %v5407 = vpack.c.b16 %v5359, %v5357
        %v5408 = vpack.c.b16 %v5360, %v5358
        %v5409 = vpack.c.b16 %v5363, %v5361
        %v5410 = vpack.c.b16 %v5364, %v5362
        %v5411 = vpack.c.b16 %v5367, %v5365
        %v5412 = vpack.c.b16 %v5368, %v5366
        %v5413 = vpack.c.b16 %v5371, %v5369
        %v5414 = vpack.c.b16 %v5372, %v5370
        %v5415 = vpack.c.b16 %v5375, %v5373
        %v5416 = vpack.c.b16 %v5376, %v5374
        %v5417 = vpack.c.b16 %v5379, %v5377
        %v5418 = vpack.c.b16 %v5380, %v5378
        %v5419 = vpack.c.b16 %v5383, %v5381
        %v5420 = vpack.c.b16 %v5384, %v5382
        %v5421 = vpack.c.b16 %v5387, %v5385
        %v5422 = vpack.c.b16 %v5388, %v5386
        %v5423 = vpack.c.b16 %v5391, %v5389
        %v5424 = vpack.c.b16 %v5392, %v5390
        %5457 = vmatprep.subr.bf16.mxu0 %v5394
        %5458 = vmatpush1.bf16.msra.mxu0 %v5393
        %5459 = vmatprep.subr.bf16.mxu0 %v5396
        %5460 = vmatpush1.bf16.msra.mxu0 %v5395
        %5461 = vmatprep.subr.bf16.mxu0 %v5398
        %5462 = vmatpush1.bf16.msra.mxu0 %v5397
        %5463 = vmatprep.subr.bf16.mxu0 %v5400
        %5464 = vmatpush1.bf16.msra.mxu0 %v5399
        %5465 = vmatprep.subr.bf16.mxu0 %v5402
        %5466 = vmatpush1.bf16.msra.mxu0 %v5401
        %5467 = vmatprep.subr.bf16.mxu0 %v5404
        %5468 = vmatpush1.bf16.msra.mxu0 %v5403
        %5469 = vmatprep.subr.bf16.mxu0 %v5406
        %5470 = vmatpush1.bf16.msra.mxu0 %v5405
        %5471 = vmatprep.subr.bf16.mxu0 %v5408
        %5472 = vmatpush1.bf16.msra.mxu0 %v5407
        %5473 = vmatprep.subr.bf16.mxu0 %v5410
        %5474 = vmatpush1.bf16.msra.mxu0 %v5409
        %5475 = vmatprep.subr.bf16.mxu0 %v5412
        %5476 = vmatpush1.bf16.msra.mxu0 %v5411
        %5477 = vmatprep.subr.bf16.mxu0 %v5414
        %5478 = vmatpush1.bf16.msra.mxu0 %v5413
        %5479 = vmatprep.subr.bf16.mxu0 %v5416
        %5480 = vmatpush1.bf16.msra.mxu0 %v5415
        %5481 = vmatprep.subr.bf16.mxu0 %v5418
        %5482 = vmatpush1.bf16.msra.mxu0 %v5417
        %5483 = vmatprep.subr.bf16.mxu0 %v5420
        %5484 = vmatpush1.bf16.msra.mxu0 %v5419
        %5485 = vmatprep.subr.bf16.mxu0 %v5422
        %5486 = vmatpush1.bf16.msra.mxu0 %v5421
        %5487 = vmatprep.subr.bf16.mxu0 %v5424
        %5488 = vmatpush1.bf16.msra.mxu0 %v5423
        %5489 = vmatprep.mubr.bf16.mxu0 %v5222
        %5490 = vmatmul.mubr.bf16.gmra.mrb[0].mxu0 %v5221
        %v5491 = vpop.f32.mrb[0].mxu0
        %v5492 = vadd.f32 %v5290, %v5491
        %v5493 = vpop.f32.mrb[0].mxu0
        %v5494 = vadd.f32 %v5294, %v5493
        %v5495 = vpop.f32.mrb[0].mxu0
        %v5496 = vadd.f32 %v5290, %v5495
        %v5497 = vpop.f32.mrb[0].mxu0
        %v5498 = vadd.f32 %v5294, %v5497
        %5499 = vmatprep.mubr.bf16.mxu0 %v5224
        %5500 = vmatmul.mubr.bf16.gmra.mrb[0].mxu0 %v5223
        %v5501 = vpop.f32.mrb[0].mxu0
        %v5502 = vadd.f32 %v5290, %v5501
        %v5503 = vpop.f32.mrb[0].mxu0
        %v5504 = vadd.f32 %v5294, %v5503
        %v5505 = vpop.f32.mrb[0].mxu0
        %v5506 = vadd.f32 %v5290, %v5505
        %v5507 = vpop.f32.mrb[0].mxu0
        %v5508 = vadd.f32 %v5294, %v5507
        %5509 = vmatprep.mubr.bf16.mxu0 %v5226
        %5510 = vmatmul.mubr.bf16.gmra.mrb[0].mxu0 %v5225
        %v5511 = vpop.f32.mrb[0].mxu0
        %v5512 = vadd.f32 %v5290, %v5511
        %v5513 = vpop.f32.mrb[0].mxu0
        %v5514 = vadd.f32 %v5294, %v5513
        %v5515 = vpop.f32.mrb[0].mxu0
        %v5516 = vadd.f32 %v5290, %v5515
        %v5517 = vpop.f32.mrb[0].mxu0
        %v5518 = vadd.f32 %v5294, %v5517
        %5519 = vmatprep.mubr.bf16.mxu0 %v5228
        %5520 = vmatmul.mubr.bf16.gmra.mrb[0].mxu0 %v5227
        %v5521 = vpop.f32.mrb[0].mxu0
        %v5522 = vadd.f32 %v5290, %v5521
        %v5523 = vpop.f32.mrb[0].mxu0
        %v5524 = vadd.f32 %v5294, %v5523
        %v5525 = vpop.f32.mrb[0].mxu0
        %v5526 = vadd.f32 %v5290, %v5525
        %v5527 = vpop.f32.mrb[0].mxu0
        %v5528 = vadd.f32 %v5294, %v5527
        %5529 = vmatprep.mubr.bf16.mxu0 %v5230
        %5530 = vmatmul.mubr.bf16.gmra.mrb[0].mxu0 %v5229
        %v5531 = vpop.f32.mrb[0].mxu0
        %v5532 = vadd.f32 %v5290, %v5531
        %v5533 = vpop.f32.mrb[0].mxu0
        %v5534 = vadd.f32 %v5294, %v5533
        %v5535 = vpop.f32.mrb[0].mxu0
        %v5536 = vadd.f32 %v5290, %v5535
        %v5537 = vpop.f32.mrb[0].mxu0
        %v5538 = vadd.f32 %v5294, %v5537
        %5539 = vmatprep.mubr.bf16.mxu0 %v5232
        %5540 = vmatmul.mubr.bf16.gmra.mrb[0].mxu0 %v5231
        %v5541 = vpop.f32.mrb[0].mxu0
        %v5542 = vadd.f32 %v5290, %v5541
        %v5543 = vpop.f32.mrb[0].mxu0
        %v5544 = vadd.f32 %v5294, %v5543
        %v5545 = vpop.f32.mrb[0].mxu0
        %v5546 = vadd.f32 %v5290, %v5545
        %v5547 = vpop.f32.mrb[0].mxu0
        %v5548 = vadd.f32 %v5294, %v5547
        %5549 = vmatprep.mubr.bf16.mxu0 %v5234
        %5550 = vmatmul.mubr.bf16.gmra.mrb[0].mxu0 %v5233
        %v5551 = vpop.f32.mrb[0].mxu0
        %v5552 = vadd.f32 %v5290, %v5551
        %v5553 = vpop.f32.mrb[0].mxu0
        %v5554 = vadd.f32 %v5294, %v5553
        %v5555 = vpop.f32.mrb[0].mxu0
        %v5556 = vadd.f32 %v5290, %v5555
        %v5557 = vpop.f32.mrb[0].mxu0
        %v5558 = vadd.f32 %v5294, %v5557
        %5559 = vmatprep.mubr.bf16.mxu0 %v5236
        %5560 = vmatmul.mubr.bf16.gmra.mrb[0].mxu0 %v5235
        %v5561 = vpop.f32.mrb[0].mxu0
        %v5562 = vadd.f32 %v5290, %v5561
        %v5563 = vpop.f32.mrb[0].mxu0
        %v5564 = vadd.f32 %v5294, %v5563
        %v5565 = vpop.f32.mrb[0].mxu0
        %v5566 = vadd.f32 %v5290, %v5565
        %v5567 = vpop.f32.mrb[0].mxu0
        %v5568 = vadd.f32 %v5294, %v5567
        %5569 = vmatprep.mubr.bf16.mxu0 %v5238
        %5570 = vmatmul.mubr.bf16.gmra.mrb[0].mxu0 %v5237
        %v5571 = vpop.f32.mrb[0].mxu0
        %v5572 = vadd.f32 %v5290, %v5571
        %v5573 = vpop.f32.mrb[0].mxu0
        %v5574 = vadd.f32 %v5294, %v5573
        %v5575 = vpop.f32.mrb[0].mxu0
        %v5576 = vadd.f32 %v5290, %v5575
        %v5577 = vpop.f32.mrb[0].mxu0
        %v5578 = vadd.f32 %v5294, %v5577
        %5579 = vmatprep.mubr.bf16.mxu0 %v5240
        %5580 = vmatmul.mubr.bf16.gmra.mrb[0].mxu0 %v5239
        %v5581 = vpop.f32.mrb[0].mxu0
        %v5582 = vadd.f32 %v5290, %v5581
        %v5583 = vpop.f32.mrb[0].mxu0
        %v5584 = vadd.f32 %v5294, %v5583
        %v5585 = vpop.f32.mrb[0].mxu0
        %v5586 = vadd.f32 %v5290, %v5585
        %v5587 = vpop.f32.mrb[0].mxu0
        %v5588 = vadd.f32 %v5294, %v5587
        %5589 = vmatprep.mubr.bf16.mxu0 %v5242
        %5590 = vmatmul.mubr.bf16.gmra.mrb[0].mxu0 %v5241
        %v5591 = vpop.f32.mrb[0].mxu0
        %v5592 = vadd.f32 %v5290, %v5591
        %v5593 = vpop.f32.mrb[0].mxu0
        %v5594 = vadd.f32 %v5294, %v5593
        %v5595 = vpop.f32.mrb[0].mxu0
        %v5596 = vadd.f32 %v5290, %v5595
        %v5597 = vpop.f32.mrb[0].mxu0
        %v5598 = vadd.f32 %v5294, %v5597
        %5599 = vmatprep.mubr.bf16.mxu0 %v5244
        %5600 = vmatmul.mubr.bf16.gmra.mrb[0].mxu0 %v5243
        %v5601 = vpop.f32.mrb[0].mxu0
        %v5602 = vadd.f32 %v5290, %v5601
        %v5603 = vpop.f32.mrb[0].mxu0
        %v5604 = vadd.f32 %v5294, %v5603
        %v5605 = vpop.f32.mrb[0].mxu0
        %v5606 = vadd.f32 %v5290, %v5605
        %v5607 = vpop.f32.mrb[0].mxu0
        %v5608 = vadd.f32 %v5294, %v5607
        %5609 = vmatprep.mubr.bf16.mxu0 %v5246
        %5610 = vmatmul.mubr.bf16.gmra.mrb[0].mxu0 %v5245
        %v5611 = vpop.f32.mrb[0].mxu0
        %v5612 = vadd.f32 %v5290, %v5611
        %v5613 = vpop.f32.mrb[0].mxu0
        %v5614 = vadd.f32 %v5294, %v5613
        %v5615 = vpop.f32.mrb[0].mxu0
        %v5616 = vadd.f32 %v5290, %v5615
        %v5617 = vpop.f32.mrb[0].mxu0
        %v5618 = vadd.f32 %v5294, %v5617
        %5619 = vmatprep.mubr.bf16.mxu0 %v5248
        %5620 = vmatmul.mubr.bf16.gmra.mrb[0].mxu0 %v5247
        %v5621 = vpop.f32.mrb[0].mxu0
        %v5622 = vadd.f32 %v5290, %v5621
        %v5623 = vpop.f32.mrb[0].mxu0
        %v5624 = vadd.f32 %v5294, %v5623
        %v5625 = vpop.f32.mrb[0].mxu0
        %v5626 = vadd.f32 %v5290, %v5625
        %v5627 = vpop.f32.mrb[0].mxu0
        %v5628 = vadd.f32 %v5294, %v5627
        %5629 = vmatprep.mubr.bf16.mxu0 %v5250
        %5630 = vmatmul.mubr.bf16.gmra.mrb[0].mxu0 %v5249
        %v5631 = vpop.f32.mrb[0].mxu0
        %v5632 = vadd.f32 %v5290, %v5631
        %v5633 = vpop.f32.mrb[0].mxu0
        %v5634 = vadd.f32 %v5294, %v5633
        %v5635 = vpop.f32.mrb[0].mxu0
        %v5636 = vadd.f32 %v5290, %v5635
        %v5637 = vpop.f32.mrb[0].mxu0
        %v5638 = vadd.f32 %v5294, %v5637
        %5639 = vmatprep.mubr.bf16.mxu0 %v5252
        %5640 = vmatmul.mubr.bf16.gmra.mrb[0].mxu0 %v5251
        %v5641 = vpop.f32.mrb[0].mxu0
        %v5642 = vadd.f32 %v5290, %v5641
        %v5643 = vpop.f32.mrb[0].mxu0
        %v5644 = vadd.f32 %v5294, %v5643
        %v5645 = vpop.f32.mrb[0].mxu0
        %v5646 = vadd.f32 %v5290, %v5645
        %v5647 = vpop.f32.mrb[0].mxu0
        %v5648 = vadd.f32 %v5294, %v5647
        %5649 = vdwg.mxu0
        %v5650 = vadd.f32 %v577, %v5492
        %v5651 = vadd.f32 %v578, %v5494
        %v5652 = vadd.f32 %v579, %v5496
        %v5653 = vadd.f32 %v580, %v5498
        %v5654 = vadd.f32 %v581, %v5502
        %v5655 = vadd.f32 %v582, %v5504
        %v5656 = vadd.f32 %v583, %v5506
        %v5657 = vadd.f32 %v584, %v5508
        %v5658 = vadd.f32 %v585, %v5512
        %v5659 = vadd.f32 %v586, %v5514
        %v5660 = vadd.f32 %v587, %v5516
        %v5661 = vadd.f32 %v588, %v5518
        %v5662 = vadd.f32 %v589, %v5522
        %v5663 = vadd.f32 %v590, %v5524
        %v5664 = vadd.f32 %v591, %v5526
        %v5665 = vadd.f32 %v592, %v5528
        %v5666 = vadd.f32 %v593, %v5532
        %v5667 = vadd.f32 %v594, %v5534
        %v5668 = vadd.f32 %v595, %v5536
        %v5669 = vadd.f32 %v596, %v5538
        %v5670 = vadd.f32 %v597, %v5542
        %v5671 = vadd.f32 %v598, %v5544
        %v5672 = vadd.f32 %v599, %v5546
        %v5673 = vadd.f32 %v600, %v5548
        %v5674 = vadd.f32 %v601, %v5552
        %v5675 = vadd.f32 %v602, %v5554
        %v5676 = vadd.f32 %v603, %v5556
        %v5677 = vadd.f32 %v604, %v5558
        %v5678 = vadd.f32 %v605, %v5562
        %v5679 = vadd.f32 %v606, %v5564
        %v5680 = vadd.f32 %v607, %v5566
        %v5681 = vadd.f32 %v608, %v5568
        %v5682 = vadd.f32 %v609, %v5572
        %v5683 = vadd.f32 %v610, %v5574
        %v5684 = vadd.f32 %v611, %v5576
        %v5685 = vadd.f32 %v612, %v5578
        %v5686 = vadd.f32 %v613, %v5582
        %v5687 = vadd.f32 %v614, %v5584
        %v5688 = vadd.f32 %v615, %v5586
        %v5689 = vadd.f32 %v616, %v5588
        %v5690 = vadd.f32 %v617, %v5592
        %v5691 = vadd.f32 %v618, %v5594
        %v5692 = vadd.f32 %v619, %v5596
        %v5693 = vadd.f32 %v620, %v5598
        %v5694 = vadd.f32 %v621, %v5602
        %v5695 = vadd.f32 %v622, %v5604
        %v5696 = vadd.f32 %v623, %v5606
        %v5697 = vadd.f32 %v624, %v5608
        %v5698 = vadd.f32 %v625, %v5612
        %v5699 = vadd.f32 %v626, %v5614
        %v5700 = vadd.f32 %v627, %v5616
        %v5701 = vadd.f32 %v628, %v5618
        %v5702 = vadd.f32 %v629, %v5622
        %v5703 = vadd.f32 %v630, %v5624
        %v5704 = vadd.f32 %v631, %v5626
        %v5705 = vadd.f32 %v632, %v5628
        %v5706 = vadd.f32 %v633, %v5632
        %v5707 = vadd.f32 %v634, %v5634
        %v5708 = vadd.f32 %v635, %v5636
        %v5709 = vadd.f32 %v636, %v5638
        %v5710 = vadd.f32 %v637, %v5642
        %v5711 = vadd.f32 %v638, %v5644
        %v5712 = vadd.f32 %v639, %v5646
        %v5713 = vadd.f32 %v640, %v5648
        %v5714 = vld [vmem:[%s8] sm:$0x3]
        %v5715 = vld [vmem:[%s9] sm:$0x3]
        %v5716 = vadd.f32 %v5650, %v5651
        %5717 = vadd.xlane.f32.xlu0 %v5716
        %v5718 = vpop.xlane.xlu0 %5717
        %v5719 = vadd.f32 %v5652, %v5653
        %5720 = vadd.xlane.f32.xlu0 %v5719
        %v5721 = vpop.xlane.xlu0 %5720
        %v5722 = vadd.f32 %v5654, %v5655
        %5723 = vadd.xlane.f32.xlu0 %v5722
        %v5724 = vpop.xlane.xlu0 %5723
        %v5725 = vadd.f32 %v5656, %v5657
        %5726 = vadd.xlane.f32.xlu0 %v5725
        %v5727 = vpop.xlane.xlu0 %5726
        %v5728 = vadd.f32 %v5658, %v5659
        %5729 = vadd.xlane.f32.xlu0 %v5728
        %v5730 = vpop.xlane.xlu0 %5729
        %v5731 = vadd.f32 %v5660, %v5661
        %5732 = vadd.xlane.f32.xlu0 %v5731
        %v5733 = vpop.xlane.xlu0 %5732
        %v5734 = vadd.f32 %v5662, %v5663
        %5735 = vadd.xlane.f32.xlu0 %v5734
        %v5736 = vpop.xlane.xlu0 %5735
        %v5737 = vadd.f32 %v5664, %v5665
        %5738 = vadd.xlane.f32.xlu0 %v5737
        %v5739 = vpop.xlane.xlu0 %5738
        %v5740 = vadd.f32 %v5666, %v5667
        %5741 = vadd.xlane.f32.xlu0 %v5740
        %v5742 = vpop.xlane.xlu0 %5741
        %v5743 = vadd.f32 %v5668, %v5669
        %5744 = vadd.xlane.f32.xlu0 %v5743
        %v5745 = vpop.xlane.xlu0 %5744
        %v5746 = vadd.f32 %v5670, %v5671
        %5747 = vadd.xlane.f32.xlu0 %v5746
        %v5748 = vpop.xlane.xlu0 %5747
        %v5749 = vadd.f32 %v5672, %v5673
        %5750 = vadd.xlane.f32.xlu0 %v5749
        %v5751 = vpop.xlane.xlu0 %5750
        %v5752 = vadd.f32 %v5674, %v5675
        %5753 = vadd.xlane.f32.xlu0 %v5752
        %v5754 = vpop.xlane.xlu0 %5753
        %v5755 = vadd.f32 %v5676, %v5677
        %5756 = vadd.xlane.f32.xlu0 %v5755
        %v5757 = vpop.xlane.xlu0 %5756
        %v5758 = vadd.f32 %v5678, %v5679
        %5759 = vadd.xlane.f32.xlu0 %v5758
        %v5760 = vpop.xlane.xlu0 %5759
        %v5761 = vadd.f32 %v5680, %v5681
        %5762 = vadd.xlane.f32.xlu0 %v5761
        %v5763 = vpop.xlane.xlu0 %5762
        %v5764 = vadd.f32 %v5682, %v5683
        %5765 = vadd.xlane.f32.xlu0 %v5764
        %v5766 = vpop.xlane.xlu0 %5765
        %v5767 = vadd.f32 %v5684, %v5685
        %5768 = vadd.xlane.f32.xlu0 %v5767
        %v5769 = vpop.xlane.xlu0 %5768
        %v5770 = vadd.f32 %v5686, %v5687
        %5771 = vadd.xlane.f32.xlu0 %v5770
        %v5772 = vpop.xlane.xlu0 %5771
        %v5773 = vadd.f32 %v5688, %v5689
        %5774 = vadd.xlane.f32.xlu0 %v5773
        %v5775 = vpop.xlane.xlu0 %5774
        %v5776 = vadd.f32 %v5690, %v5691
        %5777 = vadd.xlane.f32.xlu0 %v5776
        %v5778 = vpop.xlane.xlu0 %5777
        %v5779 = vadd.f32 %v5692, %v5693
        %5780 = vadd.xlane.f32.xlu0 %v5779
        %v5781 = vpop.xlane.xlu0 %5780
        %v5782 = vadd.f32 %v5694, %v5695
        %5783 = vadd.xlane.f32.xlu0 %v5782
        %v5784 = vpop.xlane.xlu0 %5783
        %v5785 = vadd.f32 %v5696, %v5697
        %5786 = vadd.xlane.f32.xlu0 %v5785
        %v5787 = vpop.xlane.xlu0 %5786
        %v5788 = vadd.f32 %v5698, %v5699
        %5789 = vadd.xlane.f32.xlu0 %v5788
        %v5790 = vpop.xlane.xlu0 %5789
        %v5791 = vadd.f32 %v5700, %v5701
        %5792 = vadd.xlane.f32.xlu0 %v5791
        %v5793 = vpop.xlane.xlu0 %5792
        %v5794 = vadd.f32 %v5702, %v5703
        %5795 = vadd.xlane.f32.xlu0 %v5794
        %v5796 = vpop.xlane.xlu0 %5795
        %v5797 = vadd.f32 %v5704, %v5705
        %5798 = vadd.xlane.f32.xlu0 %v5797
        %v5799 = vpop.xlane.xlu0 %5798
        %v5800 = vadd.f32 %v5706, %v5707
        %5801 = vadd.xlane.f32.xlu0 %v5800
        %v5802 = vpop.xlane.xlu0 %5801
        %v5803 = vadd.f32 %v5708, %v5709
        %5804 = vadd.xlane.f32.xlu0 %v5803
        %v5805 = vpop.xlane.xlu0 %5804
        %v5806 = vadd.f32 %v5710, %v5711
        %5807 = vadd.xlane.f32.xlu0 %v5806
        %v5808 = vpop.xlane.xlu0 %5807
        %v5809 = vadd.f32 %v5712, %v5713
        %5810 = vadd.xlane.f32.xlu0 %v5809
        %v5811 = vpop.xlane.xlu0 %5810
        %v5812 = vmul.f32 %v5718, %v739
        %v5813 = vmul.f32 %v5721, %v739
        %v5814 = vmul.f32 %v5724, %v739
        %v5815 = vmul.f32 %v5727, %v739
        %v5816 = vmul.f32 %v5730, %v739
        %v5817 = vmul.f32 %v5733, %v739
        %v5818 = vmul.f32 %v5736, %v739
        %v5819 = vmul.f32 %v5739, %v739
        %v5820 = vmul.f32 %v5742, %v739
        %v5821 = vmul.f32 %v5745, %v739
        %v5822 = vmul.f32 %v5748, %v739
        %v5823 = vmul.f32 %v5751, %v739
        %v5824 = vmul.f32 %v5754, %v739
        %v5825 = vmul.f32 %v5757, %v739
        %v5826 = vmul.f32 %v5760, %v739
        %v5827 = vmul.f32 %v5763, %v739
        %v5828 = vmul.f32 %v5766, %v739
        %v5829 = vmul.f32 %v5769, %v739
        %v5830 = vmul.f32 %v5772, %v739
        %v5831 = vmul.f32 %v5775, %v739
        %v5832 = vmul.f32 %v5778, %v739
        %v5833 = vmul.f32 %v5781, %v739
        %v5834 = vmul.f32 %v5784, %v739
        %v5835 = vmul.f32 %v5787, %v739
        %v5836 = vmul.f32 %v5790, %v739
        %v5837 = vmul.f32 %v5793, %v739
        %v5838 = vmul.f32 %v5796, %v739
        %v5839 = vmul.f32 %v5799, %v739
        %v5840 = vmul.f32 %v5802, %v739
        %v5841 = vmul.f32 %v5805, %v739
        %v5842 = vmul.f32 %v5808, %v739
        %v5843 = vmul.f32 %v5811, %v739
        %v5844 = vsub.f32 %v5650, %v5812
        %v5845 = vsub.f32 %v5651, %v5812
        %v5846 = vsub.f32 %v5652, %v5813
        %v5847 = vsub.f32 %v5653, %v5813
        %v5848 = vsub.f32 %v5654, %v5814
        %v5849 = vsub.f32 %v5655, %v5814
        %v5850 = vsub.f32 %v5656, %v5815
        %v5851 = vsub.f32 %v5657, %v5815
        %v5852 = vsub.f32 %v5658, %v5816
        %v5853 = vsub.f32 %v5659, %v5816
        %v5854 = vsub.f32 %v5660, %v5817
        %v5855 = vsub.f32 %v5661, %v5817
        %v5856 = vsub.f32 %v5662, %v5818
        %v5857 = vsub.f32 %v5663, %v5818
        %v5858 = vsub.f32 %v5664, %v5819
        %v5859 = vsub.f32 %v5665, %v5819
        %v5860 = vsub.f32 %v5666, %v5820
        %v5861 = vsub.f32 %v5667, %v5820
        %v5862 = vsub.f32 %v5668, %v5821
        %v5863 = vsub.f32 %v5669, %v5821
        %v5864 = vsub.f32 %v5670, %v5822
        %v5865 = vsub.f32 %v5671, %v5822
        %v5866 = vsub.f32 %v5672, %v5823
        %v5867 = vsub.f32 %v5673, %v5823
        %v5868 = vsub.f32 %v5674, %v5824
        %v5869 = vsub.f32 %v5675, %v5824
        %v5870 = vsub.f32 %v5676, %v5825
        %v5871 = vsub.f32 %v5677, %v5825
        %v5872 = vsub.f32 %v5678, %v5826
        %v5873 = vsub.f32 %v5679, %v5826
        %v5874 = vsub.f32 %v5680, %v5827
        %v5875 = vsub.f32 %v5681, %v5827
        %v5876 = vsub.f32 %v5682, %v5828
        %v5877 = vsub.f32 %v5683, %v5828
        %v5878 = vsub.f32 %v5684, %v5829
        %v5879 = vsub.f32 %v5685, %v5829
        %v5880 = vsub.f32 %v5686, %v5830
        %v5881 = vsub.f32 %v5687, %v5830
        %v5882 = vsub.f32 %v5688, %v5831
        %v5883 = vsub.f32 %v5689, %v5831
        %v5884 = vsub.f32 %v5690, %v5832
        %v5885 = vsub.f32 %v5691, %v5832
        %v5886 = vsub.f32 %v5692, %v5833
        %v5887 = vsub.f32 %v5693, %v5833
        %v5888 = vsub.f32 %v5694, %v5834
        %v5889 = vsub.f32 %v5695, %v5834
        %v5890 = vsub.f32 %v5696, %v5835
        %v5891 = vsub.f32 %v5697, %v5835
        %v5892 = vsub.f32 %v5698, %v5836
        %v5893 = vsub.f32 %v5699, %v5836
        %v5894 = vsub.f32 %v5700, %v5837
        %v5895 = vsub.f32 %v5701, %v5837
        %v5896 = vsub.f32 %v5702, %v5838
        %v5897 = vsub.f32 %v5703, %v5838
        %v5898 = vsub.f32 %v5704, %v5839
        %v5899 = vsub.f32 %v5705, %v5839
        %v5900 = vsub.f32 %v5706, %v5840
        %v5901 = vsub.f32 %v5707, %v5840
        %v5902 = vsub.f32 %v5708, %v5841
        %v5903 = vsub.f32 %v5709, %v5841
        %v5904 = vsub.f32 %v5710, %v5842
        %v5905 = vsub.f32 %v5711, %v5842
        %v5906 = vsub.f32 %v5712, %v5843
        %v5907 = vsub.f32 %v5713, %v5843
        %v5908 = vmul.f32 %v5844, %v5844
        %v5909 = vmul.f32 %v5845, %v5845
        %v5910 = vmul.f32 %v5846, %v5846
        %v5911 = vmul.f32 %v5847, %v5847
        %v5912 = vmul.f32 %v5848, %v5848
        %v5913 = vmul.f32 %v5849, %v5849
        %v5914 = vmul.f32 %v5850, %v5850
        %v5915 = vmul.f32 %v5851, %v5851
        %v5916 = vmul.f32 %v5852, %v5852
        %v5917 = vmul.f32 %v5853, %v5853
        %v5918 = vmul.f32 %v5854, %v5854
        %v5919 = vmul.f32 %v5855, %v5855
        %v5920 = vmul.f32 %v5856, %v5856
        %v5921 = vmul.f32 %v5857, %v5857
        %v5922 = vmul.f32 %v5858, %v5858
        %v5923 = vmul.f32 %v5859, %v5859
        %v5924 = vmul.f32 %v5860, %v5860
        %v5925 = vmul.f32 %v5861, %v5861
        %v5926 = vmul.f32 %v5862, %v5862
        %v5927 = vmul.f32 %v5863, %v5863
        %v5928 = vmul.f32 %v5864, %v5864
        %v5929 = vmul.f32 %v5865, %v5865
        %v5930 = vmul.f32 %v5866, %v5866
        %v5931 = vmul.f32 %v5867, %v5867
        %v5932 = vmul.f32 %v5868, %v5868
        %v5933 = vmul.f32 %v5869, %v5869
        %v5934 = vmul.f32 %v5870, %v5870
        %v5935 = vmul.f32 %v5871, %v5871
        %v5936 = vmul.f32 %v5872, %v5872
        %v5937 = vmul.f32 %v5873, %v5873
        %v5938 = vmul.f32 %v5874, %v5874
        %v5939 = vmul.f32 %v5875, %v5875
        %v5940 = vmul.f32 %v5876, %v5876
        %v5941 = vmul.f32 %v5877, %v5877
        %v5942 = vmul.f32 %v5878, %v5878
        %v5943 = vmul.f32 %v5879, %v5879
        %v5944 = vmul.f32 %v5880, %v5880
        %v5945 = vmul.f32 %v5881, %v5881
        %v5946 = vmul.f32 %v5882, %v5882
        %v5947 = vmul.f32 %v5883, %v5883
        %v5948 = vmul.f32 %v5884, %v5884
        %v5949 = vmul.f32 %v5885, %v5885
        %v5950 = vmul.f32 %v5886, %v5886
        %v5951 = vmul.f32 %v5887, %v5887
        %v5952 = vmul.f32 %v5888, %v5888
        %v5953 = vmul.f32 %v5889, %v5889
        %v5954 = vmul.f32 %v5890, %v5890
        %v5955 = vmul.f32 %v5891, %v5891
        %v5956 = vmul.f32 %v5892, %v5892
        %v5957 = vmul.f32 %v5893, %v5893
        %v5958 = vmul.f32 %v5894, %v5894
        %v5959 = vmul.f32 %v5895, %v5895
        %v5960 = vmul.f32 %v5896, %v5896
        %v5961 = vmul.f32 %v5897, %v5897
        %v5962 = vmul.f32 %v5898, %v5898
        %v5963 = vmul.f32 %v5899, %v5899
        %v5964 = vmul.f32 %v5900, %v5900
        %v5965 = vmul.f32 %v5901, %v5901
        %v5966 = vmul.f32 %v5902, %v5902
        %v5967 = vmul.f32 %v5903, %v5903
        %v5968 = vmul.f32 %v5904, %v5904
        %v5969 = vmul.f32 %v5905, %v5905
        %v5970 = vmul.f32 %v5906, %v5906
        %v5971 = vmul.f32 %v5907, %v5907
        %v5972 = vadd.f32 %v5908, %v5909
        %5973 = vadd.xlane.f32.xlu0 %v5972
        %v5974 = vpop.xlane.xlu0 %5973
        %v5975 = vadd.f32 %v5910, %v5911
        %5976 = vadd.xlane.f32.xlu0 %v5975
        %v5977 = vpop.xlane.xlu0 %5976
        %v5978 = vadd.f32 %v5912, %v5913
        %5979 = vadd.xlane.f32.xlu0 %v5978
        %v5980 = vpop.xlane.xlu0 %5979
        %v5981 = vadd.f32 %v5914, %v5915
        %5982 = vadd.xlane.f32.xlu0 %v5981
        %v5983 = vpop.xlane.xlu0 %5982
        %v5984 = vadd.f32 %v5916, %v5917
        %5985 = vadd.xlane.f32.xlu0 %v5984
        %v5986 = vpop.xlane.xlu0 %5985
        %v5987 = vadd.f32 %v5918, %v5919
        %5988 = vadd.xlane.f32.xlu0 %v5987
        %v5989 = vpop.xlane.xlu0 %5988
        %v5990 = vadd.f32 %v5920, %v5921
        %5991 = vadd.xlane.f32.xlu0 %v5990
        %v5992 = vpop.xlane.xlu0 %5991
        %v5993 = vadd.f32 %v5922, %v5923
        %5994 = vadd.xlane.f32.xlu0 %v5993
        %v5995 = vpop.xlane.xlu0 %5994
        %v5996 = vadd.f32 %v5924, %v5925
        %5997 = vadd.xlane.f32.xlu0 %v5996
        %v5998 = vpop.xlane.xlu0 %5997
        %v5999 = vadd.f32 %v5926, %v5927
        %6000 = vadd.xlane.f32.xlu0 %v5999
        %v6001 = vpop.xlane.xlu0 %6000
        %v6002 = vadd.f32 %v5928, %v5929
        %6003 = vadd.xlane.f32.xlu0 %v6002
        %v6004 = vpop.xlane.xlu0 %6003
        %v6005 = vadd.f32 %v5930, %v5931
        %6006 = vadd.xlane.f32.xlu0 %v6005
        %v6007 = vpop.xlane.xlu0 %6006
        %v6008 = vadd.f32 %v5932, %v5933
        %6009 = vadd.xlane.f32.xlu0 %v6008
        %v6010 = vpop.xlane.xlu0 %6009
        %v6011 = vadd.f32 %v5934, %v5935
        %6012 = vadd.xlane.f32.xlu0 %v6011
        %v6013 = vpop.xlane.xlu0 %6012
        %v6014 = vadd.f32 %v5936, %v5937
        %6015 = vadd.xlane.f32.xlu0 %v6014
        %v6016 = vpop.xlane.xlu0 %6015
        %v6017 = vadd.f32 %v5938, %v5939
        %6018 = vadd.xlane.f32.xlu0 %v6017
        %v6019 = vpop.xlane.xlu0 %6018
        %v6020 = vadd.f32 %v5940, %v5941
        %6021 = vadd.xlane.f32.xlu0 %v6020
        %v6022 = vpop.xlane.xlu0 %6021
        %v6023 = vadd.f32 %v5942, %v5943
        %6024 = vadd.xlane.f32.xlu0 %v6023
        %v6025 = vpop.xlane.xlu0 %6024
        %v6026 = vadd.f32 %v5944, %v5945
        %6027 = vadd.xlane.f32.xlu0 %v6026
        %v6028 = vpop.xlane.xlu0 %6027
        %v6029 = vadd.f32 %v5946, %v5947
        %6030 = vadd.xlane.f32.xlu0 %v6029
        %v6031 = vpop.xlane.xlu0 %6030
        %v6032 = vadd.f32 %v5948, %v5949
        %6033 = vadd.xlane.f32.xlu0 %v6032
        %v6034 = vpop.xlane.xlu0 %6033
        %v6035 = vadd.f32 %v5950, %v5951
        %6036 = vadd.xlane.f32.xlu0 %v6035
        %v6037 = vpop.xlane.xlu0 %6036
        %v6038 = vadd.f32 %v5952, %v5953
        %6039 = vadd.xlane.f32.xlu0 %v6038
        %v6040 = vpop.xlane.xlu0 %6039
        %v6041 = vadd.f32 %v5954, %v5955
        %6042 = vadd.xlane.f32.xlu0 %v6041
        %v6043 = vpop.xlane.xlu0 %6042
        %v6044 = vadd.f32 %v5956, %v5957
        %6045 = vadd.xlane.f32.xlu0 %v6044
        %v6046 = vpop.xlane.xlu0 %6045
        %v6047 = vadd.f32 %v5958, %v5959
        %6048 = vadd.xlane.f32.xlu0 %v6047
        %v6049 = vpop.xlane.xlu0 %6048
        %v6050 = vadd.f32 %v5960, %v5961
        %6051 = vadd.xlane.f32.xlu0 %v6050
        %v6052 = vpop.xlane.xlu0 %6051
        %v6053 = vadd.f32 %v5962, %v5963
        %6054 = vadd.xlane.f32.xlu0 %v6053
        %v6055 = vpop.xlane.xlu0 %6054
        %v6056 = vadd.f32 %v5964, %v5965
        %6057 = vadd.xlane.f32.xlu0 %v6056
        %v6058 = vpop.xlane.xlu0 %6057
        %v6059 = vadd.f32 %v5966, %v5967
        %6060 = vadd.xlane.f32.xlu0 %v6059
        %v6061 = vpop.xlane.xlu0 %6060
        %v6062 = vadd.f32 %v5968, %v5969
        %6063 = vadd.xlane.f32.xlu0 %v6062
        %v6064 = vpop.xlane.xlu0 %6063
        %v6065 = vadd.f32 %v5970, %v5971
        %6066 = vadd.xlane.f32.xlu0 %v6065
        %v6067 = vpop.xlane.xlu0 %6066
        %v6068 = vmul.f32 %v5974, %v739
        %v6069 = vmul.f32 %v5977, %v739
        %v6070 = vmul.f32 %v5980, %v739
        %v6071 = vmul.f32 %v5983, %v739
        %v6072 = vmul.f32 %v5986, %v739
        %v6073 = vmul.f32 %v5989, %v739
        %v6074 = vmul.f32 %v5992, %v739
        %v6075 = vmul.f32 %v5995, %v739
        %v6076 = vmul.f32 %v5998, %v739
        %v6077 = vmul.f32 %v6001, %v739
        %v6078 = vmul.f32 %v6004, %v739
        %v6079 = vmul.f32 %v6007, %v739
        %v6080 = vmul.f32 %v6010, %v739
        %v6081 = vmul.f32 %v6013, %v739
        %v6082 = vmul.f32 %v6016, %v739
        %v6083 = vmul.f32 %v6019, %v739
        %v6084 = vmul.f32 %v6022, %v739
        %v6085 = vmul.f32 %v6025, %v739
        %v6086 = vmul.f32 %v6028, %v739
        %v6087 = vmul.f32 %v6031, %v739
        %v6088 = vmul.f32 %v6034, %v739
        %v6089 = vmul.f32 %v6037, %v739
        %v6090 = vmul.f32 %v6040, %v739
        %v6091 = vmul.f32 %v6043, %v739
        %v6092 = vmul.f32 %v6046, %v739
        %v6093 = vmul.f32 %v6049, %v739
        %v6094 = vmul.f32 %v6052, %v739
        %v6095 = vmul.f32 %v6055, %v739
        %v6096 = vmul.f32 %v6058, %v739
        %v6097 = vmul.f32 %v6061, %v739
        %v6098 = vmul.f32 %v6064, %v739
        %v6099 = vmul.f32 %v6067, %v739
        %v6100 = vadd.f32 %v6068, 1e-05
        %v6101 = vadd.f32 %v6069, 1e-05
        %v6102 = vadd.f32 %v6070, 1e-05
        %v6103 = vadd.f32 %v6071, 1e-05
        %v6104 = vadd.f32 %v6072, 1e-05
        %v6105 = vadd.f32 %v6073, 1e-05
        %v6106 = vadd.f32 %v6074, 1e-05
        %v6107 = vadd.f32 %v6075, 1e-05
        %v6108 = vadd.f32 %v6076, 1e-05
        %v6109 = vadd.f32 %v6077, 1e-05
        %v6110 = vadd.f32 %v6078, 1e-05
        %v6111 = vadd.f32 %v6079, 1e-05
        %v6112 = vadd.f32 %v6080, 1e-05
        %v6113 = vadd.f32 %v6081, 1e-05
        %v6114 = vadd.f32 %v6082, 1e-05
        %v6115 = vadd.f32 %v6083, 1e-05
        %v6116 = vadd.f32 %v6084, 1e-05
        %v6117 = vadd.f32 %v6085, 1e-05
        %v6118 = vadd.f32 %v6086, 1e-05
        %v6119 = vadd.f32 %v6087, 1e-05
        %v6120 = vadd.f32 %v6088, 1e-05
        %v6121 = vadd.f32 %v6089, 1e-05
        %v6122 = vadd.f32 %v6090, 1e-05
        %v6123 = vadd.f32 %v6091, 1e-05
        %v6124 = vadd.f32 %v6092, 1e-05
        %v6125 = vadd.f32 %v6093, 1e-05
        %v6126 = vadd.f32 %v6094, 1e-05
        %v6127 = vadd.f32 %v6095, 1e-05
        %v6128 = vadd.f32 %v6096, 1e-05
        %v6129 = vadd.f32 %v6097, 1e-05
        %v6130 = vadd.f32 %v6098, 1e-05
        %v6131 = vadd.f32 %v6099, 1e-05
        %v6132 = vrsqrt.pop %v6100
        %v6133 = vrsqrt.pop %v6101
        %v6134 = vrsqrt.pop %v6102
        %v6135 = vrsqrt.pop %v6103
        %v6136 = vrsqrt.pop %v6104
        %v6137 = vrsqrt.pop %v6105
        %v6138 = vrsqrt.pop %v6106
        %v6139 = vrsqrt.pop %v6107
        %v6140 = vrsqrt.pop %v6108
        %v6141 = vrsqrt.pop %v6109
        %v6142 = vrsqrt.pop %v6110
        %v6143 = vrsqrt.pop %v6111
        %v6144 = vrsqrt.pop %v6112
        %v6145 = vrsqrt.pop %v6113
        %v6146 = vrsqrt.pop %v6114
        %v6147 = vrsqrt.pop %v6115
        %v6148 = vrsqrt.pop %v6116
        %v6149 = vrsqrt.pop %v6117
        %v6150 = vrsqrt.pop %v6118
        %v6151 = vrsqrt.pop %v6119
        %v6152 = vrsqrt.pop %v6120
        %v6153 = vrsqrt.pop %v6121
        %v6154 = vrsqrt.pop %v6122
        %v6155 = vrsqrt.pop %v6123
        %v6156 = vrsqrt.pop %v6124
        %v6157 = vrsqrt.pop %v6125
        %v6158 = vrsqrt.pop %v6126
        %v6159 = vrsqrt.pop %v6127
        %v6160 = vrsqrt.pop %v6128
        %v6161 = vrsqrt.pop %v6129
        %v6162 = vrsqrt.pop %v6130
        %v6163 = vrsqrt.pop %v6131
        %v6164 = vmul.f32 %v5844, %v6132
        %v6165 = vmul.f32 %v5845, %v6132
        %v6166 = vmul.f32 %v5846, %v6133
        %v6167 = vmul.f32 %v5847, %v6133
        %v6168 = vmul.f32 %v5848, %v6134
        %v6169 = vmul.f32 %v5849, %v6134
        %v6170 = vmul.f32 %v5850, %v6135
        %v6171 = vmul.f32 %v5851, %v6135
        %v6172 = vmul.f32 %v5852, %v6136
        %v6173 = vmul.f32 %v5853, %v6136
        %v6174 = vmul.f32 %v5854, %v6137
        %v6175 = vmul.f32 %v5855, %v6137
        %v6176 = vmul.f32 %v5856, %v6138
        %v6177 = vmul.f32 %v5857, %v6138
        %v6178 = vmul.f32 %v5858, %v6139
        %v6179 = vmul.f32 %v5859, %v6139
        %v6180 = vmul.f32 %v5860, %v6140
        %v6181 = vmul.f32 %v5861, %v6140
        %v6182 = vmul.f32 %v5862, %v6141
        %v6183 = vmul.f32 %v5863, %v6141
        %v6184 = vmul.f32 %v5864, %v6142
        %v6185 = vmul.f32 %v5865, %v6142
        %v6186 = vmul.f32 %v5866, %v6143
        %v6187 = vmul.f32 %v5867, %v6143
        %v6188 = vmul.f32 %v5868, %v6144
        %v6189 = vmul.f32 %v5869, %v6144
        %v6190 = vmul.f32 %v5870, %v6145
        %v6191 = vmul.f32 %v5871, %v6145
        %v6192 = vmul.f32 %v5872, %v6146
        %v6193 = vmul.f32 %v5873, %v6146
        %v6194 = vmul.f32 %v5874, %v6147
        %v6195 = vmul.f32 %v5875, %v6147
        %v6196 = vmul.f32 %v5876, %v6148
        %v6197 = vmul.f32 %v5877, %v6148
        %v6198 = vmul.f32 %v5878, %v6149
        %v6199 = vmul.f32 %v5879, %v6149
        %v6200 = vmul.f32 %v5880, %v6150
        %v6201 = vmul.f32 %v5881, %v6150
        %v6202 = vmul.f32 %v5882, %v6151
        %v6203 = vmul.f32 %v5883, %v6151
        %v6204 = vmul.f32 %v5884, %v6152
        %v6205 = vmul.f32 %v5885, %v6152
        %v6206 = vmul.f32 %v5886, %v6153
        %v6207 = vmul.f32 %v5887, %v6153
        %v6208 = vmul.f32 %v5888, %v6154
        %v6209 = vmul.f32 %v5889, %v6154
        %v6210 = vmul.f32 %v5890, %v6155
        %v6211 = vmul.f32 %v5891, %v6155
        %v6212 = vmul.f32 %v5892, %v6156
        %v6213 = vmul.f32 %v5893, %v6156
        %v6214 = vmul.f32 %v5894, %v6157
        %v6215 = vmul.f32 %v5895, %v6157
        %v6216 = vmul.f32 %v5896, %v6158
        %v6217 = vmul.f32 %v5897, %v6158
        %v6218 = vmul.f32 %v5898, %v6159
        %v6219 = vmul.f32 %v5899, %v6159
        %v6220 = vmul.f32 %v5900, %v6160
        %v6221 = vmul.f32 %v5901, %v6160
        %v6222 = vmul.f32 %v5902, %v6161
        %v6223 = vmul.f32 %v5903, %v6161
        %v6224 = vmul.f32 %v5904, %v6162
        %v6225 = vmul.f32 %v5905, %v6162
        %v6226 = vmul.f32 %v5906, %v6163
        %v6227 = vmul.f32 %v5907, %v6163
        %v6229 = vlaneseq
        %v6230 = vshrl.u32 %v6229, 7
        %v6231 = vsub.s32 0, %v6230
        %v6232 = vrot.slane %v5714, %v6231
        %v6233 = vlaneseq
        %v6234 = vshrl.u32 %v6233, 7
        %v6235 = vsub.s32 1, %v6234
        %v6236 = vrot.slane %v5714, %v6235
        %v6239 = vmul.f32 %v6164, %v6232
        %v6240 = vmul.f32 %v6165, %v6236
        %v6241 = vmul.f32 %v6166, %v6232
        %v6242 = vmul.f32 %v6167, %v6236
        %v6243 = vmul.f32 %v6168, %v6232
        %v6244 = vmul.f32 %v6169, %v6236
        %v6245 = vmul.f32 %v6170, %v6232
        %v6246 = vmul.f32 %v6171, %v6236
        %v6247 = vmul.f32 %v6172, %v6232
        %v6248 = vmul.f32 %v6173, %v6236
        %v6249 = vmul.f32 %v6174, %v6232
        %v6250 = vmul.f32 %v6175, %v6236
        %v6251 = vmul.f32 %v6176, %v6232
        %v6252 = vmul.f32 %v6177, %v6236
        %v6253 = vmul.f32 %v6178, %v6232
        %v6254 = vmul.f32 %v6179, %v6236
        %v6255 = vmul.f32 %v6180, %v6232
        %v6256 = vmul.f32 %v6181, %v6236
        %v6257 = vmul.f32 %v6182, %v6232
        %v6258 = vmul.f32 %v6183, %v6236
        %v6259 = vmul.f32 %v6184, %v6232
        %v6260 = vmul.f32 %v6185, %v6236
        %v6261 = vmul.f32 %v6186, %v6232
        %v6262 = vmul.f32 %v6187, %v6236
        %v6263 = vmul.f32 %v6188, %v6232
        %v6264 = vmul.f32 %v6189, %v6236
        %v6265 = vmul.f32 %v6190, %v6232
        %v6266 = vmul.f32 %v6191, %v6236
        %v6267 = vmul.f32 %v6192, %v6232
        %v6268 = vmul.f32 %v6193, %v6236
        %v6269 = vmul.f32 %v6194, %v6232
        %v6270 = vmul.f32 %v6195, %v6236
        %v6271 = vmul.f32 %v6196, %v6232
        %v6272 = vmul.f32 %v6197, %v6236
        %v6273 = vmul.f32 %v6198, %v6232
        %v6274 = vmul.f32 %v6199, %v6236
        %v6275 = vmul.f32 %v6200, %v6232
        %v6276 = vmul.f32 %v6201, %v6236
        %v6277 = vmul.f32 %v6202, %v6232
        %v6278 = vmul.f32 %v6203, %v6236
        %v6279 = vmul.f32 %v6204, %v6232
        %v6280 = vmul.f32 %v6205, %v6236
        %v6281 = vmul.f32 %v6206, %v6232
        %v6282 = vmul.f32 %v6207, %v6236
        %v6283 = vmul.f32 %v6208, %v6232
        %v6284 = vmul.f32 %v6209, %v6236
        %v6285 = vmul.f32 %v6210, %v6232
        %v6286 = vmul.f32 %v6211, %v6236
        %v6287 = vmul.f32 %v6212, %v6232
        %v6288 = vmul.f32 %v6213, %v6236
        %v6289 = vmul.f32 %v6214, %v6232
        %v6290 = vmul.f32 %v6215, %v6236
        %v6291 = vmul.f32 %v6216, %v6232
        %v6292 = vmul.f32 %v6217, %v6236
        %v6293 = vmul.f32 %v6218, %v6232
        %v6294 = vmul.f32 %v6219, %v6236
        %v6295 = vmul.f32 %v6220, %v6232
        %v6296 = vmul.f32 %v6221, %v6236
        %v6297 = vmul.f32 %v6222, %v6232
        %v6298 = vmul.f32 %v6223, %v6236
        %v6299 = vmul.f32 %v6224, %v6232
        %v6300 = vmul.f32 %v6225, %v6236
        %v6301 = vmul.f32 %v6226, %v6232
        %v6302 = vmul.f32 %v6227, %v6236
        %v6304 = vlaneseq
        %v6305 = vshrl.u32 %v6304, 7
        %v6306 = vsub.s32 0, %v6305
        %v6307 = vrot.slane %v5715, %v6306
        %v6308 = vlaneseq
        %v6309 = vshrl.u32 %v6308, 7
        %v6310 = vsub.s32 1, %v6309
        %v6311 = vrot.slane %v5715, %v6310
        %v6314 = vadd.f32 %v6239, %v6307
        %v6315 = vadd.f32 %v6240, %v6311
        %v6316 = vadd.f32 %v6241, %v6307
        %v6317 = vadd.f32 %v6242, %v6311
        %v6318 = vadd.f32 %v6243, %v6307
        %v6319 = vadd.f32 %v6244, %v6311
        %v6320 = vadd.f32 %v6245, %v6307
        %v6321 = vadd.f32 %v6246, %v6311
        %v6322 = vadd.f32 %v6247, %v6307
        %v6323 = vadd.f32 %v6248, %v6311
        %v6324 = vadd.f32 %v6249, %v6307
        %v6325 = vadd.f32 %v6250, %v6311
        %v6326 = vadd.f32 %v6251, %v6307
        %v6327 = vadd.f32 %v6252, %v6311
        %v6328 = vadd.f32 %v6253, %v6307
        %v6329 = vadd.f32 %v6254, %v6311
        %v6330 = vadd.f32 %v6255, %v6307
        %v6331 = vadd.f32 %v6256, %v6311
        %v6332 = vadd.f32 %v6257, %v6307
        %v6333 = vadd.f32 %v6258, %v6311
        %v6334 = vadd.f32 %v6259, %v6307
        %v6335 = vadd.f32 %v6260, %v6311
        %v6336 = vadd.f32 %v6261, %v6307
        %v6337 = vadd.f32 %v6262, %v6311
        %v6338 = vadd.f32 %v6263, %v6307
        %v6339 = vadd.f32 %v6264, %v6311
        %v6340 = vadd.f32 %v6265, %v6307
        %v6341 = vadd.f32 %v6266, %v6311
        %v6342 = vadd.f32 %v6267, %v6307
        %v6343 = vadd.f32 %v6268, %v6311
        %v6344 = vadd.f32 %v6269, %v6307
        %v6345 = vadd.f32 %v6270, %v6311
        %v6346 = vadd.f32 %v6271, %v6307
        %v6347 = vadd.f32 %v6272, %v6311
        %v6348 = vadd.f32 %v6273, %v6307
        %v6349 = vadd.f32 %v6274, %v6311
        %v6350 = vadd.f32 %v6275, %v6307
        %v6351 = vadd.f32 %v6276, %v6311
        %v6352 = vadd.f32 %v6277, %v6307
        %v6353 = vadd.f32 %v6278, %v6311
        %v6354 = vadd.f32 %v6279, %v6307
        %v6355 = vadd.f32 %v6280, %v6311
        %v6356 = vadd.f32 %v6281, %v6307
        %v6357 = vadd.f32 %v6282, %v6311
        %v6358 = vadd.f32 %v6283, %v6307
        %v6359 = vadd.f32 %v6284, %v6311
        %v6360 = vadd.f32 %v6285, %v6307
        %v6361 = vadd.f32 %v6286, %v6311
        %v6362 = vadd.f32 %v6287, %v6307
        %v6363 = vadd.f32 %v6288, %v6311
        %v6364 = vadd.f32 %v6289, %v6307
        %v6365 = vadd.f32 %v6290, %v6311
        %v6366 = vadd.f32 %v6291, %v6307
        %v6367 = vadd.f32 %v6292, %v6311
        %v6368 = vadd.f32 %v6293, %v6307
        %v6369 = vadd.f32 %v6294, %v6311
        %v6370 = vadd.f32 %v6295, %v6307
        %v6371 = vadd.f32 %v6296, %v6311
        %v6372 = vadd.f32 %v6297, %v6307
        %v6373 = vadd.f32 %v6298, %v6311
        %v6374 = vadd.f32 %v6299, %v6307
        %v6375 = vadd.f32 %v6300, %v6311
        %v6376 = vadd.f32 %v6301, %v6307
        %v6377 = vadd.f32 %v6302, %v6311
        %v6378 = vpack.c.bf16 %v6316, %v6314
        %v6379 = vpack.c.bf16 %v6317, %v6315
        %v6380 = vpack.c.bf16 %v6320, %v6318
        %v6381 = vpack.c.bf16 %v6321, %v6319
        %v6382 = vpack.c.bf16 %v6324, %v6322
        %v6383 = vpack.c.bf16 %v6325, %v6323
        %v6384 = vpack.c.bf16 %v6328, %v6326
        %v6385 = vpack.c.bf16 %v6329, %v6327
        %v6386 = vpack.c.bf16 %v6332, %v6330
        %v6387 = vpack.c.bf16 %v6333, %v6331
        %v6388 = vpack.c.bf16 %v6336, %v6334
        %v6389 = vpack.c.bf16 %v6337, %v6335
        %v6390 = vpack.c.bf16 %v6340, %v6338
        %v6391 = vpack.c.bf16 %v6341, %v6339
        %v6392 = vpack.c.bf16 %v6344, %v6342
        %v6393 = vpack.c.bf16 %v6345, %v6343
        %v6394 = vpack.c.bf16 %v6348, %v6346
        %v6395 = vpack.c.bf16 %v6349, %v6347
        %v6396 = vpack.c.bf16 %v6352, %v6350
        %v6397 = vpack.c.bf16 %v6353, %v6351
        %v6398 = vpack.c.bf16 %v6356, %v6354
        %v6399 = vpack.c.bf16 %v6357, %v6355
        %v6400 = vpack.c.bf16 %v6360, %v6358
        %v6401 = vpack.c.bf16 %v6361, %v6359
        %v6402 = vpack.c.bf16 %v6364, %v6362
        %v6403 = vpack.c.bf16 %v6365, %v6363
        %v6404 = vpack.c.bf16 %v6368, %v6366
        %v6405 = vpack.c.bf16 %v6369, %v6367
        %v6406 = vpack.c.bf16 %v6372, %v6370
        %v6407 = vpack.c.bf16 %v6373, %v6371
        %v6408 = vpack.c.bf16 %v6376, %v6374
        %v6409 = vpack.c.bf16 %v6377, %v6375
        %v6410 = vld [vmem:[#allocation12] sm:$0xff]
        %v6411 = vld [vmem:[#allocation12 + $0x8] sm:$0xff]
        %v6412 = vld [vmem:[#allocation12 + $0x10] sm:$0xff]
        %v6413 = vld [vmem:[#allocation12 + $0x18] sm:$0xff]
        %v6414 = vld [vmem:[#allocation12 + $0x20] sm:$0xff]
        %v6415 = vld [vmem:[#allocation12 + $0x28] sm:$0xff]
        %v6416 = vld [vmem:[#allocation12 + $0x30] sm:$0xff]
        %v6417 = vld [vmem:[#allocation12 + $0x38] sm:$0xff]
        %v6418 = vld [vmem:[#allocation12 + $0x40] sm:$0xff]
        %v6419 = vld [vmem:[#allocation12 + $0x48] sm:$0xff]
        %v6420 = vld [vmem:[#allocation12 + $0x50] sm:$0xff]
        %v6421 = vld [vmem:[#allocation12 + $0x58] sm:$0xff]
        %v6422 = vld [vmem:[#allocation12 + $0x60] sm:$0xff]
        %v6423 = vld [vmem:[#allocation12 + $0x68] sm:$0xff]
        %v6424 = vld [vmem:[#allocation12 + $0x70] sm:$0xff]
        %v6425 = vld [vmem:[#allocation12 + $0x78] sm:$0xff]
        %v6426 = vld [vmem:[#allocation12 + $0x80] sm:$0xff]
        %v6427 = vld [vmem:[#allocation12 + $0x88] sm:$0xff]
        %v6428 = vld [vmem:[#allocation12 + $0x90] sm:$0xff]
        %v6429 = vld [vmem:[#allocation12 + $0x98] sm:$0xff]
        %v6430 = vld [vmem:[#allocation12 + $0xa0] sm:$0xff]
        %v6431 = vld [vmem:[#allocation12 + $0xa8] sm:$0xff]
        %v6432 = vld [vmem:[#allocation12 + $0xb0] sm:$0xff]
        %v6433 = vld [vmem:[#allocation12 + $0xb8] sm:$0xff]
        %v6434 = vld [vmem:[#allocation12 + $0xc0] sm:$0xff]
        %v6435 = vld [vmem:[#allocation12 + $0xc8] sm:$0xff]
        %v6436 = vld [vmem:[#allocation12 + $0xd0] sm:$0xff]
        %v6437 = vld [vmem:[#allocation12 + $0xd8] sm:$0xff]
        %v6438 = vld [vmem:[#allocation12 + $0xe0] sm:$0xff]
        %v6439 = vld [vmem:[#allocation12 + $0xe8] sm:$0xff]
        %v6440 = vld [vmem:[#allocation12 + $0xf0] sm:$0xff]
        %v6441 = vld [vmem:[#allocation12 + $0xf8] sm:$0xff]
        %v6442 = vld [vmem:[#allocation12 + $0x100] sm:$0xff]
        %v6443 = vld [vmem:[#allocation12 + $0x108] sm:$0xff]
        %v6444 = vld [vmem:[#allocation12 + $0x110] sm:$0xff]
        %v6445 = vld [vmem:[#allocation12 + $0x118] sm:$0xff]
        %v6446 = vld [vmem:[#allocation12 + $0x120] sm:$0xff]
        %v6447 = vld [vmem:[#allocation12 + $0x128] sm:$0xff]
        %v6448 = vld [vmem:[#allocation12 + $0x130] sm:$0xff]
        %v6449 = vld [vmem:[#allocation12 + $0x138] sm:$0xff]
        %v6450 = vld [vmem:[#allocation12 + $0x140] sm:$0xff]
        %v6451 = vld [vmem:[#allocation12 + $0x148] sm:$0xff]
        %v6452 = vld [vmem:[#allocation12 + $0x150] sm:$0xff]
        %v6453 = vld [vmem:[#allocation12 + $0x158] sm:$0xff]
        %v6454 = vld [vmem:[#allocation12 + $0x160] sm:$0xff]
        %v6455 = vld [vmem:[#allocation12 + $0x168] sm:$0xff]
        %v6456 = vld [vmem:[#allocation12 + $0x170] sm:$0xff]
        %v6457 = vld [vmem:[#allocation12 + $0x178] sm:$0xff]
        %v6458 = vld [vmem:[#allocation12 + $0x180] sm:$0xff]
        %v6459 = vld [vmem:[#allocation12 + $0x188] sm:$0xff]
        %v6460 = vld [vmem:[#allocation12 + $0x190] sm:$0xff]
        %v6461 = vld [vmem:[#allocation12 + $0x198] sm:$0xff]
        %v6462 = vld [vmem:[#allocation12 + $0x1a0] sm:$0xff]
        %v6463 = vld [vmem:[#allocation12 + $0x1a8] sm:$0xff]
        %v6464 = vld [vmem:[#allocation12 + $0x1b0] sm:$0xff]
        %v6465 = vld [vmem:[#allocation12 + $0x1b8] sm:$0xff]
        %v6466 = vld [vmem:[#allocation12 + $0x1c0] sm:$0xff]
        %v6467 = vld [vmem:[#allocation12 + $0x1c8] sm:$0xff]
        %v6468 = vld [vmem:[#allocation12 + $0x1d0] sm:$0xff]
        %v6469 = vld [vmem:[#allocation12 + $0x1d8] sm:$0xff]
        %v6470 = vld [vmem:[#allocation12 + $0x1e0] sm:$0xff]
        %v6471 = vld [vmem:[#allocation12 + $0x1e8] sm:$0xff]
        %v6472 = vld [vmem:[#allocation12 + $0x1f0] sm:$0xff]
        %v6473 = vld [vmem:[#allocation12 + $0x1f8] sm:$0xff]
        %v6474 = vld [vmem:[#allocation12 + $0x200] sm:$0xff]
        %v6475 = vld [vmem:[#allocation12 + $0x208] sm:$0xff]
        %v6476 = vld [vmem:[#allocation12 + $0x210] sm:$0xff]
        %v6477 = vld [vmem:[#allocation12 + $0x218] sm:$0xff]
        %v6478 = vld [vmem:[#allocation12 + $0x220] sm:$0xff]
        %v6479 = vld [vmem:[#allocation12 + $0x228] sm:$0xff]
        %v6480 = vld [vmem:[#allocation12 + $0x230] sm:$0xff]
        %v6481 = vld [vmem:[#allocation12 + $0x238] sm:$0xff]
        %v6482 = vld [vmem:[#allocation12 + $0x240] sm:$0xff]
        %v6483 = vld [vmem:[#allocation12 + $0x248] sm:$0xff]
        %v6484 = vld [vmem:[#allocation12 + $0x250] sm:$0xff]
        %v6485 = vld [vmem:[#allocation12 + $0x258] sm:$0xff]
        %v6486 = vld [vmem:[#allocation12 + $0x260] sm:$0xff]
        %v6487 = vld [vmem:[#allocation12 + $0x268] sm:$0xff]
        %v6488 = vld [vmem:[#allocation12 + $0x270] sm:$0xff]
        %v6489 = vld [vmem:[#allocation12 + $0x278] sm:$0xff]
        %v6490 = vld [vmem:[#allocation12 + $0x280] sm:$0xff]
        %v6491 = vld [vmem:[#allocation12 + $0x288] sm:$0xff]
        %v6492 = vld [vmem:[#allocation12 + $0x290] sm:$0xff]
        %v6493 = vld [vmem:[#allocation12 + $0x298] sm:$0xff]
        %v6494 = vld [vmem:[#allocation12 + $0x2a0] sm:$0xff]
        %v6495 = vld [vmem:[#allocation12 + $0x2a8] sm:$0xff]
        %v6496 = vld [vmem:[#allocation12 + $0x2b0] sm:$0xff]
        %v6497 = vld [vmem:[#allocation12 + $0x2b8] sm:$0xff]
        %v6498 = vld [vmem:[#allocation12 + $0x2c0] sm:$0xff]
        %v6499 = vld [vmem:[#allocation12 + $0x2c8] sm:$0xff]
        %v6500 = vld [vmem:[#allocation12 + $0x2d0] sm:$0xff]
        %v6501 = vld [vmem:[#allocation12 + $0x2d8] sm:$0xff]
        %v6502 = vld [vmem:[#allocation12 + $0x2e0] sm:$0xff]
        %v6503 = vld [vmem:[#allocation12 + $0x2e8] sm:$0xff]
        %v6504 = vld [vmem:[#allocation12 + $0x2f0] sm:$0xff]
        %v6505 = vld [vmem:[#allocation12 + $0x2f8] sm:$0xff]
        %v6506 = vld [vmem:[#allocation12 + $0x300] sm:$0xff]
        %v6507 = vld [vmem:[#allocation12 + $0x308] sm:$0xff]
        %v6508 = vld [vmem:[#allocation12 + $0x310] sm:$0xff]
        %v6509 = vld [vmem:[#allocation12 + $0x318] sm:$0xff]
        %v6510 = vld [vmem:[#allocation12 + $0x320] sm:$0xff]
        %v6511 = vld [vmem:[#allocation12 + $0x328] sm:$0xff]
        %v6512 = vld [vmem:[#allocation12 + $0x330] sm:$0xff]
        %v6513 = vld [vmem:[#allocation12 + $0x338] sm:$0xff]
        %v6514 = vld [vmem:[#allocation12 + $0x340] sm:$0xff]
        %v6515 = vld [vmem:[#allocation12 + $0x348] sm:$0xff]
        %v6516 = vld [vmem:[#allocation12 + $0x350] sm:$0xff]
        %v6517 = vld [vmem:[#allocation12 + $0x358] sm:$0xff]
        %v6518 = vld [vmem:[#allocation12 + $0x360] sm:$0xff]
        %v6519 = vld [vmem:[#allocation12 + $0x368] sm:$0xff]
        %v6520 = vld [vmem:[#allocation12 + $0x370] sm:$0xff]
        %v6521 = vld [vmem:[#allocation12 + $0x378] sm:$0xff]
        %v6522 = vld [vmem:[#allocation12 + $0x380] sm:$0xff]
        %v6523 = vld [vmem:[#allocation12 + $0x388] sm:$0xff]
        %v6524 = vld [vmem:[#allocation12 + $0x390] sm:$0xff]
        %v6525 = vld [vmem:[#allocation12 + $0x398] sm:$0xff]
        %v6526 = vld [vmem:[#allocation12 + $0x3a0] sm:$0xff]
        %v6527 = vld [vmem:[#allocation12 + $0x3a8] sm:$0xff]
        %v6528 = vld [vmem:[#allocation12 + $0x3b0] sm:$0xff]
        %v6529 = vld [vmem:[#allocation12 + $0x3b8] sm:$0xff]
        %v6530 = vld [vmem:[#allocation12 + $0x3c0] sm:$0xff]
        %v6531 = vld [vmem:[#allocation12 + $0x3c8] sm:$0xff]
        %v6532 = vld [vmem:[#allocation12 + $0x3d0] sm:$0xff]
        %v6533 = vld [vmem:[#allocation12 + $0x3d8] sm:$0xff]
        %v6534 = vld [vmem:[#allocation12 + $0x3e0] sm:$0xff]
        %v6535 = vld [vmem:[#allocation12 + $0x3e8] sm:$0xff]
        %v6536 = vld [vmem:[#allocation12 + $0x3f0] sm:$0xff]
        %v6537 = vld [vmem:[#allocation12 + $0x3f8] sm:$0xff]
        %v6538 = vld [vmem:[%s11] sm:$0xff]
        %v6540 = vlaneseq
        %v6541 = vshrl.u32 %v6540, 7
        %v6542 = vsub.s32 0, %v6541
        %v6543 = vrot.slane %v6538, %v6542
        %v6544 = vlaneseq
        %v6545 = vshrl.u32 %v6544, 7
        %v6546 = vsub.s32 1, %v6545
        %v6547 = vrot.slane %v6538, %v6546
        %v6548 = vlaneseq
        %v6549 = vshrl.u32 %v6548, 7
        %v6550 = vsub.s32 2, %v6549
        %v6551 = vrot.slane %v6538, %v6550
        %v6552 = vlaneseq
        %v6553 = vshrl.u32 %v6552, 7
        %v6554 = vsub.s32 3, %v6553
        %v6555 = vrot.slane %v6538, %v6554
        %v6556 = vlaneseq
        %v6557 = vshrl.u32 %v6556, 7
        %v6558 = vsub.s32 4, %v6557
        %v6559 = vrot.slane %v6538, %v6558
        %v6560 = vlaneseq
        %v6561 = vshrl.u32 %v6560, 7
        %v6562 = vsub.s32 5, %v6561
        %v6563 = vrot.slane %v6538, %v6562
        %v6564 = vlaneseq
        %v6565 = vshrl.u32 %v6564, 7
        %v6566 = vsub.s32 6, %v6565
        %v6567 = vrot.slane %v6538, %v6566
        %v6568 = vlaneseq
        %v6569 = vshrl.u32 %v6568, 7
        %v6570 = vsub.s32 7, %v6569
        %v6571 = vrot.slane %v6538, %v6570
        %v6708 = vunpack.c.l.b16 %v6410
        %v6709 = vunpack.c.h.b16 %v6410
        %v6710 = vunpack.c.l.b16 %v6411
        %v6711 = vunpack.c.h.b16 %v6411
        %v6712 = vunpack.c.l.b16 %v6412
        %v6713 = vunpack.c.h.b16 %v6412
        %v6714 = vunpack.c.l.b16 %v6413
        %v6715 = vunpack.c.h.b16 %v6413
        %v6716 = vunpack.c.l.b16 %v6414
        %v6717 = vunpack.c.h.b16 %v6414
        %v6718 = vunpack.c.l.b16 %v6415
        %v6719 = vunpack.c.h.b16 %v6415
        %v6720 = vunpack.c.l.b16 %v6416
        %v6721 = vunpack.c.h.b16 %v6416
        %v6722 = vunpack.c.l.b16 %v6417
        %v6723 = vunpack.c.h.b16 %v6417
        %v6724 = vunpack.c.l.b16 %v6418
        %v6725 = vunpack.c.h.b16 %v6418
        %v6726 = vunpack.c.l.b16 %v6419
        %v6727 = vunpack.c.h.b16 %v6419
        %v6728 = vunpack.c.l.b16 %v6420
        %v6729 = vunpack.c.h.b16 %v6420
        %v6730 = vunpack.c.l.b16 %v6421
        %v6731 = vunpack.c.h.b16 %v6421
        %v6732 = vunpack.c.l.b16 %v6422
        %v6733 = vunpack.c.h.b16 %v6422
        %v6734 = vunpack.c.l.b16 %v6423
        %v6735 = vunpack.c.h.b16 %v6423
        %v6736 = vunpack.c.l.b16 %v6424
        %v6737 = vunpack.c.h.b16 %v6424
        %v6738 = vunpack.c.l.b16 %v6425
        %v6739 = vunpack.c.h.b16 %v6425
        %v6740 = vunpack.c.l.b16 %v6426
        %v6741 = vunpack.c.h.b16 %v6426
        %v6742 = vunpack.c.l.b16 %v6427
        %v6743 = vunpack.c.h.b16 %v6427
        %v6744 = vunpack.c.l.b16 %v6428
        %v6745 = vunpack.c.h.b16 %v6428
        %v6746 = vunpack.c.l.b16 %v6429
        %v6747 = vunpack.c.h.b16 %v6429
        %v6748 = vunpack.c.l.b16 %v6430
        %v6749 = vunpack.c.h.b16 %v6430
        %v6750 = vunpack.c.l.b16 %v6431
        %v6751 = vunpack.c.h.b16 %v6431
        %v6752 = vunpack.c.l.b16 %v6432
        %v6753 = vunpack.c.h.b16 %v6432
        %v6754 = vunpack.c.l.b16 %v6433
        %v6755 = vunpack.c.h.b16 %v6433
        %v6756 = vunpack.c.l.b16 %v6434
        %v6757 = vunpack.c.h.b16 %v6434
        %v6758 = vunpack.c.l.b16 %v6435
        %v6759 = vunpack.c.h.b16 %v6435
        %v6760 = vunpack.c.l.b16 %v6436
        %v6761 = vunpack.c.h.b16 %v6436
        %v6762 = vunpack.c.l.b16 %v6437
        %v6763 = vunpack.c.h.b16 %v6437
        %v6764 = vunpack.c.l.b16 %v6438
        %v6765 = vunpack.c.h.b16 %v6438
        %v6766 = vunpack.c.l.b16 %v6439
        %v6767 = vunpack.c.h.b16 %v6439
        %v6768 = vunpack.c.l.b16 %v6440
        %v6769 = vunpack.c.h.b16 %v6440
        %v6770 = vunpack.c.l.b16 %v6441
        %v6771 = vunpack.c.h.b16 %v6441
        %v6772 = vunpack.c.l.b16 %v6442
        %v6773 = vunpack.c.h.b16 %v6442
        %v6774 = vunpack.c.l.b16 %v6443
        %v6775 = vunpack.c.h.b16 %v6443
        %v6776 = vunpack.c.l.b16 %v6444
        %v6777 = vunpack.c.h.b16 %v6444
        %v6778 = vunpack.c.l.b16 %v6445
        %v6779 = vunpack.c.h.b16 %v6445
        %v6780 = vunpack.c.l.b16 %v6446
        %v6781 = vunpack.c.h.b16 %v6446
        %v6782 = vunpack.c.l.b16 %v6447
        %v6783 = vunpack.c.h.b16 %v6447
        %v6784 = vunpack.c.l.b16 %v6448
        %v6785 = vunpack.c.h.b16 %v6448
        %v6786 = vunpack.c.l.b16 %v6449
        %v6787 = vunpack.c.h.b16 %v6449
        %v6788 = vunpack.c.l.b16 %v6450
        %v6789 = vunpack.c.h.b16 %v6450
        %v6790 = vunpack.c.l.b16 %v6451
        %v6791 = vunpack.c.h.b16 %v6451
        %v6792 = vunpack.c.l.b16 %v6452
        %v6793 = vunpack.c.h.b16 %v6452
        %v6794 = vunpack.c.l.b16 %v6453
        %v6795 = vunpack.c.h.b16 %v6453
        %v6796 = vunpack.c.l.b16 %v6454
        %v6797 = vunpack.c.h.b16 %v6454
        %v6798 = vunpack.c.l.b16 %v6455
        %v6799 = vunpack.c.h.b16 %v6455
        %v6800 = vunpack.c.l.b16 %v6456
        %v6801 = vunpack.c.h.b16 %v6456
        %v6802 = vunpack.c.l.b16 %v6457
        %v6803 = vunpack.c.h.b16 %v6457
        %v6804 = vunpack.c.l.b16 %v6458
        %v6805 = vunpack.c.h.b16 %v6458
        %v6806 = vunpack.c.l.b16 %v6459
        %v6807 = vunpack.c.h.b16 %v6459
        %v6808 = vunpack.c.l.b16 %v6460
        %v6809 = vunpack.c.h.b16 %v6460
        %v6810 = vunpack.c.l.b16 %v6461
        %v6811 = vunpack.c.h.b16 %v6461
        %v6812 = vunpack.c.l.b16 %v6462
        %v6813 = vunpack.c.h.b16 %v6462
        %v6814 = vunpack.c.l.b16 %v6463
        %v6815 = vunpack.c.h.b16 %v6463
        %v6816 = vunpack.c.l.b16 %v6464
        %v6817 = vunpack.c.h.b16 %v6464
        %v6818 = vunpack.c.l.b16 %v6465
        %v6819 = vunpack.c.h.b16 %v6465
        %v6820 = vunpack.c.l.b16 %v6466
        %v6821 = vunpack.c.h.b16 %v6466
        %v6822 = vunpack.c.l.b16 %v6467
        %v6823 = vunpack.c.h.b16 %v6467
        %v6824 = vunpack.c.l.b16 %v6468
        %v6825 = vunpack.c.h.b16 %v6468
        %v6826 = vunpack.c.l.b16 %v6469
        %v6827 = vunpack.c.h.b16 %v6469
        %v6828 = vunpack.c.l.b16 %v6470
        %v6829 = vunpack.c.h.b16 %v6470
        %v6830 = vunpack.c.l.b16 %v6471
        %v6831 = vunpack.c.h.b16 %v6471
        %v6832 = vunpack.c.l.b16 %v6472
        %v6833 = vunpack.c.h.b16 %v6472
        %v6834 = vunpack.c.l.b16 %v6473
        %v6835 = vunpack.c.h.b16 %v6473
        %v6836 = vunpack.c.l.b16 %v6474
        %v6837 = vunpack.c.h.b16 %v6474
        %v6838 = vunpack.c.l.b16 %v6475
        %v6839 = vunpack.c.h.b16 %v6475
        %v6840 = vunpack.c.l.b16 %v6476
        %v6841 = vunpack.c.h.b16 %v6476
        %v6842 = vunpack.c.l.b16 %v6477
        %v6843 = vunpack.c.h.b16 %v6477
        %v6844 = vunpack.c.l.b16 %v6478
        %v6845 = vunpack.c.h.b16 %v6478
        %v6846 = vunpack.c.l.b16 %v6479
        %v6847 = vunpack.c.h.b16 %v6479
        %v6848 = vunpack.c.l.b16 %v6480
        %v6849 = vunpack.c.h.b16 %v6480
        %v6850 = vunpack.c.l.b16 %v6481
        %v6851 = vunpack.c.h.b16 %v6481
        %v6852 = vunpack.c.l.b16 %v6482
        %v6853 = vunpack.c.h.b16 %v6482
        %v6854 = vunpack.c.l.b16 %v6483
        %v6855 = vunpack.c.h.b16 %v6483
        %v6856 = vunpack.c.l.b16 %v6484
        %v6857 = vunpack.c.h.b16 %v6484
        %v6858 = vunpack.c.l.b16 %v6485
        %v6859 = vunpack.c.h.b16 %v6485
        %v6860 = vunpack.c.l.b16 %v6486
        %v6861 = vunpack.c.h.b16 %v6486
        %v6862 = vunpack.c.l.b16 %v6487
        %v6863 = vunpack.c.h.b16 %v6487
        %v6864 = vunpack.c.l.b16 %v6488
        %v6865 = vunpack.c.h.b16 %v6488
        %v6866 = vunpack.c.l.b16 %v6489
        %v6867 = vunpack.c.h.b16 %v6489
        %v6868 = vunpack.c.l.b16 %v6490
        %v6869 = vunpack.c.h.b16 %v6490
        %v6870 = vunpack.c.l.b16 %v6491
        %v6871 = vunpack.c.h.b16 %v6491
        %v6872 = vunpack.c.l.b16 %v6492
        %v6873 = vunpack.c.h.b16 %v6492
        %v6874 = vunpack.c.l.b16 %v6493
        %v6875 = vunpack.c.h.b16 %v6493
        %v6876 = vunpack.c.l.b16 %v6494
        %v6877 = vunpack.c.h.b16 %v6494
        %v6878 = vunpack.c.l.b16 %v6495
        %v6879 = vunpack.c.h.b16 %v6495
        %v6880 = vunpack.c.l.b16 %v6496
        %v6881 = vunpack.c.h.b16 %v6496
        %v6882 = vunpack.c.l.b16 %v6497
        %v6883 = vunpack.c.h.b16 %v6497
        %v6884 = vunpack.c.l.b16 %v6498
        %v6885 = vunpack.c.h.b16 %v6498
        %v6886 = vunpack.c.l.b16 %v6499
        %v6887 = vunpack.c.h.b16 %v6499
        %v6888 = vunpack.c.l.b16 %v6500
        %v6889 = vunpack.c.h.b16 %v6500
        %v6890 = vunpack.c.l.b16 %v6501
        %v6891 = vunpack.c.h.b16 %v6501
        %v6892 = vunpack.c.l.b16 %v6502
        %v6893 = vunpack.c.h.b16 %v6502
        %v6894 = vunpack.c.l.b16 %v6503
        %v6895 = vunpack.c.h.b16 %v6503
        %v6896 = vunpack.c.l.b16 %v6504
        %v6897 = vunpack.c.h.b16 %v6504
        %v6898 = vunpack.c.l.b16 %v6505
        %v6899 = vunpack.c.h.b16 %v6505
        %v6900 = vunpack.c.l.b16 %v6506
        %v6901 = vunpack.c.h.b16 %v6506
        %v6902 = vunpack.c.l.b16 %v6507
        %v6903 = vunpack.c.h.b16 %v6507
        %v6904 = vunpack.c.l.b16 %v6508
        %v6905 = vunpack.c.h.b16 %v6508
        %v6906 = vunpack.c.l.b16 %v6509
        %v6907 = vunpack.c.h.b16 %v6509
        %v6908 = vunpack.c.l.b16 %v6510
        %v6909 = vunpack.c.h.b16 %v6510
        %v6910 = vunpack.c.l.b16 %v6511
        %v6911 = vunpack.c.h.b16 %v6511
        %v6912 = vunpack.c.l.b16 %v6512
        %v6913 = vunpack.c.h.b16 %v6512
        %v6914 = vunpack.c.l.b16 %v6513
        %v6915 = vunpack.c.h.b16 %v6513
        %v6916 = vunpack.c.l.b16 %v6514
        %v6917 = vunpack.c.h.b16 %v6514
        %v6918 = vunpack.c.l.b16 %v6515
        %v6919 = vunpack.c.h.b16 %v6515
        %v6920 = vunpack.c.l.b16 %v6516
        %v6921 = vunpack.c.h.b16 %v6516
        %v6922 = vunpack.c.l.b16 %v6517
        %v6923 = vunpack.c.h.b16 %v6517
        %v6924 = vunpack.c.l.b16 %v6518
        %v6925 = vunpack.c.h.b16 %v6518
        %v6926 = vunpack.c.l.b16 %v6519
        %v6927 = vunpack.c.h.b16 %v6519
        %v6928 = vunpack.c.l.b16 %v6520
        %v6929 = vunpack.c.h.b16 %v6520
        %v6930 = vunpack.c.l.b16 %v6521
        %v6931 = vunpack.c.h.b16 %v6521
        %v6932 = vunpack.c.l.b16 %v6522
        %v6933 = vunpack.c.h.b16 %v6522
        %v6934 = vunpack.c.l.b16 %v6523
        %v6935 = vunpack.c.h.b16 %v6523
        %v6936 = vunpack.c.l.b16 %v6524
        %v6937 = vunpack.c.h.b16 %v6524
        %v6938 = vunpack.c.l.b16 %v6525
        %v6939 = vunpack.c.h.b16 %v6525
        %v6940 = vunpack.c.l.b16 %v6526
        %v6941 = vunpack.c.h.b16 %v6526
        %v6942 = vunpack.c.l.b16 %v6527
        %v6943 = vunpack.c.h.b16 %v6527
        %v6944 = vunpack.c.l.b16 %v6528
        %v6945 = vunpack.c.h.b16 %v6528
        %v6946 = vunpack.c.l.b16 %v6529
        %v6947 = vunpack.c.h.b16 %v6529
        %v6948 = vunpack.c.l.b16 %v6530
        %v6949 = vunpack.c.h.b16 %v6530
        %v6950 = vunpack.c.l.b16 %v6531
        %v6951 = vunpack.c.h.b16 %v6531
        %v6952 = vunpack.c.l.b16 %v6532
        %v6953 = vunpack.c.h.b16 %v6532
        %v6954 = vunpack.c.l.b16 %v6533
        %v6955 = vunpack.c.h.b16 %v6533
        %v6956 = vunpack.c.l.b16 %v6534
        %v6957 = vunpack.c.h.b16 %v6534
        %v6958 = vunpack.c.l.b16 %v6535
        %v6959 = vunpack.c.h.b16 %v6535
        %v6960 = vunpack.c.l.b16 %v6536
        %v6961 = vunpack.c.h.b16 %v6536
        %v6962 = vunpack.c.l.b16 %v6537
        %v6963 = vunpack.c.h.b16 %v6537
        %v6964 = vpack.c.b16 %v6716, %v6708
        %v6965 = vpack.c.b16 %v6717, %v6709
        %v6966 = vpack.c.b16 %v6718, %v6710
        %v6967 = vpack.c.b16 %v6719, %v6711
        %v6968 = vpack.c.b16 %v6720, %v6712
        %v6969 = vpack.c.b16 %v6721, %v6713
        %v6970 = vpack.c.b16 %v6722, %v6714
        %v6971 = vpack.c.b16 %v6723, %v6715
        %v6972 = vpack.c.b16 %v6732, %v6724
        %v6973 = vpack.c.b16 %v6733, %v6725
        %v6974 = vpack.c.b16 %v6734, %v6726
        %v6975 = vpack.c.b16 %v6735, %v6727
        %v6976 = vpack.c.b16 %v6736, %v6728
        %v6977 = vpack.c.b16 %v6737, %v6729
        %v6978 = vpack.c.b16 %v6738, %v6730
        %v6979 = vpack.c.b16 %v6739, %v6731
        %v6980 = vpack.c.b16 %v6748, %v6740
        %v6981 = vpack.c.b16 %v6749, %v6741
        %v6982 = vpack.c.b16 %v6750, %v6742
        %v6983 = vpack.c.b16 %v6751, %v6743
        %v6984 = vpack.c.b16 %v6752, %v6744
        %v6985 = vpack.c.b16 %v6753, %v6745
        %v6986 = vpack.c.b16 %v6754, %v6746
        %v6987 = vpack.c.b16 %v6755, %v6747
        %v6988 = vpack.c.b16 %v6764, %v6756
        %v6989 = vpack.c.b16 %v6765, %v6757
        %v6990 = vpack.c.b16 %v6766, %v6758
        %v6991 = vpack.c.b16 %v6767, %v6759
        %v6992 = vpack.c.b16 %v6768, %v6760
        %v6993 = vpack.c.b16 %v6769, %v6761
        %v6994 = vpack.c.b16 %v6770, %v6762
        %v6995 = vpack.c.b16 %v6771, %v6763
        %v6996 = vpack.c.b16 %v6780, %v6772
        %v6997 = vpack.c.b16 %v6781, %v6773
        %v6998 = vpack.c.b16 %v6782, %v6774
        %v6999 = vpack.c.b16 %v6783, %v6775
        %v7000 = vpack.c.b16 %v6784, %v6776
        %v7001 = vpack.c.b16 %v6785, %v6777
        %v7002 = vpack.c.b16 %v6786, %v6778
        %v7003 = vpack.c.b16 %v6787, %v6779
        %v7004 = vpack.c.b16 %v6796, %v6788
        %v7005 = vpack.c.b16 %v6797, %v6789
        %v7006 = vpack.c.b16 %v6798, %v6790
        %v7007 = vpack.c.b16 %v6799, %v6791
        %v7008 = vpack.c.b16 %v6800, %v6792
        %v7009 = vpack.c.b16 %v6801, %v6793
        %v7010 = vpack.c.b16 %v6802, %v6794
        %v7011 = vpack.c.b16 %v6803, %v6795
        %v7012 = vpack.c.b16 %v6812, %v6804
        %v7013 = vpack.c.b16 %v6813, %v6805
        %v7014 = vpack.c.b16 %v6814, %v6806
        %v7015 = vpack.c.b16 %v6815, %v6807
        %v7016 = vpack.c.b16 %v6816, %v6808
        %v7017 = vpack.c.b16 %v6817, %v6809
        %v7018 = vpack.c.b16 %v6818, %v6810
        %v7019 = vpack.c.b16 %v6819, %v6811
        %v7020 = vpack.c.b16 %v6828, %v6820
        %v7021 = vpack.c.b16 %v6829, %v6821
        %v7022 = vpack.c.b16 %v6830, %v6822
        %v7023 = vpack.c.b16 %v6831, %v6823
        %v7024 = vpack.c.b16 %v6832, %v6824
        %v7025 = vpack.c.b16 %v6833, %v6825
        %v7026 = vpack.c.b16 %v6834, %v6826
        %v7027 = vpack.c.b16 %v6835, %v6827
        %v7028 = vpack.c.b16 %v6844, %v6836
        %v7029 = vpack.c.b16 %v6845, %v6837
        %v7030 = vpack.c.b16 %v6846, %v6838
        %v7031 = vpack.c.b16 %v6847, %v6839
        %v7032 = vpack.c.b16 %v6848, %v6840
        %v7033 = vpack.c.b16 %v6849, %v6841
        %v7034 = vpack.c.b16 %v6850, %v6842
        %v7035 = vpack.c.b16 %v6851, %v6843
        %v7036 = vpack.c.b16 %v6860, %v6852
        %v7037 = vpack.c.b16 %v6861, %v6853
        %v7038 = vpack.c.b16 %v6862, %v6854
        %v7039 = vpack.c.b16 %v6863, %v6855
        %v7040 = vpack.c.b16 %v6864, %v6856
        %v7041 = vpack.c.b16 %v6865, %v6857
        %v7042 = vpack.c.b16 %v6866, %v6858
        %v7043 = vpack.c.b16 %v6867, %v6859
        %v7044 = vpack.c.b16 %v6876, %v6868
        %v7045 = vpack.c.b16 %v6877, %v6869
        %v7046 = vpack.c.b16 %v6878, %v6870
        %v7047 = vpack.c.b16 %v6879, %v6871
        %v7048 = vpack.c.b16 %v6880, %v6872
        %v7049 = vpack.c.b16 %v6881, %v6873
        %v7050 = vpack.c.b16 %v6882, %v6874
        %v7051 = vpack.c.b16 %v6883, %v6875
        %v7052 = vpack.c.b16 %v6892, %v6884
        %v7053 = vpack.c.b16 %v6893, %v6885
        %v7054 = vpack.c.b16 %v6894, %v6886
        %v7055 = vpack.c.b16 %v6895, %v6887
        %v7056 = vpack.c.b16 %v6896, %v6888
        %v7057 = vpack.c.b16 %v6897, %v6889
        %v7058 = vpack.c.b16 %v6898, %v6890
        %v7059 = vpack.c.b16 %v6899, %v6891
        %v7060 = vpack.c.b16 %v6908, %v6900
        %v7061 = vpack.c.b16 %v6909, %v6901
        %v7062 = vpack.c.b16 %v6910, %v6902
        %v7063 = vpack.c.b16 %v6911, %v6903
        %v7064 = vpack.c.b16 %v6912, %v6904
        %v7065 = vpack.c.b16 %v6913, %v6905
        %v7066 = vpack.c.b16 %v6914, %v6906
        %v7067 = vpack.c.b16 %v6915, %v6907
        %v7068 = vpack.c.b16 %v6924, %v6916
        %v7069 = vpack.c.b16 %v6925, %v6917
        %v7070 = vpack.c.b16 %v6926, %v6918
        %v7071 = vpack.c.b16 %v6927, %v6919
        %v7072 = vpack.c.b16 %v6928, %v6920
        %v7073 = vpack.c.b16 %v6929, %v6921
        %v7074 = vpack.c.b16 %v6930, %v6922
        %v7075 = vpack.c.b16 %v6931, %v6923
        %v7076 = vpack.c.b16 %v6940, %v6932
        %v7077 = vpack.c.b16 %v6941, %v6933
        %v7078 = vpack.c.b16 %v6942, %v6934
        %v7079 = vpack.c.b16 %v6943, %v6935
        %v7080 = vpack.c.b16 %v6944, %v6936
        %v7081 = vpack.c.b16 %v6945, %v6937
        %v7082 = vpack.c.b16 %v6946, %v6938
        %v7083 = vpack.c.b16 %v6947, %v6939
        %v7084 = vpack.c.b16 %v6956, %v6948
        %v7085 = vpack.c.b16 %v6957, %v6949
        %v7086 = vpack.c.b16 %v6958, %v6950
        %v7087 = vpack.c.b16 %v6959, %v6951
        %v7088 = vpack.c.b16 %v6960, %v6952
        %v7089 = vpack.c.b16 %v6961, %v6953
        %v7090 = vpack.c.b16 %v6962, %v6954
        %v7091 = vpack.c.b16 %v6963, %v6955
        %7220 = vmatprep.subr.bf16.mxu0 %v6965
        %7221 = vmatpush1.bf16.msra.mxu0 %v6964
        %7222 = vmatprep.subr.bf16.mxu0 %v6973
        %7223 = vmatpush1.bf16.msra.mxu0 %v6972
        %7224 = vmatprep.subr.bf16.mxu0 %v6981
        %7225 = vmatpush1.bf16.msra.mxu0 %v6980
        %7226 = vmatprep.subr.bf16.mxu0 %v6989
        %7227 = vmatpush1.bf16.msra.mxu0 %v6988
        %7228 = vmatprep.subr.bf16.mxu0 %v6997
        %7229 = vmatpush1.bf16.msra.mxu0 %v6996
        %7230 = vmatprep.subr.bf16.mxu0 %v7005
        %7231 = vmatpush1.bf16.msra.mxu0 %v7004
        %7232 = vmatprep.subr.bf16.mxu0 %v7013
        %7233 = vmatpush1.bf16.msra.mxu0 %v7012
        %7234 = vmatprep.subr.bf16.mxu0 %v7021
        %7235 = vmatpush1.bf16.msra.mxu0 %v7020
        %7236 = vmatprep.subr.bf16.mxu0 %v7029
        %7237 = vmatpush1.bf16.msra.mxu0 %v7028
        %7238 = vmatprep.subr.bf16.mxu0 %v7037
        %7239 = vmatpush1.bf16.msra.mxu0 %v7036
        %7240 = vmatprep.subr.bf16.mxu0 %v7045
        %7241 = vmatpush1.bf16.msra.mxu0 %v7044
        %7242 = vmatprep.subr.bf16.mxu0 %v7053
        %7243 = vmatpush1.bf16.msra.mxu0 %v7052
        %7244 = vmatprep.subr.bf16.mxu0 %v7061
        %7245 = vmatpush1.bf16.msra.mxu0 %v7060
        %7246 = vmatprep.subr.bf16.mxu0 %v7069
        %7247 = vmatpush1.bf16.msra.mxu0 %v7068
        %7248 = vmatprep.subr.bf16.mxu0 %v7077
        %7249 = vmatpush1.bf16.msra.mxu0 %v7076
        %7250 = vmatprep.subr.bf16.mxu0 %v7085
        %7251 = vmatpush1.bf16.msra.mxu0 %v7084
        %7252 = vmatprep.mubr.bf16.mxu0 %v6379
        %7253 = vmatmul.mubr.bf16.gmra.mrb[0].mxu0 %v6378
        %v7254 = vpop.f32.mrb[0].mxu0
        %v7255 = vadd.f32 %v6543, %v7254
        %v7256 = vpop.f32.mrb[0].mxu0
        %v7257 = vadd.f32 %v6547, %v7256
        %v7258 = vpop.f32.mrb[0].mxu0
        %v7259 = vadd.f32 %v6543, %v7258
        %v7260 = vpop.f32.mrb[0].mxu0
        %v7261 = vadd.f32 %v6547, %v7260
        %7262 = vmatprep.mubr.bf16.mxu0 %v6381
        %7263 = vmatmul.mubr.bf16.gmra.mrb[0].mxu0 %v6380
        %v7264 = vpop.f32.mrb[0].mxu0
        %v7265 = vadd.f32 %v6543, %v7264
        %v7266 = vpop.f32.mrb[0].mxu0
        %v7267 = vadd.f32 %v6547, %v7266
        %v7268 = vpop.f32.mrb[0].mxu0
        %v7269 = vadd.f32 %v6543, %v7268
        %v7270 = vpop.f32.mrb[0].mxu0
        %v7271 = vadd.f32 %v6547, %v7270
        %7272 = vmatprep.mubr.bf16.mxu0 %v6383
        %7273 = vmatmul.mubr.bf16.gmra.mrb[0].mxu0 %v6382
        %v7274 = vpop.f32.mrb[0].mxu0
        %v7275 = vadd.f32 %v6543, %v7274
        %v7276 = vpop.f32.mrb[0].mxu0
        %v7277 = vadd.f32 %v6547, %v7276
        %v7278 = vpop.f32.mrb[0].mxu0
        %v7279 = vadd.f32 %v6543, %v7278
        %v7280 = vpop.f32.mrb[0].mxu0
        %v7281 = vadd.f32 %v6547, %v7280
        %7282 = vmatprep.mubr.bf16.mxu0 %v6385
        %7283 = vmatmul.mubr.bf16.gmra.mrb[0].mxu0 %v6384
        %v7284 = vpop.f32.mrb[0].mxu0
        %v7285 = vadd.f32 %v6543, %v7284
        %v7286 = vpop.f32.mrb[0].mxu0
        %v7287 = vadd.f32 %v6547, %v7286
        %v7288 = vpop.f32.mrb[0].mxu0
        %v7289 = vadd.f32 %v6543, %v7288
        %v7290 = vpop.f32.mrb[0].mxu0
        %v7291 = vadd.f32 %v6547, %v7290
        %7292 = vmatprep.mubr.bf16.mxu0 %v6387
        %7293 = vmatmul.mubr.bf16.gmra.mrb[0].mxu0 %v6386
        %v7294 = vpop.f32.mrb[0].mxu0
        %v7295 = vadd.f32 %v6543, %v7294
        %v7296 = vpop.f32.mrb[0].mxu0
        %v7297 = vadd.f32 %v6547, %v7296
        %v7298 = vpop.f32.mrb[0].mxu0
        %v7299 = vadd.f32 %v6543, %v7298
        %v7300 = vpop.f32.mrb[0].mxu0
        %v7301 = vadd.f32 %v6547, %v7300
        %7302 = vmatprep.mubr.bf16.mxu0 %v6389
        %7303 = vmatmul.mubr.bf16.gmra.mrb[0].mxu0 %v6388
        %v7304 = vpop.f32.mrb[0].mxu0
        %v7305 = vadd.f32 %v6543, %v7304
        %v7306 = vpop.f32.mrb[0].mxu0
        %v7307 = vadd.f32 %v6547, %v7306
        %v7308 = vpop.f32.mrb[0].mxu0
        %v7309 = vadd.f32 %v6543, %v7308
        %v7310 = vpop.f32.mrb[0].mxu0
        %v7311 = vadd.f32 %v6547, %v7310
        %7312 = vmatprep.mubr.bf16.mxu0 %v6391
        %7313 = vmatmul.mubr.bf16.gmra.mrb[0].mxu0 %v6390
        %v7314 = vpop.f32.mrb[0].mxu0
        %v7315 = vadd.f32 %v6543, %v7314
        %v7316 = vpop.f32.mrb[0].mxu0
        %v7317 = vadd.f32 %v6547, %v7316
        %v7318 = vpop.f32.mrb[0].mxu0
        %v7319 = vadd.f32 %v6543, %v7318
        %v7320 = vpop.f32.mrb[0].mxu0
        %v7321 = vadd.f32 %v6547, %v7320
        %7322 = vmatprep.mubr.bf16.mxu0 %v6393
        %7323 = vmatmul.mubr.bf16.gmra.mrb[0].mxu0 %v6392
        %v7324 = vpop.f32.mrb[0].mxu0
        %v7325 = vadd.f32 %v6543, %v7324
        %v7326 = vpop.f32.mrb[0].mxu0
        %v7327 = vadd.f32 %v6547, %v7326
        %v7328 = vpop.f32.mrb[0].mxu0
        %v7329 = vadd.f32 %v6543, %v7328
        %v7330 = vpop.f32.mrb[0].mxu0
        %v7331 = vadd.f32 %v6547, %v7330
        %7332 = vmatprep.mubr.bf16.mxu0 %v6395
        %7333 = vmatmul.mubr.bf16.gmra.mrb[0].mxu0 %v6394
        %v7334 = vpop.f32.mrb[0].mxu0
        %v7335 = vadd.f32 %v6543, %v7334
        %v7336 = vpop.f32.mrb[0].mxu0
        %v7337 = vadd.f32 %v6547, %v7336
        %v7338 = vpop.f32.mrb[0].mxu0
        %v7339 = vadd.f32 %v6543, %v7338
        %v7340 = vpop.f32.mrb[0].mxu0
        %v7341 = vadd.f32 %v6547, %v7340
        %7342 = vmatprep.mubr.bf16.mxu0 %v6397
        %7343 = vmatmul.mubr.bf16.gmra.mrb[0].mxu0 %v6396
        %v7344 = vpop.f32.mrb[0].mxu0
        %v7345 = vadd.f32 %v6543, %v7344
        %v7346 = vpop.f32.mrb[0].mxu0
        %v7347 = vadd.f32 %v6547, %v7346
        %v7348 = vpop.f32.mrb[0].mxu0
        %v7349 = vadd.f32 %v6543, %v7348
        %v7350 = vpop.f32.mrb[0].mxu0
        %v7351 = vadd.f32 %v6547, %v7350
        %7352 = vmatprep.mubr.bf16.mxu0 %v6399
        %7353 = vmatmul.mubr.bf16.gmra.mrb[0].mxu0 %v6398
        %v7354 = vpop.f32.mrb[0].mxu0
        %v7355 = vadd.f32 %v6543, %v7354
        %v7356 = vpop.f32.mrb[0].mxu0
        %v7357 = vadd.f32 %v6547, %v7356
        %v7358 = vpop.f32.mrb[0].mxu0
        %v7359 = vadd.f32 %v6543, %v7358
        %v7360 = vpop.f32.mrb[0].mxu0
        %v7361 = vadd.f32 %v6547, %v7360
        %7362 = vmatprep.mubr.bf16.mxu0 %v6401
        %7363 = vmatmul.mubr.bf16.gmra.mrb[0].mxu0 %v6400
        %v7364 = vpop.f32.mrb[0].mxu0
        %v7365 = vadd.f32 %v6543, %v7364
        %v7366 = vpop.f32.mrb[0].mxu0
        %v7367 = vadd.f32 %v6547, %v7366
        %v7368 = vpop.f32.mrb[0].mxu0
        %v7369 = vadd.f32 %v6543, %v7368
        %v7370 = vpop.f32.mrb[0].mxu0
        %v7371 = vadd.f32 %v6547, %v7370
        %7372 = vmatprep.mubr.bf16.mxu0 %v6403
        %7373 = vmatmul.mubr.bf16.gmra.mrb[0].mxu0 %v6402
        %v7374 = vpop.f32.mrb[0].mxu0
        %v7375 = vadd.f32 %v6543, %v7374
        %v7376 = vpop.f32.mrb[0].mxu0
        %v7377 = vadd.f32 %v6547, %v7376
        %v7378 = vpop.f32.mrb[0].mxu0
        %v7379 = vadd.f32 %v6543, %v7378
        %v7380 = vpop.f32.mrb[0].mxu0
        %v7381 = vadd.f32 %v6547, %v7380
        %7382 = vmatprep.mubr.bf16.mxu0 %v6405
        %7383 = vmatmul.mubr.bf16.gmra.mrb[0].mxu0 %v6404
        %v7384 = vpop.f32.mrb[0].mxu0
        %v7385 = vadd.f32 %v6543, %v7384
        %v7386 = vpop.f32.mrb[0].mxu0
        %v7387 = vadd.f32 %v6547, %v7386
        %v7388 = vpop.f32.mrb[0].mxu0
        %v7389 = vadd.f32 %v6543, %v7388
        %v7390 = vpop.f32.mrb[0].mxu0
        %v7391 = vadd.f32 %v6547, %v7390
        %7392 = vmatprep.mubr.bf16.mxu0 %v6407
        %7393 = vmatmul.mubr.bf16.gmra.mrb[0].mxu0 %v6406
        %v7394 = vpop.f32.mrb[0].mxu0
        %v7395 = vadd.f32 %v6543, %v7394
        %v7396 = vpop.f32.mrb[0].mxu0
        %v7397 = vadd.f32 %v6547, %v7396
        %v7398 = vpop.f32.mrb[0].mxu0
        %v7399 = vadd.f32 %v6543, %v7398
        %v7400 = vpop.f32.mrb[0].mxu0
        %v7401 = vadd.f32 %v6547, %v7400
        %7402 = vmatprep.mubr.bf16.mxu0 %v6409
        %7403 = vmatmul.mubr.bf16.gmra.mrb[0].mxu0 %v6408
        %v7404 = vpop.f32.mrb[0].mxu0
        %v7405 = vadd.f32 %v6543, %v7404
        %v7406 = vpop.f32.mrb[0].mxu0
        %v7407 = vadd.f32 %v6547, %v7406
        %v7408 = vpop.f32.mrb[0].mxu0
        %v7409 = vadd.f32 %v6543, %v7408
        %v7410 = vpop.f32.mrb[0].mxu0
        %v7411 = vadd.f32 %v6547, %v7410
        %7412 = vdwg.mxu0
        %7413 = vmatprep.subr.bf16.mxu0 %v6967
        %7414 = vmatpush1.bf16.msra.mxu0 %v6966
        %7415 = vmatprep.subr.bf16.mxu0 %v6975
        %7416 = vmatpush1.bf16.msra.mxu0 %v6974
        %7417 = vmatprep.subr.bf16.mxu0 %v6983
        %7418 = vmatpush1.bf16.msra.mxu0 %v6982
        %7419 = vmatprep.subr.bf16.mxu0 %v6991
        %7420 = vmatpush1.bf16.msra.mxu0 %v6990
        %7421 = vmatprep.subr.bf16.mxu0 %v6999
        %7422 = vmatpush1.bf16.msra.mxu0 %v6998
        %7423 = vmatprep.subr.bf16.mxu0 %v7007
        %7424 = vmatpush1.bf16.msra.mxu0 %v7006
        %7425 = vmatprep.subr.bf16.mxu0 %v7015
        %7426 = vmatpush1.bf16.msra.mxu0 %v7014
        %7427 = vmatprep.subr.bf16.mxu0 %v7023
        %7428 = vmatpush1.bf16.msra.mxu0 %v7022
        %7429 = vmatprep.subr.bf16.mxu0 %v7031
        %7430 = vmatpush1.bf16.msra.mxu0 %v7030
        %7431 = vmatprep.subr.bf16.mxu0 %v7039
        %7432 = vmatpush1.bf16.msra.mxu0 %v7038
        %7433 = vmatprep.subr.bf16.mxu0 %v7047
        %7434 = vmatpush1.bf16.msra.mxu0 %v7046
        %7435 = vmatprep.subr.bf16.mxu0 %v7055
        %7436 = vmatpush1.bf16.msra.mxu0 %v7054
        %7437 = vmatprep.subr.bf16.mxu0 %v7063
        %7438 = vmatpush1.bf16.msra.mxu0 %v7062
        %7439 = vmatprep.subr.bf16.mxu0 %v7071
        %7440 = vmatpush1.bf16.msra.mxu0 %v7070
        %7441 = vmatprep.subr.bf16.mxu0 %v7079
        %7442 = vmatpush1.bf16.msra.mxu0 %v7078
        %7443 = vmatprep.subr.bf16.mxu0 %v7087
        %7444 = vmatpush1.bf16.msra.mxu0 %v7086
        %7445 = vmatprep.mubr.bf16.mxu0 %v6379
        %7446 = vmatmul.mubr.bf16.gmra.mrb[0].mxu0 %v6378
        %v7447 = vpop.f32.mrb[0].mxu0
        %v7448 = vadd.f32 %v6551, %v7447
        %v7449 = vpop.f32.mrb[0].mxu0
        %v7450 = vadd.f32 %v6555, %v7449
        %v7451 = vpop.f32.mrb[0].mxu0
        %v7452 = vadd.f32 %v6551, %v7451
        %v7453 = vpop.f32.mrb[0].mxu0
        %v7454 = vadd.f32 %v6555, %v7453
        %7455 = vmatprep.mubr.bf16.mxu0 %v6381
        %7456 = vmatmul.mubr.bf16.gmra.mrb[0].mxu0 %v6380
        %v7457 = vpop.f32.mrb[0].mxu0
        %v7458 = vadd.f32 %v6551, %v7457
        %v7459 = vpop.f32.mrb[0].mxu0
        %v7460 = vadd.f32 %v6555, %v7459
        %v7461 = vpop.f32.mrb[0].mxu0
        %v7462 = vadd.f32 %v6551, %v7461
        %v7463 = vpop.f32.mrb[0].mxu0
        %v7464 = vadd.f32 %v6555, %v7463
        %7465 = vmatprep.mubr.bf16.mxu0 %v6383
        %7466 = vmatmul.mubr.bf16.gmra.mrb[0].mxu0 %v6382
        %v7467 = vpop.f32.mrb[0].mxu0
        %v7468 = vadd.f32 %v6551, %v7467
        %v7469 = vpop.f32.mrb[0].mxu0
        %v7470 = vadd.f32 %v6555, %v7469
        %v7471 = vpop.f32.mrb[0].mxu0
        %v7472 = vadd.f32 %v6551, %v7471
        %v7473 = vpop.f32.mrb[0].mxu0
        %v7474 = vadd.f32 %v6555, %v7473
        %7475 = vmatprep.mubr.bf16.mxu0 %v6385
        %7476 = vmatmul.mubr.bf16.gmra.mrb[0].mxu0 %v6384
        %v7477 = vpop.f32.mrb[0].mxu0
        %v7478 = vadd.f32 %v6551, %v7477
        %v7479 = vpop.f32.mrb[0].mxu0
        %v7480 = vadd.f32 %v6555, %v7479
        %v7481 = vpop.f32.mrb[0].mxu0
        %v7482 = vadd.f32 %v6551, %v7481
        %v7483 = vpop.f32.mrb[0].mxu0
        %v7484 = vadd.f32 %v6555, %v7483
        %7485 = vmatprep.mubr.bf16.mxu0 %v6387
        %7486 = vmatmul.mubr.bf16.gmra.mrb[0].mxu0 %v6386
        %v7487 = vpop.f32.mrb[0].mxu0
        %v7488 = vadd.f32 %v6551, %v7487
        %v7489 = vpop.f32.mrb[0].mxu0
        %v7490 = vadd.f32 %v6555, %v7489
        %v7491 = vpop.f32.mrb[0].mxu0
        %v7492 = vadd.f32 %v6551, %v7491
        %v7493 = vpop.f32.mrb[0].mxu0
        %v7494 = vadd.f32 %v6555, %v7493
        %7495 = vmatprep.mubr.bf16.mxu0 %v6389
        %7496 = vmatmul.mubr.bf16.gmra.mrb[0].mxu0 %v6388
        %v7497 = vpop.f32.mrb[0].mxu0
        %v7498 = vadd.f32 %v6551, %v7497
        %v7499 = vpop.f32.mrb[0].mxu0
        %v7500 = vadd.f32 %v6555, %v7499
        %v7501 = vpop.f32.mrb[0].mxu0
        %v7502 = vadd.f32 %v6551, %v7501
        %v7503 = vpop.f32.mrb[0].mxu0
        %v7504 = vadd.f32 %v6555, %v7503
        %7505 = vmatprep.mubr.bf16.mxu0 %v6391
        %7506 = vmatmul.mubr.bf16.gmra.mrb[0].mxu0 %v6390
        %v7507 = vpop.f32.mrb[0].mxu0
        %v7508 = vadd.f32 %v6551, %v7507
        %v7509 = vpop.f32.mrb[0].mxu0
        %v7510 = vadd.f32 %v6555, %v7509
        %v7511 = vpop.f32.mrb[0].mxu0
        %v7512 = vadd.f32 %v6551, %v7511
        %v7513 = vpop.f32.mrb[0].mxu0
        %v7514 = vadd.f32 %v6555, %v7513
        %7515 = vmatprep.mubr.bf16.mxu0 %v6393
        %7516 = vmatmul.mubr.bf16.gmra.mrb[0].mxu0 %v6392
        %v7517 = vpop.f32.mrb[0].mxu0
        %v7518 = vadd.f32 %v6551, %v7517
        %v7519 = vpop.f32.mrb[0].mxu0
        %v7520 = vadd.f32 %v6555, %v7519
        %v7521 = vpop.f32.mrb[0].mxu0
        %v7522 = vadd.f32 %v6551, %v7521
        %v7523 = vpop.f32.mrb[0].mxu0
        %v7524 = vadd.f32 %v6555, %v7523
        %7525 = vmatprep.mubr.bf16.mxu0 %v6395
        %7526 = vmatmul.mubr.bf16.gmra.mrb[0].mxu0 %v6394
        %v7527 = vpop.f32.mrb[0].mxu0
        %v7528 = vadd.f32 %v6551, %v7527
        %v7529 = vpop.f32.mrb[0].mxu0
        %v7530 = vadd.f32 %v6555, %v7529
        %v7531 = vpop.f32.mrb[0].mxu0
        %v7532 = vadd.f32 %v6551, %v7531
        %v7533 = vpop.f32.mrb[0].mxu0
        %v7534 = vadd.f32 %v6555, %v7533
        %7535 = vmatprep.mubr.bf16.mxu0 %v6397
        %7536 = vmatmul.mubr.bf16.gmra.mrb[0].mxu0 %v6396
        %v7537 = vpop.f32.mrb[0].mxu0
        %v7538 = vadd.f32 %v6551, %v7537
        %v7539 = vpop.f32.mrb[0].mxu0
        %v7540 = vadd.f32 %v6555, %v7539
        %v7541 = vpop.f32.mrb[0].mxu0
        %v7542 = vadd.f32 %v6551, %v7541
        %v7543 = vpop.f32.mrb[0].mxu0
        %v7544 = vadd.f32 %v6555, %v7543
        %7545 = vmatprep.mubr.bf16.mxu0 %v6399
        %7546 = vmatmul.mubr.bf16.gmra.mrb[0].mxu0 %v6398
        %v7547 = vpop.f32.mrb[0].mxu0
        %v7548 = vadd.f32 %v6551, %v7547
        %v7549 = vpop.f32.mrb[0].mxu0
        %v7550 = vadd.f32 %v6555, %v7549
        %v7551 = vpop.f32.mrb[0].mxu0
        %v7552 = vadd.f32 %v6551, %v7551
        %v7553 = vpop.f32.mrb[0].mxu0
        %v7554 = vadd.f32 %v6555, %v7553
        %7555 = vmatprep.mubr.bf16.mxu0 %v6401
        %7556 = vmatmul.mubr.bf16.gmra.mrb[0].mxu0 %v6400
        %v7557 = vpop.f32.mrb[0].mxu0
        %v7558 = vadd.f32 %v6551, %v7557
        %v7559 = vpop.f32.mrb[0].mxu0
        %v7560 = vadd.f32 %v6555, %v7559
        %v7561 = vpop.f32.mrb[0].mxu0
        %v7562 = vadd.f32 %v6551, %v7561
        %v7563 = vpop.f32.mrb[0].mxu0
        %v7564 = vadd.f32 %v6555, %v7563
        %7565 = vmatprep.mubr.bf16.mxu0 %v6403
        %7566 = vmatmul.mubr.bf16.gmra.mrb[0].mxu0 %v6402
        %v7567 = vpop.f32.mrb[0].mxu0
        %v7568 = vadd.f32 %v6551, %v7567
        %v7569 = vpop.f32.mrb[0].mxu0
        %v7570 = vadd.f32 %v6555, %v7569
        %v7571 = vpop.f32.mrb[0].mxu0
        %v7572 = vadd.f32 %v6551, %v7571
        %v7573 = vpop.f32.mrb[0].mxu0
        %v7574 = vadd.f32 %v6555, %v7573
        %7575 = vmatprep.mubr.bf16.mxu0 %v6405
        %7576 = vmatmul.mubr.bf16.gmra.mrb[0].mxu0 %v6404
        %v7577 = vpop.f32.mrb[0].mxu0
        %v7578 = vadd.f32 %v6551, %v7577
        %v7579 = vpop.f32.mrb[0].mxu0
        %v7580 = vadd.f32 %v6555, %v7579
        %v7581 = vpop.f32.mrb[0].mxu0
        %v7582 = vadd.f32 %v6551, %v7581
        %v7583 = vpop.f32.mrb[0].mxu0
        %v7584 = vadd.f32 %v6555, %v7583
        %7585 = vmatprep.mubr.bf16.mxu0 %v6407
        %7586 = vmatmul.mubr.bf16.gmra.mrb[0].mxu0 %v6406
        %v7587 = vpop.f32.mrb[0].mxu0
        %v7588 = vadd.f32 %v6551, %v7587
        %v7589 = vpop.f32.mrb[0].mxu0
        %v7590 = vadd.f32 %v6555, %v7589
        %v7591 = vpop.f32.mrb[0].mxu0
        %v7592 = vadd.f32 %v6551, %v7591
        %v7593 = vpop.f32.mrb[0].mxu0
        %v7594 = vadd.f32 %v6555, %v7593
        %7595 = vmatprep.mubr.bf16.mxu0 %v6409
        %7596 = vmatmul.mubr.bf16.gmra.mrb[0].mxu0 %v6408
        %v7597 = vpop.f32.mrb[0].mxu0
        %v7598 = vadd.f32 %v6551, %v7597
        %v7599 = vpop.f32.mrb[0].mxu0
        %v7600 = vadd.f32 %v6555, %v7599
        %v7601 = vpop.f32.mrb[0].mxu0
        %v7602 = vadd.f32 %v6551, %v7601
        %v7603 = vpop.f32.mrb[0].mxu0
        %v7604 = vadd.f32 %v6555, %v7603
        %7605 = vdwg.mxu0
        %7606 = vmatprep.subr.bf16.mxu0 %v6969
        %7607 = vmatpush1.bf16.msra.mxu0 %v6968
        %7608 = vmatprep.subr.bf16.mxu0 %v6977
        %7609 = vmatpush1.bf16.msra.mxu0 %v6976
        %7610 = vmatprep.subr.bf16.mxu0 %v6985
        %7611 = vmatpush1.bf16.msra.mxu0 %v6984
        %7612 = vmatprep.subr.bf16.mxu0 %v6993
        %7613 = vmatpush1.bf16.msra.mxu0 %v6992
        %7614 = vmatprep.subr.bf16.mxu0 %v7001
        %7615 = vmatpush1.bf16.msra.mxu0 %v7000
        %7616 = vmatprep.subr.bf16.mxu0 %v7009
        %7617 = vmatpush1.bf16.msra.mxu0 %v7008
        %7618 = vmatprep.subr.bf16.mxu0 %v7017
        %7619 = vmatpush1.bf16.msra.mxu0 %v7016
        %7620 = vmatprep.subr.bf16.mxu0 %v7025
        %7621 = vmatpush1.bf16.msra.mxu0 %v7024
        %7622 = vmatprep.subr.bf16.mxu0 %v7033
        %7623 = vmatpush1.bf16.msra.mxu0 %v7032
        %7624 = vmatprep.subr.bf16.mxu0 %v7041
        %7625 = vmatpush1.bf16.msra.mxu0 %v7040
        %7626 = vmatprep.subr.bf16.mxu0 %v7049
        %7627 = vmatpush1.bf16.msra.mxu0 %v7048
        %7628 = vmatprep.subr.bf16.mxu0 %v7057
        %7629 = vmatpush1.bf16.msra.mxu0 %v7056
        %7630 = vmatprep.subr.bf16.mxu0 %v7065
        %7631 = vmatpush1.bf16.msra.mxu0 %v7064
        %7632 = vmatprep.subr.bf16.mxu0 %v7073
        %7633 = vmatpush1.bf16.msra.mxu0 %v7072
        %7634 = vmatprep.subr.bf16.mxu0 %v7081
        %7635 = vmatpush1.bf16.msra.mxu0 %v7080
        %7636 = vmatprep.subr.bf16.mxu0 %v7089
        %7637 = vmatpush1.bf16.msra.mxu0 %v7088
        %7638 = vmatprep.mubr.bf16.mxu0 %v6379
        %7639 = vmatmul.mubr.bf16.gmra.mrb[0].mxu0 %v6378
        %v7640 = vpop.f32.mrb[0].mxu0
        %v7641 = vadd.f32 %v6559, %v7640
        %v7642 = vpop.f32.mrb[0].mxu0
        %v7643 = vadd.f32 %v6563, %v7642
        %v7644 = vpop.f32.mrb[0].mxu0
        %v7645 = vadd.f32 %v6559, %v7644
        %v7646 = vpop.f32.mrb[0].mxu0
        %v7647 = vadd.f32 %v6563, %v7646
        %7648 = vmatprep.mubr.bf16.mxu0 %v6381
        %7649 = vmatmul.mubr.bf16.gmra.mrb[0].mxu0 %v6380
        %v7650 = vpop.f32.mrb[0].mxu0
        %v7651 = vadd.f32 %v6559, %v7650
        %v7652 = vpop.f32.mrb[0].mxu0
        %v7653 = vadd.f32 %v6563, %v7652
        %v7654 = vpop.f32.mrb[0].mxu0
        %v7655 = vadd.f32 %v6559, %v7654
        %v7656 = vpop.f32.mrb[0].mxu0
        %v7657 = vadd.f32 %v6563, %v7656
        %7658 = vmatprep.mubr.bf16.mxu0 %v6383
        %7659 = vmatmul.mubr.bf16.gmra.mrb[0].mxu0 %v6382
        %v7660 = vpop.f32.mrb[0].mxu0
        %v7661 = vadd.f32 %v6559, %v7660
        %v7662 = vpop.f32.mrb[0].mxu0
        %v7663 = vadd.f32 %v6563, %v7662
        %v7664 = vpop.f32.mrb[0].mxu0
        %v7665 = vadd.f32 %v6559, %v7664
        %v7666 = vpop.f32.mrb[0].mxu0
        %v7667 = vadd.f32 %v6563, %v7666
        %7668 = vmatprep.mubr.bf16.mxu0 %v6385
        %7669 = vmatmul.mubr.bf16.gmra.mrb[0].mxu0 %v6384
        %v7670 = vpop.f32.mrb[0].mxu0
        %v7671 = vadd.f32 %v6559, %v7670
        %v7672 = vpop.f32.mrb[0].mxu0
        %v7673 = vadd.f32 %v6563, %v7672
        %v7674 = vpop.f32.mrb[0].mxu0
        %v7675 = vadd.f32 %v6559, %v7674
        %v7676 = vpop.f32.mrb[0].mxu0
        %v7677 = vadd.f32 %v6563, %v7676
        %7678 = vmatprep.mubr.bf16.mxu0 %v6387
        %7679 = vmatmul.mubr.bf16.gmra.mrb[0].mxu0 %v6386
        %v7680 = vpop.f32.mrb[0].mxu0
        %v7681 = vadd.f32 %v6559, %v7680
        %v7682 = vpop.f32.mrb[0].mxu0
        %v7683 = vadd.f32 %v6563, %v7682
        %v7684 = vpop.f32.mrb[0].mxu0
        %v7685 = vadd.f32 %v6559, %v7684
        %v7686 = vpop.f32.mrb[0].mxu0
        %v7687 = vadd.f32 %v6563, %v7686
        %7688 = vmatprep.mubr.bf16.mxu0 %v6389
        %7689 = vmatmul.mubr.bf16.gmra.mrb[0].mxu0 %v6388
        %v7690 = vpop.f32.mrb[0].mxu0
        %v7691 = vadd.f32 %v6559, %v7690
        %v7692 = vpop.f32.mrb[0].mxu0
        %v7693 = vadd.f32 %v6563, %v7692
        %v7694 = vpop.f32.mrb[0].mxu0
        %v7695 = vadd.f32 %v6559, %v7694
        %v7696 = vpop.f32.mrb[0].mxu0
        %v7697 = vadd.f32 %v6563, %v7696
        %7698 = vmatprep.mubr.bf16.mxu0 %v6391
        %7699 = vmatmul.mubr.bf16.gmra.mrb[0].mxu0 %v6390
        %v7700 = vpop.f32.mrb[0].mxu0
        %v7701 = vadd.f32 %v6559, %v7700
        %v7702 = vpop.f32.mrb[0].mxu0
        %v7703 = vadd.f32 %v6563, %v7702
        %v7704 = vpop.f32.mrb[0].mxu0
        %v7705 = vadd.f32 %v6559, %v7704
        %v7706 = vpop.f32.mrb[0].mxu0
        %v7707 = vadd.f32 %v6563, %v7706
        %7708 = vmatprep.mubr.bf16.mxu0 %v6393
        %7709 = vmatmul.mubr.bf16.gmra.mrb[0].mxu0 %v6392
        %v7710 = vpop.f32.mrb[0].mxu0
        %v7711 = vadd.f32 %v6559, %v7710
        %v7712 = vpop.f32.mrb[0].mxu0
        %v7713 = vadd.f32 %v6563, %v7712
        %v7714 = vpop.f32.mrb[0].mxu0
        %v7715 = vadd.f32 %v6559, %v7714
        %v7716 = vpop.f32.mrb[0].mxu0
        %v7717 = vadd.f32 %v6563, %v7716
        %7718 = vmatprep.mubr.bf16.mxu0 %v6395
        %7719 = vmatmul.mubr.bf16.gmra.mrb[0].mxu0 %v6394
        %v7720 = vpop.f32.mrb[0].mxu0
        %v7721 = vadd.f32 %v6559, %v7720
        %v7722 = vpop.f32.mrb[0].mxu0
        %v7723 = vadd.f32 %v6563, %v7722
        %v7724 = vpop.f32.mrb[0].mxu0
        %v7725 = vadd.f32 %v6559, %v7724
        %v7726 = vpop.f32.mrb[0].mxu0
        %v7727 = vadd.f32 %v6563, %v7726
        %7728 = vmatprep.mubr.bf16.mxu0 %v6397
        %7729 = vmatmul.mubr.bf16.gmra.mrb[0].mxu0 %v6396
        %v7730 = vpop.f32.mrb[0].mxu0
        %v7731 = vadd.f32 %v6559, %v7730
        %v7732 = vpop.f32.mrb[0].mxu0
        %v7733 = vadd.f32 %v6563, %v7732
        %v7734 = vpop.f32.mrb[0].mxu0
        %v7735 = vadd.f32 %v6559, %v7734
        %v7736 = vpop.f32.mrb[0].mxu0
        %v7737 = vadd.f32 %v6563, %v7736
        %7738 = vmatprep.mubr.bf16.mxu0 %v6399
        %7739 = vmatmul.mubr.bf16.gmra.mrb[0].mxu0 %v6398
        %v7740 = vpop.f32.mrb[0].mxu0
        %v7741 = vadd.f32 %v6559, %v7740
        %v7742 = vpop.f32.mrb[0].mxu0
        %v7743 = vadd.f32 %v6563, %v7742
        %v7744 = vpop.f32.mrb[0].mxu0
        %v7745 = vadd.f32 %v6559, %v7744
        %v7746 = vpop.f32.mrb[0].mxu0
        %v7747 = vadd.f32 %v6563, %v7746
        %7748 = vmatprep.mubr.bf16.mxu0 %v6401
        %7749 = vmatmul.mubr.bf16.gmra.mrb[0].mxu0 %v6400
        %v7750 = vpop.f32.mrb[0].mxu0
        %v7751 = vadd.f32 %v6559, %v7750
        %v7752 = vpop.f32.mrb[0].mxu0
        %v7753 = vadd.f32 %v6563, %v7752
        %v7754 = vpop.f32.mrb[0].mxu0
        %v7755 = vadd.f32 %v6559, %v7754
        %v7756 = vpop.f32.mrb[0].mxu0
        %v7757 = vadd.f32 %v6563, %v7756
        %7758 = vmatprep.mubr.bf16.mxu0 %v6403
        %7759 = vmatmul.mubr.bf16.gmra.mrb[0].mxu0 %v6402
        %v7760 = vpop.f32.mrb[0].mxu0
        %v7761 = vadd.f32 %v6559, %v7760
        %v7762 = vpop.f32.mrb[0].mxu0
        %v7763 = vadd.f32 %v6563, %v7762
        %v7764 = vpop.f32.mrb[0].mxu0
        %v7765 = vadd.f32 %v6559, %v7764
        %v7766 = vpop.f32.mrb[0].mxu0
        %v7767 = vadd.f32 %v6563, %v7766
        %7768 = vmatprep.mubr.bf16.mxu0 %v6405
        %7769 = vmatmul.mubr.bf16.gmra.mrb[0].mxu0 %v6404
        %v7770 = vpop.f32.mrb[0].mxu0
        %v7771 = vadd.f32 %v6559, %v7770
        %v7772 = vpop.f32.mrb[0].mxu0
        %v7773 = vadd.f32 %v6563, %v7772
        %v7774 = vpop.f32.mrb[0].mxu0
        %v7775 = vadd.f32 %v6559, %v7774
        %v7776 = vpop.f32.mrb[0].mxu0
        %v7777 = vadd.f32 %v6563, %v7776
        %7778 = vmatprep.mubr.bf16.mxu0 %v6407
        %7779 = vmatmul.mubr.bf16.gmra.mrb[0].mxu0 %v6406
        %v7780 = vpop.f32.mrb[0].mxu0
        %v7781 = vadd.f32 %v6559, %v7780
        %v7782 = vpop.f32.mrb[0].mxu0
        %v7783 = vadd.f32 %v6563, %v7782
        %v7784 = vpop.f32.mrb[0].mxu0
        %v7785 = vadd.f32 %v6559, %v7784
        %v7786 = vpop.f32.mrb[0].mxu0
        %v7787 = vadd.f32 %v6563, %v7786
        %7788 = vmatprep.mubr.bf16.mxu0 %v6409
        %7789 = vmatmul.mubr.bf16.gmra.mrb[0].mxu0 %v6408
        %v7790 = vpop.f32.mrb[0].mxu0
        %v7791 = vadd.f32 %v6559, %v7790
        %v7792 = vpop.f32.mrb[0].mxu0
        %v7793 = vadd.f32 %v6563, %v7792
        %v7794 = vpop.f32.mrb[0].mxu0
        %v7795 = vadd.f32 %v6559, %v7794
        %v7796 = vpop.f32.mrb[0].mxu0
        %v7797 = vadd.f32 %v6563, %v7796
        %7798 = vdwg.mxu0
        %7799 = vmatprep.subr.bf16.mxu0 %v6971
        %7800 = vmatpush1.bf16.msra.mxu0 %v6970
        %7801 = vmatprep.subr.bf16.mxu0 %v6979
        %7802 = vmatpush1.bf16.msra.mxu0 %v6978
        %7803 = vmatprep.subr.bf16.mxu0 %v6987
        %7804 = vmatpush1.bf16.msra.mxu0 %v6986
        %7805 = vmatprep.subr.bf16.mxu0 %v6995
        %7806 = vmatpush1.bf16.msra.mxu0 %v6994
        %7807 = vmatprep.subr.bf16.mxu0 %v7003
        %7808 = vmatpush1.bf16.msra.mxu0 %v7002
        %7809 = vmatprep.subr.bf16.mxu0 %v7011
        %7810 = vmatpush1.bf16.msra.mxu0 %v7010
        %7811 = vmatprep.subr.bf16.mxu0 %v7019
        %7812 = vmatpush1.bf16.msra.mxu0 %v7018
        %7813 = vmatprep.subr.bf16.mxu0 %v7027
        %7814 = vmatpush1.bf16.msra.mxu0 %v7026
        %7815 = vmatprep.subr.bf16.mxu0 %v7035
        %7816 = vmatpush1.bf16.msra.mxu0 %v7034
        %7817 = vmatprep.subr.bf16.mxu0 %v7043
        %7818 = vmatpush1.bf16.msra.mxu0 %v7042
        %7819 = vmatprep.subr.bf16.mxu0 %v7051
        %7820 = vmatpush1.bf16.msra.mxu0 %v7050
        %7821 = vmatprep.subr.bf16.mxu0 %v7059
        %7822 = vmatpush1.bf16.msra.mxu0 %v7058
        %7823 = vmatprep.subr.bf16.mxu0 %v7067
        %7824 = vmatpush1.bf16.msra.mxu0 %v7066
        %7825 = vmatprep.subr.bf16.mxu0 %v7075
        %7826 = vmatpush1.bf16.msra.mxu0 %v7074
        %7827 = vmatprep.subr.bf16.mxu0 %v7083
        %7828 = vmatpush1.bf16.msra.mxu0 %v7082
        %7829 = vmatprep.subr.bf16.mxu0 %v7091
        %7830 = vmatpush1.bf16.msra.mxu0 %v7090
        %7831 = vmatprep.mubr.bf16.mxu0 %v6379
        %7832 = vmatmul.mubr.bf16.gmra.mrb[0].mxu0 %v6378
        %v7833 = vpop.f32.mrb[0].mxu0
        %v7834 = vadd.f32 %v6567, %v7833
        %v7835 = vpop.f32.mrb[0].mxu0
        %v7836 = vadd.f32 %v6571, %v7835
        %v7837 = vpop.f32.mrb[0].mxu0
        %v7838 = vadd.f32 %v6567, %v7837
        %v7839 = vpop.f32.mrb[0].mxu0
        %v7840 = vadd.f32 %v6571, %v7839
        %7841 = vmatprep.mubr.bf16.mxu0 %v6381
        %7842 = vmatmul.mubr.bf16.gmra.mrb[0].mxu0 %v6380
        %v7843 = vpop.f32.mrb[0].mxu0
        %v7844 = vadd.f32 %v6567, %v7843
        %v7845 = vpop.f32.mrb[0].mxu0
        %v7846 = vadd.f32 %v6571, %v7845
        %v7847 = vpop.f32.mrb[0].mxu0
        %v7848 = vadd.f32 %v6567, %v7847
        %v7849 = vpop.f32.mrb[0].mxu0
        %v7850 = vadd.f32 %v6571, %v7849
        %7851 = vmatprep.mubr.bf16.mxu0 %v6383
        %7852 = vmatmul.mubr.bf16.gmra.mrb[0].mxu0 %v6382
        %v7853 = vpop.f32.mrb[0].mxu0
        %v7854 = vadd.f32 %v6567, %v7853
        %v7855 = vpop.f32.mrb[0].mxu0
        %v7856 = vadd.f32 %v6571, %v7855
        %v7857 = vpop.f32.mrb[0].mxu0
        %v7858 = vadd.f32 %v6567, %v7857
        %v7859 = vpop.f32.mrb[0].mxu0
        %v7860 = vadd.f32 %v6571, %v7859
        %7861 = vmatprep.mubr.bf16.mxu0 %v6385
        %7862 = vmatmul.mubr.bf16.gmra.mrb[0].mxu0 %v6384
        %v7863 = vpop.f32.mrb[0].mxu0
        %v7864 = vadd.f32 %v6567, %v7863
        %v7865 = vpop.f32.mrb[0].mxu0
        %v7866 = vadd.f32 %v6571, %v7865
        %v7867 = vpop.f32.mrb[0].mxu0
        %v7868 = vadd.f32 %v6567, %v7867
        %v7869 = vpop.f32.mrb[0].mxu0
        %v7870 = vadd.f32 %v6571, %v7869
        %7871 = vmatprep.mubr.bf16.mxu0 %v6387
        %7872 = vmatmul.mubr.bf16.gmra.mrb[0].mxu0 %v6386
        %v7873 = vpop.f32.mrb[0].mxu0
        %v7874 = vadd.f32 %v6567, %v7873
        %v7875 = vpop.f32.mrb[0].mxu0
        %v7876 = vadd.f32 %v6571, %v7875
        %v7877 = vpop.f32.mrb[0].mxu0
        %v7878 = vadd.f32 %v6567, %v7877
        %v7879 = vpop.f32.mrb[0].mxu0
        %v7880 = vadd.f32 %v6571, %v7879
        %7881 = vmatprep.mubr.bf16.mxu0 %v6389
        %7882 = vmatmul.mubr.bf16.gmra.mrb[0].mxu0 %v6388
        %v7883 = vpop.f32.mrb[0].mxu0
        %v7884 = vadd.f32 %v6567, %v7883
        %v7885 = vpop.f32.mrb[0].mxu0
        %v7886 = vadd.f32 %v6571, %v7885
        %v7887 = vpop.f32.mrb[0].mxu0
        %v7888 = vadd.f32 %v6567, %v7887
        %v7889 = vpop.f32.mrb[0].mxu0
        %v7890 = vadd.f32 %v6571, %v7889
        %7891 = vmatprep.mubr.bf16.mxu0 %v6391
        %7892 = vmatmul.mubr.bf16.gmra.mrb[0].mxu0 %v6390
        %v7893 = vpop.f32.mrb[0].mxu0
        %v7894 = vadd.f32 %v6567, %v7893
        %v7895 = vpop.f32.mrb[0].mxu0
        %v7896 = vadd.f32 %v6571, %v7895
        %v7897 = vpop.f32.mrb[0].mxu0
        %v7898 = vadd.f32 %v6567, %v7897
        %v7899 = vpop.f32.mrb[0].mxu0
        %v7900 = vadd.f32 %v6571, %v7899
        %7901 = vmatprep.mubr.bf16.mxu0 %v6393
        %7902 = vmatmul.mubr.bf16.gmra.mrb[0].mxu0 %v6392
        %v7903 = vpop.f32.mrb[0].mxu0
        %v7904 = vadd.f32 %v6567, %v7903
        %v7905 = vpop.f32.mrb[0].mxu0
        %v7906 = vadd.f32 %v6571, %v7905
        %v7907 = vpop.f32.mrb[0].mxu0
        %v7908 = vadd.f32 %v6567, %v7907
        %v7909 = vpop.f32.mrb[0].mxu0
        %v7910 = vadd.f32 %v6571, %v7909
        %7911 = vmatprep.mubr.bf16.mxu0 %v6395
        %7912 = vmatmul.mubr.bf16.gmra.mrb[0].mxu0 %v6394
        %v7913 = vpop.f32.mrb[0].mxu0
        %v7914 = vadd.f32 %v6567, %v7913
        %v7915 = vpop.f32.mrb[0].mxu0
        %v7916 = vadd.f32 %v6571, %v7915
        %v7917 = vpop.f32.mrb[0].mxu0
        %v7918 = vadd.f32 %v6567, %v7917
        %v7919 = vpop.f32.mrb[0].mxu0
        %v7920 = vadd.f32 %v6571, %v7919
        %7921 = vmatprep.mubr.bf16.mxu0 %v6397
        %7922 = vmatmul.mubr.bf16.gmra.mrb[0].mxu0 %v6396
        %v7923 = vpop.f32.mrb[0].mxu0
        %v7924 = vadd.f32 %v6567, %v7923
        %v7925 = vpop.f32.mrb[0].mxu0
        %v7926 = vadd.f32 %v6571, %v7925
        %v7927 = vpop.f32.mrb[0].mxu0
        %v7928 = vadd.f32 %v6567, %v7927
        %v7929 = vpop.f32.mrb[0].mxu0
        %v7930 = vadd.f32 %v6571, %v7929
        %7931 = vmatprep.mubr.bf16.mxu0 %v6399
        %7932 = vmatmul.mubr.bf16.gmra.mrb[0].mxu0 %v6398
        %v7933 = vpop.f32.mrb[0].mxu0
        %v7934 = vadd.f32 %v6567, %v7933
        %v7935 = vpop.f32.mrb[0].mxu0
        %v7936 = vadd.f32 %v6571, %v7935
        %v7937 = vpop.f32.mrb[0].mxu0
        %v7938 = vadd.f32 %v6567, %v7937
        %v7939 = vpop.f32.mrb[0].mxu0
        %v7940 = vadd.f32 %v6571, %v7939
        %7941 = vmatprep.mubr.bf16.mxu0 %v6401
        %7942 = vmatmul.mubr.bf16.gmra.mrb[0].mxu0 %v6400
        %v7943 = vpop.f32.mrb[0].mxu0
        %v7944 = vadd.f32 %v6567, %v7943
        %v7945 = vpop.f32.mrb[0].mxu0
        %v7946 = vadd.f32 %v6571, %v7945
        %v7947 = vpop.f32.mrb[0].mxu0
        %v7948 = vadd.f32 %v6567, %v7947
        %v7949 = vpop.f32.mrb[0].mxu0
        %v7950 = vadd.f32 %v6571, %v7949
        %7951 = vmatprep.mubr.bf16.mxu0 %v6403
        %7952 = vmatmul.mubr.bf16.gmra.mrb[0].mxu0 %v6402
        %v7953 = vpop.f32.mrb[0].mxu0
        %v7954 = vadd.f32 %v6567, %v7953
        %v7955 = vpop.f32.mrb[0].mxu0
        %v7956 = vadd.f32 %v6571, %v7955
        %v7957 = vpop.f32.mrb[0].mxu0
        %v7958 = vadd.f32 %v6567, %v7957
        %v7959 = vpop.f32.mrb[0].mxu0
        %v7960 = vadd.f32 %v6571, %v7959
        %7961 = vmatprep.mubr.bf16.mxu0 %v6405
        %7962 = vmatmul.mubr.bf16.gmra.mrb[0].mxu0 %v6404
        %v7963 = vpop.f32.mrb[0].mxu0
        %v7964 = vadd.f32 %v6567, %v7963
        %v7965 = vpop.f32.mrb[0].mxu0
        %v7966 = vadd.f32 %v6571, %v7965
        %v7967 = vpop.f32.mrb[0].mxu0
        %v7968 = vadd.f32 %v6567, %v7967
        %v7969 = vpop.f32.mrb[0].mxu0
        %v7970 = vadd.f32 %v6571, %v7969
        %7971 = vmatprep.mubr.bf16.mxu0 %v6407
        %7972 = vmatmul.mubr.bf16.gmra.mrb[0].mxu0 %v6406
        %v7973 = vpop.f32.mrb[0].mxu0
        %v7974 = vadd.f32 %v6567, %v7973
        %v7975 = vpop.f32.mrb[0].mxu0
        %v7976 = vadd.f32 %v6571, %v7975
        %v7977 = vpop.f32.mrb[0].mxu0
        %v7978 = vadd.f32 %v6567, %v7977
        %v7979 = vpop.f32.mrb[0].mxu0
        %v7980 = vadd.f32 %v6571, %v7979
        %7981 = vmatprep.mubr.bf16.mxu0 %v6409
        %7982 = vmatmul.mubr.bf16.gmra.mrb[0].mxu0 %v6408
        %v7983 = vpop.f32.mrb[0].mxu0
        %v7984 = vadd.f32 %v6567, %v7983
        %v7985 = vpop.f32.mrb[0].mxu0
        %v7986 = vadd.f32 %v6571, %v7985
        %v7987 = vpop.f32.mrb[0].mxu0
        %v7988 = vadd.f32 %v6567, %v7987
        %v7989 = vpop.f32.mrb[0].mxu0
        %v7990 = vadd.f32 %v6571, %v7989
        %7991 = vdwg.mxu0
        %v7992 = vmul.f32 %v7255, 0.5
        %v7993 = vmul.f32 %v7257, 0.5
        %v7994 = vmul.f32 %v7448, 0.5
        %v7995 = vmul.f32 %v7450, 0.5
        %v7996 = vmul.f32 %v7641, 0.5
        %v7997 = vmul.f32 %v7643, 0.5
        %v7998 = vmul.f32 %v7834, 0.5
        %v7999 = vmul.f32 %v7836, 0.5
        %v8000 = vmul.f32 %v7259, 0.5
        %v8001 = vmul.f32 %v7261, 0.5
        %v8002 = vmul.f32 %v7452, 0.5
        %v8003 = vmul.f32 %v7454, 0.5
        %v8004 = vmul.f32 %v7645, 0.5
        %v8005 = vmul.f32 %v7647, 0.5
        %v8006 = vmul.f32 %v7838, 0.5
        %v8007 = vmul.f32 %v7840, 0.5
        %v8008 = vmul.f32 %v7265, 0.5
        %v8009 = vmul.f32 %v7267, 0.5
        %v8010 = vmul.f32 %v7458, 0.5
        %v8011 = vmul.f32 %v7460, 0.5
        %v8012 = vmul.f32 %v7651, 0.5
        %v8013 = vmul.f32 %v7653, 0.5
        %v8014 = vmul.f32 %v7844, 0.5
        %v8015 = vmul.f32 %v7846, 0.5
        %v8016 = vmul.f32 %v7269, 0.5
        %v8017 = vmul.f32 %v7271, 0.5
        %v8018 = vmul.f32 %v7462, 0.5
        %v8019 = vmul.f32 %v7464, 0.5
        %v8020 = vmul.f32 %v7655, 0.5
        %v8021 = vmul.f32 %v7657, 0.5
        %v8022 = vmul.f32 %v7848, 0.5
        %v8023 = vmul.f32 %v7850, 0.5
        %v8024 = vmul.f32 %v7275, 0.5
        %v8025 = vmul.f32 %v7277, 0.5
        %v8026 = vmul.f32 %v7468, 0.5
        %v8027 = vmul.f32 %v7470, 0.5
        %v8028 = vmul.f32 %v7661, 0.5
        %v8029 = vmul.f32 %v7663, 0.5
        %v8030 = vmul.f32 %v7854, 0.5
        %v8031 = vmul.f32 %v7856, 0.5
        %v8032 = vmul.f32 %v7279, 0.5
        %v8033 = vmul.f32 %v7281, 0.5
        %v8034 = vmul.f32 %v7472, 0.5
        %v8035 = vmul.f32 %v7474, 0.5
        %v8036 = vmul.f32 %v7665, 0.5
        %v8037 = vmul.f32 %v7667, 0.5
        %v8038 = vmul.f32 %v7858, 0.5
        %v8039 = vmul.f32 %v7860, 0.5
        %v8040 = vmul.f32 %v7285, 0.5
        %v8041 = vmul.f32 %v7287, 0.5
        %v8042 = vmul.f32 %v7478, 0.5
        %v8043 = vmul.f32 %v7480, 0.5
        %v8044 = vmul.f32 %v7671, 0.5
        %v8045 = vmul.f32 %v7673, 0.5
        %v8046 = vmul.f32 %v7864, 0.5
        %v8047 = vmul.f32 %v7866, 0.5
        %v8048 = vmul.f32 %v7289, 0.5
        %v8049 = vmul.f32 %v7291, 0.5
        %v8050 = vmul.f32 %v7482, 0.5
        %v8051 = vmul.f32 %v7484, 0.5
        %v8052 = vmul.f32 %v7675, 0.5
        %v8053 = vmul.f32 %v7677, 0.5
        %v8054 = vmul.f32 %v7868, 0.5
        %v8055 = vmul.f32 %v7870, 0.5
        %v8056 = vmul.f32 %v7295, 0.5
        %v8057 = vmul.f32 %v7297, 0.5
        %v8058 = vmul.f32 %v7488, 0.5
        %v8059 = vmul.f32 %v7490, 0.5
        %v8060 = vmul.f32 %v7681, 0.5
        %v8061 = vmul.f32 %v7683, 0.5
        %v8062 = vmul.f32 %v7874, 0.5
        %v8063 = vmul.f32 %v7876, 0.5
        %v8064 = vmul.f32 %v7299, 0.5
        %v8065 = vmul.f32 %v7301, 0.5
        %v8066 = vmul.f32 %v7492, 0.5
        %v8067 = vmul.f32 %v7494, 0.5
        %v8068 = vmul.f32 %v7685, 0.5
        %v8069 = vmul.f32 %v7687, 0.5
        %v8070 = vmul.f32 %v7878, 0.5
        %v8071 = vmul.f32 %v7880, 0.5
        %v8072 = vmul.f32 %v7305, 0.5
        %v8073 = vmul.f32 %v7307, 0.5
        %v8074 = vmul.f32 %v7498, 0.5
        %v8075 = vmul.f32 %v7500, 0.5
        %v8076 = vmul.f32 %v7691, 0.5
        %v8077 = vmul.f32 %v7693, 0.5
        %v8078 = vmul.f32 %v7884, 0.5
        %v8079 = vmul.f32 %v7886, 0.5
        %v8080 = vmul.f32 %v7309, 0.5
        %v8081 = vmul.f32 %v7311, 0.5
        %v8082 = vmul.f32 %v7502, 0.5
        %v8083 = vmul.f32 %v7504, 0.5
        %v8084 = vmul.f32 %v7695, 0.5
        %v8085 = vmul.f32 %v7697, 0.5
        %v8086 = vmul.f32 %v7888, 0.5
        %v8087 = vmul.f32 %v7890, 0.5
        %v8088 = vmul.f32 %v7315, 0.5
        %v8089 = vmul.f32 %v7317, 0.5
        %v8090 = vmul.f32 %v7508, 0.5
        %v8091 = vmul.f32 %v7510, 0.5
        %v8092 = vmul.f32 %v7701, 0.5
        %v8093 = vmul.f32 %v7703, 0.5
        %v8094 = vmul.f32 %v7894, 0.5
        %v8095 = vmul.f32 %v7896, 0.5
        %v8096 = vmul.f32 %v7319, 0.5
        %v8097 = vmul.f32 %v7321, 0.5
        %v8098 = vmul.f32 %v7512, 0.5
        %v8099 = vmul.f32 %v7514, 0.5
        %v8100 = vmul.f32 %v7705, 0.5
        %v8101 = vmul.f32 %v7707, 0.5
        %v8102 = vmul.f32 %v7898, 0.5
        %v8103 = vmul.f32 %v7900, 0.5
        %v8104 = vmul.f32 %v7325, 0.5
        %v8105 = vmul.f32 %v7327, 0.5
        %v8106 = vmul.f32 %v7518, 0.5
        %v8107 = vmul.f32 %v7520, 0.5
        %v8108 = vmul.f32 %v7711, 0.5
        %v8109 = vmul.f32 %v7713, 0.5
        %v8110 = vmul.f32 %v7904, 0.5
        %v8111 = vmul.f32 %v7906, 0.5
        %v8112 = vmul.f32 %v7329, 0.5
        %v8113 = vmul.f32 %v7331, 0.5
        %v8114 = vmul.f32 %v7522, 0.5
        %v8115 = vmul.f32 %v7524, 0.5
        %v8116 = vmul.f32 %v7715, 0.5
        %v8117 = vmul.f32 %v7717, 0.5
        %v8118 = vmul.f32 %v7908, 0.5
        %v8119 = vmul.f32 %v7910, 0.5
        %v8120 = vmul.f32 %v7335, 0.5
        %v8121 = vmul.f32 %v7337, 0.5
        %v8122 = vmul.f32 %v7528, 0.5
        %v8123 = vmul.f32 %v7530, 0.5
        %v8124 = vmul.f32 %v7721, 0.5
        %v8125 = vmul.f32 %v7723, 0.5
        %v8126 = vmul.f32 %v7914, 0.5
        %v8127 = vmul.f32 %v7916, 0.5
        %v8128 = vmul.f32 %v7339, 0.5
        %v8129 = vmul.f32 %v7341, 0.5
        %v8130 = vmul.f32 %v7532, 0.5
        %v8131 = vmul.f32 %v7534, 0.5
        %v8132 = vmul.f32 %v7725, 0.5
        %v8133 = vmul.f32 %v7727, 0.5
        %v8134 = vmul.f32 %v7918, 0.5
        %v8135 = vmul.f32 %v7920, 0.5
        %v8136 = vmul.f32 %v7345, 0.5
        %v8137 = vmul.f32 %v7347, 0.5
        %v8138 = vmul.f32 %v7538, 0.5
        %v8139 = vmul.f32 %v7540, 0.5
        %v8140 = vmul.f32 %v7731, 0.5
        %v8141 = vmul.f32 %v7733, 0.5
        %v8142 = vmul.f32 %v7924, 0.5
        %v8143 = vmul.f32 %v7926, 0.5
        %v8144 = vmul.f32 %v7349, 0.5
        %v8145 = vmul.f32 %v7351, 0.5
        %v8146 = vmul.f32 %v7542, 0.5
        %v8147 = vmul.f32 %v7544, 0.5
        %v8148 = vmul.f32 %v7735, 0.5
        %v8149 = vmul.f32 %v7737, 0.5
        %v8150 = vmul.f32 %v7928, 0.5
        %v8151 = vmul.f32 %v7930, 0.5
        %v8152 = vmul.f32 %v7355, 0.5
        %v8153 = vmul.f32 %v7357, 0.5
        %v8154 = vmul.f32 %v7548, 0.5
        %v8155 = vmul.f32 %v7550, 0.5
        %v8156 = vmul.f32 %v7741, 0.5
        %v8157 = vmul.f32 %v7743, 0.5
        %v8158 = vmul.f32 %v7934, 0.5
        %v8159 = vmul.f32 %v7936, 0.5
        %v8160 = vmul.f32 %v7359, 0.5
        %v8161 = vmul.f32 %v7361, 0.5
        %v8162 = vmul.f32 %v7552, 0.5
        %v8163 = vmul.f32 %v7554, 0.5
        %v8164 = vmul.f32 %v7745, 0.5
        %v8165 = vmul.f32 %v7747, 0.5
        %v8166 = vmul.f32 %v7938, 0.5
        %v8167 = vmul.f32 %v7940, 0.5
        %v8168 = vmul.f32 %v7365, 0.5
        %v8169 = vmul.f32 %v7367, 0.5
        %v8170 = vmul.f32 %v7558, 0.5
        %v8171 = vmul.f32 %v7560, 0.5
        %v8172 = vmul.f32 %v7751, 0.5
        %v8173 = vmul.f32 %v7753, 0.5
        %v8174 = vmul.f32 %v7944, 0.5
        %v8175 = vmul.f32 %v7946, 0.5
        %v8176 = vmul.f32 %v7369, 0.5
        %v8177 = vmul.f32 %v7371, 0.5
        %v8178 = vmul.f32 %v7562, 0.5
        %v8179 = vmul.f32 %v7564, 0.5
        %v8180 = vmul.f32 %v7755, 0.5
        %v8181 = vmul.f32 %v7757, 0.5
        %v8182 = vmul.f32 %v7948, 0.5
        %v8183 = vmul.f32 %v7950, 0.5
        %v8184 = vmul.f32 %v7375, 0.5
        %v8185 = vmul.f32 %v7377, 0.5
        %v8186 = vmul.f32 %v7568, 0.5
        %v8187 = vmul.f32 %v7570, 0.5
        %v8188 = vmul.f32 %v7761, 0.5
        %v8189 = vmul.f32 %v7763, 0.5
        %v8190 = vmul.f32 %v7954, 0.5
        %v8191 = vmul.f32 %v7956, 0.5
        %v8192 = vmul.f32 %v7379, 0.5
        %v8193 = vmul.f32 %v7381, 0.5
        %v8194 = vmul.f32 %v7572, 0.5
        %v8195 = vmul.f32 %v7574, 0.5
        %v8196 = vmul.f32 %v7765, 0.5
        %v8197 = vmul.f32 %v7767, 0.5
        %v8198 = vmul.f32 %v7958, 0.5
        %v8199 = vmul.f32 %v7960, 0.5
        %v8200 = vmul.f32 %v7385, 0.5
        %v8201 = vmul.f32 %v7387, 0.5
        %v8202 = vmul.f32 %v7578, 0.5
        %v8203 = vmul.f32 %v7580, 0.5
        %v8204 = vmul.f32 %v7771, 0.5
        %v8205 = vmul.f32 %v7773, 0.5
        %v8206 = vmul.f32 %v7964, 0.5
        %v8207 = vmul.f32 %v7966, 0.5
        %v8208 = vmul.f32 %v7389, 0.5
        %v8209 = vmul.f32 %v7391, 0.5
        %v8210 = vmul.f32 %v7582, 0.5
        %v8211 = vmul.f32 %v7584, 0.5
        %v8212 = vmul.f32 %v7775, 0.5
        %v8213 = vmul.f32 %v7777, 0.5
        %v8214 = vmul.f32 %v7968, 0.5
        %v8215 = vmul.f32 %v7970, 0.5
        %v8216 = vmul.f32 %v7395, 0.5
        %v8217 = vmul.f32 %v7397, 0.5
        %v8218 = vmul.f32 %v7588, 0.5
        %v8219 = vmul.f32 %v7590, 0.5
        %v8220 = vmul.f32 %v7781, 0.5
        %v8221 = vmul.f32 %v7783, 0.5
        %v8222 = vmul.f32 %v7974, 0.5
        %v8223 = vmul.f32 %v7976, 0.5
        %v8224 = vmul.f32 %v7399, 0.5
        %v8225 = vmul.f32 %v7401, 0.5
        %v8226 = vmul.f32 %v7592, 0.5
        %v8227 = vmul.f32 %v7594, 0.5
        %v8228 = vmul.f32 %v7785, 0.5
        %v8229 = vmul.f32 %v7787, 0.5
        %v8230 = vmul.f32 %v7978, 0.5
        %v8231 = vmul.f32 %v7980, 0.5
        %v8232 = vmul.f32 %v7405, 0.5
        %v8233 = vmul.f32 %v7407, 0.5
        %v8234 = vmul.f32 %v7598, 0.5
        %v8235 = vmul.f32 %v7600, 0.5
        %v8236 = vmul.f32 %v7791, 0.5
        %v8237 = vmul.f32 %v7793, 0.5
        %v8238 = vmul.f32 %v7984, 0.5
        %v8239 = vmul.f32 %v7986, 0.5
        %v8240 = vmul.f32 %v7409, 0.5
        %v8241 = vmul.f32 %v7411, 0.5
        %v8242 = vmul.f32 %v7602, 0.5
        %v8243 = vmul.f32 %v7604, 0.5
        %v8244 = vmul.f32 %v7795, 0.5
        %v8245 = vmul.f32 %v7797, 0.5
        %v8246 = vmul.f32 %v7988, 0.5
        %v8247 = vmul.f32 %v7990, 0.5
        %v8248 = vmul.f32 %v7255, 0.70710677
        %v8249 = vmul.f32 %v7257, 0.70710677
        %v8250 = vmul.f32 %v7448, 0.70710677
        %v8251 = vmul.f32 %v7450, 0.70710677
        %v8252 = vmul.f32 %v7641, 0.70710677
        %v8253 = vmul.f32 %v7643, 0.70710677
        %v8254 = vmul.f32 %v7834, 0.70710677
        %v8255 = vmul.f32 %v7836, 0.70710677
        %v8256 = vmul.f32 %v7259, 0.70710677
        %v8257 = vmul.f32 %v7261, 0.70710677
        %v8258 = vmul.f32 %v7452, 0.70710677
        %v8259 = vmul.f32 %v7454, 0.70710677
        %v8260 = vmul.f32 %v7645, 0.70710677
        %v8261 = vmul.f32 %v7647, 0.70710677
        %v8262 = vmul.f32 %v7838, 0.70710677
        %v8263 = vmul.f32 %v7840, 0.70710677
        %v8264 = vmul.f32 %v7265, 0.70710677
        %v8265 = vmul.f32 %v7267, 0.70710677
        %v8266 = vmul.f32 %v7458, 0.70710677
        %v8267 = vmul.f32 %v7460, 0.70710677
        %v8268 = vmul.f32 %v7651, 0.70710677
        %v8269 = vmul.f32 %v7653, 0.70710677
        %v8270 = vmul.f32 %v7844, 0.70710677
        %v8271 = vmul.f32 %v7846, 0.70710677
        %v8272 = vmul.f32 %v7269, 0.70710677
        %v8273 = vmul.f32 %v7271, 0.70710677
        %v8274 = vmul.f32 %v7462, 0.70710677
        %v8275 = vmul.f32 %v7464, 0.70710677
        %v8276 = vmul.f32 %v7655, 0.70710677
        %v8277 = vmul.f32 %v7657, 0.70710677
        %v8278 = vmul.f32 %v7848, 0.70710677
        %v8279 = vmul.f32 %v7850, 0.70710677
        %v8280 = vmul.f32 %v7275, 0.70710677
        %v8281 = vmul.f32 %v7277, 0.70710677
        %v8282 = vmul.f32 %v7468, 0.70710677
        %v8283 = vmul.f32 %v7470, 0.70710677
        %v8284 = vmul.f32 %v7661, 0.70710677
        %v8285 = vmul.f32 %v7663, 0.70710677
        %v8286 = vmul.f32 %v7854, 0.70710677
        %v8287 = vmul.f32 %v7856, 0.70710677
        %v8288 = vmul.f32 %v7279, 0.70710677
        %v8289 = vmul.f32 %v7281, 0.70710677
        %v8290 = vmul.f32 %v7472, 0.70710677
        %v8291 = vmul.f32 %v7474, 0.70710677
        %v8292 = vmul.f32 %v7665, 0.70710677
        %v8293 = vmul.f32 %v7667, 0.70710677
        %v8294 = vmul.f32 %v7858, 0.70710677
        %v8295 = vmul.f32 %v7860, 0.70710677
        %v8296 = vmul.f32 %v7285, 0.70710677
        %v8297 = vmul.f32 %v7287, 0.70710677
        %v8298 = vmul.f32 %v7478, 0.70710677
        %v8299 = vmul.f32 %v7480, 0.70710677
        %v8300 = vmul.f32 %v7671, 0.70710677
        %v8301 = vmul.f32 %v7673, 0.70710677
        %v8302 = vmul.f32 %v7864, 0.70710677
        %v8303 = vmul.f32 %v7866, 0.70710677
        %v8304 = vmul.f32 %v7289, 0.70710677
        %v8305 = vmul.f32 %v7291, 0.70710677
        %v8306 = vmul.f32 %v7482, 0.70710677
        %v8307 = vmul.f32 %v7484, 0.70710677
        %v8308 = vmul.f32 %v7675, 0.70710677
        %v8309 = vmul.f32 %v7677, 0.70710677
        %v8310 = vmul.f32 %v7868, 0.70710677
        %v8311 = vmul.f32 %v7870, 0.70710677
        %v8312 = vmul.f32 %v7295, 0.70710677
        %v8313 = vmul.f32 %v7297, 0.70710677
        %v8314 = vmul.f32 %v7488, 0.70710677
        %v8315 = vmul.f32 %v7490, 0.70710677
        %v8316 = vmul.f32 %v7681, 0.70710677
        %v8317 = vmul.f32 %v7683, 0.70710677
        %v8318 = vmul.f32 %v7874, 0.70710677
        %v8319 = vmul.f32 %v7876, 0.70710677
        %v8320 = vmul.f32 %v7299, 0.70710677
        %v8321 = vmul.f32 %v7301, 0.70710677
        %v8322 = vmul.f32 %v7492, 0.70710677
        %v8323 = vmul.f32 %v7494, 0.70710677
        %v8324 = vmul.f32 %v7685, 0.70710677
        %v8325 = vmul.f32 %v7687, 0.70710677
        %v8326 = vmul.f32 %v7878, 0.70710677
        %v8327 = vmul.f32 %v7880, 0.70710677
        %v8328 = vmul.f32 %v7305, 0.70710677
        %v8329 = vmul.f32 %v7307, 0.70710677
        %v8330 = vmul.f32 %v7498, 0.70710677
        %v8331 = vmul.f32 %v7500, 0.70710677
        %v8332 = vmul.f32 %v7691, 0.70710677
        %v8333 = vmul.f32 %v7693, 0.70710677
        %v8334 = vmul.f32 %v7884, 0.70710677
        %v8335 = vmul.f32 %v7886, 0.70710677
        %v8336 = vmul.f32 %v7309, 0.70710677
        %v8337 = vmul.f32 %v7311, 0.70710677
        %v8338 = vmul.f32 %v7502, 0.70710677
        %v8339 = vmul.f32 %v7504, 0.70710677
        %v8340 = vmul.f32 %v7695, 0.70710677
        %v8341 = vmul.f32 %v7697, 0.70710677
        %v8342 = vmul.f32 %v7888, 0.70710677
        %v8343 = vmul.f32 %v7890, 0.70710677
        %v8344 = vmul.f32 %v7315, 0.70710677
        %v8345 = vmul.f32 %v7317, 0.70710677
        %v8346 = vmul.f32 %v7508, 0.70710677
        %v8347 = vmul.f32 %v7510, 0.70710677
        %v8348 = vmul.f32 %v7701, 0.70710677
        %v8349 = vmul.f32 %v7703, 0.70710677
        %v8350 = vmul.f32 %v7894, 0.70710677
        %v8351 = vmul.f32 %v7896, 0.70710677
        %v8352 = vmul.f32 %v7319, 0.70710677
        %v8353 = vmul.f32 %v7321, 0.70710677
        %v8354 = vmul.f32 %v7512, 0.70710677
        %v8355 = vmul.f32 %v7514, 0.70710677
        %v8356 = vmul.f32 %v7705, 0.70710677
        %v8357 = vmul.f32 %v7707, 0.70710677
        %v8358 = vmul.f32 %v7898, 0.70710677
        %v8359 = vmul.f32 %v7900, 0.70710677
        %v8360 = vmul.f32 %v7325, 0.70710677
        %v8361 = vmul.f32 %v7327, 0.70710677
        %v8362 = vmul.f32 %v7518, 0.70710677
        %v8363 = vmul.f32 %v7520, 0.70710677
        %v8364 = vmul.f32 %v7711, 0.70710677
        %v8365 = vmul.f32 %v7713, 0.70710677
        %v8366 = vmul.f32 %v7904, 0.70710677
        %v8367 = vmul.f32 %v7906, 0.70710677
        %v8368 = vmul.f32 %v7329, 0.70710677
        %v8369 = vmul.f32 %v7331, 0.70710677
        %v8370 = vmul.f32 %v7522, 0.70710677
        %v8371 = vmul.f32 %v7524, 0.70710677
        %v8372 = vmul.f32 %v7715, 0.70710677
        %v8373 = vmul.f32 %v7717, 0.70710677
        %v8374 = vmul.f32 %v7908, 0.70710677
        %v8375 = vmul.f32 %v7910, 0.70710677
        %v8376 = vmul.f32 %v7335, 0.70710677
        %v8377 = vmul.f32 %v7337, 0.70710677
        %v8378 = vmul.f32 %v7528, 0.70710677
        %v8379 = vmul.f32 %v7530, 0.70710677
        %v8380 = vmul.f32 %v7721, 0.70710677
        %v8381 = vmul.f32 %v7723, 0.70710677
        %v8382 = vmul.f32 %v7914, 0.70710677
        %v8383 = vmul.f32 %v7916, 0.70710677
        %v8384 = vmul.f32 %v7339, 0.70710677
        %v8385 = vmul.f32 %v7341, 0.70710677
        %v8386 = vmul.f32 %v7532, 0.70710677
        %v8387 = vmul.f32 %v7534, 0.70710677
        %v8388 = vmul.f32 %v7725, 0.70710677
        %v8389 = vmul.f32 %v7727, 0.70710677
        %v8390 = vmul.f32 %v7918, 0.70710677
        %v8391 = vmul.f32 %v7920, 0.70710677
        %v8392 = vmul.f32 %v7345, 0.70710677
        %v8393 = vmul.f32 %v7347, 0.70710677
        %v8394 = vmul.f32 %v7538, 0.70710677
        %v8395 = vmul.f32 %v7540, 0.70710677
        %v8396 = vmul.f32 %v7731, 0.70710677
        %v8397 = vmul.f32 %v7733, 0.70710677
        %v8398 = vmul.f32 %v7924, 0.70710677
        %v8399 = vmul.f32 %v7926, 0.70710677
        %v8400 = vmul.f32 %v7349, 0.70710677
        %v8401 = vmul.f32 %v7351, 0.70710677
        %v8402 = vmul.f32 %v7542, 0.70710677
        %v8403 = vmul.f32 %v7544, 0.70710677
        %v8404 = vmul.f32 %v7735, 0.70710677
        %v8405 = vmul.f32 %v7737, 0.70710677
        %v8406 = vmul.f32 %v7928, 0.70710677
        %v8407 = vmul.f32 %v7930, 0.70710677
        %v8408 = vmul.f32 %v7355, 0.70710677
        %v8409 = vmul.f32 %v7357, 0.70710677
        %v8410 = vmul.f32 %v7548, 0.70710677
        %v8411 = vmul.f32 %v7550, 0.70710677
        %v8412 = vmul.f32 %v7741, 0.70710677
        %v8413 = vmul.f32 %v7743, 0.70710677
        %v8414 = vmul.f32 %v7934, 0.70710677
        %v8415 = vmul.f32 %v7936, 0.70710677
        %v8416 = vmul.f32 %v7359, 0.70710677
        %v8417 = vmul.f32 %v7361, 0.70710677
        %v8418 = vmul.f32 %v7552, 0.70710677
        %v8419 = vmul.f32 %v7554, 0.70710677
        %v8420 = vmul.f32 %v7745, 0.70710677
        %v8421 = vmul.f32 %v7747, 0.70710677
        %v8422 = vmul.f32 %v7938, 0.70710677
        %v8423 = vmul.f32 %v7940, 0.70710677
        %v8424 = vmul.f32 %v7365, 0.70710677
        %v8425 = vmul.f32 %v7367, 0.70710677
        %v8426 = vmul.f32 %v7558, 0.70710677
        %v8427 = vmul.f32 %v7560, 0.70710677
        %v8428 = vmul.f32 %v7751, 0.70710677
        %v8429 = vmul.f32 %v7753, 0.70710677
        %v8430 = vmul.f32 %v7944, 0.70710677
        %v8431 = vmul.f32 %v7946, 0.70710677
        %v8432 = vmul.f32 %v7369, 0.70710677
        %v8433 = vmul.f32 %v7371, 0.70710677
        %v8434 = vmul.f32 %v7562, 0.70710677
        %v8435 = vmul.f32 %v7564, 0.70710677
        %v8436 = vmul.f32 %v7755, 0.70710677
        %v8437 = vmul.f32 %v7757, 0.70710677
        %v8438 = vmul.f32 %v7948, 0.70710677
        %v8439 = vmul.f32 %v7950, 0.70710677
        %v8440 = vmul.f32 %v7375, 0.70710677
        %v8441 = vmul.f32 %v7377, 0.70710677
        %v8442 = vmul.f32 %v7568, 0.70710677
        %v8443 = vmul.f32 %v7570, 0.70710677
        %v8444 = vmul.f32 %v7761, 0.70710677
        %v8445 = vmul.f32 %v7763, 0.70710677
        %v8446 = vmul.f32 %v7954, 0.70710677
        %v8447 = vmul.f32 %v7956, 0.70710677
        %v8448 = vmul.f32 %v7379, 0.70710677
        %v8449 = vmul.f32 %v7381, 0.70710677
        %v8450 = vmul.f32 %v7572, 0.70710677
        %v8451 = vmul.f32 %v7574, 0.70710677
        %v8452 = vmul.f32 %v7765, 0.70710677
        %v8453 = vmul.f32 %v7767, 0.70710677
        %v8454 = vmul.f32 %v7958, 0.70710677
        %v8455 = vmul.f32 %v7960, 0.70710677
        %v8456 = vmul.f32 %v7385, 0.70710677
        %v8457 = vmul.f32 %v7387, 0.70710677
        %v8458 = vmul.f32 %v7578, 0.70710677
        %v8459 = vmul.f32 %v7580, 0.70710677
        %v8460 = vmul.f32 %v7771, 0.70710677
        %v8461 = vmul.f32 %v7773, 0.70710677
        %v8462 = vmul.f32 %v7964, 0.70710677
        %v8463 = vmul.f32 %v7966, 0.70710677
        %v8464 = vmul.f32 %v7389, 0.70710677
        %v8465 = vmul.f32 %v7391, 0.70710677
        %v8466 = vmul.f32 %v7582, 0.70710677
        %v8467 = vmul.f32 %v7584, 0.70710677
        %v8468 = vmul.f32 %v7775, 0.70710677
        %v8469 = vmul.f32 %v7777, 0.70710677
        %v8470 = vmul.f32 %v7968, 0.70710677
        %v8471 = vmul.f32 %v7970, 0.70710677
        %v8472 = vmul.f32 %v7395, 0.70710677
        %v8473 = vmul.f32 %v7397, 0.70710677
        %v8474 = vmul.f32 %v7588, 0.70710677
        %v8475 = vmul.f32 %v7590, 0.70710677
        %v8476 = vmul.f32 %v7781, 0.70710677
        %v8477 = vmul.f32 %v7783, 0.70710677
        %v8478 = vmul.f32 %v7974, 0.70710677
        %v8479 = vmul.f32 %v7976, 0.70710677
        %v8480 = vmul.f32 %v7399, 0.70710677
        %v8481 = vmul.f32 %v7401, 0.70710677
        %v8482 = vmul.f32 %v7592, 0.70710677
        %v8483 = vmul.f32 %v7594, 0.70710677
        %v8484 = vmul.f32 %v7785, 0.70710677
        %v8485 = vmul.f32 %v7787, 0.70710677
        %v8486 = vmul.f32 %v7978, 0.70710677
        %v8487 = vmul.f32 %v7980, 0.70710677
        %v8488 = vmul.f32 %v7405, 0.70710677
        %v8489 = vmul.f32 %v7407, 0.70710677
        %v8490 = vmul.f32 %v7598, 0.70710677
        %v8491 = vmul.f32 %v7600, 0.70710677
        %v8492 = vmul.f32 %v7791, 0.70710677
        %v8493 = vmul.f32 %v7793, 0.70710677
        %v8494 = vmul.f32 %v7984, 0.70710677
        %v8495 = vmul.f32 %v7986, 0.70710677
        %v8496 = vmul.f32 %v7409, 0.70710677
        %v8497 = vmul.f32 %v7411, 0.70710677
        %v8498 = vmul.f32 %v7602, 0.70710677
        %v8499 = vmul.f32 %v7604, 0.70710677
        %v8500 = vmul.f32 %v7795, 0.70710677
        %v8501 = vmul.f32 %v7797, 0.70710677
        %v8502 = vmul.f32 %v7988, 0.70710677
        %v8503 = vmul.f32 %v7990, 0.70710677
        %v8504 = verf.f32.pop %v8248
        %v8505 = verf.f32.pop %v8249
        %v8506 = verf.f32.pop %v8250
        %v8507 = verf.f32.pop %v8251
        %v8508 = verf.f32.pop %v8252
        %v8509 = verf.f32.pop %v8253
        %v8510 = verf.f32.pop %v8254
        %v8511 = verf.f32.pop %v8255
        %v8512 = verf.f32.pop %v8256
        %v8513 = verf.f32.pop %v8257
        %v8514 = verf.f32.pop %v8258
        %v8515 = verf.f32.pop %v8259
        %v8516 = verf.f32.pop %v8260
        %v8517 = verf.f32.pop %v8261
        %v8518 = verf.f32.pop %v8262
        %v8519 = verf.f32.pop %v8263
        %v8520 = verf.f32.pop %v8264
        %v8521 = verf.f32.pop %v8265
        %v8522 = verf.f32.pop %v8266
        %v8523 = verf.f32.pop %v8267
        %v8524 = verf.f32.pop %v8268
        %v8525 = verf.f32.pop %v8269
        %v8526 = verf.f32.pop %v8270
        %v8527 = verf.f32.pop %v8271
        %v8528 = verf.f32.pop %v8272
        %v8529 = verf.f32.pop %v8273
        %v8530 = verf.f32.pop %v8274
        %v8531 = verf.f32.pop %v8275
        %v8532 = verf.f32.pop %v8276
        %v8533 = verf.f32.pop %v8277
        %v8534 = verf.f32.pop %v8278
        %v8535 = verf.f32.pop %v8279
        %v8536 = verf.f32.pop %v8280
        %v8537 = verf.f32.pop %v8281
        %v8538 = verf.f32.pop %v8282
        %v8539 = verf.f32.pop %v8283
        %v8540 = verf.f32.pop %v8284
        %v8541 = verf.f32.pop %v8285
        %v8542 = verf.f32.pop %v8286
        %v8543 = verf.f32.pop %v8287
        %v8544 = verf.f32.pop %v8288
        %v8545 = verf.f32.pop %v8289
        %v8546 = verf.f32.pop %v8290
        %v8547 = verf.f32.pop %v8291
        %v8548 = verf.f32.pop %v8292
        %v8549 = verf.f32.pop %v8293
        %v8550 = verf.f32.pop %v8294
        %v8551 = verf.f32.pop %v8295
        %v8552 = verf.f32.pop %v8296
        %v8553 = verf.f32.pop %v8297
        %v8554 = verf.f32.pop %v8298
        %v8555 = verf.f32.pop %v8299
        %v8556 = verf.f32.pop %v8300
        %v8557 = verf.f32.pop %v8301
        %v8558 = verf.f32.pop %v8302
        %v8559 = verf.f32.pop %v8303
        %v8560 = verf.f32.pop %v8304
        %v8561 = verf.f32.pop %v8305
        %v8562 = verf.f32.pop %v8306
        %v8563 = verf.f32.pop %v8307
        %v8564 = verf.f32.pop %v8308
        %v8565 = verf.f32.pop %v8309
        %v8566 = verf.f32.pop %v8310
        %v8567 = verf.f32.pop %v8311
        %v8568 = verf.f32.pop %v8312
        %v8569 = verf.f32.pop %v8313
        %v8570 = verf.f32.pop %v8314
        %v8571 = verf.f32.pop %v8315
        %v8572 = verf.f32.pop %v8316
        %v8573 = verf.f32.pop %v8317
        %v8574 = verf.f32.pop %v8318
        %v8575 = verf.f32.pop %v8319
        %v8576 = verf.f32.pop %v8320
        %v8577 = verf.f32.pop %v8321
        %v8578 = verf.f32.pop %v8322
        %v8579 = verf.f32.pop %v8323
        %v8580 = verf.f32.pop %v8324
        %v8581 = verf.f32.pop %v8325
        %v8582 = verf.f32.pop %v8326
        %v8583 = verf.f32.pop %v8327
        %v8584 = verf.f32.pop %v8328
        %v8585 = verf.f32.pop %v8329
        %v8586 = verf.f32.pop %v8330
        %v8587 = verf.f32.pop %v8331
        %v8588 = verf.f32.pop %v8332
        %v8589 = verf.f32.pop %v8333
        %v8590 = verf.f32.pop %v8334
        %v8591 = verf.f32.pop %v8335
        %v8592 = verf.f32.pop %v8336
        %v8593 = verf.f32.pop %v8337
        %v8594 = verf.f32.pop %v8338
        %v8595 = verf.f32.pop %v8339
        %v8596 = verf.f32.pop %v8340
        %v8597 = verf.f32.pop %v8341
        %v8598 = verf.f32.pop %v8342
        %v8599 = verf.f32.pop %v8343
        %v8600 = verf.f32.pop %v8344
        %v8601 = verf.f32.pop %v8345
        %v8602 = verf.f32.pop %v8346
        %v8603 = verf.f32.pop %v8347
        %v8604 = verf.f32.pop %v8348
        %v8605 = verf.f32.pop %v8349
        %v8606 = verf.f32.pop %v8350
        %v8607 = verf.f32.pop %v8351
        %v8608 = verf.f32.pop %v8352
        %v8609 = verf.f32.pop %v8353
        %v8610 = verf.f32.pop %v8354
        %v8611 = verf.f32.pop %v8355
        %v8612 = verf.f32.pop %v8356
        %v8613 = verf.f32.pop %v8357
        %v8614 = verf.f32.pop %v8358
        %v8615 = verf.f32.pop %v8359
        %v8616 = verf.f32.pop %v8360
        %v8617 = verf.f32.pop %v8361
        %v8618 = verf.f32.pop %v8362
        %v8619 = verf.f32.pop %v8363
        %v8620 = verf.f32.pop %v8364
        %v8621 = verf.f32.pop %v8365
        %v8622 = verf.f32.pop %v8366
        %v8623 = verf.f32.pop %v8367
        %v8624 = verf.f32.pop %v8368
        %v8625 = verf.f32.pop %v8369
        %v8626 = verf.f32.pop %v8370
        %v8627 = verf.f32.pop %v8371
        %v8628 = verf.f32.pop %v8372
        %v8629 = verf.f32.pop %v8373
        %v8630 = verf.f32.pop %v8374
        %v8631 = verf.f32.pop %v8375
        %v8632 = verf.f32.pop %v8376
        %v8633 = verf.f32.pop %v8377
        %v8634 = verf.f32.pop %v8378
        %v8635 = verf.f32.pop %v8379
        %v8636 = verf.f32.pop %v8380
        %v8637 = verf.f32.pop %v8381
        %v8638 = verf.f32.pop %v8382
        %v8639 = verf.f32.pop %v8383
        %v8640 = verf.f32.pop %v8384
        %v8641 = verf.f32.pop %v8385
        %v8642 = verf.f32.pop %v8386
        %v8643 = verf.f32.pop %v8387
        %v8644 = verf.f32.pop %v8388
        %v8645 = verf.f32.pop %v8389
        %v8646 = verf.f32.pop %v8390
        %v8647 = verf.f32.pop %v8391
        %v8648 = verf.f32.pop %v8392
        %v8649 = verf.f32.pop %v8393
        %v8650 = verf.f32.pop %v8394
        %v8651 = verf.f32.pop %v8395
        %v8652 = verf.f32.pop %v8396
        %v8653 = verf.f32.pop %v8397
        %v8654 = verf.f32.pop %v8398
        %v8655 = verf.f32.pop %v8399
        %v8656 = verf.f32.pop %v8400
        %v8657 = verf.f32.pop %v8401
        %v8658 = verf.f32.pop %v8402
        %v8659 = verf.f32.pop %v8403
        %v8660 = verf.f32.pop %v8404
        %v8661 = verf.f32.pop %v8405
        %v8662 = verf.f32.pop %v8406
        %v8663 = verf.f32.pop %v8407
        %v8664 = verf.f32.pop %v8408
        %v8665 = verf.f32.pop %v8409
        %v8666 = verf.f32.pop %v8410
        %v8667 = verf.f32.pop %v8411
        %v8668 = verf.f32.pop %v8412
        %v8669 = verf.f32.pop %v8413
        %v8670 = verf.f32.pop %v8414
        %v8671 = verf.f32.pop %v8415
        %v8672 = verf.f32.pop %v8416
        %v8673 = verf.f32.pop %v8417
        %v8674 = verf.f32.pop %v8418
        %v8675 = verf.f32.pop %v8419
        %v8676 = verf.f32.pop %v8420
        %v8677 = verf.f32.pop %v8421
        %v8678 = verf.f32.pop %v8422
        %v8679 = verf.f32.pop %v8423
        %v8680 = verf.f32.pop %v8424
        %v8681 = verf.f32.pop %v8425
        %v8682 = verf.f32.pop %v8426
        %v8683 = verf.f32.pop %v8427
        %v8684 = verf.f32.pop %v8428
        %v8685 = verf.f32.pop %v8429
        %v8686 = verf.f32.pop %v8430
        %v8687 = verf.f32.pop %v8431
        %v8688 = verf.f32.pop %v8432
        %v8689 = verf.f32.pop %v8433
        %v8690 = verf.f32.pop %v8434
        %v8691 = verf.f32.pop %v8435
        %v8692 = verf.f32.pop %v8436
        %v8693 = verf.f32.pop %v8437
        %v8694 = verf.f32.pop %v8438
        %v8695 = verf.f32.pop %v8439
        %v8696 = verf.f32.pop %v8440
        %v8697 = verf.f32.pop %v8441
        %v8698 = verf.f32.pop %v8442
        %v8699 = verf.f32.pop %v8443
        %v8700 = verf.f32.pop %v8444
        %v8701 = verf.f32.pop %v8445
        %v8702 = verf.f32.pop %v8446
        %v8703 = verf.f32.pop %v8447
        %v8704 = verf.f32.pop %v8448
        %v8705 = verf.f32.pop %v8449
        %v8706 = verf.f32.pop %v8450
        %v8707 = verf.f32.pop %v8451
        %v8708 = verf.f32.pop %v8452
        %v8709 = verf.f32.pop %v8453
        %v8710 = verf.f32.pop %v8454
        %v8711 = verf.f32.pop %v8455
        %v8712 = verf.f32.pop %v8456
        %v8713 = verf.f32.pop %v8457
        %v8714 = verf.f32.pop %v8458
        %v8715 = verf.f32.pop %v8459
        %v8716 = verf.f32.pop %v8460
        %v8717 = verf.f32.pop %v8461
        %v8718 = verf.f32.pop %v8462
        %v8719 = verf.f32.pop %v8463
        %v8720 = verf.f32.pop %v8464
        %v8721 = verf.f32.pop %v8465
        %v8722 = verf.f32.pop %v8466
        %v8723 = verf.f32.pop %v8467
        %v8724 = verf.f32.pop %v8468
        %v8725 = verf.f32.pop %v8469
        %v8726 = verf.f32.pop %v8470
        %v8727 = verf.f32.pop %v8471
        %v8728 = verf.f32.pop %v8472
        %v8729 = verf.f32.pop %v8473
        %v8730 = verf.f32.pop %v8474
        %v8731 = verf.f32.pop %v8475
        %v8732 = verf.f32.pop %v8476
        %v8733 = verf.f32.pop %v8477
        %v8734 = verf.f32.pop %v8478
        %v8735 = verf.f32.pop %v8479
        %v8736 = verf.f32.pop %v8480
        %v8737 = verf.f32.pop %v8481
        %v8738 = verf.f32.pop %v8482
        %v8739 = verf.f32.pop %v8483
        %v8740 = verf.f32.pop %v8484
        %v8741 = verf.f32.pop %v8485
        %v8742 = verf.f32.pop %v8486
        %v8743 = verf.f32.pop %v8487
        %v8744 = verf.f32.pop %v8488
        %v8745 = verf.f32.pop %v8489
        %v8746 = verf.f32.pop %v8490
        %v8747 = verf.f32.pop %v8491
        %v8748 = verf.f32.pop %v8492
        %v8749 = verf.f32.pop %v8493
        %v8750 = verf.f32.pop %v8494
        %v8751 = verf.f32.pop %v8495
        %v8752 = verf.f32.pop %v8496
        %v8753 = verf.f32.pop %v8497
        %v8754 = verf.f32.pop %v8498
        %v8755 = verf.f32.pop %v8499
        %v8756 = verf.f32.pop %v8500
        %v8757 = verf.f32.pop %v8501
        %v8758 = verf.f32.pop %v8502
        %v8759 = verf.f32.pop %v8503
        %v8760 = vadd.f32 %v8504, 1.0
        %v8761 = vadd.f32 %v8505, 1.0
        %v8762 = vadd.f32 %v8506, 1.0
        %v8763 = vadd.f32 %v8507, 1.0
        %v8764 = vadd.f32 %v8508, 1.0
        %v8765 = vadd.f32 %v8509, 1.0
        %v8766 = vadd.f32 %v8510, 1.0
        %v8767 = vadd.f32 %v8511, 1.0
        %v8768 = vadd.f32 %v8512, 1.0
        %v8769 = vadd.f32 %v8513, 1.0
        %v8770 = vadd.f32 %v8514, 1.0
        %v8771 = vadd.f32 %v8515, 1.0
        %v8772 = vadd.f32 %v8516, 1.0
        %v8773 = vadd.f32 %v8517, 1.0
        %v8774 = vadd.f32 %v8518, 1.0
        %v8775 = vadd.f32 %v8519, 1.0
        %v8776 = vadd.f32 %v8520, 1.0
        %v8777 = vadd.f32 %v8521, 1.0
        %v8778 = vadd.f32 %v8522, 1.0
        %v8779 = vadd.f32 %v8523, 1.0
        %v8780 = vadd.f32 %v8524, 1.0
        %v8781 = vadd.f32 %v8525, 1.0
        %v8782 = vadd.f32 %v8526, 1.0
        %v8783 = vadd.f32 %v8527, 1.0
        %v8784 = vadd.f32 %v8528, 1.0
        %v8785 = vadd.f32 %v8529, 1.0
        %v8786 = vadd.f32 %v8530, 1.0
        %v8787 = vadd.f32 %v8531, 1.0
        %v8788 = vadd.f32 %v8532, 1.0
        %v8789 = vadd.f32 %v8533, 1.0
        %v8790 = vadd.f32 %v8534, 1.0
        %v8791 = vadd.f32 %v8535, 1.0
        %v8792 = vadd.f32 %v8536, 1.0
        %v8793 = vadd.f32 %v8537, 1.0
        %v8794 = vadd.f32 %v8538, 1.0
        %v8795 = vadd.f32 %v8539, 1.0
        %v8796 = vadd.f32 %v8540, 1.0
        %v8797 = vadd.f32 %v8541, 1.0
        %v8798 = vadd.f32 %v8542, 1.0
        %v8799 = vadd.f32 %v8543, 1.0
        %v8800 = vadd.f32 %v8544, 1.0
        %v8801 = vadd.f32 %v8545, 1.0
        %v8802 = vadd.f32 %v8546, 1.0
        %v8803 = vadd.f32 %v8547, 1.0
        %v8804 = vadd.f32 %v8548, 1.0
        %v8805 = vadd.f32 %v8549, 1.0
        %v8806 = vadd.f32 %v8550, 1.0
        %v8807 = vadd.f32 %v8551, 1.0
        %v8808 = vadd.f32 %v8552, 1.0
        %v8809 = vadd.f32 %v8553, 1.0
        %v8810 = vadd.f32 %v8554, 1.0
        %v8811 = vadd.f32 %v8555, 1.0
        %v8812 = vadd.f32 %v8556, 1.0
        %v8813 = vadd.f32 %v8557, 1.0
        %v8814 = vadd.f32 %v8558, 1.0
        %v8815 = vadd.f32 %v8559, 1.0
        %v8816 = vadd.f32 %v8560, 1.0
        %v8817 = vadd.f32 %v8561, 1.0
        %v8818 = vadd.f32 %v8562, 1.0
        %v8819 = vadd.f32 %v8563, 1.0
        %v8820 = vadd.f32 %v8564, 1.0
        %v8821 = vadd.f32 %v8565, 1.0
        %v8822 = vadd.f32 %v8566, 1.0
        %v8823 = vadd.f32 %v8567, 1.0
        %v8824 = vadd.f32 %v8568, 1.0
        %v8825 = vadd.f32 %v8569, 1.0
        %v8826 = vadd.f32 %v8570, 1.0
        %v8827 = vadd.f32 %v8571, 1.0
        %v8828 = vadd.f32 %v8572, 1.0
        %v8829 = vadd.f32 %v8573, 1.0
        %v8830 = vadd.f32 %v8574, 1.0
        %v8831 = vadd.f32 %v8575, 1.0
        %v8832 = vadd.f32 %v8576, 1.0
        %v8833 = vadd.f32 %v8577, 1.0
        %v8834 = vadd.f32 %v8578, 1.0
        %v8835 = vadd.f32 %v8579, 1.0
        %v8836 = vadd.f32 %v8580, 1.0
        %v8837 = vadd.f32 %v8581, 1.0
        %v8838 = vadd.f32 %v8582, 1.0
        %v8839 = vadd.f32 %v8583, 1.0
        %v8840 = vadd.f32 %v8584, 1.0
        %v8841 = vadd.f32 %v8585, 1.0
        %v8842 = vadd.f32 %v8586, 1.0
        %v8843 = vadd.f32 %v8587, 1.0
        %v8844 = vadd.f32 %v8588, 1.0
        %v8845 = vadd.f32 %v8589, 1.0
        %v8846 = vadd.f32 %v8590, 1.0
        %v8847 = vadd.f32 %v8591, 1.0
        %v8848 = vadd.f32 %v8592, 1.0
        %v8849 = vadd.f32 %v8593, 1.0
        %v8850 = vadd.f32 %v8594, 1.0
        %v8851 = vadd.f32 %v8595, 1.0
        %v8852 = vadd.f32 %v8596, 1.0
        %v8853 = vadd.f32 %v8597, 1.0
        %v8854 = vadd.f32 %v8598, 1.0
        %v8855 = vadd.f32 %v8599, 1.0
        %v8856 = vadd.f32 %v8600, 1.0
        %v8857 = vadd.f32 %v8601, 1.0
        %v8858 = vadd.f32 %v8602, 1.0
        %v8859 = vadd.f32 %v8603, 1.0
        %v8860 = vadd.f32 %v8604, 1.0
        %v8861 = vadd.f32 %v8605, 1.0
        %v8862 = vadd.f32 %v8606, 1.0
        %v8863 = vadd.f32 %v8607, 1.0
        %v8864 = vadd.f32 %v8608, 1.0
        %v8865 = vadd.f32 %v8609, 1.0
        %v8866 = vadd.f32 %v8610, 1.0
        %v8867 = vadd.f32 %v8611, 1.0
        %v8868 = vadd.f32 %v8612, 1.0
        %v8869 = vadd.f32 %v8613, 1.0
        %v8870 = vadd.f32 %v8614, 1.0
        %v8871 = vadd.f32 %v8615, 1.0
        %v8872 = vadd.f32 %v8616, 1.0
        %v8873 = vadd.f32 %v8617, 1.0
        %v8874 = vadd.f32 %v8618, 1.0
        %v8875 = vadd.f32 %v8619, 1.0
        %v8876 = vadd.f32 %v8620, 1.0
        %v8877 = vadd.f32 %v8621, 1.0
        %v8878 = vadd.f32 %v8622, 1.0
        %v8879 = vadd.f32 %v8623, 1.0
        %v8880 = vadd.f32 %v8624, 1.0
        %v8881 = vadd.f32 %v8625, 1.0
        %v8882 = vadd.f32 %v8626, 1.0
        %v8883 = vadd.f32 %v8627, 1.0
        %v8884 = vadd.f32 %v8628, 1.0
        %v8885 = vadd.f32 %v8629, 1.0
        %v8886 = vadd.f32 %v8630, 1.0
        %v8887 = vadd.f32 %v8631, 1.0
        %v8888 = vadd.f32 %v8632, 1.0
        %v8889 = vadd.f32 %v8633, 1.0
        %v8890 = vadd.f32 %v8634, 1.0
        %v8891 = vadd.f32 %v8635, 1.0
        %v8892 = vadd.f32 %v8636, 1.0
        %v8893 = vadd.f32 %v8637, 1.0
        %v8894 = vadd.f32 %v8638, 1.0
        %v8895 = vadd.f32 %v8639, 1.0
        %v8896 = vadd.f32 %v8640, 1.0
        %v8897 = vadd.f32 %v8641, 1.0
        %v8898 = vadd.f32 %v8642, 1.0
        %v8899 = vadd.f32 %v8643, 1.0
        %v8900 = vadd.f32 %v8644, 1.0
        %v8901 = vadd.f32 %v8645, 1.0
        %v8902 = vadd.f32 %v8646, 1.0
        %v8903 = vadd.f32 %v8647, 1.0
        %v8904 = vadd.f32 %v8648, 1.0
        %v8905 = vadd.f32 %v8649, 1.0
        %v8906 = vadd.f32 %v8650, 1.0
        %v8907 = vadd.f32 %v8651, 1.0
        %v8908 = vadd.f32 %v8652, 1.0
        %v8909 = vadd.f32 %v8653, 1.0
        %v8910 = vadd.f32 %v8654, 1.0
        %v8911 = vadd.f32 %v8655, 1.0
        %v8912 = vadd.f32 %v8656, 1.0
        %v8913 = vadd.f32 %v8657, 1.0
        %v8914 = vadd.f32 %v8658, 1.0
        %v8915 = vadd.f32 %v8659, 1.0
        %v8916 = vadd.f32 %v8660, 1.0
        %v8917 = vadd.f32 %v8661, 1.0
        %v8918 = vadd.f32 %v8662, 1.0
        %v8919 = vadd.f32 %v8663, 1.0
        %v8920 = vadd.f32 %v8664, 1.0
        %v8921 = vadd.f32 %v8665, 1.0
        %v8922 = vadd.f32 %v8666, 1.0
        %v8923 = vadd.f32 %v8667, 1.0
        %v8924 = vadd.f32 %v8668, 1.0
        %v8925 = vadd.f32 %v8669, 1.0
        %v8926 = vadd.f32 %v8670, 1.0
        %v8927 = vadd.f32 %v8671, 1.0
        %v8928 = vadd.f32 %v8672, 1.0
        %v8929 = vadd.f32 %v8673, 1.0
        %v8930 = vadd.f32 %v8674, 1.0
        %v8931 = vadd.f32 %v8675, 1.0
        %v8932 = vadd.f32 %v8676, 1.0
        %v8933 = vadd.f32 %v8677, 1.0
        %v8934 = vadd.f32 %v8678, 1.0
        %v8935 = vadd.f32 %v8679, 1.0
        %v8936 = vadd.f32 %v8680, 1.0
        %v8937 = vadd.f32 %v8681, 1.0
        %v8938 = vadd.f32 %v8682, 1.0
        %v8939 = vadd.f32 %v8683, 1.0
        %v8940 = vadd.f32 %v8684, 1.0
        %v8941 = vadd.f32 %v8685, 1.0
        %v8942 = vadd.f32 %v8686, 1.0
        %v8943 = vadd.f32 %v8687, 1.0
        %v8944 = vadd.f32 %v8688, 1.0
        %v8945 = vadd.f32 %v8689, 1.0
        %v8946 = vadd.f32 %v8690, 1.0
        %v8947 = vadd.f32 %v8691, 1.0
        %v8948 = vadd.f32 %v8692, 1.0
        %v8949 = vadd.f32 %v8693, 1.0
        %v8950 = vadd.f32 %v8694, 1.0
        %v8951 = vadd.f32 %v8695, 1.0
        %v8952 = vadd.f32 %v8696, 1.0
        %v8953 = vadd.f32 %v8697, 1.0
        %v8954 = vadd.f32 %v8698, 1.0
        %v8955 = vadd.f32 %v8699, 1.0
        %v8956 = vadd.f32 %v8700, 1.0
        %v8957 = vadd.f32 %v8701, 1.0
        %v8958 = vadd.f32 %v8702, 1.0
        %v8959 = vadd.f32 %v8703, 1.0
        %v8960 = vadd.f32 %v8704, 1.0
        %v8961 = vadd.f32 %v8705, 1.0
        %v8962 = vadd.f32 %v8706, 1.0
        %v8963 = vadd.f32 %v8707, 1.0
        %v8964 = vadd.f32 %v8708, 1.0
        %v8965 = vadd.f32 %v8709, 1.0
        %v8966 = vadd.f32 %v8710, 1.0
        %v8967 = vadd.f32 %v8711, 1.0
        %v8968 = vadd.f32 %v8712, 1.0
        %v8969 = vadd.f32 %v8713, 1.0
        %v8970 = vadd.f32 %v8714, 1.0
        %v8971 = vadd.f32 %v8715, 1.0
        %v8972 = vadd.f32 %v8716, 1.0
        %v8973 = vadd.f32 %v8717, 1.0
        %v8974 = vadd.f32 %v8718, 1.0
        %v8975 = vadd.f32 %v8719, 1.0
        %v8976 = vadd.f32 %v8720, 1.0
        %v8977 = vadd.f32 %v8721, 1.0
        %v8978 = vadd.f32 %v8722, 1.0
        %v8979 = vadd.f32 %v8723, 1.0
        %v8980 = vadd.f32 %v8724, 1.0
        %v8981 = vadd.f32 %v8725, 1.0
        %v8982 = vadd.f32 %v8726, 1.0
        %v8983 = vadd.f32 %v8727, 1.0
        %v8984 = vadd.f32 %v8728, 1.0
        %v8985 = vadd.f32 %v8729, 1.0
        %v8986 = vadd.f32 %v8730, 1.0
        %v8987 = vadd.f32 %v8731, 1.0
        %v8988 = vadd.f32 %v8732, 1.0
        %v8989 = vadd.f32 %v8733, 1.0
        %v8990 = vadd.f32 %v8734, 1.0
        %v8991 = vadd.f32 %v8735, 1.0
        %v8992 = vadd.f32 %v8736, 1.0
        %v8993 = vadd.f32 %v8737, 1.0
        %v8994 = vadd.f32 %v8738, 1.0
        %v8995 = vadd.f32 %v8739, 1.0
        %v8996 = vadd.f32 %v8740, 1.0
        %v8997 = vadd.f32 %v8741, 1.0
        %v8998 = vadd.f32 %v8742, 1.0
        %v8999 = vadd.f32 %v8743, 1.0
        %v9000 = vadd.f32 %v8744, 1.0
        %v9001 = vadd.f32 %v8745, 1.0
        %v9002 = vadd.f32 %v8746, 1.0
        %v9003 = vadd.f32 %v8747, 1.0
        %v9004 = vadd.f32 %v8748, 1.0
        %v9005 = vadd.f32 %v8749, 1.0
        %v9006 = vadd.f32 %v8750, 1.0
        %v9007 = vadd.f32 %v8751, 1.0
        %v9008 = vadd.f32 %v8752, 1.0
        %v9009 = vadd.f32 %v8753, 1.0
        %v9010 = vadd.f32 %v8754, 1.0
        %v9011 = vadd.f32 %v8755, 1.0
        %v9012 = vadd.f32 %v8756, 1.0
        %v9013 = vadd.f32 %v8757, 1.0
        %v9014 = vadd.f32 %v8758, 1.0
        %v9015 = vadd.f32 %v8759, 1.0
        %v9016 = vmul.f32 %v7992, %v8760
        %v9017 = vmul.f32 %v7993, %v8761
        %v9018 = vmul.f32 %v7994, %v8762
        %v9019 = vmul.f32 %v7995, %v8763
        %v9020 = vmul.f32 %v7996, %v8764
        %v9021 = vmul.f32 %v7997, %v8765
        %v9022 = vmul.f32 %v7998, %v8766
        %v9023 = vmul.f32 %v7999, %v8767
        %v9024 = vmul.f32 %v8000, %v8768
        %v9025 = vmul.f32 %v8001, %v8769
        %v9026 = vmul.f32 %v8002, %v8770
        %v9027 = vmul.f32 %v8003, %v8771
        %v9028 = vmul.f32 %v8004, %v8772
        %v9029 = vmul.f32 %v8005, %v8773
        %v9030 = vmul.f32 %v8006, %v8774
        %v9031 = vmul.f32 %v8007, %v8775
        %v9032 = vmul.f32 %v8008, %v8776
        %v9033 = vmul.f32 %v8009, %v8777
        %v9034 = vmul.f32 %v8010, %v8778
        %v9035 = vmul.f32 %v8011, %v8779
        %v9036 = vmul.f32 %v8012, %v8780
        %v9037 = vmul.f32 %v8013, %v8781
        %v9038 = vmul.f32 %v8014, %v8782
        %v9039 = vmul.f32 %v8015, %v8783
        %v9040 = vmul.f32 %v8016, %v8784
        %v9041 = vmul.f32 %v8017, %v8785
        %v9042 = vmul.f32 %v8018, %v8786
        %v9043 = vmul.f32 %v8019, %v8787
        %v9044 = vmul.f32 %v8020, %v8788
        %v9045 = vmul.f32 %v8021, %v8789
        %v9046 = vmul.f32 %v8022, %v8790
        %v9047 = vmul.f32 %v8023, %v8791
        %v9048 = vmul.f32 %v8024, %v8792
        %v9049 = vmul.f32 %v8025, %v8793
        %v9050 = vmul.f32 %v8026, %v8794
        %v9051 = vmul.f32 %v8027, %v8795
        %v9052 = vmul.f32 %v8028, %v8796
        %v9053 = vmul.f32 %v8029, %v8797
        %v9054 = vmul.f32 %v8030, %v8798
        %v9055 = vmul.f32 %v8031, %v8799
        %v9056 = vmul.f32 %v8032, %v8800
        %v9057 = vmul.f32 %v8033, %v8801
        %v9058 = vmul.f32 %v8034, %v8802
        %v9059 = vmul.f32 %v8035, %v8803
        %v9060 = vmul.f32 %v8036, %v8804
        %v9061 = vmul.f32 %v8037, %v8805
        %v9062 = vmul.f32 %v8038, %v8806
        %v9063 = vmul.f32 %v8039, %v8807
        %v9064 = vmul.f32 %v8040, %v8808
        %v9065 = vmul.f32 %v8041, %v8809
        %v9066 = vmul.f32 %v8042, %v8810
        %v9067 = vmul.f32 %v8043, %v8811
        %v9068 = vmul.f32 %v8044, %v8812
        %v9069 = vmul.f32 %v8045, %v8813
        %v9070 = vmul.f32 %v8046, %v8814
        %v9071 = vmul.f32 %v8047, %v8815
        %v9072 = vmul.f32 %v8048, %v8816
        %v9073 = vmul.f32 %v8049, %v8817
        %v9074 = vmul.f32 %v8050, %v8818
        %v9075 = vmul.f32 %v8051, %v8819
        %v9076 = vmul.f32 %v8052, %v8820
        %v9077 = vmul.f32 %v8053, %v8821
        %v9078 = vmul.f32 %v8054, %v8822
        %v9079 = vmul.f32 %v8055, %v8823
        %v9080 = vmul.f32 %v8056, %v8824
        %v9081 = vmul.f32 %v8057, %v8825
        %v9082 = vmul.f32 %v8058, %v8826
        %v9083 = vmul.f32 %v8059, %v8827
        %v9084 = vmul.f32 %v8060, %v8828
        %v9085 = vmul.f32 %v8061, %v8829
        %v9086 = vmul.f32 %v8062, %v8830
        %v9087 = vmul.f32 %v8063, %v8831
        %v9088 = vmul.f32 %v8064, %v8832
        %v9089 = vmul.f32 %v8065, %v8833
        %v9090 = vmul.f32 %v8066, %v8834
        %v9091 = vmul.f32 %v8067, %v8835
        %v9092 = vmul.f32 %v8068, %v8836
        %v9093 = vmul.f32 %v8069, %v8837
        %v9094 = vmul.f32 %v8070, %v8838
        %v9095 = vmul.f32 %v8071, %v8839
        %v9096 = vmul.f32 %v8072, %v8840
        %v9097 = vmul.f32 %v8073, %v8841
        %v9098 = vmul.f32 %v8074, %v8842
        %v9099 = vmul.f32 %v8075, %v8843
        %v9100 = vmul.f32 %v8076, %v8844
        %v9101 = vmul.f32 %v8077, %v8845
        %v9102 = vmul.f32 %v8078, %v8846
        %v9103 = vmul.f32 %v8079, %v8847
        %v9104 = vmul.f32 %v8080, %v8848
        %v9105 = vmul.f32 %v8081, %v8849
        %v9106 = vmul.f32 %v8082, %v8850
        %v9107 = vmul.f32 %v8083, %v8851
        %v9108 = vmul.f32 %v8084, %v8852
        %v9109 = vmul.f32 %v8085, %v8853
        %v9110 = vmul.f32 %v8086, %v8854
        %v9111 = vmul.f32 %v8087, %v8855
        %v9112 = vmul.f32 %v8088, %v8856
        %v9113 = vmul.f32 %v8089, %v8857
        %v9114 = vmul.f32 %v8090, %v8858
        %v9115 = vmul.f32 %v8091, %v8859
        %v9116 = vmul.f32 %v8092, %v8860
        %v9117 = vmul.f32 %v8093, %v8861
        %v9118 = vmul.f32 %v8094, %v8862
        %v9119 = vmul.f32 %v8095, %v8863
        %v9120 = vmul.f32 %v8096, %v8864
        %v9121 = vmul.f32 %v8097, %v8865
        %v9122 = vmul.f32 %v8098, %v8866
        %v9123 = vmul.f32 %v8099, %v8867
        %v9124 = vmul.f32 %v8100, %v8868
        %v9125 = vmul.f32 %v8101, %v8869
        %v9126 = vmul.f32 %v8102, %v8870
        %v9127 = vmul.f32 %v8103, %v8871
        %v9128 = vmul.f32 %v8104, %v8872
        %v9129 = vmul.f32 %v8105, %v8873
        %v9130 = vmul.f32 %v8106, %v8874
        %v9131 = vmul.f32 %v8107, %v8875
        %v9132 = vmul.f32 %v8108, %v8876
        %v9133 = vmul.f32 %v8109, %v8877
        %v9134 = vmul.f32 %v8110, %v8878
        %v9135 = vmul.f32 %v8111, %v8879
        %v9136 = vmul.f32 %v8112, %v8880
        %v9137 = vmul.f32 %v8113, %v8881
        %v9138 = vmul.f32 %v8114, %v8882
        %v9139 = vmul.f32 %v8115, %v8883
        %v9140 = vmul.f32 %v8116, %v8884
        %v9141 = vmul.f32 %v8117, %v8885
        %v9142 = vmul.f32 %v8118, %v8886
        %v9143 = vmul.f32 %v8119, %v8887
        %v9144 = vmul.f32 %v8120, %v8888
        %v9145 = vmul.f32 %v8121, %v8889
        %v9146 = vmul.f32 %v8122, %v8890
        %v9147 = vmul.f32 %v8123, %v8891
        %v9148 = vmul.f32 %v8124, %v8892
        %v9149 = vmul.f32 %v8125, %v8893
        %v9150 = vmul.f32 %v8126, %v8894
        %v9151 = vmul.f32 %v8127, %v8895
        %v9152 = vmul.f32 %v8128, %v8896
        %v9153 = vmul.f32 %v8129, %v8897
        %v9154 = vmul.f32 %v8130, %v8898
        %v9155 = vmul.f32 %v8131, %v8899
        %v9156 = vmul.f32 %v8132, %v8900
        %v9157 = vmul.f32 %v8133, %v8901
        %v9158 = vmul.f32 %v8134, %v8902
        %v9159 = vmul.f32 %v8135, %v8903
        %v9160 = vmul.f32 %v8136, %v8904
        %v9161 = vmul.f32 %v8137, %v8905
        %v9162 = vmul.f32 %v8138, %v8906
        %v9163 = vmul.f32 %v8139, %v8907
        %v9164 = vmul.f32 %v8140, %v8908
        %v9165 = vmul.f32 %v8141, %v8909
        %v9166 = vmul.f32 %v8142, %v8910
        %v9167 = vmul.f32 %v8143, %v8911
        %v9168 = vmul.f32 %v8144, %v8912
        %v9169 = vmul.f32 %v8145, %v8913
        %v9170 = vmul.f32 %v8146, %v8914
        %v9171 = vmul.f32 %v8147, %v8915
        %v9172 = vmul.f32 %v8148, %v8916
        %v9173 = vmul.f32 %v8149, %v8917
        %v9174 = vmul.f32 %v8150, %v8918
        %v9175 = vmul.f32 %v8151, %v8919
        %v9176 = vmul.f32 %v8152, %v8920
        %v9177 = vmul.f32 %v8153, %v8921
        %v9178 = vmul.f32 %v8154, %v8922
        %v9179 = vmul.f32 %v8155, %v8923
        %v9180 = vmul.f32 %v8156, %v8924
        %v9181 = vmul.f32 %v8157, %v8925
        %v9182 = vmul.f32 %v8158, %v8926
        %v9183 = vmul.f32 %v8159, %v8927
        %v9184 = vmul.f32 %v8160, %v8928
        %v9185 = vmul.f32 %v8161, %v8929
        %v9186 = vmul.f32 %v8162, %v8930
        %v9187 = vmul.f32 %v8163, %v8931
        %v9188 = vmul.f32 %v8164, %v8932
        %v9189 = vmul.f32 %v8165, %v8933
        %v9190 = vmul.f32 %v8166, %v8934
        %v9191 = vmul.f32 %v8167, %v8935
        %v9192 = vmul.f32 %v8168, %v8936
        %v9193 = vmul.f32 %v8169, %v8937
        %v9194 = vmul.f32 %v8170, %v8938
        %v9195 = vmul.f32 %v8171, %v8939
        %v9196 = vmul.f32 %v8172, %v8940
        %v9197 = vmul.f32 %v8173, %v8941
        %v9198 = vmul.f32 %v8174, %v8942
        %v9199 = vmul.f32 %v8175, %v8943
        %v9200 = vmul.f32 %v8176, %v8944
        %v9201 = vmul.f32 %v8177, %v8945
        %v9202 = vmul.f32 %v8178, %v8946
        %v9203 = vmul.f32 %v8179, %v8947
        %v9204 = vmul.f32 %v8180, %v8948
        %v9205 = vmul.f32 %v8181, %v8949
        %v9206 = vmul.f32 %v8182, %v8950
        %v9207 = vmul.f32 %v8183, %v8951
        %v9208 = vmul.f32 %v8184, %v8952
        %v9209 = vmul.f32 %v8185, %v8953
        %v9210 = vmul.f32 %v8186, %v8954
        %v9211 = vmul.f32 %v8187, %v8955
        %v9212 = vmul.f32 %v8188, %v8956
        %v9213 = vmul.f32 %v8189, %v8957
        %v9214 = vmul.f32 %v8190, %v8958
        %v9215 = vmul.f32 %v8191, %v8959
        %v9216 = vmul.f32 %v8192, %v8960
        %v9217 = vmul.f32 %v8193, %v8961
        %v9218 = vmul.f32 %v8194, %v8962
        %v9219 = vmul.f32 %v8195, %v8963
        %v9220 = vmul.f32 %v8196, %v8964
        %v9221 = vmul.f32 %v8197, %v8965
        %v9222 = vmul.f32 %v8198, %v8966
        %v9223 = vmul.f32 %v8199, %v8967
        %v9224 = vmul.f32 %v8200, %v8968
        %v9225 = vmul.f32 %v8201, %v8969
        %v9226 = vmul.f32 %v8202, %v8970
        %v9227 = vmul.f32 %v8203, %v8971
        %v9228 = vmul.f32 %v8204, %v8972
        %v9229 = vmul.f32 %v8205, %v8973
        %v9230 = vmul.f32 %v8206, %v8974
        %v9231 = vmul.f32 %v8207, %v8975
        %v9232 = vmul.f32 %v8208, %v8976
        %v9233 = vmul.f32 %v8209, %v8977
        %v9234 = vmul.f32 %v8210, %v8978
        %v9235 = vmul.f32 %v8211, %v8979
        %v9236 = vmul.f32 %v8212, %v8980
        %v9237 = vmul.f32 %v8213, %v8981
        %v9238 = vmul.f32 %v8214, %v8982
        %v9239 = vmul.f32 %v8215, %v8983
        %v9240 = vmul.f32 %v8216, %v8984
        %v9241 = vmul.f32 %v8217, %v8985
        %v9242 = vmul.f32 %v8218, %v8986
        %v9243 = vmul.f32 %v8219, %v8987
        %v9244 = vmul.f32 %v8220, %v8988
        %v9245 = vmul.f32 %v8221, %v8989
        %v9246 = vmul.f32 %v8222, %v8990
        %v9247 = vmul.f32 %v8223, %v8991
        %v9248 = vmul.f32 %v8224, %v8992
        %v9249 = vmul.f32 %v8225, %v8993
        %v9250 = vmul.f32 %v8226, %v8994
        %v9251 = vmul.f32 %v8227, %v8995
        %v9252 = vmul.f32 %v8228, %v8996
        %v9253 = vmul.f32 %v8229, %v8997
        %v9254 = vmul.f32 %v8230, %v8998
        %v9255 = vmul.f32 %v8231, %v8999
        %v9256 = vmul.f32 %v8232, %v9000
        %v9257 = vmul.f32 %v8233, %v9001
        %v9258 = vmul.f32 %v8234, %v9002
        %v9259 = vmul.f32 %v8235, %v9003
        %v9260 = vmul.f32 %v8236, %v9004
        %v9261 = vmul.f32 %v8237, %v9005
        %v9262 = vmul.f32 %v8238, %v9006
        %v9263 = vmul.f32 %v8239, %v9007
        %v9264 = vmul.f32 %v8240, %v9008
        %v9265 = vmul.f32 %v8241, %v9009
        %v9266 = vmul.f32 %v8242, %v9010
        %v9267 = vmul.f32 %v8243, %v9011
        %v9268 = vmul.f32 %v8244, %v9012
        %v9269 = vmul.f32 %v8245, %v9013
        %v9270 = vmul.f32 %v8246, %v9014
        %v9271 = vmul.f32 %v8247, %v9015
        %v9272 = vpack.c.bf16 %v9024, %v9016
        %v9273 = vpack.c.bf16 %v9025, %v9017
        %v9274 = vpack.c.bf16 %v9026, %v9018
        %v9275 = vpack.c.bf16 %v9027, %v9019
        %v9276 = vpack.c.bf16 %v9028, %v9020
        %v9277 = vpack.c.bf16 %v9029, %v9021
        %v9278 = vpack.c.bf16 %v9030, %v9022
        %v9279 = vpack.c.bf16 %v9031, %v9023
        %v9280 = vpack.c.bf16 %v9040, %v9032
        %v9281 = vpack.c.bf16 %v9041, %v9033
        %v9282 = vpack.c.bf16 %v9042, %v9034
        %v9283 = vpack.c.bf16 %v9043, %v9035
        %v9284 = vpack.c.bf16 %v9044, %v9036
        %v9285 = vpack.c.bf16 %v9045, %v9037
        %v9286 = vpack.c.bf16 %v9046, %v9038
        %v9287 = vpack.c.bf16 %v9047, %v9039
        %v9288 = vpack.c.bf16 %v9056, %v9048
        %v9289 = vpack.c.bf16 %v9057, %v9049
        %v9290 = vpack.c.bf16 %v9058, %v9050
        %v9291 = vpack.c.bf16 %v9059, %v9051
        %v9292 = vpack.c.bf16 %v9060, %v9052
        %v9293 = vpack.c.bf16 %v9061, %v9053
        %v9294 = vpack.c.bf16 %v9062, %v9054
        %v9295 = vpack.c.bf16 %v9063, %v9055
        %v9296 = vpack.c.bf16 %v9072, %v9064
        %v9297 = vpack.c.bf16 %v9073, %v9065
        %v9298 = vpack.c.bf16 %v9074, %v9066
        %v9299 = vpack.c.bf16 %v9075, %v9067
        %v9300 = vpack.c.bf16 %v9076, %v9068
        %v9301 = vpack.c.bf16 %v9077, %v9069
        %v9302 = vpack.c.bf16 %v9078, %v9070
        %v9303 = vpack.c.bf16 %v9079, %v9071
        %v9304 = vpack.c.bf16 %v9088, %v9080
        %v9305 = vpack.c.bf16 %v9089, %v9081
        %v9306 = vpack.c.bf16 %v9090, %v9082
        %v9307 = vpack.c.bf16 %v9091, %v9083
        %v9308 = vpack.c.bf16 %v9092, %v9084
        %v9309 = vpack.c.bf16 %v9093, %v9085
        %v9310 = vpack.c.bf16 %v9094, %v9086
        %v9311 = vpack.c.bf16 %v9095, %v9087
        %v9312 = vpack.c.bf16 %v9104, %v9096
        %v9313 = vpack.c.bf16 %v9105, %v9097
        %v9314 = vpack.c.bf16 %v9106, %v9098
        %v9315 = vpack.c.bf16 %v9107, %v9099
        %v9316 = vpack.c.bf16 %v9108, %v9100
        %v9317 = vpack.c.bf16 %v9109, %v9101
        %v9318 = vpack.c.bf16 %v9110, %v9102
        %v9319 = vpack.c.bf16 %v9111, %v9103
        %v9320 = vpack.c.bf16 %v9120, %v9112
        %v9321 = vpack.c.bf16 %v9121, %v9113
        %v9322 = vpack.c.bf16 %v9122, %v9114
        %v9323 = vpack.c.bf16 %v9123, %v9115
        %v9324 = vpack.c.bf16 %v9124, %v9116
        %v9325 = vpack.c.bf16 %v9125, %v9117
        %v9326 = vpack.c.bf16 %v9126, %v9118
        %v9327 = vpack.c.bf16 %v9127, %v9119
        %v9328 = vpack.c.bf16 %v9136, %v9128
        %v9329 = vpack.c.bf16 %v9137, %v9129
        %v9330 = vpack.c.bf16 %v9138, %v9130
        %v9331 = vpack.c.bf16 %v9139, %v9131
        %v9332 = vpack.c.bf16 %v9140, %v9132
        %v9333 = vpack.c.bf16 %v9141, %v9133
        %v9334 = vpack.c.bf16 %v9142, %v9134
        %v9335 = vpack.c.bf16 %v9143, %v9135
        %v9336 = vpack.c.bf16 %v9152, %v9144
        %v9337 = vpack.c.bf16 %v9153, %v9145
        %v9338 = vpack.c.bf16 %v9154, %v9146
        %v9339 = vpack.c.bf16 %v9155, %v9147
        %v9340 = vpack.c.bf16 %v9156, %v9148
        %v9341 = vpack.c.bf16 %v9157, %v9149
        %v9342 = vpack.c.bf16 %v9158, %v9150
        %v9343 = vpack.c.bf16 %v9159, %v9151
        %v9344 = vpack.c.bf16 %v9168, %v9160
        %v9345 = vpack.c.bf16 %v9169, %v9161
        %v9346 = vpack.c.bf16 %v9170, %v9162
        %v9347 = vpack.c.bf16 %v9171, %v9163
        %v9348 = vpack.c.bf16 %v9172, %v9164
        %v9349 = vpack.c.bf16 %v9173, %v9165
        %v9350 = vpack.c.bf16 %v9174, %v9166
        %v9351 = vpack.c.bf16 %v9175, %v9167
        %v9352 = vpack.c.bf16 %v9184, %v9176
        %v9353 = vpack.c.bf16 %v9185, %v9177
        %v9354 = vpack.c.bf16 %v9186, %v9178
        %v9355 = vpack.c.bf16 %v9187, %v9179
        %v9356 = vpack.c.bf16 %v9188, %v9180
        %v9357 = vpack.c.bf16 %v9189, %v9181
        %v9358 = vpack.c.bf16 %v9190, %v9182
        %v9359 = vpack.c.bf16 %v9191, %v9183
        %v9360 = vpack.c.bf16 %v9200, %v9192
        %v9361 = vpack.c.bf16 %v9201, %v9193
        %v9362 = vpack.c.bf16 %v9202, %v9194
        %v9363 = vpack.c.bf16 %v9203, %v9195
        %v9364 = vpack.c.bf16 %v9204, %v9196
        %v9365 = vpack.c.bf16 %v9205, %v9197
        %v9366 = vpack.c.bf16 %v9206, %v9198
        %v9367 = vpack.c.bf16 %v9207, %v9199
        %v9368 = vpack.c.bf16 %v9216, %v9208
        %v9369 = vpack.c.bf16 %v9217, %v9209
        %v9370 = vpack.c.bf16 %v9218, %v9210
        %v9371 = vpack.c.bf16 %v9219, %v9211
        %v9372 = vpack.c.bf16 %v9220, %v9212
        %v9373 = vpack.c.bf16 %v9221, %v9213
        %v9374 = vpack.c.bf16 %v9222, %v9214
        %v9375 = vpack.c.bf16 %v9223, %v9215
        %v9376 = vpack.c.bf16 %v9232, %v9224
        %v9377 = vpack.c.bf16 %v9233, %v9225
        %v9378 = vpack.c.bf16 %v9234, %v9226
        %v9379 = vpack.c.bf16 %v9235, %v9227
        %v9380 = vpack.c.bf16 %v9236, %v9228
        %v9381 = vpack.c.bf16 %v9237, %v9229
        %v9382 = vpack.c.bf16 %v9238, %v9230
        %v9383 = vpack.c.bf16 %v9239, %v9231
        %v9384 = vpack.c.bf16 %v9248, %v9240
        %v9385 = vpack.c.bf16 %v9249, %v9241
        %v9386 = vpack.c.bf16 %v9250, %v9242
        %v9387 = vpack.c.bf16 %v9251, %v9243
        %v9388 = vpack.c.bf16 %v9252, %v9244
        %v9389 = vpack.c.bf16 %v9253, %v9245
        %v9390 = vpack.c.bf16 %v9254, %v9246
        %v9391 = vpack.c.bf16 %v9255, %v9247
        %v9392 = vpack.c.bf16 %v9264, %v9256
        %v9393 = vpack.c.bf16 %v9265, %v9257
        %v9394 = vpack.c.bf16 %v9266, %v9258
        %v9395 = vpack.c.bf16 %v9267, %v9259
        %v9396 = vpack.c.bf16 %v9268, %v9260
        %v9397 = vpack.c.bf16 %v9269, %v9261
        %v9398 = vpack.c.bf16 %v9270, %v9262
        %v9399 = vpack.c.bf16 %v9271, %v9263
        %v9400 = vld [vmem:[#allocation14] sm:$0xff]
        %v9401 = vld [vmem:[#allocation14 + $0x8] sm:$0xff]
        %v9402 = vld [vmem:[#allocation14 + $0x10] sm:$0xff]
        %v9403 = vld [vmem:[#allocation14 + $0x18] sm:$0xff]
        %v9404 = vld [vmem:[#allocation14 + $0x20] sm:$0xff]
        %v9405 = vld [vmem:[#allocation14 + $0x28] sm:$0xff]
        %v9406 = vld [vmem:[#allocation14 + $0x30] sm:$0xff]
        %v9407 = vld [vmem:[#allocation14 + $0x38] sm:$0xff]
        %v9408 = vld [vmem:[#allocation14 + $0x40] sm:$0xff]
        %v9409 = vld [vmem:[#allocation14 + $0x48] sm:$0xff]
        %v9410 = vld [vmem:[#allocation14 + $0x50] sm:$0xff]
        %v9411 = vld [vmem:[#allocation14 + $0x58] sm:$0xff]
        %v9412 = vld [vmem:[#allocation14 + $0x60] sm:$0xff]
        %v9413 = vld [vmem:[#allocation14 + $0x68] sm:$0xff]
        %v9414 = vld [vmem:[#allocation14 + $0x70] sm:$0xff]
        %v9415 = vld [vmem:[#allocation14 + $0x78] sm:$0xff]
        %v9416 = vld [vmem:[#allocation14 + $0x80] sm:$0xff]
        %v9417 = vld [vmem:[#allocation14 + $0x88] sm:$0xff]
        %v9418 = vld [vmem:[#allocation14 + $0x90] sm:$0xff]
        %v9419 = vld [vmem:[#allocation14 + $0x98] sm:$0xff]
        %v9420 = vld [vmem:[#allocation14 + $0xa0] sm:$0xff]
        %v9421 = vld [vmem:[#allocation14 + $0xa8] sm:$0xff]
        %v9422 = vld [vmem:[#allocation14 + $0xb0] sm:$0xff]
        %v9423 = vld [vmem:[#allocation14 + $0xb8] sm:$0xff]
        %v9424 = vld [vmem:[#allocation14 + $0xc0] sm:$0xff]
        %v9425 = vld [vmem:[#allocation14 + $0xc8] sm:$0xff]
        %v9426 = vld [vmem:[#allocation14 + $0xd0] sm:$0xff]
        %v9427 = vld [vmem:[#allocation14 + $0xd8] sm:$0xff]
        %v9428 = vld [vmem:[#allocation14 + $0xe0] sm:$0xff]
        %v9429 = vld [vmem:[#allocation14 + $0xe8] sm:$0xff]
        %v9430 = vld [vmem:[#allocation14 + $0xf0] sm:$0xff]
        %v9431 = vld [vmem:[#allocation14 + $0xf8] sm:$0xff]
        %v9432 = vld [vmem:[#allocation14 + $0x100] sm:$0xff]
        %v9433 = vld [vmem:[#allocation14 + $0x108] sm:$0xff]
        %v9434 = vld [vmem:[#allocation14 + $0x110] sm:$0xff]
        %v9435 = vld [vmem:[#allocation14 + $0x118] sm:$0xff]
        %v9436 = vld [vmem:[#allocation14 + $0x120] sm:$0xff]
        %v9437 = vld [vmem:[#allocation14 + $0x128] sm:$0xff]
        %v9438 = vld [vmem:[#allocation14 + $0x130] sm:$0xff]
        %v9439 = vld [vmem:[#allocation14 + $0x138] sm:$0xff]
        %v9440 = vld [vmem:[#allocation14 + $0x140] sm:$0xff]
        %v9441 = vld [vmem:[#allocation14 + $0x148] sm:$0xff]
        %v9442 = vld [vmem:[#allocation14 + $0x150] sm:$0xff]
        %v9443 = vld [vmem:[#allocation14 + $0x158] sm:$0xff]
        %v9444 = vld [vmem:[#allocation14 + $0x160] sm:$0xff]
        %v9445 = vld [vmem:[#allocation14 + $0x168] sm:$0xff]
        %v9446 = vld [vmem:[#allocation14 + $0x170] sm:$0xff]
        %v9447 = vld [vmem:[#allocation14 + $0x178] sm:$0xff]
        %v9448 = vld [vmem:[#allocation14 + $0x180] sm:$0xff]
        %v9449 = vld [vmem:[#allocation14 + $0x188] sm:$0xff]
        %v9450 = vld [vmem:[#allocation14 + $0x190] sm:$0xff]
        %v9451 = vld [vmem:[#allocation14 + $0x198] sm:$0xff]
        %v9452 = vld [vmem:[#allocation14 + $0x1a0] sm:$0xff]
        %v9453 = vld [vmem:[#allocation14 + $0x1a8] sm:$0xff]
        %v9454 = vld [vmem:[#allocation14 + $0x1b0] sm:$0xff]
        %v9455 = vld [vmem:[#allocation14 + $0x1b8] sm:$0xff]
        %v9456 = vld [vmem:[#allocation14 + $0x1c0] sm:$0xff]
        %v9457 = vld [vmem:[#allocation14 + $0x1c8] sm:$0xff]
        %v9458 = vld [vmem:[#allocation14 + $0x1d0] sm:$0xff]
        %v9459 = vld [vmem:[#allocation14 + $0x1d8] sm:$0xff]
        %v9460 = vld [vmem:[#allocation14 + $0x1e0] sm:$0xff]
        %v9461 = vld [vmem:[#allocation14 + $0x1e8] sm:$0xff]
        %v9462 = vld [vmem:[#allocation14 + $0x1f0] sm:$0xff]
        %v9463 = vld [vmem:[#allocation14 + $0x1f8] sm:$0xff]
        %v9464 = vld [vmem:[#allocation14 + $0x200] sm:$0xff]
        %v9465 = vld [vmem:[#allocation14 + $0x208] sm:$0xff]
        %v9466 = vld [vmem:[#allocation14 + $0x210] sm:$0xff]
        %v9467 = vld [vmem:[#allocation14 + $0x218] sm:$0xff]
        %v9468 = vld [vmem:[#allocation14 + $0x220] sm:$0xff]
        %v9469 = vld [vmem:[#allocation14 + $0x228] sm:$0xff]
        %v9470 = vld [vmem:[#allocation14 + $0x230] sm:$0xff]
        %v9471 = vld [vmem:[#allocation14 + $0x238] sm:$0xff]
        %v9472 = vld [vmem:[#allocation14 + $0x240] sm:$0xff]
        %v9473 = vld [vmem:[#allocation14 + $0x248] sm:$0xff]
        %v9474 = vld [vmem:[#allocation14 + $0x250] sm:$0xff]
        %v9475 = vld [vmem:[#allocation14 + $0x258] sm:$0xff]
        %v9476 = vld [vmem:[#allocation14 + $0x260] sm:$0xff]
        %v9477 = vld [vmem:[#allocation14 + $0x268] sm:$0xff]
        %v9478 = vld [vmem:[#allocation14 + $0x270] sm:$0xff]
        %v9479 = vld [vmem:[#allocation14 + $0x278] sm:$0xff]
        %v9480 = vld [vmem:[#allocation14 + $0x280] sm:$0xff]
        %v9481 = vld [vmem:[#allocation14 + $0x288] sm:$0xff]
        %v9482 = vld [vmem:[#allocation14 + $0x290] sm:$0xff]
        %v9483 = vld [vmem:[#allocation14 + $0x298] sm:$0xff]
        %v9484 = vld [vmem:[#allocation14 + $0x2a0] sm:$0xff]
        %v9485 = vld [vmem:[#allocation14 + $0x2a8] sm:$0xff]
        %v9486 = vld [vmem:[#allocation14 + $0x2b0] sm:$0xff]
        %v9487 = vld [vmem:[#allocation14 + $0x2b8] sm:$0xff]
        %v9488 = vld [vmem:[#allocation14 + $0x2c0] sm:$0xff]
        %v9489 = vld [vmem:[#allocation14 + $0x2c8] sm:$0xff]
        %v9490 = vld [vmem:[#allocation14 + $0x2d0] sm:$0xff]
        %v9491 = vld [vmem:[#allocation14 + $0x2d8] sm:$0xff]
        %v9492 = vld [vmem:[#allocation14 + $0x2e0] sm:$0xff]
        %v9493 = vld [vmem:[#allocation14 + $0x2e8] sm:$0xff]
        %v9494 = vld [vmem:[#allocation14 + $0x2f0] sm:$0xff]
        %v9495 = vld [vmem:[#allocation14 + $0x2f8] sm:$0xff]
        %v9496 = vld [vmem:[#allocation14 + $0x300] sm:$0xff]
        %v9497 = vld [vmem:[#allocation14 + $0x308] sm:$0xff]
        %v9498 = vld [vmem:[#allocation14 + $0x310] sm:$0xff]
        %v9499 = vld [vmem:[#allocation14 + $0x318] sm:$0xff]
        %v9500 = vld [vmem:[#allocation14 + $0x320] sm:$0xff]
        %v9501 = vld [vmem:[#allocation14 + $0x328] sm:$0xff]
        %v9502 = vld [vmem:[#allocation14 + $0x330] sm:$0xff]
        %v9503 = vld [vmem:[#allocation14 + $0x338] sm:$0xff]
        %v9504 = vld [vmem:[#allocation14 + $0x340] sm:$0xff]
        %v9505 = vld [vmem:[#allocation14 + $0x348] sm:$0xff]
        %v9506 = vld [vmem:[#allocation14 + $0x350] sm:$0xff]
        %v9507 = vld [vmem:[#allocation14 + $0x358] sm:$0xff]
        %v9508 = vld [vmem:[#allocation14 + $0x360] sm:$0xff]
        %v9509 = vld [vmem:[#allocation14 + $0x368] sm:$0xff]
        %v9510 = vld [vmem:[#allocation14 + $0x370] sm:$0xff]
        %v9511 = vld [vmem:[#allocation14 + $0x378] sm:$0xff]
        %v9512 = vld [vmem:[#allocation14 + $0x380] sm:$0xff]
        %v9513 = vld [vmem:[#allocation14 + $0x388] sm:$0xff]
        %v9514 = vld [vmem:[#allocation14 + $0x390] sm:$0xff]
        %v9515 = vld [vmem:[#allocation14 + $0x398] sm:$0xff]
        %v9516 = vld [vmem:[#allocation14 + $0x3a0] sm:$0xff]
        %v9517 = vld [vmem:[#allocation14 + $0x3a8] sm:$0xff]
        %v9518 = vld [vmem:[#allocation14 + $0x3b0] sm:$0xff]
        %v9519 = vld [vmem:[#allocation14 + $0x3b8] sm:$0xff]
        %v9520 = vld [vmem:[#allocation14 + $0x3c0] sm:$0xff]
        %v9521 = vld [vmem:[#allocation14 + $0x3c8] sm:$0xff]
        %v9522 = vld [vmem:[#allocation14 + $0x3d0] sm:$0xff]
        %v9523 = vld [vmem:[#allocation14 + $0x3d8] sm:$0xff]
        %v9524 = vld [vmem:[#allocation14 + $0x3e0] sm:$0xff]
        %v9525 = vld [vmem:[#allocation14 + $0x3e8] sm:$0xff]
        %v9526 = vld [vmem:[#allocation14 + $0x3f0] sm:$0xff]
        %v9527 = vld [vmem:[#allocation14 + $0x3f8] sm:$0xff]
        %v9528 = vld [vmem:[%s13] sm:$0x3]
        %v9530 = vlaneseq
        %v9531 = vshrl.u32 %v9530, 7
        %v9532 = vsub.s32 0, %v9531
        %v9533 = vrot.slane %v9528, %v9532
        %v9534 = vlaneseq
        %v9535 = vshrl.u32 %v9534, 7
        %v9536 = vsub.s32 1, %v9535
        %v9537 = vrot.slane %v9528, %v9536
        %v9668 = vunpack.c.l.b16 %v9400
        %v9669 = vunpack.c.h.b16 %v9400
        %v9670 = vunpack.c.l.b16 %v9401
        %v9671 = vunpack.c.h.b16 %v9401
        %v9672 = vunpack.c.l.b16 %v9402
        %v9673 = vunpack.c.h.b16 %v9402
        %v9674 = vunpack.c.l.b16 %v9403
        %v9675 = vunpack.c.h.b16 %v9403
        %v9676 = vunpack.c.l.b16 %v9404
        %v9677 = vunpack.c.h.b16 %v9404
        %v9678 = vunpack.c.l.b16 %v9405
        %v9679 = vunpack.c.h.b16 %v9405
        %v9680 = vunpack.c.l.b16 %v9406
        %v9681 = vunpack.c.h.b16 %v9406
        %v9682 = vunpack.c.l.b16 %v9407
        %v9683 = vunpack.c.h.b16 %v9407
        %v9684 = vunpack.c.l.b16 %v9408
        %v9685 = vunpack.c.h.b16 %v9408
        %v9686 = vunpack.c.l.b16 %v9409
        %v9687 = vunpack.c.h.b16 %v9409
        %v9688 = vunpack.c.l.b16 %v9410
        %v9689 = vunpack.c.h.b16 %v9410
        %v9690 = vunpack.c.l.b16 %v9411
        %v9691 = vunpack.c.h.b16 %v9411
        %v9692 = vunpack.c.l.b16 %v9412
        %v9693 = vunpack.c.h.b16 %v9412
        %v9694 = vunpack.c.l.b16 %v9413
        %v9695 = vunpack.c.h.b16 %v9413
        %v9696 = vunpack.c.l.b16 %v9414
        %v9697 = vunpack.c.h.b16 %v9414
        %v9698 = vunpack.c.l.b16 %v9415
        %v9699 = vunpack.c.h.b16 %v9415
        %v9700 = vunpack.c.l.b16 %v9416
        %v9701 = vunpack.c.h.b16 %v9416
        %v9702 = vunpack.c.l.b16 %v9417
        %v9703 = vunpack.c.h.b16 %v9417
        %v9704 = vunpack.c.l.b16 %v9418
        %v9705 = vunpack.c.h.b16 %v9418
        %v9706 = vunpack.c.l.b16 %v9419
        %v9707 = vunpack.c.h.b16 %v9419
        %v9708 = vunpack.c.l.b16 %v9420
        %v9709 = vunpack.c.h.b16 %v9420
        %v9710 = vunpack.c.l.b16 %v9421
        %v9711 = vunpack.c.h.b16 %v9421
        %v9712 = vunpack.c.l.b16 %v9422
        %v9713 = vunpack.c.h.b16 %v9422
        %v9714 = vunpack.c.l.b16 %v9423
        %v9715 = vunpack.c.h.b16 %v9423
        %v9716 = vunpack.c.l.b16 %v9424
        %v9717 = vunpack.c.h.b16 %v9424
        %v9718 = vunpack.c.l.b16 %v9425
        %v9719 = vunpack.c.h.b16 %v9425
        %v9720 = vunpack.c.l.b16 %v9426
        %v9721 = vunpack.c.h.b16 %v9426
        %v9722 = vunpack.c.l.b16 %v9427
        %v9723 = vunpack.c.h.b16 %v9427
        %v9724 = vunpack.c.l.b16 %v9428
        %v9725 = vunpack.c.h.b16 %v9428
        %v9726 = vunpack.c.l.b16 %v9429
        %v9727 = vunpack.c.h.b16 %v9429
        %v9728 = vunpack.c.l.b16 %v9430
        %v9729 = vunpack.c.h.b16 %v9430
        %v9730 = vunpack.c.l.b16 %v9431
        %v9731 = vunpack.c.h.b16 %v9431
        %v9732 = vunpack.c.l.b16 %v9432
        %v9733 = vunpack.c.h.b16 %v9432
        %v9734 = vunpack.c.l.b16 %v9433
        %v9735 = vunpack.c.h.b16 %v9433
        %v9736 = vunpack.c.l.b16 %v9434
        %v9737 = vunpack.c.h.b16 %v9434
        %v9738 = vunpack.c.l.b16 %v9435
        %v9739 = vunpack.c.h.b16 %v9435
        %v9740 = vunpack.c.l.b16 %v9436
        %v9741 = vunpack.c.h.b16 %v9436
        %v9742 = vunpack.c.l.b16 %v9437
        %v9743 = vunpack.c.h.b16 %v9437
        %v9744 = vunpack.c.l.b16 %v9438
        %v9745 = vunpack.c.h.b16 %v9438
        %v9746 = vunpack.c.l.b16 %v9439
        %v9747 = vunpack.c.h.b16 %v9439
        %v9748 = vunpack.c.l.b16 %v9440
        %v9749 = vunpack.c.h.b16 %v9440
        %v9750 = vunpack.c.l.b16 %v9441
        %v9751 = vunpack.c.h.b16 %v9441
        %v9752 = vunpack.c.l.b16 %v9442
        %v9753 = vunpack.c.h.b16 %v9442
        %v9754 = vunpack.c.l.b16 %v9443
        %v9755 = vunpack.c.h.b16 %v9443
        %v9756 = vunpack.c.l.b16 %v9444
        %v9757 = vunpack.c.h.b16 %v9444
        %v9758 = vunpack.c.l.b16 %v9445
        %v9759 = vunpack.c.h.b16 %v9445
        %v9760 = vunpack.c.l.b16 %v9446
        %v9761 = vunpack.c.h.b16 %v9446
        %v9762 = vunpack.c.l.b16 %v9447
        %v9763 = vunpack.c.h.b16 %v9447
        %v9764 = vunpack.c.l.b16 %v9448
        %v9765 = vunpack.c.h.b16 %v9448
        %v9766 = vunpack.c.l.b16 %v9449
        %v9767 = vunpack.c.h.b16 %v9449
        %v9768 = vunpack.c.l.b16 %v9450
        %v9769 = vunpack.c.h.b16 %v9450
        %v9770 = vunpack.c.l.b16 %v9451
        %v9771 = vunpack.c.h.b16 %v9451
        %v9772 = vunpack.c.l.b16 %v9452
        %v9773 = vunpack.c.h.b16 %v9452
        %v9774 = vunpack.c.l.b16 %v9453
        %v9775 = vunpack.c.h.b16 %v9453
        %v9776 = vunpack.c.l.b16 %v9454
        %v9777 = vunpack.c.h.b16 %v9454
        %v9778 = vunpack.c.l.b16 %v9455
        %v9779 = vunpack.c.h.b16 %v9455
        %v9780 = vunpack.c.l.b16 %v9456
        %v9781 = vunpack.c.h.b16 %v9456
        %v9782 = vunpack.c.l.b16 %v9457
        %v9783 = vunpack.c.h.b16 %v9457
        %v9784 = vunpack.c.l.b16 %v9458
        %v9785 = vunpack.c.h.b16 %v9458
        %v9786 = vunpack.c.l.b16 %v9459
        %v9787 = vunpack.c.h.b16 %v9459
        %v9788 = vunpack.c.l.b16 %v9460
        %v9789 = vunpack.c.h.b16 %v9460
        %v9790 = vunpack.c.l.b16 %v9461
        %v9791 = vunpack.c.h.b16 %v9461
        %v9792 = vunpack.c.l.b16 %v9462
        %v9793 = vunpack.c.h.b16 %v9462
        %v9794 = vunpack.c.l.b16 %v9463
        %v9795 = vunpack.c.h.b16 %v9463
        %v9796 = vunpack.c.l.b16 %v9464
        %v9797 = vunpack.c.h.b16 %v9464
        %v9798 = vunpack.c.l.b16 %v9465
        %v9799 = vunpack.c.h.b16 %v9465
        %v9800 = vunpack.c.l.b16 %v9466
        %v9801 = vunpack.c.h.b16 %v9466
        %v9802 = vunpack.c.l.b16 %v9467
        %v9803 = vunpack.c.h.b16 %v9467
        %v9804 = vunpack.c.l.b16 %v9468
        %v9805 = vunpack.c.h.b16 %v9468
        %v9806 = vunpack.c.l.b16 %v9469
        %v9807 = vunpack.c.h.b16 %v9469
        %v9808 = vunpack.c.l.b16 %v9470
        %v9809 = vunpack.c.h.b16 %v9470
        %v9810 = vunpack.c.l.b16 %v9471
        %v9811 = vunpack.c.h.b16 %v9471
        %v9812 = vunpack.c.l.b16 %v9472
        %v9813 = vunpack.c.h.b16 %v9472
        %v9814 = vunpack.c.l.b16 %v9473
        %v9815 = vunpack.c.h.b16 %v9473
        %v9816 = vunpack.c.l.b16 %v9474
        %v9817 = vunpack.c.h.b16 %v9474
        %v9818 = vunpack.c.l.b16 %v9475
        %v9819 = vunpack.c.h.b16 %v9475
        %v9820 = vunpack.c.l.b16 %v9476
        %v9821 = vunpack.c.h.b16 %v9476
        %v9822 = vunpack.c.l.b16 %v9477
        %v9823 = vunpack.c.h.b16 %v9477
        %v9824 = vunpack.c.l.b16 %v9478
        %v9825 = vunpack.c.h.b16 %v9478
        %v9826 = vunpack.c.l.b16 %v9479
        %v9827 = vunpack.c.h.b16 %v9479
        %v9828 = vunpack.c.l.b16 %v9480
        %v9829 = vunpack.c.h.b16 %v9480
        %v9830 = vunpack.c.l.b16 %v9481
        %v9831 = vunpack.c.h.b16 %v9481
        %v9832 = vunpack.c.l.b16 %v9482
        %v9833 = vunpack.c.h.b16 %v9482
        %v9834 = vunpack.c.l.b16 %v9483
        %v9835 = vunpack.c.h.b16 %v9483
        %v9836 = vunpack.c.l.b16 %v9484
        %v9837 = vunpack.c.h.b16 %v9484
        %v9838 = vunpack.c.l.b16 %v9485
        %v9839 = vunpack.c.h.b16 %v9485
        %v9840 = vunpack.c.l.b16 %v9486
        %v9841 = vunpack.c.h.b16 %v9486
        %v9842 = vunpack.c.l.b16 %v9487
        %v9843 = vunpack.c.h.b16 %v9487
        %v9844 = vunpack.c.l.b16 %v9488
        %v9845 = vunpack.c.h.b16 %v9488
        %v9846 = vunpack.c.l.b16 %v9489
        %v9847 = vunpack.c.h.b16 %v9489
        %v9848 = vunpack.c.l.b16 %v9490
        %v9849 = vunpack.c.h.b16 %v9490
        %v9850 = vunpack.c.l.b16 %v9491
        %v9851 = vunpack.c.h.b16 %v9491
        %v9852 = vunpack.c.l.b16 %v9492
        %v9853 = vunpack.c.h.b16 %v9492
        %v9854 = vunpack.c.l.b16 %v9493
        %v9855 = vunpack.c.h.b16 %v9493
        %v9856 = vunpack.c.l.b16 %v9494
        %v9857 = vunpack.c.h.b16 %v9494
        %v9858 = vunpack.c.l.b16 %v9495
        %v9859 = vunpack.c.h.b16 %v9495
        %v9860 = vunpack.c.l.b16 %v9496
        %v9861 = vunpack.c.h.b16 %v9496
        %v9862 = vunpack.c.l.b16 %v9497
        %v9863 = vunpack.c.h.b16 %v9497
        %v9864 = vunpack.c.l.b16 %v9498
        %v9865 = vunpack.c.h.b16 %v9498
        %v9866 = vunpack.c.l.b16 %v9499
        %v9867 = vunpack.c.h.b16 %v9499
        %v9868 = vunpack.c.l.b16 %v9500
        %v9869 = vunpack.c.h.b16 %v9500
        %v9870 = vunpack.c.l.b16 %v9501
        %v9871 = vunpack.c.h.b16 %v9501
        %v9872 = vunpack.c.l.b16 %v9502
        %v9873 = vunpack.c.h.b16 %v9502
        %v9874 = vunpack.c.l.b16 %v9503
        %v9875 = vunpack.c.h.b16 %v9503
        %v9876 = vunpack.c.l.b16 %v9504
        %v9877 = vunpack.c.h.b16 %v9504
        %v9878 = vunpack.c.l.b16 %v9505
        %v9879 = vunpack.c.h.b16 %v9505
        %v9880 = vunpack.c.l.b16 %v9506
        %v9881 = vunpack.c.h.b16 %v9506
        %v9882 = vunpack.c.l.b16 %v9507
        %v9883 = vunpack.c.h.b16 %v9507
        %v9884 = vunpack.c.l.b16 %v9508
        %v9885 = vunpack.c.h.b16 %v9508
        %v9886 = vunpack.c.l.b16 %v9509
        %v9887 = vunpack.c.h.b16 %v9509
        %v9888 = vunpack.c.l.b16 %v9510
        %v9889 = vunpack.c.h.b16 %v9510
        %v9890 = vunpack.c.l.b16 %v9511
        %v9891 = vunpack.c.h.b16 %v9511
        %v9892 = vunpack.c.l.b16 %v9512
        %v9893 = vunpack.c.h.b16 %v9512
        %v9894 = vunpack.c.l.b16 %v9513
        %v9895 = vunpack.c.h.b16 %v9513
        %v9896 = vunpack.c.l.b16 %v9514
        %v9897 = vunpack.c.h.b16 %v9514
        %v9898 = vunpack.c.l.b16 %v9515
        %v9899 = vunpack.c.h.b16 %v9515
        %v9900 = vunpack.c.l.b16 %v9516
        %v9901 = vunpack.c.h.b16 %v9516
        %v9902 = vunpack.c.l.b16 %v9517
        %v9903 = vunpack.c.h.b16 %v9517
        %v9904 = vunpack.c.l.b16 %v9518
        %v9905 = vunpack.c.h.b16 %v9518
        %v9906 = vunpack.c.l.b16 %v9519
        %v9907 = vunpack.c.h.b16 %v9519
        %v9908 = vunpack.c.l.b16 %v9520
        %v9909 = vunpack.c.h.b16 %v9520
        %v9910 = vunpack.c.l.b16 %v9521
        %v9911 = vunpack.c.h.b16 %v9521
        %v9912 = vunpack.c.l.b16 %v9522
        %v9913 = vunpack.c.h.b16 %v9522
        %v9914 = vunpack.c.l.b16 %v9523
        %v9915 = vunpack.c.h.b16 %v9523
        %v9916 = vunpack.c.l.b16 %v9524
        %v9917 = vunpack.c.h.b16 %v9524
        %v9918 = vunpack.c.l.b16 %v9525
        %v9919 = vunpack.c.h.b16 %v9525
        %v9920 = vunpack.c.l.b16 %v9526
        %v9921 = vunpack.c.h.b16 %v9526
        %v9922 = vunpack.c.l.b16 %v9527
        %v9923 = vunpack.c.h.b16 %v9527
        %v9924 = vpack.c.b16 %v9670, %v9668
        %v9925 = vpack.c.b16 %v9671, %v9669
        %v9926 = vpack.c.b16 %v9674, %v9672
        %v9927 = vpack.c.b16 %v9675, %v9673
        %v9928 = vpack.c.b16 %v9678, %v9676
        %v9929 = vpack.c.b16 %v9679, %v9677
        %v9930 = vpack.c.b16 %v9682, %v9680
        %v9931 = vpack.c.b16 %v9683, %v9681
        %v9932 = vpack.c.b16 %v9686, %v9684
        %v9933 = vpack.c.b16 %v9687, %v9685
        %v9934 = vpack.c.b16 %v9690, %v9688
        %v9935 = vpack.c.b16 %v9691, %v9689
        %v9936 = vpack.c.b16 %v9694, %v9692
        %v9937 = vpack.c.b16 %v9695, %v9693
        %v9938 = vpack.c.b16 %v9698, %v9696
        %v9939 = vpack.c.b16 %v9699, %v9697
        %v9940 = vpack.c.b16 %v9702, %v9700
        %v9941 = vpack.c.b16 %v9703, %v9701
        %v9942 = vpack.c.b16 %v9706, %v9704
        %v9943 = vpack.c.b16 %v9707, %v9705
        %v9944 = vpack.c.b16 %v9710, %v9708
        %v9945 = vpack.c.b16 %v9711, %v9709
        %v9946 = vpack.c.b16 %v9714, %v9712
        %v9947 = vpack.c.b16 %v9715, %v9713
        %v9948 = vpack.c.b16 %v9718, %v9716
        %v9949 = vpack.c.b16 %v9719, %v9717
        %v9950 = vpack.c.b16 %v9722, %v9720
        %v9951 = vpack.c.b16 %v9723, %v9721
        %v9952 = vpack.c.b16 %v9726, %v9724
        %v9953 = vpack.c.b16 %v9727, %v9725
        %v9954 = vpack.c.b16 %v9730, %v9728
        %v9955 = vpack.c.b16 %v9731, %v9729
        %v9956 = vpack.c.b16 %v9734, %v9732
        %v9957 = vpack.c.b16 %v9735, %v9733
        %v9958 = vpack.c.b16 %v9738, %v9736
        %v9959 = vpack.c.b16 %v9739, %v9737
        %v9960 = vpack.c.b16 %v9742, %v9740
        %v9961 = vpack.c.b16 %v9743, %v9741
        %v9962 = vpack.c.b16 %v9746, %v9744
        %v9963 = vpack.c.b16 %v9747, %v9745
        %v9964 = vpack.c.b16 %v9750, %v9748
        %v9965 = vpack.c.b16 %v9751, %v9749
        %v9966 = vpack.c.b16 %v9754, %v9752
        %v9967 = vpack.c.b16 %v9755, %v9753
        %v9968 = vpack.c.b16 %v9758, %v9756
        %v9969 = vpack.c.b16 %v9759, %v9757
        %v9970 = vpack.c.b16 %v9762, %v9760
        %v9971 = vpack.c.b16 %v9763, %v9761
        %v9972 = vpack.c.b16 %v9766, %v9764
        %v9973 = vpack.c.b16 %v9767, %v9765
        %v9974 = vpack.c.b16 %v9770, %v9768
        %v9975 = vpack.c.b16 %v9771, %v9769
        %v9976 = vpack.c.b16 %v9774, %v9772
        %v9977 = vpack.c.b16 %v9775, %v9773
        %v9978 = vpack.c.b16 %v9778, %v9776
        %v9979 = vpack.c.b16 %v9779, %v9777
        %v9980 = vpack.c.b16 %v9782, %v9780
        %v9981 = vpack.c.b16 %v9783, %v9781
        %v9982 = vpack.c.b16 %v9786, %v9784
        %v9983 = vpack.c.b16 %v9787, %v9785
        %v9984 = vpack.c.b16 %v9790, %v9788
        %v9985 = vpack.c.b16 %v9791, %v9789
        %v9986 = vpack.c.b16 %v9794, %v9792
        %v9987 = vpack.c.b16 %v9795, %v9793
        %v9988 = vpack.c.b16 %v9798, %v9796
        %v9989 = vpack.c.b16 %v9799, %v9797
        %v9990 = vpack.c.b16 %v9802, %v9800
        %v9991 = vpack.c.b16 %v9803, %v9801
        %v9992 = vpack.c.b16 %v9806, %v9804
        %v9993 = vpack.c.b16 %v9807, %v9805
        %v9994 = vpack.c.b16 %v9810, %v9808
        %v9995 = vpack.c.b16 %v9811, %v9809
        %v9996 = vpack.c.b16 %v9814, %v9812
        %v9997 = vpack.c.b16 %v9815, %v9813
        %v9998 = vpack.c.b16 %v9818, %v9816
        %v9999 = vpack.c.b16 %v9819, %v9817
        %v10000 = vpack.c.b16 %v9822, %v9820
        %v10001 = vpack.c.b16 %v9823, %v9821
        %v10002 = vpack.c.b16 %v9826, %v9824
        %v10003 = vpack.c.b16 %v9827, %v9825
        %v10004 = vpack.c.b16 %v9830, %v9828
        %v10005 = vpack.c.b16 %v9831, %v9829
        %v10006 = vpack.c.b16 %v9834, %v9832
        %v10007 = vpack.c.b16 %v9835, %v9833
        %v10008 = vpack.c.b16 %v9838, %v9836
        %v10009 = vpack.c.b16 %v9839, %v9837
        %v10010 = vpack.c.b16 %v9842, %v9840
        %v10011 = vpack.c.b16 %v9843, %v9841
        %v10012 = vpack.c.b16 %v9846, %v9844
        %v10013 = vpack.c.b16 %v9847, %v9845
        %v10014 = vpack.c.b16 %v9850, %v9848
        %v10015 = vpack.c.b16 %v9851, %v9849
        %v10016 = vpack.c.b16 %v9854, %v9852
        %v10017 = vpack.c.b16 %v9855, %v9853
        %v10018 = vpack.c.b16 %v9858, %v9856
        %v10019 = vpack.c.b16 %v9859, %v9857
        %v10020 = vpack.c.b16 %v9862, %v9860
        %v10021 = vpack.c.b16 %v9863, %v9861
        %v10022 = vpack.c.b16 %v9866, %v9864
        %v10023 = vpack.c.b16 %v9867, %v9865
        %v10024 = vpack.c.b16 %v9870, %v9868
        %v10025 = vpack.c.b16 %v9871, %v9869
        %v10026 = vpack.c.b16 %v9874, %v9872
        %v10027 = vpack.c.b16 %v9875, %v9873
        %v10028 = vpack.c.b16 %v9878, %v9876
        %v10029 = vpack.c.b16 %v9879, %v9877
        %v10030 = vpack.c.b16 %v9882, %v9880
        %v10031 = vpack.c.b16 %v9883, %v9881
        %v10032 = vpack.c.b16 %v9886, %v9884
        %v10033 = vpack.c.b16 %v9887, %v9885
        %v10034 = vpack.c.b16 %v9890, %v9888
        %v10035 = vpack.c.b16 %v9891, %v9889
        %v10036 = vpack.c.b16 %v9894, %v9892
        %v10037 = vpack.c.b16 %v9895, %v9893
        %v10038 = vpack.c.b16 %v9898, %v9896
        %v10039 = vpack.c.b16 %v9899, %v9897
        %v10040 = vpack.c.b16 %v9902, %v9900
        %v10041 = vpack.c.b16 %v9903, %v9901
        %v10042 = vpack.c.b16 %v9906, %v9904
        %v10043 = vpack.c.b16 %v9907, %v9905
        %v10044 = vpack.c.b16 %v9910, %v9908
        %v10045 = vpack.c.b16 %v9911, %v9909
        %v10046 = vpack.c.b16 %v9914, %v9912
        %v10047 = vpack.c.b16 %v9915, %v9913
        %v10048 = vpack.c.b16 %v9918, %v9916
        %v10049 = vpack.c.b16 %v9919, %v9917
        %v10050 = vpack.c.b16 %v9922, %v9920
        %v10051 = vpack.c.b16 %v9923, %v9921
        %10180 = vmatprep.subr.bf16.mxu0 %v9925
        %10181 = vmatpush1.bf16.msra.mxu0 %v9924
        %10182 = vmatprep.subr.bf16.mxu0 %v9927
        %10183 = vmatpush1.bf16.msra.mxu0 %v9926
        %10184 = vmatprep.subr.bf16.mxu0 %v9929
        %10185 = vmatpush1.bf16.msra.mxu0 %v9928
        %10186 = vmatprep.subr.bf16.mxu0 %v9931
        %10187 = vmatpush1.bf16.msra.mxu0 %v9930
        %10188 = vmatprep.subr.bf16.mxu0 %v9933
        %10189 = vmatpush1.bf16.msra.mxu0 %v9932
        %10190 = vmatprep.subr.bf16.mxu0 %v9935
        %10191 = vmatpush1.bf16.msra.mxu0 %v9934
        %10192 = vmatprep.subr.bf16.mxu0 %v9937
        %10193 = vmatpush1.bf16.msra.mxu0 %v9936
        %10194 = vmatprep.subr.bf16.mxu0 %v9939
        %10195 = vmatpush1.bf16.msra.mxu0 %v9938
        %10196 = vmatprep.subr.bf16.mxu0 %v9941
        %10197 = vmatpush1.bf16.msra.mxu0 %v9940
        %10198 = vmatprep.subr.bf16.mxu0 %v9943
        %10199 = vmatpush1.bf16.msra.mxu0 %v9942
        %10200 = vmatprep.subr.bf16.mxu0 %v9945
        %10201 = vmatpush1.bf16.msra.mxu0 %v9944
        %10202 = vmatprep.subr.bf16.mxu0 %v9947
        %10203 = vmatpush1.bf16.msra.mxu0 %v9946
        %10204 = vmatprep.subr.bf16.mxu0 %v9949
        %10205 = vmatpush1.bf16.msra.mxu0 %v9948
        %10206 = vmatprep.subr.bf16.mxu0 %v9951
        %10207 = vmatpush1.bf16.msra.mxu0 %v9950
        %10208 = vmatprep.subr.bf16.mxu0 %v9953
        %10209 = vmatpush1.bf16.msra.mxu0 %v9952
        %10210 = vmatprep.subr.bf16.mxu0 %v9955
        %10211 = vmatpush1.bf16.msra.mxu0 %v9954
        %10212 = vmatprep.mubr.bf16.mxu0 %v9273
        %10213 = vmatmul.mubr.bf16.gmra.mrb[0].mxu0 %v9272
        %v10214 = vpop.f32.mrb[0].mxu0
        %v10215 = vadd.f32 %v9533, %v10214
        %v10216 = vpop.f32.mrb[0].mxu0
        %v10217 = vadd.f32 %v9537, %v10216
        %v10218 = vpop.f32.mrb[0].mxu0
        %v10219 = vadd.f32 %v9533, %v10218
        %v10220 = vpop.f32.mrb[0].mxu0
        %v10221 = vadd.f32 %v9537, %v10220
        %10222 = vmatprep.mubr.bf16.mxu0 %v9281
        %10223 = vmatmul.mubr.bf16.gmra.mrb[0].mxu0 %v9280
        %v10224 = vpop.f32.mrb[0].mxu0
        %v10225 = vadd.f32 %v9533, %v10224
        %v10226 = vpop.f32.mrb[0].mxu0
        %v10227 = vadd.f32 %v9537, %v10226
        %v10228 = vpop.f32.mrb[0].mxu0
        %v10229 = vadd.f32 %v9533, %v10228
        %v10230 = vpop.f32.mrb[0].mxu0
        %v10231 = vadd.f32 %v9537, %v10230
        %10232 = vmatprep.mubr.bf16.mxu0 %v9289
        %10233 = vmatmul.mubr.bf16.gmra.mrb[0].mxu0 %v9288
        %v10234 = vpop.f32.mrb[0].mxu0
        %v10235 = vadd.f32 %v9533, %v10234
        %v10236 = vpop.f32.mrb[0].mxu0
        %v10237 = vadd.f32 %v9537, %v10236
        %v10238 = vpop.f32.mrb[0].mxu0
        %v10239 = vadd.f32 %v9533, %v10238
        %v10240 = vpop.f32.mrb[0].mxu0
        %v10241 = vadd.f32 %v9537, %v10240
        %10242 = vmatprep.mubr.bf16.mxu0 %v9297
        %10243 = vmatmul.mubr.bf16.gmra.mrb[0].mxu0 %v9296
        %v10244 = vpop.f32.mrb[0].mxu0
        %v10245 = vadd.f32 %v9533, %v10244
        %v10246 = vpop.f32.mrb[0].mxu0
        %v10247 = vadd.f32 %v9537, %v10246
        %v10248 = vpop.f32.mrb[0].mxu0
        %v10249 = vadd.f32 %v9533, %v10248
        %v10250 = vpop.f32.mrb[0].mxu0
        %v10251 = vadd.f32 %v9537, %v10250
        %10252 = vmatprep.mubr.bf16.mxu0 %v9305
        %10253 = vmatmul.mubr.bf16.gmra.mrb[0].mxu0 %v9304
        %v10254 = vpop.f32.mrb[0].mxu0
        %v10255 = vadd.f32 %v9533, %v10254
        %v10256 = vpop.f32.mrb[0].mxu0
        %v10257 = vadd.f32 %v9537, %v10256
        %v10258 = vpop.f32.mrb[0].mxu0
        %v10259 = vadd.f32 %v9533, %v10258
        %v10260 = vpop.f32.mrb[0].mxu0
        %v10261 = vadd.f32 %v9537, %v10260
        %10262 = vmatprep.mubr.bf16.mxu0 %v9313
        %10263 = vmatmul.mubr.bf16.gmra.mrb[0].mxu0 %v9312
        %v10264 = vpop.f32.mrb[0].mxu0
        %v10265 = vadd.f32 %v9533, %v10264
        %v10266 = vpop.f32.mrb[0].mxu0
        %v10267 = vadd.f32 %v9537, %v10266
        %v10268 = vpop.f32.mrb[0].mxu0
        %v10269 = vadd.f32 %v9533, %v10268
        %v10270 = vpop.f32.mrb[0].mxu0
        %v10271 = vadd.f32 %v9537, %v10270
        %10272 = vmatprep.mubr.bf16.mxu0 %v9321
        %10273 = vmatmul.mubr.bf16.gmra.mrb[0].mxu0 %v9320
        %v10274 = vpop.f32.mrb[0].mxu0
        %v10275 = vadd.f32 %v9533, %v10274
        %v10276 = vpop.f32.mrb[0].mxu0
        %v10277 = vadd.f32 %v9537, %v10276
        %v10278 = vpop.f32.mrb[0].mxu0
        %v10279 = vadd.f32 %v9533, %v10278
        %v10280 = vpop.f32.mrb[0].mxu0
        %v10281 = vadd.f32 %v9537, %v10280
        %10282 = vmatprep.mubr.bf16.mxu0 %v9329
        %10283 = vmatmul.mubr.bf16.gmra.mrb[0].mxu0 %v9328
        %v10284 = vpop.f32.mrb[0].mxu0
        %v10285 = vadd.f32 %v9533, %v10284
        %v10286 = vpop.f32.mrb[0].mxu0
        %v10287 = vadd.f32 %v9537, %v10286
        %v10288 = vpop.f32.mrb[0].mxu0
        %v10289 = vadd.f32 %v9533, %v10288
        %v10290 = vpop.f32.mrb[0].mxu0
        %v10291 = vadd.f32 %v9537, %v10290
        %10292 = vmatprep.mubr.bf16.mxu0 %v9337
        %10293 = vmatmul.mubr.bf16.gmra.mrb[0].mxu0 %v9336
        %v10294 = vpop.f32.mrb[0].mxu0
        %v10295 = vadd.f32 %v9533, %v10294
        %v10296 = vpop.f32.mrb[0].mxu0
        %v10297 = vadd.f32 %v9537, %v10296
        %v10298 = vpop.f32.mrb[0].mxu0
        %v10299 = vadd.f32 %v9533, %v10298
        %v10300 = vpop.f32.mrb[0].mxu0
        %v10301 = vadd.f32 %v9537, %v10300
        %10302 = vmatprep.mubr.bf16.mxu0 %v9345
        %10303 = vmatmul.mubr.bf16.gmra.mrb[0].mxu0 %v9344
        %v10304 = vpop.f32.mrb[0].mxu0
        %v10305 = vadd.f32 %v9533, %v10304
        %v10306 = vpop.f32.mrb[0].mxu0
        %v10307 = vadd.f32 %v9537, %v10306
        %v10308 = vpop.f32.mrb[0].mxu0
        %v10309 = vadd.f32 %v9533, %v10308
        %v10310 = vpop.f32.mrb[0].mxu0
        %v10311 = vadd.f32 %v9537, %v10310
        %10312 = vmatprep.mubr.bf16.mxu0 %v9353
        %10313 = vmatmul.mubr.bf16.gmra.mrb[0].mxu0 %v9352
        %v10314 = vpop.f32.mrb[0].mxu0
        %v10315 = vadd.f32 %v9533, %v10314
        %v10316 = vpop.f32.mrb[0].mxu0
        %v10317 = vadd.f32 %v9537, %v10316
        %v10318 = vpop.f32.mrb[0].mxu0
        %v10319 = vadd.f32 %v9533, %v10318
        %v10320 = vpop.f32.mrb[0].mxu0
        %v10321 = vadd.f32 %v9537, %v10320
        %10322 = vmatprep.mubr.bf16.mxu0 %v9361
        %10323 = vmatmul.mubr.bf16.gmra.mrb[0].mxu0 %v9360
        %v10324 = vpop.f32.mrb[0].mxu0
        %v10325 = vadd.f32 %v9533, %v10324
        %v10326 = vpop.f32.mrb[0].mxu0
        %v10327 = vadd.f32 %v9537, %v10326
        %v10328 = vpop.f32.mrb[0].mxu0
        %v10329 = vadd.f32 %v9533, %v10328
        %v10330 = vpop.f32.mrb[0].mxu0
        %v10331 = vadd.f32 %v9537, %v10330
        %10332 = vmatprep.mubr.bf16.mxu0 %v9369
        %10333 = vmatmul.mubr.bf16.gmra.mrb[0].mxu0 %v9368
        %v10334 = vpop.f32.mrb[0].mxu0
        %v10335 = vadd.f32 %v9533, %v10334
        %v10336 = vpop.f32.mrb[0].mxu0
        %v10337 = vadd.f32 %v9537, %v10336
        %v10338 = vpop.f32.mrb[0].mxu0
        %v10339 = vadd.f32 %v9533, %v10338
        %v10340 = vpop.f32.mrb[0].mxu0
        %v10341 = vadd.f32 %v9537, %v10340
        %10342 = vmatprep.mubr.bf16.mxu0 %v9377
        %10343 = vmatmul.mubr.bf16.gmra.mrb[0].mxu0 %v9376
        %v10344 = vpop.f32.mrb[0].mxu0
        %v10345 = vadd.f32 %v9533, %v10344
        %v10346 = vpop.f32.mrb[0].mxu0
        %v10347 = vadd.f32 %v9537, %v10346
        %v10348 = vpop.f32.mrb[0].mxu0
        %v10349 = vadd.f32 %v9533, %v10348
        %v10350 = vpop.f32.mrb[0].mxu0
        %v10351 = vadd.f32 %v9537, %v10350
        %10352 = vmatprep.mubr.bf16.mxu0 %v9385
        %10353 = vmatmul.mubr.bf16.gmra.mrb[0].mxu0 %v9384
        %v10354 = vpop.f32.mrb[0].mxu0
        %v10355 = vadd.f32 %v9533, %v10354
        %v10356 = vpop.f32.mrb[0].mxu0
        %v10357 = vadd.f32 %v9537, %v10356
        %v10358 = vpop.f32.mrb[0].mxu0
        %v10359 = vadd.f32 %v9533, %v10358
        %v10360 = vpop.f32.mrb[0].mxu0
        %v10361 = vadd.f32 %v9537, %v10360
        %10362 = vmatprep.mubr.bf16.mxu0 %v9393
        %10363 = vmatmul.mubr.bf16.gmra.mrb[0].mxu0 %v9392
        %v10364 = vpop.f32.mrb[0].mxu0
        %v10365 = vadd.f32 %v9533, %v10364
        %v10366 = vpop.f32.mrb[0].mxu0
        %v10367 = vadd.f32 %v9537, %v10366
        %v10368 = vpop.f32.mrb[0].mxu0
        %v10369 = vadd.f32 %v9533, %v10368
        %v10370 = vpop.f32.mrb[0].mxu0
        %v10371 = vadd.f32 %v9537, %v10370
        %10372 = vdwg.mxu0
        %10373 = vmatprep.subr.bf16.mxu0 %v9957
        %10374 = vmatpush1.bf16.msra.mxu0 %v9956
        %10375 = vmatprep.subr.bf16.mxu0 %v9959
        %10376 = vmatpush1.bf16.msra.mxu0 %v9958
        %10377 = vmatprep.subr.bf16.mxu0 %v9961
        %10378 = vmatpush1.bf16.msra.mxu0 %v9960
        %10379 = vmatprep.subr.bf16.mxu0 %v9963
        %10380 = vmatpush1.bf16.msra.mxu0 %v9962
        %10381 = vmatprep.subr.bf16.mxu0 %v9965
        %10382 = vmatpush1.bf16.msra.mxu0 %v9964
        %10383 = vmatprep.subr.bf16.mxu0 %v9967
        %10384 = vmatpush1.bf16.msra.mxu0 %v9966
        %10385 = vmatprep.subr.bf16.mxu0 %v9969
        %10386 = vmatpush1.bf16.msra.mxu0 %v9968
        %10387 = vmatprep.subr.bf16.mxu0 %v9971
        %10388 = vmatpush1.bf16.msra.mxu0 %v9970
        %10389 = vmatprep.subr.bf16.mxu0 %v9973
        %10390 = vmatpush1.bf16.msra.mxu0 %v9972
        %10391 = vmatprep.subr.bf16.mxu0 %v9975
        %10392 = vmatpush1.bf16.msra.mxu0 %v9974
        %10393 = vmatprep.subr.bf16.mxu0 %v9977
        %10394 = vmatpush1.bf16.msra.mxu0 %v9976
        %10395 = vmatprep.subr.bf16.mxu0 %v9979
        %10396 = vmatpush1.bf16.msra.mxu0 %v9978
        %10397 = vmatprep.subr.bf16.mxu0 %v9981
        %10398 = vmatpush1.bf16.msra.mxu0 %v9980
        %10399 = vmatprep.subr.bf16.mxu0 %v9983
        %10400 = vmatpush1.bf16.msra.mxu0 %v9982
        %10401 = vmatprep.subr.bf16.mxu0 %v9985
        %10402 = vmatpush1.bf16.msra.mxu0 %v9984
        %10403 = vmatprep.subr.bf16.mxu0 %v9987
        %10404 = vmatpush1.bf16.msra.mxu0 %v9986
        %10405 = vmatprep.mubr.bf16.mxu0 %v9275
        %10406 = vmatmul.mubr.bf16.gmra.mrb[0].mxu0 %v9274
        %v10407 = vpop.f32.mrb[0].mxu0
        %v10408 = vadd.f32 %v10215, %v10407
        %v10409 = vpop.f32.mrb[0].mxu0
        %v10410 = vadd.f32 %v10217, %v10409
        %v10411 = vpop.f32.mrb[0].mxu0
        %v10412 = vadd.f32 %v10219, %v10411
        %v10413 = vpop.f32.mrb[0].mxu0
        %v10414 = vadd.f32 %v10221, %v10413
        %10415 = vmatprep.mubr.bf16.mxu0 %v9283
        %10416 = vmatmul.mubr.bf16.gmra.mrb[0].mxu0 %v9282
        %v10417 = vpop.f32.mrb[0].mxu0
        %v10418 = vadd.f32 %v10225, %v10417
        %v10419 = vpop.f32.mrb[0].mxu0
        %v10420 = vadd.f32 %v10227, %v10419
        %v10421 = vpop.f32.mrb[0].mxu0
        %v10422 = vadd.f32 %v10229, %v10421
        %v10423 = vpop.f32.mrb[0].mxu0
        %v10424 = vadd.f32 %v10231, %v10423
        %10425 = vmatprep.mubr.bf16.mxu0 %v9291
        %10426 = vmatmul.mubr.bf16.gmra.mrb[0].mxu0 %v9290
        %v10427 = vpop.f32.mrb[0].mxu0
        %v10428 = vadd.f32 %v10235, %v10427
        %v10429 = vpop.f32.mrb[0].mxu0
        %v10430 = vadd.f32 %v10237, %v10429
        %v10431 = vpop.f32.mrb[0].mxu0
        %v10432 = vadd.f32 %v10239, %v10431
        %v10433 = vpop.f32.mrb[0].mxu0
        %v10434 = vadd.f32 %v10241, %v10433
        %10435 = vmatprep.mubr.bf16.mxu0 %v9299
        %10436 = vmatmul.mubr.bf16.gmra.mrb[0].mxu0 %v9298
        %v10437 = vpop.f32.mrb[0].mxu0
        %v10438 = vadd.f32 %v10245, %v10437
        %v10439 = vpop.f32.mrb[0].mxu0
        %v10440 = vadd.f32 %v10247, %v10439
        %v10441 = vpop.f32.mrb[0].mxu0
        %v10442 = vadd.f32 %v10249, %v10441
        %v10443 = vpop.f32.mrb[0].mxu0
        %v10444 = vadd.f32 %v10251, %v10443
        %10445 = vmatprep.mubr.bf16.mxu0 %v9307
        %10446 = vmatmul.mubr.bf16.gmra.mrb[0].mxu0 %v9306
        %v10447 = vpop.f32.mrb[0].mxu0
        %v10448 = vadd.f32 %v10255, %v10447
        %v10449 = vpop.f32.mrb[0].mxu0
        %v10450 = vadd.f32 %v10257, %v10449
        %v10451 = vpop.f32.mrb[0].mxu0
        %v10452 = vadd.f32 %v10259, %v10451
        %v10453 = vpop.f32.mrb[0].mxu0
        %v10454 = vadd.f32 %v10261, %v10453
        %10455 = vmatprep.mubr.bf16.mxu0 %v9315
        %10456 = vmatmul.mubr.bf16.gmra.mrb[0].mxu0 %v9314
        %v10457 = vpop.f32.mrb[0].mxu0
        %v10458 = vadd.f32 %v10265, %v10457
        %v10459 = vpop.f32.mrb[0].mxu0
        %v10460 = vadd.f32 %v10267, %v10459
        %v10461 = vpop.f32.mrb[0].mxu0
        %v10462 = vadd.f32 %v10269, %v10461
        %v10463 = vpop.f32.mrb[0].mxu0
        %v10464 = vadd.f32 %v10271, %v10463
        %10465 = vmatprep.mubr.bf16.mxu0 %v9323
        %10466 = vmatmul.mubr.bf16.gmra.mrb[0].mxu0 %v9322
        %v10467 = vpop.f32.mrb[0].mxu0
        %v10468 = vadd.f32 %v10275, %v10467
        %v10469 = vpop.f32.mrb[0].mxu0
        %v10470 = vadd.f32 %v10277, %v10469
        %v10471 = vpop.f32.mrb[0].mxu0
        %v10472 = vadd.f32 %v10279, %v10471
        %v10473 = vpop.f32.mrb[0].mxu0
        %v10474 = vadd.f32 %v10281, %v10473
        %10475 = vmatprep.mubr.bf16.mxu0 %v9331
        %10476 = vmatmul.mubr.bf16.gmra.mrb[0].mxu0 %v9330
        %v10477 = vpop.f32.mrb[0].mxu0
        %v10478 = vadd.f32 %v10285, %v10477
        %v10479 = vpop.f32.mrb[0].mxu0
        %v10480 = vadd.f32 %v10287, %v10479
        %v10481 = vpop.f32.mrb[0].mxu0
        %v10482 = vadd.f32 %v10289, %v10481
        %v10483 = vpop.f32.mrb[0].mxu0
        %v10484 = vadd.f32 %v10291, %v10483
        %10485 = vmatprep.mubr.bf16.mxu0 %v9339
        %10486 = vmatmul.mubr.bf16.gmra.mrb[0].mxu0 %v9338
        %v10487 = vpop.f32.mrb[0].mxu0
        %v10488 = vadd.f32 %v10295, %v10487
        %v10489 = vpop.f32.mrb[0].mxu0
        %v10490 = vadd.f32 %v10297, %v10489
        %v10491 = vpop.f32.mrb[0].mxu0
        %v10492 = vadd.f32 %v10299, %v10491
        %v10493 = vpop.f32.mrb[0].mxu0
        %v10494 = vadd.f32 %v10301, %v10493
        %10495 = vmatprep.mubr.bf16.mxu0 %v9347
        %10496 = vmatmul.mubr.bf16.gmra.mrb[0].mxu0 %v9346
        %v10497 = vpop.f32.mrb[0].mxu0
        %v10498 = vadd.f32 %v10305, %v10497
        %v10499 = vpop.f32.mrb[0].mxu0
        %v10500 = vadd.f32 %v10307, %v10499
        %v10501 = vpop.f32.mrb[0].mxu0
        %v10502 = vadd.f32 %v10309, %v10501
        %v10503 = vpop.f32.mrb[0].mxu0
        %v10504 = vadd.f32 %v10311, %v10503
        %10505 = vmatprep.mubr.bf16.mxu0 %v9355
        %10506 = vmatmul.mubr.bf16.gmra.mrb[0].mxu0 %v9354
        %v10507 = vpop.f32.mrb[0].mxu0
        %v10508 = vadd.f32 %v10315, %v10507
        %v10509 = vpop.f32.mrb[0].mxu0
        %v10510 = vadd.f32 %v10317, %v10509
        %v10511 = vpop.f32.mrb[0].mxu0
        %v10512 = vadd.f32 %v10319, %v10511
        %v10513 = vpop.f32.mrb[0].mxu0
        %v10514 = vadd.f32 %v10321, %v10513
        %10515 = vmatprep.mubr.bf16.mxu0 %v9363
        %10516 = vmatmul.mubr.bf16.gmra.mrb[0].mxu0 %v9362
        %v10517 = vpop.f32.mrb[0].mxu0
        %v10518 = vadd.f32 %v10325, %v10517
        %v10519 = vpop.f32.mrb[0].mxu0
        %v10520 = vadd.f32 %v10327, %v10519
        %v10521 = vpop.f32.mrb[0].mxu0
        %v10522 = vadd.f32 %v10329, %v10521
        %v10523 = vpop.f32.mrb[0].mxu0
        %v10524 = vadd.f32 %v10331, %v10523
        %10525 = vmatprep.mubr.bf16.mxu0 %v9371
        %10526 = vmatmul.mubr.bf16.gmra.mrb[0].mxu0 %v9370
        %v10527 = vpop.f32.mrb[0].mxu0
        %v10528 = vadd.f32 %v10335, %v10527
        %v10529 = vpop.f32.mrb[0].mxu0
        %v10530 = vadd.f32 %v10337, %v10529
        %v10531 = vpop.f32.mrb[0].mxu0
        %v10532 = vadd.f32 %v10339, %v10531
        %v10533 = vpop.f32.mrb[0].mxu0
        %v10534 = vadd.f32 %v10341, %v10533
        %10535 = vmatprep.mubr.bf16.mxu0 %v9379
        %10536 = vmatmul.mubr.bf16.gmra.mrb[0].mxu0 %v9378
        %v10537 = vpop.f32.mrb[0].mxu0
        %v10538 = vadd.f32 %v10345, %v10537
        %v10539 = vpop.f32.mrb[0].mxu0
        %v10540 = vadd.f32 %v10347, %v10539
        %v10541 = vpop.f32.mrb[0].mxu0
        %v10542 = vadd.f32 %v10349, %v10541
        %v10543 = vpop.f32.mrb[0].mxu0
        %v10544 = vadd.f32 %v10351, %v10543
        %10545 = vmatprep.mubr.bf16.mxu0 %v9387
        %10546 = vmatmul.mubr.bf16.gmra.mrb[0].mxu0 %v9386
        %v10547 = vpop.f32.mrb[0].mxu0
        %v10548 = vadd.f32 %v10355, %v10547
        %v10549 = vpop.f32.mrb[0].mxu0
        %v10550 = vadd.f32 %v10357, %v10549
        %v10551 = vpop.f32.mrb[0].mxu0
        %v10552 = vadd.f32 %v10359, %v10551
        %v10553 = vpop.f32.mrb[0].mxu0
        %v10554 = vadd.f32 %v10361, %v10553
        %10555 = vmatprep.mubr.bf16.mxu0 %v9395
        %10556 = vmatmul.mubr.bf16.gmra.mrb[0].mxu0 %v9394
        %v10557 = vpop.f32.mrb[0].mxu0
        %v10558 = vadd.f32 %v10365, %v10557
        %v10559 = vpop.f32.mrb[0].mxu0
        %v10560 = vadd.f32 %v10367, %v10559
        %v10561 = vpop.f32.mrb[0].mxu0
        %v10562 = vadd.f32 %v10369, %v10561
        %v10563 = vpop.f32.mrb[0].mxu0
        %v10564 = vadd.f32 %v10371, %v10563
        %10565 = vdwg.mxu0
        %10566 = vmatprep.subr.bf16.mxu0 %v9989
        %10567 = vmatpush1.bf16.msra.mxu0 %v9988
        %10568 = vmatprep.subr.bf16.mxu0 %v9991
        %10569 = vmatpush1.bf16.msra.mxu0 %v9990
        %10570 = vmatprep.subr.bf16.mxu0 %v9993
        %10571 = vmatpush1.bf16.msra.mxu0 %v9992
        %10572 = vmatprep.subr.bf16.mxu0 %v9995
        %10573 = vmatpush1.bf16.msra.mxu0 %v9994
        %10574 = vmatprep.subr.bf16.mxu0 %v9997
        %10575 = vmatpush1.bf16.msra.mxu0 %v9996
        %10576 = vmatprep.subr.bf16.mxu0 %v9999
        %10577 = vmatpush1.bf16.msra.mxu0 %v9998
        %10578 = vmatprep.subr.bf16.mxu0 %v10001
        %10579 = vmatpush1.bf16.msra.mxu0 %v10000
        %10580 = vmatprep.subr.bf16.mxu0 %v10003
        %10581 = vmatpush1.bf16.msra.mxu0 %v10002
        %10582 = vmatprep.subr.bf16.mxu0 %v10005
        %10583 = vmatpush1.bf16.msra.mxu0 %v10004
        %10584 = vmatprep.subr.bf16.mxu0 %v10007
        %10585 = vmatpush1.bf16.msra.mxu0 %v10006
        %10586 = vmatprep.subr.bf16.mxu0 %v10009
        %10587 = vmatpush1.bf16.msra.mxu0 %v10008
        %10588 = vmatprep.subr.bf16.mxu0 %v10011
        %10589 = vmatpush1.bf16.msra.mxu0 %v10010
        %10590 = vmatprep.subr.bf16.mxu0 %v10013
        %10591 = vmatpush1.bf16.msra.mxu0 %v10012
        %10592 = vmatprep.subr.bf16.mxu0 %v10015
        %10593 = vmatpush1.bf16.msra.mxu0 %v10014
        %10594 = vmatprep.subr.bf16.mxu0 %v10017
        %10595 = vmatpush1.bf16.msra.mxu0 %v10016
        %10596 = vmatprep.subr.bf16.mxu0 %v10019
        %10597 = vmatpush1.bf16.msra.mxu0 %v10018
        %10598 = vmatprep.mubr.bf16.mxu0 %v9277
        %10599 = vmatmul.mubr.bf16.gmra.mrb[0].mxu0 %v9276
        %v10600 = vpop.f32.mrb[0].mxu0
        %v10601 = vadd.f32 %v10408, %v10600
        %v10602 = vpop.f32.mrb[0].mxu0
        %v10603 = vadd.f32 %v10410, %v10602
        %v10604 = vpop.f32.mrb[0].mxu0
        %v10605 = vadd.f32 %v10412, %v10604
        %v10606 = vpop.f32.mrb[0].mxu0
        %v10607 = vadd.f32 %v10414, %v10606
        %10608 = vmatprep.mubr.bf16.mxu0 %v9285
        %10609 = vmatmul.mubr.bf16.gmra.mrb[0].mxu0 %v9284
        %v10610 = vpop.f32.mrb[0].mxu0
        %v10611 = vadd.f32 %v10418, %v10610
        %v10612 = vpop.f32.mrb[0].mxu0
        %v10613 = vadd.f32 %v10420, %v10612
        %v10614 = vpop.f32.mrb[0].mxu0
        %v10615 = vadd.f32 %v10422, %v10614
        %v10616 = vpop.f32.mrb[0].mxu0
        %v10617 = vadd.f32 %v10424, %v10616
        %10618 = vmatprep.mubr.bf16.mxu0 %v9293
        %10619 = vmatmul.mubr.bf16.gmra.mrb[0].mxu0 %v9292
        %v10620 = vpop.f32.mrb[0].mxu0
        %v10621 = vadd.f32 %v10428, %v10620
        %v10622 = vpop.f32.mrb[0].mxu0
        %v10623 = vadd.f32 %v10430, %v10622
        %v10624 = vpop.f32.mrb[0].mxu0
        %v10625 = vadd.f32 %v10432, %v10624
        %v10626 = vpop.f32.mrb[0].mxu0
        %v10627 = vadd.f32 %v10434, %v10626
        %10628 = vmatprep.mubr.bf16.mxu0 %v9301
        %10629 = vmatmul.mubr.bf16.gmra.mrb[0].mxu0 %v9300
        %v10630 = vpop.f32.mrb[0].mxu0
        %v10631 = vadd.f32 %v10438, %v10630
        %v10632 = vpop.f32.mrb[0].mxu0
        %v10633 = vadd.f32 %v10440, %v10632
        %v10634 = vpop.f32.mrb[0].mxu0
        %v10635 = vadd.f32 %v10442, %v10634
        %v10636 = vpop.f32.mrb[0].mxu0
        %v10637 = vadd.f32 %v10444, %v10636
        %10638 = vmatprep.mubr.bf16.mxu0 %v9309
        %10639 = vmatmul.mubr.bf16.gmra.mrb[0].mxu0 %v9308
        %v10640 = vpop.f32.mrb[0].mxu0
        %v10641 = vadd.f32 %v10448, %v10640
        %v10642 = vpop.f32.mrb[0].mxu0
        %v10643 = vadd.f32 %v10450, %v10642
        %v10644 = vpop.f32.mrb[0].mxu0
        %v10645 = vadd.f32 %v10452, %v10644
        %v10646 = vpop.f32.mrb[0].mxu0
        %v10647 = vadd.f32 %v10454, %v10646
        %10648 = vmatprep.mubr.bf16.mxu0 %v9317
        %10649 = vmatmul.mubr.bf16.gmra.mrb[0].mxu0 %v9316
        %v10650 = vpop.f32.mrb[0].mxu0
        %v10651 = vadd.f32 %v10458, %v10650
        %v10652 = vpop.f32.mrb[0].mxu0
        %v10653 = vadd.f32 %v10460, %v10652
        %v10654 = vpop.f32.mrb[0].mxu0
        %v10655 = vadd.f32 %v10462, %v10654
        %v10656 = vpop.f32.mrb[0].mxu0
        %v10657 = vadd.f32 %v10464, %v10656
        %10658 = vmatprep.mubr.bf16.mxu0 %v9325
        %10659 = vmatmul.mubr.bf16.gmra.mrb[0].mxu0 %v9324
        %v10660 = vpop.f32.mrb[0].mxu0
        %v10661 = vadd.f32 %v10468, %v10660
        %v10662 = vpop.f32.mrb[0].mxu0
        %v10663 = vadd.f32 %v10470, %v10662
        %v10664 = vpop.f32.mrb[0].mxu0
        %v10665 = vadd.f32 %v10472, %v10664
        %v10666 = vpop.f32.mrb[0].mxu0
        %v10667 = vadd.f32 %v10474, %v10666
        %10668 = vmatprep.mubr.bf16.mxu0 %v9333
        %10669 = vmatmul.mubr.bf16.gmra.mrb[0].mxu0 %v9332
        %v10670 = vpop.f32.mrb[0].mxu0
        %v10671 = vadd.f32 %v10478, %v10670
        %v10672 = vpop.f32.mrb[0].mxu0
        %v10673 = vadd.f32 %v10480, %v10672
        %v10674 = vpop.f32.mrb[0].mxu0
        %v10675 = vadd.f32 %v10482, %v10674
        %v10676 = vpop.f32.mrb[0].mxu0
        %v10677 = vadd.f32 %v10484, %v10676
        %10678 = vmatprep.mubr.bf16.mxu0 %v9341
        %10679 = vmatmul.mubr.bf16.gmra.mrb[0].mxu0 %v9340
        %v10680 = vpop.f32.mrb[0].mxu0
        %v10681 = vadd.f32 %v10488, %v10680
        %v10682 = vpop.f32.mrb[0].mxu0
        %v10683 = vadd.f32 %v10490, %v10682
        %v10684 = vpop.f32.mrb[0].mxu0
        %v10685 = vadd.f32 %v10492, %v10684
        %v10686 = vpop.f32.mrb[0].mxu0
        %v10687 = vadd.f32 %v10494, %v10686
        %10688 = vmatprep.mubr.bf16.mxu0 %v9349
        %10689 = vmatmul.mubr.bf16.gmra.mrb[0].mxu0 %v9348
        %v10690 = vpop.f32.mrb[0].mxu0
        %v10691 = vadd.f32 %v10498, %v10690
        %v10692 = vpop.f32.mrb[0].mxu0
        %v10693 = vadd.f32 %v10500, %v10692
        %v10694 = vpop.f32.mrb[0].mxu0
        %v10695 = vadd.f32 %v10502, %v10694
        %v10696 = vpop.f32.mrb[0].mxu0
        %v10697 = vadd.f32 %v10504, %v10696
        %10698 = vmatprep.mubr.bf16.mxu0 %v9357
        %10699 = vmatmul.mubr.bf16.gmra.mrb[0].mxu0 %v9356
        %v10700 = vpop.f32.mrb[0].mxu0
        %v10701 = vadd.f32 %v10508, %v10700
        %v10702 = vpop.f32.mrb[0].mxu0
        %v10703 = vadd.f32 %v10510, %v10702
        %v10704 = vpop.f32.mrb[0].mxu0
        %v10705 = vadd.f32 %v10512, %v10704
        %v10706 = vpop.f32.mrb[0].mxu0
        %v10707 = vadd.f32 %v10514, %v10706
        %10708 = vmatprep.mubr.bf16.mxu0 %v9365
        %10709 = vmatmul.mubr.bf16.gmra.mrb[0].mxu0 %v9364
        %v10710 = vpop.f32.mrb[0].mxu0
        %v10711 = vadd.f32 %v10518, %v10710
        %v10712 = vpop.f32.mrb[0].mxu0
        %v10713 = vadd.f32 %v10520, %v10712
        %v10714 = vpop.f32.mrb[0].mxu0
        %v10715 = vadd.f32 %v10522, %v10714
        %v10716 = vpop.f32.mrb[0].mxu0
        %v10717 = vadd.f32 %v10524, %v10716
        %10718 = vmatprep.mubr.bf16.mxu0 %v9373
        %10719 = vmatmul.mubr.bf16.gmra.mrb[0].mxu0 %v9372
        %v10720 = vpop.f32.mrb[0].mxu0
        %v10721 = vadd.f32 %v10528, %v10720
        %v10722 = vpop.f32.mrb[0].mxu0
        %v10723 = vadd.f32 %v10530, %v10722
        %v10724 = vpop.f32.mrb[0].mxu0
        %v10725 = vadd.f32 %v10532, %v10724
        %v10726 = vpop.f32.mrb[0].mxu0
        %v10727 = vadd.f32 %v10534, %v10726
        %10728 = vmatprep.mubr.bf16.mxu0 %v9381
        %10729 = vmatmul.mubr.bf16.gmra.mrb[0].mxu0 %v9380
        %v10730 = vpop.f32.mrb[0].mxu0
        %v10731 = vadd.f32 %v10538, %v10730
        %v10732 = vpop.f32.mrb[0].mxu0
        %v10733 = vadd.f32 %v10540, %v10732
        %v10734 = vpop.f32.mrb[0].mxu0
        %v10735 = vadd.f32 %v10542, %v10734
        %v10736 = vpop.f32.mrb[0].mxu0
        %v10737 = vadd.f32 %v10544, %v10736
        %10738 = vmatprep.mubr.bf16.mxu0 %v9389
        %10739 = vmatmul.mubr.bf16.gmra.mrb[0].mxu0 %v9388
        %v10740 = vpop.f32.mrb[0].mxu0
        %v10741 = vadd.f32 %v10548, %v10740
        %v10742 = vpop.f32.mrb[0].mxu0
        %v10743 = vadd.f32 %v10550, %v10742
        %v10744 = vpop.f32.mrb[0].mxu0
        %v10745 = vadd.f32 %v10552, %v10744
        %v10746 = vpop.f32.mrb[0].mxu0
        %v10747 = vadd.f32 %v10554, %v10746
        %10748 = vmatprep.mubr.bf16.mxu0 %v9397
        %10749 = vmatmul.mubr.bf16.gmra.mrb[0].mxu0 %v9396
        %v10750 = vpop.f32.mrb[0].mxu0
        %v10751 = vadd.f32 %v10558, %v10750
        %v10752 = vpop.f32.mrb[0].mxu0
        %v10753 = vadd.f32 %v10560, %v10752
        %v10754 = vpop.f32.mrb[0].mxu0
        %v10755 = vadd.f32 %v10562, %v10754
        %v10756 = vpop.f32.mrb[0].mxu0
        %v10757 = vadd.f32 %v10564, %v10756
        %10758 = vdwg.mxu0
        %10759 = vmatprep.subr.bf16.mxu0 %v10021
        %10760 = vmatpush1.bf16.msra.mxu0 %v10020
        %10761 = vmatprep.subr.bf16.mxu0 %v10023
        %10762 = vmatpush1.bf16.msra.mxu0 %v10022
        %10763 = vmatprep.subr.bf16.mxu0 %v10025
        %10764 = vmatpush1.bf16.msra.mxu0 %v10024
        %10765 = vmatprep.subr.bf16.mxu0 %v10027
        %10766 = vmatpush1.bf16.msra.mxu0 %v10026
        %10767 = vmatprep.subr.bf16.mxu0 %v10029
        %10768 = vmatpush1.bf16.msra.mxu0 %v10028
        %10769 = vmatprep.subr.bf16.mxu0 %v10031
        %10770 = vmatpush1.bf16.msra.mxu0 %v10030
        %10771 = vmatprep.subr.bf16.mxu0 %v10033
        %10772 = vmatpush1.bf16.msra.mxu0 %v10032
        %10773 = vmatprep.subr.bf16.mxu0 %v10035
        %10774 = vmatpush1.bf16.msra.mxu0 %v10034
        %10775 = vmatprep.subr.bf16.mxu0 %v10037
        %10776 = vmatpush1.bf16.msra.mxu0 %v10036
        %10777 = vmatprep.subr.bf16.mxu0 %v10039
        %10778 = vmatpush1.bf16.msra.mxu0 %v10038
        %10779 = vmatprep.subr.bf16.mxu0 %v10041
        %10780 = vmatpush1.bf16.msra.mxu0 %v10040
        %10781 = vmatprep.subr.bf16.mxu0 %v10043
        %10782 = vmatpush1.bf16.msra.mxu0 %v10042
        %10783 = vmatprep.subr.bf16.mxu0 %v10045
        %10784 = vmatpush1.bf16.msra.mxu0 %v10044
        %10785 = vmatprep.subr.bf16.mxu0 %v10047
        %10786 = vmatpush1.bf16.msra.mxu0 %v10046
        %10787 = vmatprep.subr.bf16.mxu0 %v10049
        %10788 = vmatpush1.bf16.msra.mxu0 %v10048
        %10789 = vmatprep.subr.bf16.mxu0 %v10051
        %10790 = vmatpush1.bf16.msra.mxu0 %v10050
        %10791 = vmatprep.mubr.bf16.mxu0 %v9279
        %10792 = vmatmul.mubr.bf16.gmra.mrb[0].mxu0 %v9278
        %v10793 = vpop.f32.mrb[0].mxu0
        %v10794 = vadd.f32 %v10601, %v10793
        %v10795 = vpop.f32.mrb[0].mxu0
        %v10796 = vadd.f32 %v10603, %v10795
        %v10797 = vpop.f32.mrb[0].mxu0
        %v10798 = vadd.f32 %v10605, %v10797
        %v10799 = vpop.f32.mrb[0].mxu0
        %v10800 = vadd.f32 %v10607, %v10799
        %10801 = vmatprep.mubr.bf16.mxu0 %v9287
        %10802 = vmatmul.mubr.bf16.gmra.mrb[0].mxu0 %v9286
        %v10803 = vpop.f32.mrb[0].mxu0
        %v10804 = vadd.f32 %v10611, %v10803
        %v10805 = vpop.f32.mrb[0].mxu0
        %v10806 = vadd.f32 %v10613, %v10805
        %v10807 = vpop.f32.mrb[0].mxu0
        %v10808 = vadd.f32 %v10615, %v10807
        %v10809 = vpop.f32.mrb[0].mxu0
        %v10810 = vadd.f32 %v10617, %v10809
        %10811 = vmatprep.mubr.bf16.mxu0 %v9295
        %10812 = vmatmul.mubr.bf16.gmra.mrb[0].mxu0 %v9294
        %v10813 = vpop.f32.mrb[0].mxu0
        %v10814 = vadd.f32 %v10621, %v10813
        %v10815 = vpop.f32.mrb[0].mxu0
        %v10816 = vadd.f32 %v10623, %v10815
        %v10817 = vpop.f32.mrb[0].mxu0
        %v10818 = vadd.f32 %v10625, %v10817
        %v10819 = vpop.f32.mrb[0].mxu0
        %v10820 = vadd.f32 %v10627, %v10819
        %10821 = vmatprep.mubr.bf16.mxu0 %v9303
        %10822 = vmatmul.mubr.bf16.gmra.mrb[0].mxu0 %v9302
        %v10823 = vpop.f32.mrb[0].mxu0
        %v10824 = vadd.f32 %v10631, %v10823
        %v10825 = vpop.f32.mrb[0].mxu0
        %v10826 = vadd.f32 %v10633, %v10825
        %v10827 = vpop.f32.mrb[0].mxu0
        %v10828 = vadd.f32 %v10635, %v10827
        %v10829 = vpop.f32.mrb[0].mxu0
        %v10830 = vadd.f32 %v10637, %v10829
        %10831 = vmatprep.mubr.bf16.mxu0 %v9311
        %10832 = vmatmul.mubr.bf16.gmra.mrb[0].mxu0 %v9310
        %v10833 = vpop.f32.mrb[0].mxu0
        %v10834 = vadd.f32 %v10641, %v10833
        %v10835 = vpop.f32.mrb[0].mxu0
        %v10836 = vadd.f32 %v10643, %v10835
        %v10837 = vpop.f32.mrb[0].mxu0
        %v10838 = vadd.f32 %v10645, %v10837
        %v10839 = vpop.f32.mrb[0].mxu0
        %v10840 = vadd.f32 %v10647, %v10839
        %10841 = vmatprep.mubr.bf16.mxu0 %v9319
        %10842 = vmatmul.mubr.bf16.gmra.mrb[0].mxu0 %v9318
        %v10843 = vpop.f32.mrb[0].mxu0
        %v10844 = vadd.f32 %v10651, %v10843
        %v10845 = vpop.f32.mrb[0].mxu0
        %v10846 = vadd.f32 %v10653, %v10845
        %v10847 = vpop.f32.mrb[0].mxu0
        %v10848 = vadd.f32 %v10655, %v10847
        %v10849 = vpop.f32.mrb[0].mxu0
        %v10850 = vadd.f32 %v10657, %v10849
        %10851 = vmatprep.mubr.bf16.mxu0 %v9327
        %10852 = vmatmul.mubr.bf16.gmra.mrb[0].mxu0 %v9326
        %v10853 = vpop.f32.mrb[0].mxu0
        %v10854 = vadd.f32 %v10661, %v10853
        %v10855 = vpop.f32.mrb[0].mxu0
        %v10856 = vadd.f32 %v10663, %v10855
        %v10857 = vpop.f32.mrb[0].mxu0
        %v10858 = vadd.f32 %v10665, %v10857
        %v10859 = vpop.f32.mrb[0].mxu0
        %v10860 = vadd.f32 %v10667, %v10859
        %10861 = vmatprep.mubr.bf16.mxu0 %v9335
        %10862 = vmatmul.mubr.bf16.gmra.mrb[0].mxu0 %v9334
        %v10863 = vpop.f32.mrb[0].mxu0
        %v10864 = vadd.f32 %v10671, %v10863
        %v10865 = vpop.f32.mrb[0].mxu0
        %v10866 = vadd.f32 %v10673, %v10865
        %v10867 = vpop.f32.mrb[0].mxu0
        %v10868 = vadd.f32 %v10675, %v10867
        %v10869 = vpop.f32.mrb[0].mxu0
        %v10870 = vadd.f32 %v10677, %v10869
        %10871 = vmatprep.mubr.bf16.mxu0 %v9343
        %10872 = vmatmul.mubr.bf16.gmra.mrb[0].mxu0 %v9342
        %v10873 = vpop.f32.mrb[0].mxu0
        %v10874 = vadd.f32 %v10681, %v10873
        %v10875 = vpop.f32.mrb[0].mxu0
        %v10876 = vadd.f32 %v10683, %v10875
        %v10877 = vpop.f32.mrb[0].mxu0
        %v10878 = vadd.f32 %v10685, %v10877
        %v10879 = vpop.f32.mrb[0].mxu0
        %v10880 = vadd.f32 %v10687, %v10879
        %10881 = vmatprep.mubr.bf16.mxu0 %v9351
        %10882 = vmatmul.mubr.bf16.gmra.mrb[0].mxu0 %v9350
        %v10883 = vpop.f32.mrb[0].mxu0
        %v10884 = vadd.f32 %v10691, %v10883
        %v10885 = vpop.f32.mrb[0].mxu0
        %v10886 = vadd.f32 %v10693, %v10885
        %v10887 = vpop.f32.mrb[0].mxu0
        %v10888 = vadd.f32 %v10695, %v10887
        %v10889 = vpop.f32.mrb[0].mxu0
        %v10890 = vadd.f32 %v10697, %v10889
        %10891 = vmatprep.mubr.bf16.mxu0 %v9359
        %10892 = vmatmul.mubr.bf16.gmra.mrb[0].mxu0 %v9358
        %v10893 = vpop.f32.mrb[0].mxu0
        %v10894 = vadd.f32 %v10701, %v10893
        %v10895 = vpop.f32.mrb[0].mxu0
        %v10896 = vadd.f32 %v10703, %v10895
        %v10897 = vpop.f32.mrb[0].mxu0
        %v10898 = vadd.f32 %v10705, %v10897
        %v10899 = vpop.f32.mrb[0].mxu0
        %v10900 = vadd.f32 %v10707, %v10899
        %10901 = vmatprep.mubr.bf16.mxu0 %v9367
        %10902 = vmatmul.mubr.bf16.gmra.mrb[0].mxu0 %v9366
        %v10903 = vpop.f32.mrb[0].mxu0
        %v10904 = vadd.f32 %v10711, %v10903
        %v10905 = vpop.f32.mrb[0].mxu0
        %v10906 = vadd.f32 %v10713, %v10905
        %v10907 = vpop.f32.mrb[0].mxu0
        %v10908 = vadd.f32 %v10715, %v10907
        %v10909 = vpop.f32.mrb[0].mxu0
        %v10910 = vadd.f32 %v10717, %v10909
        %10911 = vmatprep.mubr.bf16.mxu0 %v9375
        %10912 = vmatmul.mubr.bf16.gmra.mrb[0].mxu0 %v9374
        %v10913 = vpop.f32.mrb[0].mxu0
        %v10914 = vadd.f32 %v10721, %v10913
        %v10915 = vpop.f32.mrb[0].mxu0
        %v10916 = vadd.f32 %v10723, %v10915
        %v10917 = vpop.f32.mrb[0].mxu0
        %v10918 = vadd.f32 %v10725, %v10917
        %v10919 = vpop.f32.mrb[0].mxu0
        %v10920 = vadd.f32 %v10727, %v10919
        %10921 = vmatprep.mubr.bf16.mxu0 %v9383
        %10922 = vmatmul.mubr.bf16.gmra.mrb[0].mxu0 %v9382
        %v10923 = vpop.f32.mrb[0].mxu0
        %v10924 = vadd.f32 %v10731, %v10923
        %v10925 = vpop.f32.mrb[0].mxu0
        %v10926 = vadd.f32 %v10733, %v10925
        %v10927 = vpop.f32.mrb[0].mxu0
        %v10928 = vadd.f32 %v10735, %v10927
        %v10929 = vpop.f32.mrb[0].mxu0
        %v10930 = vadd.f32 %v10737, %v10929
        %10931 = vmatprep.mubr.bf16.mxu0 %v9391
        %10932 = vmatmul.mubr.bf16.gmra.mrb[0].mxu0 %v9390
        %v10933 = vpop.f32.mrb[0].mxu0
        %v10934 = vadd.f32 %v10741, %v10933
        %v10935 = vpop.f32.mrb[0].mxu0
        %v10936 = vadd.f32 %v10743, %v10935
        %v10937 = vpop.f32.mrb[0].mxu0
        %v10938 = vadd.f32 %v10745, %v10937
        %v10939 = vpop.f32.mrb[0].mxu0
        %v10940 = vadd.f32 %v10747, %v10939
        %10941 = vmatprep.mubr.bf16.mxu0 %v9399
        %10942 = vmatmul.mubr.bf16.gmra.mrb[0].mxu0 %v9398
        %v10943 = vpop.f32.mrb[0].mxu0
        %v10944 = vadd.f32 %v10751, %v10943
        %v10945 = vpop.f32.mrb[0].mxu0
        %v10946 = vadd.f32 %v10753, %v10945
        %v10947 = vpop.f32.mrb[0].mxu0
        %v10948 = vadd.f32 %v10755, %v10947
        %v10949 = vpop.f32.mrb[0].mxu0
        %v10950 = vadd.f32 %v10757, %v10949
        %10951 = vdwg.mxu0
        %v10952 = vadd.f32 %v5650, %v10794
        %v10953 = vadd.f32 %v5651, %v10796
        %v10954 = vadd.f32 %v5652, %v10798
        %v10955 = vadd.f32 %v5653, %v10800
        %v10956 = vadd.f32 %v5654, %v10804
        %v10957 = vadd.f32 %v5655, %v10806
        %v10958 = vadd.f32 %v5656, %v10808
        %v10959 = vadd.f32 %v5657, %v10810
        %v10960 = vadd.f32 %v5658, %v10814
        %v10961 = vadd.f32 %v5659, %v10816
        %v10962 = vadd.f32 %v5660, %v10818
        %v10963 = vadd.f32 %v5661, %v10820
        %v10964 = vadd.f32 %v5662, %v10824
        %v10965 = vadd.f32 %v5663, %v10826
        %v10966 = vadd.f32 %v5664, %v10828
        %v10967 = vadd.f32 %v5665, %v10830
        %v10968 = vadd.f32 %v5666, %v10834
        %v10969 = vadd.f32 %v5667, %v10836
        %v10970 = vadd.f32 %v5668, %v10838
        %v10971 = vadd.f32 %v5669, %v10840
        %v10972 = vadd.f32 %v5670, %v10844
        %v10973 = vadd.f32 %v5671, %v10846
        %v10974 = vadd.f32 %v5672, %v10848
        %v10975 = vadd.f32 %v5673, %v10850
        %v10976 = vadd.f32 %v5674, %v10854
        %v10977 = vadd.f32 %v5675, %v10856
        %v10978 = vadd.f32 %v5676, %v10858
        %v10979 = vadd.f32 %v5677, %v10860
        %v10980 = vadd.f32 %v5678, %v10864
        %v10981 = vadd.f32 %v5679, %v10866
        %v10982 = vadd.f32 %v5680, %v10868
        %v10983 = vadd.f32 %v5681, %v10870
        %v10984 = vadd.f32 %v5682, %v10874
        %v10985 = vadd.f32 %v5683, %v10876
        %v10986 = vadd.f32 %v5684, %v10878
        %v10987 = vadd.f32 %v5685, %v10880
        %v10988 = vadd.f32 %v5686, %v10884
        %v10989 = vadd.f32 %v5687, %v10886
        %v10990 = vadd.f32 %v5688, %v10888
        %v10991 = vadd.f32 %v5689, %v10890
        %v10992 = vadd.f32 %v5690, %v10894
        %v10993 = vadd.f32 %v5691, %v10896
        %v10994 = vadd.f32 %v5692, %v10898
        %v10995 = vadd.f32 %v5693, %v10900
        %v10996 = vadd.f32 %v5694, %v10904
        %v10997 = vadd.f32 %v5695, %v10906
        %v10998 = vadd.f32 %v5696, %v10908
        %v10999 = vadd.f32 %v5697, %v10910
        %v11000 = vadd.f32 %v5698, %v10914
        %v11001 = vadd.f32 %v5699, %v10916
        %v11002 = vadd.f32 %v5700, %v10918
        %v11003 = vadd.f32 %v5701, %v10920
        %v11004 = vadd.f32 %v5702, %v10924
        %v11005 = vadd.f32 %v5703, %v10926
        %v11006 = vadd.f32 %v5704, %v10928
        %v11007 = vadd.f32 %v5705, %v10930
        %v11008 = vadd.f32 %v5706, %v10934
        %v11009 = vadd.f32 %v5707, %v10936
        %v11010 = vadd.f32 %v5708, %v10938
        %v11011 = vadd.f32 %v5709, %v10940
        %v11012 = vadd.f32 %v5710, %v10944
        %v11013 = vadd.f32 %v5711, %v10946
        %v11014 = vadd.f32 %v5712, %v10948
        %v11015 = vadd.f32 %v5713, %v10950
        %11016 = vst [vmem:[%s573] sm:$0xff] %v10952
        %11017 = vst [vmem:[%s573 + $0x8] sm:$0xff] %v10953
        %11018 = vst [vmem:[%s573 + $0x10] sm:$0xff] %v10954
        %11019 = vst [vmem:[%s573 + $0x18] sm:$0xff] %v10955
        %11020 = vst [vmem:[%s573 + $0x20] sm:$0xff] %v10956
        %11021 = vst [vmem:[%s573 + $0x28] sm:$0xff] %v10957
        %11022 = vst [vmem:[%s573 + $0x30] sm:$0xff] %v10958
        %11023 = vst [vmem:[%s573 + $0x38] sm:$0xff] %v10959
        %11024 = vst [vmem:[%s573 + $0x40] sm:$0xff] %v10960
        %11025 = vst [vmem:[%s573 + $0x48] sm:$0xff] %v10961
        %11026 = vst [vmem:[%s573 + $0x50] sm:$0xff] %v10962
        %11027 = vst [vmem:[%s573 + $0x58] sm:$0xff] %v10963
        %11028 = vst [vmem:[%s573 + $0x60] sm:$0xff] %v10964
        %11029 = vst [vmem:[%s573 + $0x68] sm:$0xff] %v10965
        %11030 = vst [vmem:[%s573 + $0x70] sm:$0xff] %v10966
        %11031 = vst [vmem:[%s573 + $0x78] sm:$0xff] %v10967
        %11032 = vst [vmem:[%s573 + $0x80] sm:$0xff] %v10968
        %11033 = vst [vmem:[%s573 + $0x88] sm:$0xff] %v10969
        %11034 = vst [vmem:[%s573 + $0x90] sm:$0xff] %v10970
        %11035 = vst [vmem:[%s573 + $0x98] sm:$0xff] %v10971
        %11036 = vst [vmem:[%s573 + $0xa0] sm:$0xff] %v10972
        %11037 = vst [vmem:[%s573 + $0xa8] sm:$0xff] %v10973
        %11038 = vst [vmem:[%s573 + $0xb0] sm:$0xff] %v10974
        %11039 = vst [vmem:[%s573 + $0xb8] sm:$0xff] %v10975
        %11040 = vst [vmem:[%s573 + $0xc0] sm:$0xff] %v10976
        %11041 = vst [vmem:[%s573 + $0xc8] sm:$0xff] %v10977
        %11042 = vst [vmem:[%s573 + $0xd0] sm:$0xff] %v10978
        %11043 = vst [vmem:[%s573 + $0xd8] sm:$0xff] %v10979
        %11044 = vst [vmem:[%s573 + $0xe0] sm:$0xff] %v10980
        %11045 = vst [vmem:[%s573 + $0xe8] sm:$0xff] %v10981
        %11046 = vst [vmem:[%s573 + $0xf0] sm:$0xff] %v10982
        %11047 = vst [vmem:[%s573 + $0xf8] sm:$0xff] %v10983
        %11048 = vst [vmem:[%s573 + $0x100] sm:$0xff] %v10984
        %11049 = vst [vmem:[%s573 + $0x108] sm:$0xff] %v10985
        %11050 = vst [vmem:[%s573 + $0x110] sm:$0xff] %v10986
        %11051 = vst [vmem:[%s573 + $0x118] sm:$0xff] %v10987
        %11052 = vst [vmem:[%s573 + $0x120] sm:$0xff] %v10988
        %11053 = vst [vmem:[%s573 + $0x128] sm:$0xff] %v10989
        %11054 = vst [vmem:[%s573 + $0x130] sm:$0xff] %v10990
        %11055 = vst [vmem:[%s573 + $0x138] sm:$0xff] %v10991
        %11056 = vst [vmem:[%s573 + $0x140] sm:$0xff] %v10992
        %11057 = vst [vmem:[%s573 + $0x148] sm:$0xff] %v10993
        %11058 = vst [vmem:[%s573 + $0x150] sm:$0xff] %v10994
        %11059 = vst [vmem:[%s573 + $0x158] sm:$0xff] %v10995
        %11060 = vst [vmem:[%s573 + $0x160] sm:$0xff] %v10996
        %11061 = vst [vmem:[%s573 + $0x168] sm:$0xff] %v10997
        %11062 = vst [vmem:[%s573 + $0x170] sm:$0xff] %v10998
        %11063 = vst [vmem:[%s573 + $0x178] sm:$0xff] %v10999
        %11064 = vst [vmem:[%s573 + $0x180] sm:$0xff] %v11000
        %11065 = vst [vmem:[%s573 + $0x188] sm:$0xff] %v11001
        %11066 = vst [vmem:[%s573 + $0x190] sm:$0xff] %v11002
        %11067 = vst [vmem:[%s573 + $0x198] sm:$0xff] %v11003
        %11068 = vst [vmem:[%s573 + $0x1a0] sm:$0xff] %v11004
        %11069 = vst [vmem:[%s573 + $0x1a8] sm:$0xff] %v11005
        %11070 = vst [vmem:[%s573 + $0x1b0] sm:$0xff] %v11006
        %11071 = vst [vmem:[%s573 + $0x1b8] sm:$0xff] %v11007
        %11072 = vst [vmem:[%s573 + $0x1c0] sm:$0xff] %v11008
        %11073 = vst [vmem:[%s573 + $0x1c8] sm:$0xff] %v11009
        %11074 = vst [vmem:[%s573 + $0x1d0] sm:$0xff] %v11010
        %11075 = vst [vmem:[%s573 + $0x1d8] sm:$0xff] %v11011
        %11076 = vst [vmem:[%s573 + $0x1e0] sm:$0xff] %v11012
        %11077 = vst [vmem:[%s573 + $0x1e8] sm:$0xff] %v11013
        %11078 = vst [vmem:[%s573 + $0x1f0] sm:$0xff] %v11014
        %11079 = vst [vmem:[%s573 + $0x1f8] sm:$0xff] %v11015
        %s11080 = sand.u32 %s341, 1
        %s11081 = scalar_lea.sflag [#allocation5], %s11080
        %s11082 = sand.u32 %s341, 1
        %s11083 = smul.addr %s11082, 512
        %s11084 = scalar_lea.vmem [#allocation15], %s11083
        // Predicated region
        $region105: #{tpu_custom_call.1} parent=75 // pred_check
          %p11085 = pneg %p351
        $region106: #{tpu_custom_call.1} parent=75 // pred_check_branch
          %11087 = sbr.rel (%p11085) target = $region108
        $region107: #{tpu_custom_call.1} parent=75 // pred_region
          %s11088 = smul.u32 2, %s34
          %s11090 = ssub.s32 8192, 8192
          %11091 = vsyncadd %s11081, %s11090
          %s11092 = smul.addr %s11088, 32
          %s11093 = smul.addr %s11092, 128
          %s11094 = scalar_lea.hbm %s14, %s11093
          %s11095 = sshll.u32 %s11084, 4
          %s11096 = int_to_ptr.vmem [resolvable:$true] %s11095
          %11101 = dma.vmem_to_hbm [thread:$0]  %s11096, 8192, %s11094, %s11081, 256, 256, 16
        $region108: #{tpu_custom_call.1} parent=75 // pred_fallthru
          _
      $region76: #{tpu_custom_call.1} parent=5 // pred_fallthru
        _
      %p11102 = scmp.le.s32.totalorder 2, %s29
      // Predicated region
      $region109: #{tpu_custom_call.1} parent=5 // pred_check
        %p11103 = pneg %p11102
      $region110: #{tpu_custom_call.1} parent=5 // pred_check_branch
        %11105 = sbr.rel (%p11103) target = $region112
      $region111: #{tpu_custom_call.1} parent=5 // pred_region
        %s11106 = ssub.s32 %s29, 2
        // Predicated region
        $region113: #{tpu_custom_call.1} parent=111 // pred_check
          %p11107 = pneg %p357
        $region114: #{tpu_custom_call.1} parent=111 // pred_check_branch
          %11109 = sbr.rel (%p11107) target = $region116
        $region115: #{tpu_custom_call.1} parent=111 // pred_region
          %s11110 = sand.u32 %s342, 1
          %s11111 = scalar_lea.sflag [#allocation5], %s11110
          %s11112 = sand.u32 %s342, 1
          %s11113 = smul.addr %s11112, 512
          %s11114 = scalar_lea.vmem [#allocation15], %s11113
          %11115 = dma.done %s11111, 8192
        $region116: #{tpu_custom_call.1} parent=111 // pred_fallthru
          _
      $region112: #{tpu_custom_call.1} parent=5 // pred_fallthru
        _
    $region6: #{tpu_custom_call.1} parent=1 // loop_footer
      %s33 = sadd.s32 1, %s29
    $region7: #{tpu_custom_call.1} parent=1 // loop_footer_branch
      %28 = sbr.rel target = $region3
    $region8: #{tpu_custom_call.1} parent=1 // loop_exit
      _
    %11116 = vsyncpa [#allocation4], 1
    %s11117 = scalar_lea.sflag [#allocation4], 1
    %11118 = vsyncpa %s11117, 1
    %11119 = vsyncpa [#allocation7], 1
    %11120 = vsyncpa [#allocation10], 1
    %11121 = vsyncpa [#allocation13], 1
    %11122 = vsyncpa [#allocation5], 1
    %s11123 = scalar_lea.sflag [#allocation5], 1
    %11124 = vsyncpa %s11123, 1

</llo_original>
